<compile_context>
chip_gen: v6e
topology: v6e:2x2x1
jax: 0.10.0
libtpu: 0.0.40
codegen_flags: <defaults>
</compile_context>

<pallas_src>
import functools

import jax
import jax.numpy as jnp
from jax.experimental import pallas as pl
from jax.experimental.pallas import tpu as pltpu

EPS = 1e-5  # PyTorch BatchNorm default eps

_ARB2 = pltpu.CompilerParams(dimension_semantics=("arbitrary", "arbitrary"))
_PAR1 = pltpu.CompilerParams(dimension_semantics=("parallel",))


# ---------------------------------------------------------------------------
# Kernel 1: transpose conv (per output parity) + folded Wg 1x1 + BN statistics
# Grid: (N, H); step (n, r) produces output rows 2r and 2r+1 of image n.
# ---------------------------------------------------------------------------
def upsample_gate_pre_kernel(x0_ref, x1_ref, skip_ref, w_ref, b_ref, ws_ref,
                             ga_ref, stats_ref):
    # x0_ref, x1_ref: (1, 1, W+1, Cx)   rows r, r+1 of bottom/right zero-padded x
    # skip_ref:       (1, 2, 2W, Cs)    skip rows 2r, 2r+1
    # w_ref:          (3, 3, Cx, 2Cup)  per tap: [W_t | W_t @ W_g]
    # b_ref:          (1, 2Cup)         [b_t | 0]
    # ws_ref:         (Cs, Cup)         Ws 1x1 weight (statistics only)
    # ga_ref:         (1, 2, 2, W, 2Cup) [n, dy, q, c, :] = pixel (2r+dy, 2c+q)
    # stats_ref:      (2, 2Cup)         rows [sum, sumsq], cols [a | b]
    @pl.when(jnp.logical_and(pl.program_id(0) == 0, pl.program_id(1) == 0))
    def _init():
        stats_ref[...] = jnp.zeros_like(stats_ref)

    cup = w_ref.shape[3] // 2
    x0 = x0_ref[0, 0, :, :]
    x1 = x1_ref[0, 0, :, :]
    wd = x0.shape[0] - 1
    bias = b_ref[...]

    def tap(v, kh, kw):
        return jnp.dot(v, w_ref[kh, kw, :, :], preferred_element_type=jnp.float32)

    x0l, x0r = x0[:wd, :], x0[1:, :]
    x1l, x1r = x1[:wd, :], x1[1:, :]

    # ConvTranspose2d: out[2i-1+kh, 2j-1+kw] += x[i, j] @ W[kh, kw]
    ee = tap(x0l, 1, 1) + bias                                      # (2r  , even)
    eo = tap(x0r, 1, 0) + tap(x0l, 1, 2) + bias                     # (2r  , odd )
    oe = tap(x1l, 0, 1) + tap(x0l, 2, 1) + bias                     # (2r+1, even)
    oo = (tap(x1r, 0, 0) + tap(x1l, 0, 2)
          + tap(x0r, 2, 0) + tap(x0l, 2, 2) + bias)                 # (2r+1, odd )

    ga_ref[0, 0, 0, :, :] = ee
    ga_ref[0, 0, 1, :, :] = eo
    ga_ref[0, 1, 0, :, :] = oe
    ga_ref[0, 1, 1, :, :] = oo

    def csum(v):
        return jnp.sum(v, axis=0, keepdims=True)

    s_a = (csum(ee) + csum(eo) + csum(oe) + csum(oo))[:, cup:]
    q_a = (csum(ee * ee) + csum(eo * eo) + csum(oe * oe) + csum(oo * oo))[:, cup:]
    b0 = jnp.dot(skip_ref[0, 0, :, :], ws_ref[...], preferred_element_type=jnp.float32)
    b1 = jnp.dot(skip_ref[0, 1, :, :], ws_ref[...], preferred_element_type=jnp.float32)
    s_b = csum(b0) + csum(b1)
    q_b = csum(b0 * b0) + csum(b1 * b1)

    stats_ref[...] += jnp.concatenate(
        [jnp.concatenate([s_a, s_b], axis=1),
         jnp.concatenate([q_a, q_b], axis=1)], axis=0)


# ---------------------------------------------------------------------------
# Kernel 2: attention-gate apply + lane-dense concat([skip, att*g])
# ---------------------------------------------------------------------------
def gate_concat_kernel(ga_ref, skip_ref, ws_ref, wo_ref, bo_ref,
                       sa_ref, ha_ref, sb_ref, hb_ref, out_ref):
    cup = ws_ref.shape[1]
    ga = ga_ref[...]
    g = ga[:, :cup]
    a = ga[:, cup:]
    s = skip_ref[...]
    b = jnp.dot(s, ws_ref[...], preferred_element_type=jnp.float32)
    h = jnp.maximum(a * sa_ref[...] + ha_ref[...] + b * sb_ref[...] + hb_ref[...], 0.0)
    # 1x1 conv to a single channel is a lane reduction (keep it off the MXU)
    logit = jnp.sum(h * wo_ref[...], axis=1, keepdims=True) + bo_ref[...]
    att = jax.nn.sigmoid(logit)
    out_ref[...] = jnp.concatenate([s, att * g], axis=1)


# ---------------------------------------------------------------------------
# Kernel 3/4: 3x3 conv (pad=1) as 9 shifted matmuls + BN statistics.
# Optionally fuses BN+ReLU of the *previous* conv onto its input rows.
# Grid: (N, H2); step (n, oy) produces output row oy of image n.
# ---------------------------------------------------------------------------
def conv3x3_stats_kernel(*refs, fuse_bnrelu):
    if fuse_bnrelu:
        x0_ref, x1_ref, x2_ref, w_ref, sc_ref, sh_ref, out_ref, stats_ref = refs
    else:
        x0_ref, x1_ref, x2_ref, w_ref, out_ref, stats_ref = refs

    @pl.when(jnp.logical_and(pl.program_id(0) == 0, pl.program_id(1) == 0))
    def _init():
        stats_ref[...] = jnp.zeros_like(stats_ref)

    w_out = out_ref.shape[2]
    c_out = out_ref.shape[3]
    rows = [x0_ref[0, 0, :, :], x1_ref[0, 0, :, :], x2_ref[0, 0, :, :]]

    if fuse_bnrelu:
        # Input rows are pre-BN conv outputs (zero padded).  Apply BN+ReLU and
        # re-zero the spatial padding (BN shifts zeros away from zero).
        oy = pl.program_id(1)
        col = jax.lax.broadcasted_iota(jnp.int32, (w_out + 2, 1), 0)
        inner = jnp.logical_and(col >= 1, col <= w_out)
        valid = [jnp.logical_and(inner, oy > 0),
                 inner,
                 jnp.logical_and(inner, oy < pl.num_programs(1) - 1)]
        rows = [jnp.where(valid[dy],
                          jnp.maximum(rows[dy] * sc_ref[...] + sh_ref[...], 0.0),
                          0.0)
                for dy in range(3)]

    acc = jnp.zeros((w_out, c_out), jnp.float32)
    for dy in range(3):
        for dx in range(3):
            acc = acc + jnp.dot(rows[dy][dx:dx + w_out, :], w_ref[dy, dx, :, :],
                                preferred_element_type=jnp.float32)

    out_ref[0, 0, :, :] = acc
    stats_ref[...] += jnp.concatenate(
        [jnp.sum(acc, axis=0, keepdims=True),
         jnp.sum(acc * acc, axis=0, keepdims=True)], axis=0)


# ---------------------------------------------------------------------------
# Kernel 5: pointwise BN + ReLU apply
# ---------------------------------------------------------------------------
def bn_relu_kernel(y_ref, sc_ref, sh_ref, out_ref):
    out_ref[...] = jnp.maximum(y_ref[...] * sc_ref[...] + sh_ref[...], 0.0)


# ------------------------------- wrappers ----------------------------------
def _row_tile(m, target=512):
    """Largest divisor of m that is <= target and a multiple of 8 (else m)."""
    for cand in range(min(m, target), 0, -1):
        if m % cand == 0 and (cand % 8 == 0 or cand == m):
            return cand
    return m


def _call_upsample_gate(x_pad, skip, wcomb, bcomb, ws_mat):
    n, hp1, wp1, cx = x_pad.shape
    h, w = hp1 - 1, wp1 - 1
    _, h2, w2, cs = skip.shape
    cup2 = wcomb.shape[3]

    in_specs = [
        pl.BlockSpec((1, 1, wp1, cx), lambda nn, r: (nn, r, 0, 0)),
        pl.BlockSpec((1, 1, wp1, cx), lambda nn, r: (nn, r + 1, 0, 0)),
        pl.BlockSpec((1, 2, w2, cs), lambda nn, r: (nn, r, 0, 0)),
        pl.BlockSpec((3, 3, cx, cup2), lambda nn, r: (0, 0, 0, 0)),
        pl.BlockSpec((1, cup2), lambda nn, r: (0, 0)),
        pl.BlockSpec(ws_mat.shape, lambda nn, r: (0, 0)),
    ]
    out_specs = (
        pl.BlockSpec((1, 2, 2, w, cup2), lambda nn, r: (nn, r, 0, 0, 0)),
        pl.BlockSpec((2, cup2), lambda nn, r: (0, 0)),
    )
    out_shape = (
        jax.ShapeDtypeStruct((n, h2, 2, w, cup2), jnp.float32),
        jax.ShapeDtypeStruct((2, cup2), jnp.float32),
    )
    return pl.pallas_call(
        upsample_gate_pre_kernel,
        grid=(n, h),
        in_specs=in_specs,
        out_specs=out_specs,
        out_shape=out_shape,
        compiler_params=_ARB2,
    )(x_pad, x_pad, skip, wcomb, bcomb, ws_mat)


def _call_gate_concat(ga_flat, skip_flat, ws_mat, wo, bo, sa, ha, sb, hb):
    m, cup2 = ga_flat.shape
    cs = skip_flat.shape[1]
    cin = cs + cup2 // 2
    tm = _row_tile(m)
    params = [ws_mat, wo, bo, sa, ha, sb, hb]
    in_specs = ([pl.BlockSpec((tm, cup2), lambda i: (i, 0)),
                 pl.BlockSpec((tm, cs), lambda i: (i, 0))]
                + [pl.BlockSpec(p.shape, lambda i: (0, 0)) for p in params])
    return pl.pallas_call(
        gate_concat_kernel,
        grid=(m // tm,),
        in_specs=in_specs,
        out_specs=pl.BlockSpec((tm, cin), lambda i: (i, 0)),
        out_shape=jax.ShapeDtypeStruct((m, cin), jnp.float32),
        compiler_params=_PAR1,
    )(ga_flat, skip_flat, *params)


def _call_conv3x3(x_pad, w, scale_shift=None):
    n, hp2, wp2, cin = x_pad.shape
    h2, w2 = hp2 - 2, wp2 - 2
    cout = w.shape[3]
    fuse = scale_shift is not None

    def row_spec(dy):
        return pl.BlockSpec((1, 1, wp2, cin),
                            lambda nn, oy, dy=dy: (nn, oy + dy, 0, 0))

    in_specs = [row_spec(0), row_spec(1), row_spec(2),
                pl.BlockSpec((3, 3, cin, cout), lambda nn, oy: (0, 0, 0, 0))]
    args = [x_pad, x_pad, x_pad, w]
    if fuse:
        sc, sh = scale_shift
        in_specs += [pl.BlockSpec((1, cin), lambda nn, oy: (0, 0)),
                     pl.BlockSpec((1, cin), lambda nn, oy: (0, 0))]
        args += [sc, sh]

    out_specs = (
        pl.BlockSpec((1, 1, w2, cout), lambda nn, oy: (nn, oy, 0, 0)),
        pl.BlockSpec((2, cout), lambda nn, oy: (0, 0)),
    )
    out_shape = (
        jax.ShapeDtypeStruct((n, h2, w2, cout), jnp.float32),
        jax.ShapeDtypeStruct((2, cout), jnp.float32),
    )
    kern = functools.partial(conv3x3_stats_kernel, fuse_bnrelu=fuse)
    return pl.pallas_call(
        kern,
        grid=(n, h2),
        in_specs=in_specs,
        out_specs=out_specs,
        out_shape=out_shape,
        compiler_params=_ARB2,
    )(*args)


def _call_bn_relu(y_flat, sc, sh):
    m, c = y_flat.shape
    tm = _row_tile(m)
    return pl.pallas_call(
        bn_relu_kernel,
        grid=(m // tm,),
        in_specs=[pl.BlockSpec((tm, c), lambda i: (i, 0)),
                  pl.BlockSpec((1, c), lambda i: (0, 0)),
                  pl.BlockSpec((1, c), lambda i: (0, 0))],
        out_specs=pl.BlockSpec((tm, c), lambda i: (i, 0)),
        out_shape=jax.ShapeDtypeStruct((m, c), jnp.float32),
        compiler_params=_PAR1,
    )(y_flat, sc, sh)


def _bn_affine(stats, count, gamma, beta):
    """(sum, sumsq) -> (scale, shift) for training-mode BN (biased variance)."""
    mu = stats[0] / count
    var = jnp.maximum(stats[1] / count - mu * mu, 0.0)
    scale = gamma * jax.lax.rsqrt(var + EPS)
    shift = beta - mu * scale
    return scale.reshape(1, -1), shift.reshape(1, -1)


# --------------------------------- glue ------------------------------------
def init_decoder_params(key, up_in_channels, x_in_channels):
    cx = up_in_channels
    cup = up_in_channels // 2
    cs = x_in_channels
    cin = cup + cs
    cmid = cin // 2
    keys = jax.random.split(key, 12)

    def rnd(k, shape, scale=0.1):
        return scale * jax.random.normal(k, shape, dtype=jnp.float32)

    p = {}
    # ConvTranspose2d(Cx, Cup, 3, stride=2, padding=1, output_padding=1)
    p['up_w'] = rnd(keys[0], (cx, cup, 3, 3)); p['up_b'] = rnd(keys[1], (cup,))
    # AttentionGate Wg: Conv2d(Cup, Cup, 1) + BN   (bias unused: BN absorbs it)
    p['wg_w'] = rnd(keys[2], (cup, cup, 1, 1)); p['wg_b'] = rnd(keys[3], (cup,))
    p['gg'] = jnp.ones((cup,), jnp.float32); p['betg'] = jnp.zeros((cup,), jnp.float32)
    # AttentionGate Ws: Conv2d(Cs, Cup, 1) + BN    (bias unused: BN absorbs it)
    p['ws_w'] = rnd(keys[4], (cup, cs, 1, 1)); p['ws_b'] = rnd(keys[5], (cup,))
    p['gs'] = jnp.ones((cup,), jnp.float32); p['bets'] = jnp.zeros((cup,), jnp.float32)
    # AttentionGate output: Conv2d(Cup, 1, 1)
    p['wo_w'] = rnd(keys[6], (1, cup, 1, 1)); p['wo_b'] = rnd(keys[7], (1,))
    # DoubleConv conv1/conv2: Conv2d(...,3,pad=1) + BN (biases unused: BN absorbs)
    p['c1_w'] = rnd(keys[8], (cmid, cin, 3, 3)); p['c1_b'] = rnd(keys[9], (cmid,))
    p['g1'] = jnp.ones((cmid,), jnp.float32); p['b1'] = jnp.zeros((cmid,), jnp.float32)
    p['c2_w'] = rnd(keys[10], (cmid, cmid, 3, 3)); p['c2_b'] = rnd(keys[11], (cmid,))
    p['g2'] = jnp.ones((cmid,), jnp.float32); p['b2'] = jnp.zeros((cmid,), jnp.float32)
    return p


def decoder_forward(skip_nchw, x_nchw, p):
    n, cs, h2, w2 = skip_nchw.shape
    _, cx, h, w = x_nchw.shape
    cup = cx // 2
    cin = cs + cup
    cmid = cin // 2
    assert h2 == 2 * h and w2 == 2 * w
    m = n * h2 * w2
    count = float(m)

    skip = jnp.transpose(skip_nchw, (0, 2, 3, 1)).astype(jnp.float32)   # NHWC
    x = jnp.transpose(x_nchw, (0, 2, 3, 1)).astype(jnp.float32)         # NHWC

    # ---- weight layout plumbing (tiny, wrapper side) ----
    wt = jnp.transpose(p['up_w'], (2, 3, 0, 1))                  # (3,3,Cx,Cup)
    wg_mat = p['wg_w'].reshape(cup, cup).T                       # (Cup,Cup)
    wcomb = jnp.concatenate([wt, wt @ wg_mat], axis=-1)          # folded [W_t | W_t@W_g]
    bcomb = jnp.concatenate([p['up_b'],
                             jnp.zeros((cup,), jnp.float32)]).reshape(1, 2 * cup)
    ws_mat = p['ws_w'].reshape(cup, cs).T                        # (Cs,Cup)
    wo = p['wo_w'].reshape(1, cup)
    bo = p['wo_b'].reshape(1, 1)
    w1 = jnp.transpose(p['c1_w'], (2, 3, 1, 0))                  # (3,3,Cin,Cmid)
    w2m = jnp.transpose(p['c2_w'], (2, 3, 1, 0))                 # (3,3,Cmid,Cmid)
    # NOTE: wg_b, ws_b, c1_b, c2_b feed training-mode BN and cancel exactly.

    # ---- K1: transpose conv + folded Wg + AttentionGate BN statistics ----
    x_pad = jnp.pad(x, ((0, 0), (0, 1), (0, 1), (0, 0)))         # bottom/right halo
    ga_par, gate_stats = _call_upsample_gate(x_pad, skip, wcomb, bcomb, ws_mat)
    # interleave column parities -> NHWC (layout plumbing)
    ga = jnp.transpose(ga_par, (0, 1, 3, 2, 4)).reshape(n, h2, w2, 2 * cup)

    sa, ha = _bn_affine(gate_stats[:, :cup], count, p['gg'], p['betg'])
    sb, hb = _bn_affine(gate_stats[:, cup:], count, p['gs'], p['bets'])

    # ---- K2: gate apply + lane-dense concat([skip, att*g]) ----
    cat = _call_gate_concat(ga.reshape(m, 2 * cup), skip.reshape(m, cs),
                            ws_mat, wo, bo, sa, ha, sb, hb)

    # ---- K3: DoubleConv conv1 (+ BN1 statistics) ----
    cat_pad = jnp.pad(cat.reshape(n, h2, w2, cin), ((0, 0), (1, 1), (1, 1), (0, 0)))
    y1, s1 = _call_conv3x3(cat_pad, w1)
    sc1, sh1 = _bn_affine(s1, count, p['g1'], p['b1'])

    # ---- K4: DoubleConv conv2 with BN1+ReLU fused onto its input (+ BN2 stats) ----
    y1_pad = jnp.pad(y1, ((0, 0), (1, 1), (1, 1), (0, 0)))
    y2, s2 = _call_conv3x3(y1_pad, w2m, scale_shift=(sc1, sh1))
    sc2, sh2 = _bn_affine(s2, count, p['g2'], p['b2'])

    # ---- K5: final BN2 + ReLU ----
    out = _call_bn_relu(y2.reshape(m, cmid), sc2, sh2).reshape(n, h2, w2, cmid)
    return jnp.transpose(out, (0, 3, 1, 2))                      # back to NCHW


if __name__ == "__main__":
    key = jax.random.PRNGKey(0)
    k_skip, k_x, k_p = jax.random.split(key, 3)
    up_in_channels, x_in_channels = 8, 4
    N, H = 2, 8
    # skip_connection has x_in_channels at 2x the spatial size of x
    skip = jax.random.normal(k_skip, (N, x_in_channels, 2 * H, 2 * H), dtype=jnp.float32)
    x = jax.random.normal(k_x, (N, up_in_channels, H, H), dtype=jnp.float32)
    params = init_decoder_params(k_p, up_in_channels, x_in_channels)

    out = jax.jit(decoder_forward)(skip, x, params)
    jax.block_until_ready(out)
    assert out.shape == (N, (up_in_channels // 2 + x_in_channels) // 2, 2 * H, 2 * H)
    print("KERNEL_OK")
</pallas_src>

<mosaic_0001>
module attributes {stable_mosaic.version = 11 : i64} {
  func.func @upsample_gate_pre_kernel(%arg0: i32, %arg1: i32, %arg2: memref<1x1x9x8xf32, #tpu.memory_space<vmem>>, %arg3: memref<1x1x9x8xf32, #tpu.memory_space<vmem>>, %arg4: memref<1x2x16x4xf32, #tpu.memory_space<vmem>>, %arg5: memref<3x3x8x8xf32, #tpu.memory_space<vmem>>, %arg6: memref<1x8xf32, #tpu.memory_space<vmem>>, %arg7: memref<4x4xf32, #tpu.memory_space<vmem>>, %arg8: memref<1x2x2x8x8xf32, #tpu.memory_space<vmem>>, %arg9: memref<2x8xf32, #tpu.memory_space<vmem>>) attributes {dimension_semantics = [#tpu.dimension_semantics<arbitrary>, #tpu.dimension_semantics<arbitrary>], iteration_bounds = array<i64: 2, 8>, scalar_prefetch = 0 : i64, scratch_operands = 0 : i64, tpu.core_type = #tpu.core_type<tc>, window_params = [{transform_indices = @transform_0, window_bounds = array<i64: 1, 1, 9, 8>}, {transform_indices = @transform_1, window_bounds = array<i64: 1, 1, 9, 8>}, {transform_indices = @transform_2, window_bounds = array<i64: 1, 2, 16, 4>}, {pipeline_mode = #tpu.pipeline_mode<synchronous>, transform_indices = @transform_3, window_bounds = array<i64: 3, 3, 8, 8>}, {pipeline_mode = #tpu.pipeline_mode<synchronous>, transform_indices = @transform_4, window_bounds = array<i64: 1, 8>}, {pipeline_mode = #tpu.pipeline_mode<synchronous>, transform_indices = @transform_5, window_bounds = array<i64: 4, 4>}, {transform_indices = @transform_6, window_bounds = array<i64: 1, 2, 2, 8, 8>}, {pipeline_mode = #tpu.pipeline_mode<synchronous>, transform_indices = @transform_7, window_bounds = array<i64: 2, 8>}]} {
    %c0_i32 = arith.constant 0 : i32
    %0 = arith.cmpi eq, %arg0, %c0_i32 : i32
    %c0_i32_0 = arith.constant 0 : i32
    %1 = arith.cmpi eq, %arg1, %c0_i32_0 : i32
    %2 = arith.andi %0, %1 : i1
    %3 = arith.extui %2 : i1 to i32
    %c0_i32_1 = arith.constant 0 : i32
    %4 = arith.cmpi ne, %3, %c0_i32_1 : i32
    scf.if %4 {
      %cst_103 = arith.constant 0.000000e+00 : f32
      %120 = vector.broadcast %cst_103 : f32 to vector<2x8xf32>
      %c0_104 = arith.constant 0 : index
      %c0_105 = arith.constant 0 : index
      %121 = vector.load %arg9[%c0_104, %c0_105] : memref<2x8xf32, #tpu.memory_space<vmem>>, vector<2x8xf32>
      tpu.vector_store %arg9[%c0_104, %c0_105], %120 {strides = array<i32>} : memref<2x8xf32, #tpu.memory_space<vmem>>, vector<2x8xf32>,
    } else {
    }
    %c0 = arith.constant 0 : index
    %c0_2 = arith.constant 0 : index
    %c0_3 = arith.constant 0 : index
    %c0_4 = arith.constant 0 : index
    %5 = vector.load %arg2[%c0, %c0_2, %c0_3, %c0_4] : memref<1x1x9x8xf32, #tpu.memory_space<vmem>>, vector<1x1x9x8xf32>
    %6 = vector.shape_cast %5 : vector<1x1x9x8xf32> to vector<9x8xf32>
    %c0_5 = arith.constant 0 : index
    %c0_6 = arith.constant 0 : index
    %c0_7 = arith.constant 0 : index
    %c0_8 = arith.constant 0 : index
    %7 = vector.load %arg3[%c0_5, %c0_6, %c0_7, %c0_8] : memref<1x1x9x8xf32, #tpu.memory_space<vmem>>, vector<1x1x9x8xf32>
    %8 = vector.shape_cast %7 : vector<1x1x9x8xf32> to vector<9x8xf32>
    %c0_9 = arith.constant 0 : index
    %c0_10 = arith.constant 0 : index
    %9 = vector.load %arg6[%c0_9, %c0_10] : memref<1x8xf32, #tpu.memory_space<vmem>>, vector<1x8xf32>
    %10 = vector.extract_strided_slice %6 {offsets = [0, 0], sizes = [8, 8], strides = [1, 1]} : vector<9x8xf32> to vector<8x8xf32>
    %11 = vector.extract_strided_slice %6 {offsets = [1, 0], sizes = [8, 8], strides = [1, 1]} : vector<9x8xf32> to vector<8x8xf32>
    %12 = vector.extract_strided_slice %8 {offsets = [0, 0], sizes = [8, 8], strides = [1, 1]} : vector<9x8xf32> to vector<8x8xf32>
    %13 = vector.extract_strided_slice %8 {offsets = [1, 0], sizes = [8, 8], strides = [1, 1]} : vector<9x8xf32> to vector<8x8xf32>
    %c1 = arith.constant 1 : index
    %c1_11 = arith.constant 1 : index
    %c0_12 = arith.constant 0 : index
    %c0_13 = arith.constant 0 : index
    %14 = vector.load %arg5[%c1, %c1_11, %c0_12, %c0_13] : memref<3x3x8x8xf32, #tpu.memory_space<vmem>>, vector<1x1x8x8xf32>
    %15 = vector.shape_cast %14 : vector<1x1x8x8xf32> to vector<8x8xf32>
    %cst = arith.constant dense<0.000000e+00> : vector<8x8xf32>
    %16 = tpu.matmul %10, %15, %cst {dimension_numbers = #tpu.dot_dimension_numbers<[1], [0], [0], [1], [0, 0, 1, 1], [], []>} : vector<8x8xf32>, vector<8x8xf32>, vector<8x8xf32> -> vector<8x8xf32>
    %17 = vector.broadcast %9 : vector<1x8xf32> to vector<8x8xf32>
    %18 = arith.addf %16, %17 : vector<8x8xf32>
    %c1_14 = arith.constant 1 : index
    %c0_15 = arith.constant 0 : index
    %c0_16 = arith.constant 0 : index
    %c0_17 = arith.constant 0 : index
    %19 = vector.load %arg5[%c1_14, %c0_15, %c0_16, %c0_17] : memref<3x3x8x8xf32, #tpu.memory_space<vmem>>, vector<1x1x8x8xf32>
    %20 = vector.shape_cast %19 : vector<1x1x8x8xf32> to vector<8x8xf32>
    %cst_18 = arith.constant dense<0.000000e+00> : vector<8x8xf32>
    %21 = tpu.matmul %11, %20, %cst_18 {dimension_numbers = #tpu.dot_dimension_numbers<[1], [0], [0], [1], [0, 0, 1, 1], [], []>} : vector<8x8xf32>, vector<8x8xf32>, vector<8x8xf32> -> vector<8x8xf32>
    %c1_19 = arith.constant 1 : index
    %c2 = arith.constant 2 : index
    %c0_20 = arith.constant 0 : index
    %c0_21 = arith.constant 0 : index
    %22 = vector.load %arg5[%c1_19, %c2, %c0_20, %c0_21] : memref<3x3x8x8xf32, #tpu.memory_space<vmem>>, vector<1x1x8x8xf32>
    %23 = vector.shape_cast %22 : vector<1x1x8x8xf32> to vector<8x8xf32>
    %cst_22 = arith.constant dense<0.000000e+00> : vector<8x8xf32>
    %24 = tpu.matmul %10, %23, %cst_22 {dimension_numbers = #tpu.dot_dimension_numbers<[1], [0], [0], [1], [0, 0, 1, 1], [], []>} : vector<8x8xf32>, vector<8x8xf32>, vector<8x8xf32> -> vector<8x8xf32>
    %25 = arith.addf %21, %24 : vector<8x8xf32>
    %26 = vector.broadcast %9 : vector<1x8xf32> to vector<8x8xf32>
    %27 = arith.addf %25, %26 : vector<8x8xf32>
    %c0_23 = arith.constant 0 : index
    %c1_24 = arith.constant 1 : index
    %c0_25 = arith.constant 0 : index
    %c0_26 = arith.constant 0 : index
    %28 = vector.load %arg5[%c0_23, %c1_24, %c0_25, %c0_26] : memref<3x3x8x8xf32, #tpu.memory_space<vmem>>, vector<1x1x8x8xf32>
    %29 = vector.shape_cast %28 : vector<1x1x8x8xf32> to vector<8x8xf32>
    %cst_27 = arith.constant dense<0.000000e+00> : vector<8x8xf32>
    %30 = tpu.matmul %12, %29, %cst_27 {dimension_numbers = #tpu.dot_dimension_numbers<[1], [0], [0], [1], [0, 0, 1, 1], [], []>} : vector<8x8xf32>, vector<8x8xf32>, vector<8x8xf32> -> vector<8x8xf32>
    %c2_28 = arith.constant 2 : index
    %c1_29 = arith.constant 1 : index
    %c0_30 = arith.constant 0 : index
    %c0_31 = arith.constant 0 : index
    %31 = vector.load %arg5[%c2_28, %c1_29, %c0_30, %c0_31] : memref<3x3x8x8xf32, #tpu.memory_space<vmem>>, vector<1x1x8x8xf32>
    %32 = vector.shape_cast %31 : vector<1x1x8x8xf32> to vector<8x8xf32>
    %cst_32 = arith.constant dense<0.000000e+00> : vector<8x8xf32>
    %33 = tpu.matmul %10, %32, %cst_32 {dimension_numbers = #tpu.dot_dimension_numbers<[1], [0], [0], [1], [0, 0, 1, 1], [], []>} : vector<8x8xf32>, vector<8x8xf32>, vector<8x8xf32> -> vector<8x8xf32>
    %34 = arith.addf %30, %33 : vector<8x8xf32>
    %35 = vector.broadcast %9 : vector<1x8xf32> to vector<8x8xf32>
    %36 = arith.addf %34, %35 : vector<8x8xf32>
    %c0_33 = arith.constant 0 : index
    %c0_34 = arith.constant 0 : index
    %c0_35 = arith.constant 0 : index
    %c0_36 = arith.constant 0 : index
    %37 = vector.load %arg5[%c0_33, %c0_34, %c0_35, %c0_36] : memref<3x3x8x8xf32, #tpu.memory_space<vmem>>, vector<1x1x8x8xf32>
    %38 = vector.shape_cast %37 : vector<1x1x8x8xf32> to vector<8x8xf32>
    %cst_37 = arith.constant dense<0.000000e+00> : vector<8x8xf32>
    %39 = tpu.matmul %13, %38, %cst_37 {dimension_numbers = #tpu.dot_dimension_numbers<[1], [0], [0], [1], [0, 0, 1, 1], [], []>} : vector<8x8xf32>, vector<8x8xf32>, vector<8x8xf32> -> vector<8x8xf32>
    %c0_38 = arith.constant 0 : index
    %c2_39 = arith.constant 2 : index
    %c0_40 = arith.constant 0 : index
    %c0_41 = arith.constant 0 : index
    %40 = vector.load %arg5[%c0_38, %c2_39, %c0_40, %c0_41] : memref<3x3x8x8xf32, #tpu.memory_space<vmem>>, vector<1x1x8x8xf32>
    %41 = vector.shape_cast %40 : vector<1x1x8x8xf32> to vector<8x8xf32>
    %cst_42 = arith.constant dense<0.000000e+00> : vector<8x8xf32>
    %42 = tpu.matmul %12, %41, %cst_42 {dimension_numbers = #tpu.dot_dimension_numbers<[1], [0], [0], [1], [0, 0, 1, 1], [], []>} : vector<8x8xf32>, vector<8x8xf32>, vector<8x8xf32> -> vector<8x8xf32>
    %43 = arith.addf %39, %42 : vector<8x8xf32>
    %c2_43 = arith.constant 2 : index
    %c0_44 = arith.constant 0 : index
    %c0_45 = arith.constant 0 : index
    %c0_46 = arith.constant 0 : index
    %44 = vector.load %arg5[%c2_43, %c0_44, %c0_45, %c0_46] : memref<3x3x8x8xf32, #tpu.memory_space<vmem>>, vector<1x1x8x8xf32>
    %45 = vector.shape_cast %44 : vector<1x1x8x8xf32> to vector<8x8xf32>
    %cst_47 = arith.constant dense<0.000000e+00> : vector<8x8xf32>
    %46 = tpu.matmul %11, %45, %cst_47 {dimension_numbers = #tpu.dot_dimension_numbers<[1], [0], [0], [1], [0, 0, 1, 1], [], []>} : vector<8x8xf32>, vector<8x8xf32>, vector<8x8xf32> -> vector<8x8xf32>
    %47 = arith.addf %43, %46 : vector<8x8xf32>
    %c2_48 = arith.constant 2 : index
    %c2_49 = arith.constant 2 : index
    %c0_50 = arith.constant 0 : index
    %c0_51 = arith.constant 0 : index
    %48 = vector.load %arg5[%c2_48, %c2_49, %c0_50, %c0_51] : memref<3x3x8x8xf32, #tpu.memory_space<vmem>>, vector<1x1x8x8xf32>
    %49 = vector.shape_cast %48 : vector<1x1x8x8xf32> to vector<8x8xf32>
    %cst_52 = arith.constant dense<0.000000e+00> : vector<8x8xf32>
    %50 = tpu.matmul %10, %49, %cst_52 {dimension_numbers = #tpu.dot_dimension_numbers<[1], [0], [0], [1], [0, 0, 1, 1], [], []>} : vector<8x8xf32>, vector<8x8xf32>, vector<8x8xf32> -> vector<8x8xf32>
    %51 = arith.addf %47, %50 : vector<8x8xf32>
    %52 = vector.broadcast %9 : vector<1x8xf32> to vector<8x8xf32>
    %53 = arith.addf %51, %52 : vector<8x8xf32>
    %c0_53 = arith.constant 0 : index
    %c0_54 = arith.constant 0 : index
    %c0_55 = arith.constant 0 : index
    %c0_56 = arith.constant 0 : index
    %c0_57 = arith.constant 0 : index
    %54 = vector.load %arg8[%c0_53, %c0_54, %c0_55, %c0_56, %c0_57] : memref<1x2x2x8x8xf32, #tpu.memory_space<vmem>>, vector<1x1x1x8x8xf32>
    %55 = vector.shape_cast %54 : vector<1x1x1x8x8xf32> to vector<8x8xf32>
    %56 = vector.shape_cast %18 : vector<8x8xf32> to vector<1x1x1x8x8xf32>
    tpu.vector_store %arg8[%c0_53, %c0_54, %c0_55, %c0_56, %c0_57], %56 {strides = array<i32>} : memref<1x2x2x8x8xf32, #tpu.memory_space<vmem>>, vector<1x1x1x8x8xf32>,
    %c0_58 = arith.constant 0 : index
    %c0_59 = arith.constant 0 : index
    %c1_60 = arith.constant 1 : index
    %c0_61 = arith.constant 0 : index
    %c0_62 = arith.constant 0 : index
    %57 = vector.load %arg8[%c0_58, %c0_59, %c1_60, %c0_61, %c0_62] : memref<1x2x2x8x8xf32, #tpu.memory_space<vmem>>, vector<1x1x1x8x8xf32>
    %58 = vector.shape_cast %57 : vector<1x1x1x8x8xf32> to vector<8x8xf32>
    %59 = vector.shape_cast %27 : vector<8x8xf32> to vector<1x1x1x8x8xf32>
    tpu.vector_store %arg8[%c0_58, %c0_59, %c1_60, %c0_61, %c0_62], %59 {strides = array<i32>} : memref<1x2x2x8x8xf32, #tpu.memory_space<vmem>>, vector<1x1x1x8x8xf32>,
    %c0_63 = arith.constant 0 : index
    %c1_64 = arith.constant 1 : index
    %c0_65 = arith.constant 0 : index
    %c0_66 = arith.constant 0 : index
    %c0_67 = arith.constant 0 : index
    %60 = vector.load %arg8[%c0_63, %c1_64, %c0_65, %c0_66, %c0_67] : memref<1x2x2x8x8xf32, #tpu.memory_space<vmem>>, vector<1x1x1x8x8xf32>
    %61 = vector.shape_cast %60 : vector<1x1x1x8x8xf32> to vector<8x8xf32>
    %62 = vector.shape_cast %36 : vector<8x8xf32> to vector<1x1x1x8x8xf32>
    tpu.vector_store %arg8[%c0_63, %c1_64, %c0_65, %c0_66, %c0_67], %62 {strides = array<i32>} : memref<1x2x2x8x8xf32, #tpu.memory_space<vmem>>, vector<1x1x1x8x8xf32>,
    %c0_68 = arith.constant 0 : index
    %c1_69 = arith.constant 1 : index
    %c1_70 = arith.constant 1 : index
    %c0_71 = arith.constant 0 : index
    %c0_72 = arith.constant 0 : index
    %63 = vector.load %arg8[%c0_68, %c1_69, %c1_70, %c0_71, %c0_72] : memref<1x2x2x8x8xf32, #tpu.memory_space<vmem>>, vector<1x1x1x8x8xf32>
    %64 = vector.shape_cast %63 : vector<1x1x1x8x8xf32> to vector<8x8xf32>
    %65 = vector.shape_cast %53 : vector<8x8xf32> to vector<1x1x1x8x8xf32>
    tpu.vector_store %arg8[%c0_68, %c1_69, %c1_70, %c0_71, %c0_72], %65 {strides = array<i32>} : memref<1x2x2x8x8xf32, #tpu.memory_space<vmem>>, vector<1x1x1x8x8xf32>,
    %cst_73 = arith.constant dense<0.000000e+00> : vector<8xf32>
    %66 = vector.multi_reduction <add>, %18, %cst_73 [0] : vector<8x8xf32> to vector<8xf32>
    %67 = vector.shape_cast %66 : vector<8xf32> to vector<1x8xf32>
    %cst_74 = arith.constant dense<0.000000e+00> : vector<8xf32>
    %68 = vector.multi_reduction <add>, %27, %cst_74 [0] : vector<8x8xf32> to vector<8xf32>
    %69 = vector.shape_cast %68 : vector<8xf32> to vector<1x8xf32>
    %70 = arith.addf %67, %69 : vector<1x8xf32>
    %cst_75 = arith.constant dense<0.000000e+00> : vector<8xf32>
    %71 = vector.multi_reduction <add>, %36, %cst_75 [0] : vector<8x8xf32> to vector<8xf32>
    %72 = vector.shape_cast %71 : vector<8xf32> to vector<1x8xf32>
    %73 = arith.addf %70, %72 : vector<1x8xf32>
    %cst_76 = arith.constant dense<0.000000e+00> : vector<8xf32>
    %74 = vector.multi_reduction <add>, %53, %cst_76 [0] : vector<8x8xf32> to vector<8xf32>
    %75 = vector.shape_cast %74 : vector<8xf32> to vector<1x8xf32>
    %76 = arith.addf %73, %75 : vector<1x8xf32>
    %77 = vector.extract_strided_slice %76 {offsets = [0, 4], sizes = [1, 4], strides = [1, 1]} : vector<1x8xf32> to vector<1x4xf32>
    %78 = arith.mulf %18, %18 : vector<8x8xf32>
    %cst_77 = arith.constant dense<0.000000e+00> : vector<8xf32>
    %79 = vector.multi_reduction <add>, %78, %cst_77 [0] : vector<8x8xf32> to vector<8xf32>
    %80 = vector.shape_cast %79 : vector<8xf32> to vector<1x8xf32>
    %81 = arith.mulf %27, %27 : vector<8x8xf32>
    %cst_78 = arith.constant dense<0.000000e+00> : vector<8xf32>
    %82 = vector.multi_reduction <add>, %81, %cst_78 [0] : vector<8x8xf32> to vector<8xf32>
    %83 = vector.shape_cast %82 : vector<8xf32> to vector<1x8xf32>
    %84 = arith.addf %80, %83 : vector<1x8xf32>
    %85 = arith.mulf %36, %36 : vector<8x8xf32>
    %cst_79 = arith.constant dense<0.000000e+00> : vector<8xf32>
    %86 = vector.multi_reduction <add>, %85, %cst_79 [0] : vector<8x8xf32> to vector<8xf32>
    %87 = vector.shape_cast %86 : vector<8xf32> to vector<1x8xf32>
    %88 = arith.addf %84, %87 : vector<1x8xf32>
    %89 = arith.mulf %53, %53 : vector<8x8xf32>
    %cst_80 = arith.constant dense<0.000000e+00> : vector<8xf32>
    %90 = vector.multi_reduction <add>, %89, %cst_80 [0] : vector<8x8xf32> to vector<8xf32>
    %91 = vector.shape_cast %90 : vector<8xf32> to vector<1x8xf32>
    %92 = arith.addf %88, %91 : vector<1x8xf32>
    %93 = vector.extract_strided_slice %92 {offsets = [0, 4], sizes = [1, 4], strides = [1, 1]} : vector<1x8xf32> to vector<1x4xf32>
    %c0_81 = arith.constant 0 : index
    %c0_82 = arith.constant 0 : index
    %c0_83 = arith.constant 0 : index
    %c0_84 = arith.constant 0 : index
    %94 = vector.load %arg4[%c0_81, %c0_82, %c0_83, %c0_84] : memref<1x2x16x4xf32, #tpu.memory_space<vmem>>, vector<1x1x16x4xf32>
    %95 = vector.shape_cast %94 : vector<1x1x16x4xf32> to vector<16x4xf32>
    %c0_85 = arith.constant 0 : index
    %c0_86 = arith.constant 0 : index
    %96 = vector.load %arg7[%c0_85, %c0_86] : memref<4x4xf32, #tpu.memory_space<vmem>>, vector<4x4xf32>
    %cst_87 = arith.constant dense<0.000000e+00> : vector<16x4xf32>
    %97 = tpu.matmul %95, %96, %cst_87 {dimension_numbers = #tpu.dot_dimension_numbers<[1], [0], [0], [1], [0, 0, 1, 1], [], []>} : vector<16x4xf32>, vector<4x4xf32>, vector<16x4xf32> -> vector<16x4xf32>
    %c0_88 = arith.constant 0 : index
    %c1_89 = arith.constant 1 : index
    %c0_90 = arith.constant 0 : index
    %c0_91 = arith.constant 0 : index
    %98 = vector.load %arg4[%c0_88, %c1_89, %c0_90, %c0_91] : memref<1x2x16x4xf32, #tpu.memory_space<vmem>>, vector<1x1x16x4xf32>
    %99 = vector.shape_cast %98 : vector<1x1x16x4xf32> to vector<16x4xf32>
    %c0_92 = arith.constant 0 : index
    %c0_93 = arith.constant 0 : index
    %100 = vector.load %arg7[%c0_92, %c0_93] : memref<4x4xf32, #tpu.memory_space<vmem>>, vector<4x4xf32>
    %cst_94 = arith.constant dense<0.000000e+00> : vector<16x4xf32>
    %101 = tpu.matmul %99, %100, %cst_94 {dimension_numbers = #tpu.dot_dimension_numbers<[1], [0], [0], [1], [0, 0, 1, 1], [], []>} : vector<16x4xf32>, vector<4x4xf32>, vector<16x4xf32> -> vector<16x4xf32>
    %cst_95 = arith.constant dense<0.000000e+00> : vector<4xf32>
    %102 = vector.multi_reduction <add>, %97, %cst_95 [0] : vector<16x4xf32> to vector<4xf32>
    %103 = vector.shape_cast %102 : vector<4xf32> to vector<1x4xf32>
    %cst_96 = arith.constant dense<0.000000e+00> : vector<4xf32>
    %104 = vector.multi_reduction <add>, %101, %cst_96 [0] : vector<16x4xf32> to vector<4xf32>
    %105 = vector.shape_cast %104 : vector<4xf32> to vector<1x4xf32>
    %106 = arith.addf %103, %105 : vector<1x4xf32>
    %107 = arith.mulf %97, %97 : vector<16x4xf32>
    %cst_97 = arith.constant dense<0.000000e+00> : vector<4xf32>
    %108 = vector.multi_reduction <add>, %107, %cst_97 [0] : vector<16x4xf32> to vector<4xf32>
    %109 = vector.shape_cast %108 : vector<4xf32> to vector<1x4xf32>
    %110 = arith.mulf %101, %101 : vector<16x4xf32>
    %cst_98 = arith.constant dense<0.000000e+00> : vector<4xf32>
    %111 = vector.multi_reduction <add>, %110, %cst_98 [0] : vector<16x4xf32> to vector<4xf32>
    %112 = vector.shape_cast %111 : vector<4xf32> to vector<1x4xf32>
    %113 = arith.addf %109, %112 : vector<1x4xf32>
    %c0_99 = arith.constant 0 : index
    %c0_100 = arith.constant 0 : index
    %114 = vector.load %arg9[%c0_99, %c0_100] : memref<2x8xf32, #tpu.memory_space<vmem>>, vector<2x8xf32>
    %115 = tpu.concatenate %77, %106 in 1 : vector<1x4xf32>, vector<1x4xf32> -> vector<1x8xf32>
    %116 = tpu.concatenate %93, %113 in 1 : vector<1x4xf32>, vector<1x4xf32> -> vector<1x8xf32>
    %117 = tpu.concatenate %115, %116 in 0 : vector<1x8xf32>, vector<1x8xf32> -> vector<2x8xf32>
    %118 = arith.addf %114, %117 : vector<2x8xf32>
    %c0_101 = arith.constant 0 : index
    %c0_102 = arith.constant 0 : index
    %119 = vector.load %arg9[%c0_101, %c0_102] : memref<2x8xf32, #tpu.memory_space<vmem>>, vector<2x8xf32>
    tpu.vector_store %arg9[%c0_101, %c0_102], %118 {strides = array<i32>} : memref<2x8xf32, #tpu.memory_space<vmem>>, vector<2x8xf32>,
    return
  }
  func.func @transform_0(%arg0: i32, %arg1: i32) -> (i32, i32, i32, i32) {
    %c0_i32 = arith.constant 0 : i32
    %c0_i32_0 = arith.constant 0 : i32
    %c0_i32_1 = arith.constant 0 : i32
    return %arg0, %arg1, %c0_i32, %c0_i32_0 : i32, i32, i32, i32
  }
  func.func @transform_1(%arg0: i32, %arg1: i32) -> (i32, i32, i32, i32) {
    %c1_i32 = arith.constant 1 : i32
    %0 = arith.addi %arg1, %c1_i32 : i32
    %c0_i32 = arith.constant 0 : i32
    %c0_i32_0 = arith.constant 0 : i32
    %c0_i32_1 = arith.constant 0 : i32
    return %arg0, %0, %c0_i32, %c0_i32_0 : i32, i32, i32, i32
  }
  func.func @transform_2(%arg0: i32, %arg1: i32) -> (i32, i32, i32, i32) {
    %c0_i32 = arith.constant 0 : i32
    %c0_i32_0 = arith.constant 0 : i32
    %c0_i32_1 = arith.constant 0 : i32
    return %arg0, %arg1, %c0_i32, %c0_i32_0 : i32, i32, i32, i32
  }
  func.func @transform_3(%arg0: i32, %arg1: i32) -> (i32, i32, i32, i32) {
    %c0_i32 = arith.constant 0 : i32
    %c0_i32_0 = arith.constant 0 : i32
    %c0_i32_1 = arith.constant 0 : i32
    %c0_i32_2 = arith.constant 0 : i32
    %c0_i32_3 = arith.constant 0 : i32
    return %c0_i32, %c0_i32_0, %c0_i32_1, %c0_i32_2 : i32, i32, i32, i32
  }
  func.func @transform_4(%arg0: i32, %arg1: i32) -> (i32, i32) {
    %c0_i32 = arith.constant 0 : i32
    %c0_i32_0 = arith.constant 0 : i32
    %c0_i32_1 = arith.constant 0 : i32
    return %c0_i32, %c0_i32_0 : i32, i32
  }
  func.func @transform_5(%arg0: i32, %arg1: i32) -> (i32, i32) {
    %c0_i32 = arith.constant 0 : i32
    %c0_i32_0 = arith.constant 0 : i32
    %c0_i32_1 = arith.constant 0 : i32
    return %c0_i32, %c0_i32_0 : i32, i32
  }
  func.func @transform_6(%arg0: i32, %arg1: i32) -> (i32, i32, i32, i32, i32) {
    %c0_i32 = arith.constant 0 : i32
    %c0_i32_0 = arith.constant 0 : i32
    %c0_i32_1 = arith.constant 0 : i32
    %c0_i32_2 = arith.constant 0 : i32
    return %arg0, %arg1, %c0_i32, %c0_i32_0, %c0_i32_1 : i32, i32, i32, i32, i32
  }
  func.func @transform_7(%arg0: i32, %arg1: i32) -> (i32, i32) {
    %c0_i32 = arith.constant 0 : i32
    %c0_i32_0 = arith.constant 0 : i32
    %c0_i32_1 = arith.constant 0 : i32
    return %c0_i32, %c0_i32_0 : i32, i32
  }
}

module attributes {stable_mosaic.version = 11 : i64} {
  func.func @gate_concat_kernel(%arg0: i32, %arg1: memref<512x8xf32, #tpu.memory_space<vmem>>, %arg2: memref<512x4xf32, #tpu.memory_space<vmem>>, %arg3: memref<4x4xf32, #tpu.memory_space<vmem>>, %arg4: memref<1x4xf32, #tpu.memory_space<vmem>>, %arg5: memref<1x1xf32, #tpu.memory_space<vmem>>, %arg6: memref<1x4xf32, #tpu.memory_space<vmem>>, %arg7: memref<1x4xf32, #tpu.memory_space<vmem>>, %arg8: memref<1x4xf32, #tpu.memory_space<vmem>>, %arg9: memref<1x4xf32, #tpu.memory_space<vmem>>, %arg10: memref<512x8xf32, #tpu.memory_space<vmem>>) attributes {dimension_semantics = [#tpu.dimension_semantics<parallel>], iteration_bounds = array<i64: 1>, scalar_prefetch = 0 : i64, scratch_operands = 0 : i64, tpu.core_type = #tpu.core_type<tc>, window_params = [{transform_indices = @transform_0, window_bounds = array<i64: 512, 8>}, {transform_indices = @transform_1, window_bounds = array<i64: 512, 4>}, {pipeline_mode = #tpu.pipeline_mode<synchronous>, transform_indices = @transform_2, window_bounds = array<i64: 4, 4>}, {pipeline_mode = #tpu.pipeline_mode<synchronous>, transform_indices = @transform_3, window_bounds = array<i64: 1, 4>}, {pipeline_mode = #tpu.pipeline_mode<synchronous>, transform_indices = @transform_4, window_bounds = array<i64: 1, 1>}, {pipeline_mode = #tpu.pipeline_mode<synchronous>, transform_indices = @transform_5, window_bounds = array<i64: 1, 4>}, {pipeline_mode = #tpu.pipeline_mode<synchronous>, transform_indices = @transform_6, window_bounds = array<i64: 1, 4>}, {pipeline_mode = #tpu.pipeline_mode<synchronous>, transform_indices = @transform_7, window_bounds = array<i64: 1, 4>}, {pipeline_mode = #tpu.pipeline_mode<synchronous>, transform_indices = @transform_8, window_bounds = array<i64: 1, 4>}, {transform_indices = @transform_9, window_bounds = array<i64: 512, 8>}]} {
    %c0 = arith.constant 0 : index
    %c0_0 = arith.constant 0 : index
    %0 = vector.load %arg1[%c0, %c0_0] : memref<512x8xf32, #tpu.memory_space<vmem>>, vector<512x8xf32>
    %1 = vector.extract_strided_slice %0 {offsets = [0, 0], sizes = [512, 4], strides = [1, 1]} : vector<512x8xf32> to vector<512x4xf32>
    %2 = vector.extract_strided_slice %0 {offsets = [0, 4], sizes = [512, 4], strides = [1, 1]} : vector<512x8xf32> to vector<512x4xf32>
    %c0_1 = arith.constant 0 : index
    %c0_2 = arith.constant 0 : index
    %3 = vector.load %arg2[%c0_1, %c0_2] : memref<512x4xf32, #tpu.memory_space<vmem>>, vector<512x4xf32>
    %c0_3 = arith.constant 0 : index
    %c0_4 = arith.constant 0 : index
    %4 = vector.load %arg3[%c0_3, %c0_4] : memref<4x4xf32, #tpu.memory_space<vmem>>, vector<4x4xf32>
    %cst = arith.constant dense<0.000000e+00> : vector<512x4xf32>
    %5 = tpu.matmul %3, %4, %cst {dimension_numbers = #tpu.dot_dimension_numbers<[1], [0], [0], [1], [0, 0, 1, 1], [], []>} : vector<512x4xf32>, vector<4x4xf32>, vector<512x4xf32> -> vector<512x4xf32>
    %c0_5 = arith.constant 0 : index
    %c0_6 = arith.constant 0 : index
    %6 = vector.load %arg6[%c0_5, %c0_6] : memref<1x4xf32, #tpu.memory_space<vmem>>, vector<1x4xf32>
    %7 = vector.broadcast %6 : vector<1x4xf32> to vector<512x4xf32>
    %8 = arith.mulf %2, %7 : vector<512x4xf32>
    %c0_7 = arith.constant 0 : index
    %c0_8 = arith.constant 0 : index
    %9 = vector.load %arg7[%c0_7, %c0_8] : memref<1x4xf32, #tpu.memory_space<vmem>>, vector<1x4xf32>
    %10 = vector.broadcast %9 : vector<1x4xf32> to vector<512x4xf32>
    %11 = arith.addf %8, %10 : vector<512x4xf32>
    %c0_9 = arith.constant 0 : index
    %c0_10 = arith.constant 0 : index
    %12 = vector.load %arg8[%c0_9, %c0_10] : memref<1x4xf32, #tpu.memory_space<vmem>>, vector<1x4xf32>
    %13 = vector.broadcast %12 : vector<1x4xf32> to vector<512x4xf32>
    %14 = arith.mulf %5, %13 : vector<512x4xf32>
    %15 = arith.addf %11, %14 : vector<512x4xf32>
    %c0_11 = arith.constant 0 : index
    %c0_12 = arith.constant 0 : index
    %16 = vector.load %arg9[%c0_11, %c0_12] : memref<1x4xf32, #tpu.memory_space<vmem>>, vector<1x4xf32>
    %17 = vector.broadcast %16 : vector<1x4xf32> to vector<512x4xf32>
    %18 = arith.addf %15, %17 : vector<512x4xf32>
    %cst_13 = arith.constant 0.000000e+00 : f32
    %19 = vector.broadcast %cst_13 : f32 to vector<512x4xf32>
    %20 = arith.maximumf %18, %19 : vector<512x4xf32>
    %c0_14 = arith.constant 0 : index
    %c0_15 = arith.constant 0 : index
    %21 = vector.load %arg4[%c0_14, %c0_15] : memref<1x4xf32, #tpu.memory_space<vmem>>, vector<1x4xf32>
    %22 = vector.broadcast %21 : vector<1x4xf32> to vector<512x4xf32>
    %23 = arith.mulf %20, %22 : vector<512x4xf32>
    %cst_16 = arith.constant dense<0.000000e+00> : vector<512xf32>
    %24 = vector.multi_reduction <add>, %23, %cst_16 [1] : vector<512x4xf32> to vector<512xf32>
    %25 = vector.shape_cast %24 : vector<512xf32> to vector<512x1xf32>
    %c0_17 = arith.constant 0 : index
    %c0_18 = arith.constant 0 : index
    %26 = vector.load %arg5[%c0_17, %c0_18] : memref<1x1xf32, #tpu.memory_space<vmem>>, vector<1x1xf32>
    %27 = vector.broadcast %26 : vector<1x1xf32> to vector<512x1xf32>
    %28 = arith.addf %25, %27 : vector<512x1xf32>
    %29 = arith.negf %28 : vector<512x1xf32>
    %30 = math.exp %29 : vector<512x1xf32>
    %cst_19 = arith.constant 1.000000e+00 : f32
    %31 = vector.broadcast %cst_19 : f32 to vector<512x1xf32>
    %32 = arith.addf %31, %30 : vector<512x1xf32>
    %33 = arith.divf %31, %32 : vector<512x1xf32>
    %34 = vector.broadcast %33 : vector<512x1xf32> to vector<512x4xf32>
    %35 = arith.mulf %34, %1 : vector<512x4xf32>
    %36 = tpu.concatenate %3, %35 in 1 : vector<512x4xf32>, vector<512x4xf32> -> vector<512x8xf32>
    %c0_20 = arith.constant 0 : index
    %c0_21 = arith.constant 0 : index
    %37 = vector.load %arg10[%c0_20, %c0_21] : memref<512x8xf32, #tpu.memory_space<vmem>>, vector<512x8xf32>
    tpu.vector_store %arg10[%c0_20, %c0_21], %36 {strides = array<i32>} : memref<512x8xf32, #tpu.memory_space<vmem>>, vector<512x8xf32>,
    return
  }
  func.func @transform_0(%arg0: i32) -> (i32, i32) {
    %c0_i32 = arith.constant 0 : i32
    %c0_i32_0 = arith.constant 0 : i32
    return %arg0, %c0_i32 : i32, i32
  }
  func.func @transform_1(%arg0: i32) -> (i32, i32) {
    %c0_i32 = arith.constant 0 : i32
    %c0_i32_0 = arith.constant 0 : i32
    return %arg0, %c0_i32 : i32, i32
  }
  func.func @transform_2(%arg0: i32) -> (i32, i32) {
    %c0_i32 = arith.constant 0 : i32
    %c0_i32_0 = arith.constant 0 : i32
    %c0_i32_1 = arith.constant 0 : i32
    return %c0_i32, %c0_i32_0 : i32, i32
  }
  func.func @transform_3(%arg0: i32) -> (i32, i32) {
    %c0_i32 = arith.constant 0 : i32
    %c0_i32_0 = arith.constant 0 : i32
    %c0_i32_1 = arith.constant 0 : i32
    return %c0_i32, %c0_i32_0 : i32, i32
  }
  func.func @transform_4(%arg0: i32) -> (i32, i32) {
    %c0_i32 = arith.constant 0 : i32
    %c0_i32_0 = arith.constant 0 : i32
    %c0_i32_1 = arith.constant 0 : i32
    return %c0_i32, %c0_i32_0 : i32, i32
  }
  func.func @transform_5(%arg0: i32) -> (i32, i32) {
    %c0_i32 = arith.constant 0 : i32
    %c0_i32_0 = arith.constant 0 : i32
    %c0_i32_1 = arith.constant 0 : i32
    return %c0_i32, %c0_i32_0 : i32, i32
  }
  func.func @transform_6(%arg0: i32) -> (i32, i32) {
    %c0_i32 = arith.constant 0 : i32
    %c0_i32_0 = arith.constant 0 : i32
    %c0_i32_1 = arith.constant 0 : i32
    return %c0_i32, %c0_i32_0 : i32, i32
  }
  func.func @transform_7(%arg0: i32) -> (i32, i32) {
    %c0_i32 = arith.constant 0 : i32
    %c0_i32_0 = arith.constant 0 : i32
    %c0_i32_1 = arith.constant 0 : i32
    return %c0_i32, %c0_i32_0 : i32, i32
  }
  func.func @transform_8(%arg0: i32) -> (i32, i32) {
    %c0_i32 = arith.constant 0 : i32
    %c0_i32_0 = arith.constant 0 : i32
    %c0_i32_1 = arith.constant 0 : i32
    return %c0_i32, %c0_i32_0 : i32, i32
  }
  func.func @transform_9(%arg0: i32) -> (i32, i32) {
    %c0_i32 = arith.constant 0 : i32
    %c0_i32_0 = arith.constant 0 : i32
    return %arg0, %c0_i32 : i32, i32
  }
}

module attributes {stable_mosaic.version = 11 : i64} {
  func.func @conv3x3_stats_kernel(%arg0: i32, %arg1: i32, %arg2: memref<1x1x18x8xf32, #tpu.memory_space<vmem>>, %arg3: memref<1x1x18x8xf32, #tpu.memory_space<vmem>>, %arg4: memref<1x1x18x8xf32, #tpu.memory_space<vmem>>, %arg5: memref<3x3x8x4xf32, #tpu.memory_space<vmem>>, %arg6: memref<1x1x16x4xf32, #tpu.memory_space<vmem>>, %arg7: memref<2x4xf32, #tpu.memory_space<vmem>>) attributes {dimension_semantics = [#tpu.dimension_semantics<arbitrary>, #tpu.dimension_semantics<arbitrary>], iteration_bounds = array<i64: 2, 16>, scalar_prefetch = 0 : i64, scratch_operands = 0 : i64, tpu.core_type = #tpu.core_type<tc>, window_params = [{transform_indices = @transform_0, window_bounds = array<i64: 1, 1, 18, 8>}, {transform_indices = @transform_1, window_bounds = array<i64: 1, 1, 18, 8>}, {transform_indices = @transform_2, window_bounds = array<i64: 1, 1, 18, 8>}, {pipeline_mode = #tpu.pipeline_mode<synchronous>, transform_indices = @transform_3, window_bounds = array<i64: 3, 3, 8, 4>}, {transform_indices = @transform_4, window_bounds = array<i64: 1, 1, 16, 4>}, {pipeline_mode = #tpu.pipeline_mode<synchronous>, transform_indices = @transform_5, window_bounds = array<i64: 2, 4>}]} {
    %c0_i32 = arith.constant 0 : i32
    %0 = arith.cmpi eq, %arg0, %c0_i32 : i32
    %c0_i32_0 = arith.constant 0 : i32
    %1 = arith.cmpi eq, %arg1, %c0_i32_0 : i32
    %2 = arith.andi %0, %1 : i1
    %3 = arith.extui %2 : i1 to i32
    %c0_i32_1 = arith.constant 0 : i32
    %4 = arith.cmpi ne, %3, %c0_i32_1 : i32
    scf.if %4 {
      %cst_66 = arith.constant 0.000000e+00 : f32
      %69 = vector.broadcast %cst_66 : f32 to vector<2x4xf32>
      %c0_67 = arith.constant 0 : index
      %c0_68 = arith.constant 0 : index
      %70 = vector.load %arg7[%c0_67, %c0_68] : memref<2x4xf32, #tpu.memory_space<vmem>>, vector<2x4xf32>
      tpu.vector_store %arg7[%c0_67, %c0_68], %69 {strides = array<i32>} : memref<2x4xf32, #tpu.memory_space<vmem>>, vector<2x4xf32>,
    } else {
    }
    %c0 = arith.constant 0 : index
    %c0_2 = arith.constant 0 : index
    %c0_3 = arith.constant 0 : index
    %c0_4 = arith.constant 0 : index
    %5 = vector.load %arg2[%c0, %c0_2, %c0_3, %c0_4] : memref<1x1x18x8xf32, #tpu.memory_space<vmem>>, vector<1x1x18x8xf32>
    %6 = vector.shape_cast %5 : vector<1x1x18x8xf32> to vector<18x8xf32>
    %c0_5 = arith.constant 0 : index
    %c0_6 = arith.constant 0 : index
    %c0_7 = arith.constant 0 : index
    %c0_8 = arith.constant 0 : index
    %7 = vector.load %arg3[%c0_5, %c0_6, %c0_7, %c0_8] : memref<1x1x18x8xf32, #tpu.memory_space<vmem>>, vector<1x1x18x8xf32>
    %8 = vector.shape_cast %7 : vector<1x1x18x8xf32> to vector<18x8xf32>
    %c0_9 = arith.constant 0 : index
    %c0_10 = arith.constant 0 : index
    %c0_11 = arith.constant 0 : index
    %c0_12 = arith.constant 0 : index
    %9 = vector.load %arg4[%c0_9, %c0_10, %c0_11, %c0_12] : memref<1x1x18x8xf32, #tpu.memory_space<vmem>>, vector<1x1x18x8xf32>
    %10 = vector.shape_cast %9 : vector<1x1x18x8xf32> to vector<18x8xf32>
    %cst = arith.constant 0.000000e+00 : f32
    %11 = vector.broadcast %cst : f32 to vector<16x4xf32>
    %12 = vector.extract_strided_slice %6 {offsets = [0, 0], sizes = [16, 8], strides = [1, 1]} : vector<18x8xf32> to vector<16x8xf32>
    %c0_13 = arith.constant 0 : index
    %c0_14 = arith.constant 0 : index
    %c0_15 = arith.constant 0 : index
    %c0_16 = arith.constant 0 : index
    %13 = vector.load %arg5[%c0_13, %c0_14, %c0_15, %c0_16] : memref<3x3x8x4xf32, #tpu.memory_space<vmem>>, vector<1x1x8x4xf32>
    %14 = vector.shape_cast %13 : vector<1x1x8x4xf32> to vector<8x4xf32>
    %cst_17 = arith.constant dense<0.000000e+00> : vector<16x4xf32>
    %15 = tpu.matmul %12, %14, %cst_17 {dimension_numbers = #tpu.dot_dimension_numbers<[1], [0], [0], [1], [0, 0, 1, 1], [], []>} : vector<16x8xf32>, vector<8x4xf32>, vector<16x4xf32> -> vector<16x4xf32>
    %16 = arith.addf %11, %15 : vector<16x4xf32>
    %17 = vector.extract_strided_slice %6 {offsets = [1, 0], sizes = [16, 8], strides = [1, 1]} : vector<18x8xf32> to vector<16x8xf32>
    %c0_18 = arith.constant 0 : index
    %c1 = arith.constant 1 : index
    %c0_19 = arith.constant 0 : index
    %c0_20 = arith.constant 0 : index
    %18 = vector.load %arg5[%c0_18, %c1, %c0_19, %c0_20] : memref<3x3x8x4xf32, #tpu.memory_space<vmem>>, vector<1x1x8x4xf32>
    %19 = vector.shape_cast %18 : vector<1x1x8x4xf32> to vector<8x4xf32>
    %cst_21 = arith.constant dense<0.000000e+00> : vector<16x4xf32>
    %20 = tpu.matmul %17, %19, %cst_21 {dimension_numbers = #tpu.dot_dimension_numbers<[1], [0], [0], [1], [0, 0, 1, 1], [], []>} : vector<16x8xf32>, vector<8x4xf32>, vector<16x4xf32> -> vector<16x4xf32>
    %21 = arith.addf %16, %20 : vector<16x4xf32>
    %22 = vector.extract_strided_slice %6 {offsets = [2, 0], sizes = [16, 8], strides = [1, 1]} : vector<18x8xf32> to vector<16x8xf32>
    %c0_22 = arith.constant 0 : index
    %c2 = arith.constant 2 : index
    %c0_23 = arith.constant 0 : index
    %c0_24 = arith.constant 0 : index
    %23 = vector.load %arg5[%c0_22, %c2, %c0_23, %c0_24] : memref<3x3x8x4xf32, #tpu.memory_space<vmem>>, vector<1x1x8x4xf32>
    %24 = vector.shape_cast %23 : vector<1x1x8x4xf32> to vector<8x4xf32>
    %cst_25 = arith.constant dense<0.000000e+00> : vector<16x4xf32>
    %25 = tpu.matmul %22, %24, %cst_25 {dimension_numbers = #tpu.dot_dimension_numbers<[1], [0], [0], [1], [0, 0, 1, 1], [], []>} : vector<16x8xf32>, vector<8x4xf32>, vector<16x4xf32> -> vector<16x4xf32>
    %26 = arith.addf %21, %25 : vector<16x4xf32>
    %27 = vector.extract_strided_slice %8 {offsets = [0, 0], sizes = [16, 8], strides = [1, 1]} : vector<18x8xf32> to vector<16x8xf32>
    %c1_26 = arith.constant 1 : index
    %c0_27 = arith.constant 0 : index
    %c0_28 = arith.constant 0 : index
    %c0_29 = arith.constant 0 : index
    %28 = vector.load %arg5[%c1_26, %c0_27, %c0_28, %c0_29] : memref<3x3x8x4xf32, #tpu.memory_space<vmem>>, vector<1x1x8x4xf32>
    %29 = vector.shape_cast %28 : vector<1x1x8x4xf32> to vector<8x4xf32>
    %cst_30 = arith.constant dense<0.000000e+00> : vector<16x4xf32>
    %30 = tpu.matmul %27, %29, %cst_30 {dimension_numbers = #tpu.dot_dimension_numbers<[1], [0], [0], [1], [0, 0, 1, 1], [], []>} : vector<16x8xf32>, vector<8x4xf32>, vector<16x4xf32> -> vector<16x4xf32>
    %31 = arith.addf %26, %30 : vector<16x4xf32>
    %32 = vector.extract_strided_slice %8 {offsets = [1, 0], sizes = [16, 8], strides = [1, 1]} : vector<18x8xf32> to vector<16x8xf32>
    %c1_31 = arith.constant 1 : index
    %c1_32 = arith.constant 1 : index
    %c0_33 = arith.constant 0 : index
    %c0_34 = arith.constant 0 : index
    %33 = vector.load %arg5[%c1_31, %c1_32, %c0_33, %c0_34] : memref<3x3x8x4xf32, #tpu.memory_space<vmem>>, vector<1x1x8x4xf32>
    %34 = vector.shape_cast %33 : vector<1x1x8x4xf32> to vector<8x4xf32>
    %cst_35 = arith.constant dense<0.000000e+00> : vector<16x4xf32>
    %35 = tpu.matmul %32, %34, %cst_35 {dimension_numbers = #tpu.dot_dimension_numbers<[1], [0], [0], [1], [0, 0, 1, 1], [], []>} : vector<16x8xf32>, vector<8x4xf32>, vector<16x4xf32> -> vector<16x4xf32>
    %36 = arith.addf %31, %35 : vector<16x4xf32>
    %37 = vector.extract_strided_slice %8 {offsets = [2, 0], sizes = [16, 8], strides = [1, 1]} : vector<18x8xf32> to vector<16x8xf32>
    %c1_36 = arith.constant 1 : index
    %c2_37 = arith.constant 2 : index
    %c0_38 = arith.constant 0 : index
    %c0_39 = arith.constant 0 : index
    %38 = vector.load %arg5[%c1_36, %c2_37, %c0_38, %c0_39] : memref<3x3x8x4xf32, #tpu.memory_space<vmem>>, vector<1x1x8x4xf32>
    %39 = vector.shape_cast %38 : vector<1x1x8x4xf32> to vector<8x4xf32>
    %cst_40 = arith.constant dense<0.000000e+00> : vector<16x4xf32>
    %40 = tpu.matmul %37, %39, %cst_40 {dimension_numbers = #tpu.dot_dimension_numbers<[1], [0], [0], [1], [0, 0, 1, 1], [], []>} : vector<16x8xf32>, vector<8x4xf32>, vector<16x4xf32> -> vector<16x4xf32>
    %41 = arith.addf %36, %40 : vector<16x4xf32>
    %42 = vector.extract_strided_slice %10 {offsets = [0, 0], sizes = [16, 8], strides = [1, 1]} : vector<18x8xf32> to vector<16x8xf32>
    %c2_41 = arith.constant 2 : index
    %c0_42 = arith.constant 0 : index
    %c0_43 = arith.constant 0 : index
    %c0_44 = arith.constant 0 : index
    %43 = vector.load %arg5[%c2_41, %c0_42, %c0_43, %c0_44] : memref<3x3x8x4xf32, #tpu.memory_space<vmem>>, vector<1x1x8x4xf32>
    %44 = vector.shape_cast %43 : vector<1x1x8x4xf32> to vector<8x4xf32>
    %cst_45 = arith.constant dense<0.000000e+00> : vector<16x4xf32>
    %45 = tpu.matmul %42, %44, %cst_45 {dimension_numbers = #tpu.dot_dimension_numbers<[1], [0], [0], [1], [0, 0, 1, 1], [], []>} : vector<16x8xf32>, vector<8x4xf32>, vector<16x4xf32> -> vector<16x4xf32>
    %46 = arith.addf %41, %45 : vector<16x4xf32>
    %47 = vector.extract_strided_slice %10 {offsets = [1, 0], sizes = [16, 8], strides = [1, 1]} : vector<18x8xf32> to vector<16x8xf32>
    %c2_46 = arith.constant 2 : index
    %c1_47 = arith.constant 1 : index
    %c0_48 = arith.constant 0 : index
    %c0_49 = arith.constant 0 : index
    %48 = vector.load %arg5[%c2_46, %c1_47, %c0_48, %c0_49] : memref<3x3x8x4xf32, #tpu.memory_space<vmem>>, vector<1x1x8x4xf32>
    %49 = vector.shape_cast %48 : vector<1x1x8x4xf32> to vector<8x4xf32>
    %cst_50 = arith.constant dense<0.000000e+00> : vector<16x4xf32>
    %50 = tpu.matmul %47, %49, %cst_50 {dimension_numbers = #tpu.dot_dimension_numbers<[1], [0], [0], [1], [0, 0, 1, 1], [], []>} : vector<16x8xf32>, vector<8x4xf32>, vector<16x4xf32> -> vector<16x4xf32>
    %51 = arith.addf %46, %50 : vector<16x4xf32>
    %52 = vector.extract_strided_slice %10 {offsets = [2, 0], sizes = [16, 8], strides = [1, 1]} : vector<18x8xf32> to vector<16x8xf32>
    %c2_51 = arith.constant 2 : index
    %c2_52 = arith.constant 2 : index
    %c0_53 = arith.constant 0 : index
    %c0_54 = arith.constant 0 : index
    %53 = vector.load %arg5[%c2_51, %c2_52, %c0_53, %c0_54] : memref<3x3x8x4xf32, #tpu.memory_space<vmem>>, vector<1x1x8x4xf32>
    %54 = vector.shape_cast %53 : vector<1x1x8x4xf32> to vector<8x4xf32>
    %cst_55 = arith.constant dense<0.000000e+00> : vector<16x4xf32>
    %55 = tpu.matmul %52, %54, %cst_55 {dimension_numbers = #tpu.dot_dimension_numbers<[1], [0], [0], [1], [0, 0, 1, 1], [], []>} : vector<16x8xf32>, vector<8x4xf32>, vector<16x4xf32> -> vector<16x4xf32>
    %56 = arith.addf %51, %55 : vector<16x4xf32>
    %c0_56 = arith.constant 0 : index
    %c0_57 = arith.constant 0 : index
    %c0_58 = arith.constant 0 : index
    %c0_59 = arith.constant 0 : index
    %57 = vector.load %arg6[%c0_56, %c0_57, %c0_58, %c0_59] : memref<1x1x16x4xf32, #tpu.memory_space<vmem>>, vector<1x1x16x4xf32>
    %58 = vector.shape_cast %57 : vector<1x1x16x4xf32> to vector<16x4xf32>
    %59 = vector.shape_cast %56 : vector<16x4xf32> to vector<1x1x16x4xf32>
    tpu.vector_store %arg6[%c0_56, %c0_57, %c0_58, %c0_59], %59 {strides = array<i32>} : memref<1x1x16x4xf32, #tpu.memory_space<vmem>>, vector<1x1x16x4xf32>,
    %c0_60 = arith.constant 0 : index
    %c0_61 = arith.constant 0 : index
    %60 = vector.load %arg7[%c0_60, %c0_61] : memref<2x4xf32, #tpu.memory_space<vmem>>, vector<2x4xf32>
    %cst_62 = arith.constant dense<0.000000e+00> : vector<4xf32>
    %61 = vector.multi_reduction <add>, %56, %cst_62 [0] : vector<16x4xf32> to vector<4xf32>
    %62 = vector.shape_cast %61 : vector<4xf32> to vector<1x4xf32>
    %63 = arith.mulf %56, %56 : vector<16x4xf32>
    %cst_63 = arith.constant dense<0.000000e+00> : vector<4xf32>
    %64 = vector.multi_reduction <add>, %63, %cst_63 [0] : vector<16x4xf32> to vector<4xf32>
    %65 = vector.shape_cast %64 : vector<4xf32> to vector<1x4xf32>
    %66 = tpu.concatenate %62, %65 in 0 : vector<1x4xf32>, vector<1x4xf32> -> vector<2x4xf32>
    %67 = arith.addf %60, %66 : vector<2x4xf32>
    %c0_64 = arith.constant 0 : index
    %c0_65 = arith.constant 0 : index
    %68 = vector.load %arg7[%c0_64, %c0_65] : memref<2x4xf32, #tpu.memory_space<vmem>>, vector<2x4xf32>
    tpu.vector_store %arg7[%c0_64, %c0_65], %67 {strides = array<i32>} : memref<2x4xf32, #tpu.memory_space<vmem>>, vector<2x4xf32>,
    return
  }
  func.func @transform_0(%arg0: i32, %arg1: i32) -> (i32, i32, i32, i32) {
    %c0_i32 = arith.constant 0 : i32
    %0 = arith.addi %arg1, %c0_i32 : i32
    %c0_i32_0 = arith.constant 0 : i32
    %c0_i32_1 = arith.constant 0 : i32
    %c0_i32_2 = arith.constant 0 : i32
    return %arg0, %0, %c0_i32_0, %c0_i32_1 : i32, i32, i32, i32
  }
  func.func @transform_1(%arg0: i32, %arg1: i32) -> (i32, i32, i32, i32) {
    %c1_i32 = arith.constant 1 : i32
    %0 = arith.addi %arg1, %c1_i32 : i32
    %c0_i32 = arith.constant 0 : i32
    %c0_i32_0 = arith.constant 0 : i32
    %c0_i32_1 = arith.constant 0 : i32
    return %arg0, %0, %c0_i32, %c0_i32_0 : i32, i32, i32, i32
  }
  func.func @transform_2(%arg0: i32, %arg1: i32) -> (i32, i32, i32, i32) {
    %c2_i32 = arith.constant 2 : i32
    %0 = arith.addi %arg1, %c2_i32 : i32
    %c0_i32 = arith.constant 0 : i32
    %c0_i32_0 = arith.constant 0 : i32
    %c0_i32_1 = arith.constant 0 : i32
    return %arg0, %0, %c0_i32, %c0_i32_0 : i32, i32, i32, i32
  }
  func.func @transform_3(%arg0: i32, %arg1: i32) -> (i32, i32, i32, i32) {
    %c0_i32 = arith.constant 0 : i32
    %c0_i32_0 = arith.constant 0 : i32
    %c0_i32_1 = arith.constant 0 : i32
    %c0_i32_2 = arith.constant 0 : i32
    %c0_i32_3 = arith.constant 0 : i32
    return %c0_i32, %c0_i32_0, %c0_i32_1, %c0_i32_2 : i32, i32, i32, i32
  }
  func.func @transform_4(%arg0: i32, %arg1: i32) -> (i32, i32, i32, i32) {
    %c0_i32 = arith.constant 0 : i32
    %c0_i32_0 = arith.constant 0 : i32
    %c0_i32_1 = arith.constant 0 : i32
    return %arg0, %arg1, %c0_i32, %c0_i32_0 : i32, i32, i32, i32
  }
  func.func @transform_5(%arg0: i32, %arg1: i32) -> (i32, i32) {
    %c0_i32 = arith.constant 0 : i32
    %c0_i32_0 = arith.constant 0 : i32
    %c0_i32_1 = arith.constant 0 : i32
    return %c0_i32, %c0_i32_0 : i32, i32
  }
}

module attributes {stable_mosaic.version = 11 : i64} {
  func.func @bn_relu_kernel(%arg0: i32, %arg1: memref<512x4xf32, #tpu.memory_space<vmem>>, %arg2: memref<1x4xf32, #tpu.memory_space<vmem>>, %arg3: memref<1x4xf32, #tpu.memory_space<vmem>>, %arg4: memref<512x4xf32, #tpu.memory_space<vmem>>) attributes {dimension_semantics = [#tpu.dimension_semantics<parallel>], iteration_bounds = array<i64: 1>, scalar_prefetch = 0 : i64, scratch_operands = 0 : i64, tpu.core_type = #tpu.core_type<tc>, window_params = [{transform_indices = @transform_0, window_bounds = array<i64: 512, 4>}, {pipeline_mode = #tpu.pipeline_mode<synchronous>, transform_indices = @transform_1, window_bounds = array<i64: 1, 4>}, {pipeline_mode = #tpu.pipeline_mode<synchronous>, transform_indices = @transform_2, window_bounds = array<i64: 1, 4>}, {transform_indices = @transform_3, window_bounds = array<i64: 512, 4>}]} {
    %c0 = arith.constant 0 : index
    %c0_0 = arith.constant 0 : index
    %0 = vector.load %arg1[%c0, %c0_0] : memref<512x4xf32, #tpu.memory_space<vmem>>, vector<512x4xf32>
    %c0_1 = arith.constant 0 : index
    %c0_2 = arith.constant 0 : index
    %1 = vector.load %arg2[%c0_1, %c0_2] : memref<1x4xf32, #tpu.memory_space<vmem>>, vector<1x4xf32>
    %2 = vector.broadcast %1 : vector<1x4xf32> to vector<512x4xf32>
    %3 = arith.mulf %0, %2 : vector<512x4xf32>
    %c0_3 = arith.constant 0 : index
    %c0_4 = arith.constant 0 : index
    %4 = vector.load %arg3[%c0_3, %c0_4] : memref<1x4xf32, #tpu.memory_space<vmem>>, vector<1x4xf32>
    %5 = vector.broadcast %4 : vector<1x4xf32> to vector<512x4xf32>
    %6 = arith.addf %3, %5 : vector<512x4xf32>
    %cst = arith.constant 0.000000e+00 : f32
    %7 = vector.broadcast %cst : f32 to vector<512x4xf32>
    %8 = arith.maximumf %6, %7 : vector<512x4xf32>
    %c0_5 = arith.constant 0 : index
    %c0_6 = arith.constant 0 : index
    %9 = vector.load %arg4[%c0_5, %c0_6] : memref<512x4xf32, #tpu.memory_space<vmem>>, vector<512x4xf32>
    tpu.vector_store %arg4[%c0_5, %c0_6], %8 {strides = array<i32>} : memref<512x4xf32, #tpu.memory_space<vmem>>, vector<512x4xf32>,
    return
  }
  func.func @transform_0(%arg0: i32) -> (i32, i32) {
    %c0_i32 = arith.constant 0 : i32
    %c0_i32_0 = arith.constant 0 : i32
    return %arg0, %c0_i32 : i32, i32
  }
  func.func @transform_1(%arg0: i32) -> (i32, i32) {
    %c0_i32 = arith.constant 0 : i32
    %c0_i32_0 = arith.constant 0 : i32
    %c0_i32_1 = arith.constant 0 : i32
    return %c0_i32, %c0_i32_0 : i32, i32
  }
  func.func @transform_2(%arg0: i32) -> (i32, i32) {
    %c0_i32 = arith.constant 0 : i32
    %c0_i32_0 = arith.constant 0 : i32
    %c0_i32_1 = arith.constant 0 : i32
    return %c0_i32, %c0_i32_0 : i32, i32
  }
  func.func @transform_3(%arg0: i32) -> (i32, i32) {
    %c0_i32 = arith.constant 0 : i32
    %c0_i32_0 = arith.constant 0 : i32
    return %arg0, %c0_i32 : i32, i32
  }
}

module attributes {stable_mosaic.version = 11 : i64} {
  func.func @conv3x3_stats_kernel(%arg0: i32, %arg1: i32, %arg2: memref<1x1x18x4xf32, #tpu.memory_space<vmem>>, %arg3: memref<1x1x18x4xf32, #tpu.memory_space<vmem>>, %arg4: memref<1x1x18x4xf32, #tpu.memory_space<vmem>>, %arg5: memref<3x3x4x4xf32, #tpu.memory_space<vmem>>, %arg6: memref<1x4xf32, #tpu.memory_space<vmem>>, %arg7: memref<1x4xf32, #tpu.memory_space<vmem>>, %arg8: memref<1x1x16x4xf32, #tpu.memory_space<vmem>>, %arg9: memref<2x4xf32, #tpu.memory_space<vmem>>) attributes {dimension_semantics = [#tpu.dimension_semantics<arbitrary>, #tpu.dimension_semantics<arbitrary>], iteration_bounds = array<i64: 2, 16>, scalar_prefetch = 0 : i64, scratch_operands = 0 : i64, tpu.core_type = #tpu.core_type<tc>, window_params = [{transform_indices = @transform_0, window_bounds = array<i64: 1, 1, 18, 4>}, {transform_indices = @transform_1, window_bounds = array<i64: 1, 1, 18, 4>}, {transform_indices = @transform_2, window_bounds = array<i64: 1, 1, 18, 4>}, {pipeline_mode = #tpu.pipeline_mode<synchronous>, transform_indices = @transform_3, window_bounds = array<i64: 3, 3, 4, 4>}, {pipeline_mode = #tpu.pipeline_mode<synchronous>, transform_indices = @transform_4, window_bounds = array<i64: 1, 4>}, {pipeline_mode = #tpu.pipeline_mode<synchronous>, transform_indices = @transform_5, window_bounds = array<i64: 1, 4>}, {transform_indices = @transform_6, window_bounds = array<i64: 1, 1, 16, 4>}, {pipeline_mode = #tpu.pipeline_mode<synchronous>, transform_indices = @transform_7, window_bounds = array<i64: 2, 4>}]} {
    %c0_i32 = arith.constant 0 : i32
    %0 = arith.cmpi eq, %arg0, %c0_i32 : i32
    %c0_i32_0 = arith.constant 0 : i32
    %1 = arith.cmpi eq, %arg1, %c0_i32_0 : i32
    %2 = arith.andi %0, %1 : i1
    %3 = arith.extui %2 : i1 to i32
    %c0_i32_1 = arith.constant 0 : i32
    %4 = arith.cmpi ne, %3, %c0_i32_1 : i32
    scf.if %4 {
      %cst_85 = arith.constant 0.000000e+00 : f32
      %117 = vector.broadcast %cst_85 : f32 to vector<2x4xf32>
      %c0_86 = arith.constant 0 : index
      %c0_87 = arith.constant 0 : index
      %118 = vector.load %arg9[%c0_86, %c0_87] : memref<2x4xf32, #tpu.memory_space<vmem>>, vector<2x4xf32>
      tpu.vector_store %arg9[%c0_86, %c0_87], %117 {strides = array<i32>} : memref<2x4xf32, #tpu.memory_space<vmem>>, vector<2x4xf32>,
    } else {
    }
    %c0 = arith.constant 0 : index
    %c0_2 = arith.constant 0 : index
    %c0_3 = arith.constant 0 : index
    %c0_4 = arith.constant 0 : index
    %5 = vector.load %arg2[%c0, %c0_2, %c0_3, %c0_4] : memref<1x1x18x4xf32, #tpu.memory_space<vmem>>, vector<1x1x18x4xf32>
    %6 = vector.shape_cast %5 : vector<1x1x18x4xf32> to vector<18x4xf32>
    %c0_5 = arith.constant 0 : index
    %c0_6 = arith.constant 0 : index
    %c0_7 = arith.constant 0 : index
    %c0_8 = arith.constant 0 : index
    %7 = vector.load %arg3[%c0_5, %c0_6, %c0_7, %c0_8] : memref<1x1x18x4xf32, #tpu.memory_space<vmem>>, vector<1x1x18x4xf32>
    %8 = vector.shape_cast %7 : vector<1x1x18x4xf32> to vector<18x4xf32>
    %c0_9 = arith.constant 0 : index
    %c0_10 = arith.constant 0 : index
    %c0_11 = arith.constant 0 : index
    %c0_12 = arith.constant 0 : index
    %9 = vector.load %arg4[%c0_9, %c0_10, %c0_11, %c0_12] : memref<1x1x18x4xf32, #tpu.memory_space<vmem>>, vector<1x1x18x4xf32>
    %10 = vector.shape_cast %9 : vector<1x1x18x4xf32> to vector<18x4xf32>
    %11 = tpu.iota {dimensions = array<i32: 0>} : vector<18x1xi32>
    %c1_i32 = arith.constant 1 : i32
    %12 = vector.broadcast %c1_i32 : i32 to vector<18x1xi32>
    %13 = arith.cmpi sge, %11, %12 : vector<18x1xi32>
    %c16_i32 = arith.constant 16 : i32
    %14 = vector.broadcast %c16_i32 : i32 to vector<18x1xi32>
    %15 = arith.cmpi sle, %11, %14 : vector<18x1xi32>
    %16 = arith.andi %13, %15 : vector<18x1xi1>
    %c0_i32_13 = arith.constant 0 : i32
    %17 = arith.cmpi sgt, %arg1, %c0_i32_13 : i32
    %18 = vector.broadcast %17 : i1 to vector<18x1xi1>
    %19 = arith.andi %16, %18 : vector<18x1xi1>
    %c15_i32 = arith.constant 15 : i32
    %20 = arith.cmpi slt, %arg1, %c15_i32 : i32
    %21 = vector.broadcast %20 : i1 to vector<18x1xi1>
    %22 = arith.andi %16, %21 : vector<18x1xi1>
    %c0_14 = arith.constant 0 : index
    %c0_15 = arith.constant 0 : index
    %23 = vector.load %arg6[%c0_14, %c0_15] : memref<1x4xf32, #tpu.memory_space<vmem>>, vector<1x4xf32>
    %24 = vector.broadcast %23 : vector<1x4xf32> to vector<18x4xf32>
    %25 = arith.mulf %6, %24 : vector<18x4xf32>
    %c0_16 = arith.constant 0 : index
    %c0_17 = arith.constant 0 : index
    %26 = vector.load %arg7[%c0_16, %c0_17] : memref<1x4xf32, #tpu.memory_space<vmem>>, vector<1x4xf32>
    %27 = vector.broadcast %26 : vector<1x4xf32> to vector<18x4xf32>
    %28 = arith.addf %25, %27 : vector<18x4xf32>
    %cst = arith.constant 0.000000e+00 : f32
    %29 = vector.broadcast %cst : f32 to vector<18x4xf32>
    %30 = arith.maximumf %28, %29 : vector<18x4xf32>
    %cst_18 = arith.constant 0.000000e+00 : f32
    %31 = vector.shape_cast %19 : vector<18x1xi1> to vector<18x1xi1>
    %32 = vector.broadcast %31 : vector<18x1xi1> to vector<18x4xi1>
    %33 = vector.broadcast %cst_18 : f32 to vector<18x4xf32>
    %34 = arith.select %32, %30, %33 : vector<18x4xi1>, vector<18x4xf32>
    %c0_19 = arith.constant 0 : index
    %c0_20 = arith.constant 0 : index
    %35 = vector.load %arg6[%c0_19, %c0_20] : memref<1x4xf32, #tpu.memory_space<vmem>>, vector<1x4xf32>
    %36 = vector.broadcast %35 : vector<1x4xf32> to vector<18x4xf32>
    %37 = arith.mulf %8, %36 : vector<18x4xf32>
    %c0_21 = arith.constant 0 : index
    %c0_22 = arith.constant 0 : index
    %38 = vector.load %arg7[%c0_21, %c0_22] : memref<1x4xf32, #tpu.memory_space<vmem>>, vector<1x4xf32>
    %39 = vector.broadcast %38 : vector<1x4xf32> to vector<18x4xf32>
    %40 = arith.addf %37, %39 : vector<18x4xf32>
    %cst_23 = arith.constant 0.000000e+00 : f32
    %41 = vector.broadcast %cst_23 : f32 to vector<18x4xf32>
    %42 = arith.maximumf %40, %41 : vector<18x4xf32>
    %cst_24 = arith.constant 0.000000e+00 : f32
    %43 = vector.shape_cast %16 : vector<18x1xi1> to vector<18x1xi1>
    %44 = vector.broadcast %43 : vector<18x1xi1> to vector<18x4xi1>
    %45 = vector.broadcast %cst_24 : f32 to vector<18x4xf32>
    %46 = arith.select %44, %42, %45 : vector<18x4xi1>, vector<18x4xf32>
    %c0_25 = arith.constant 0 : index
    %c0_26 = arith.constant 0 : index
    %47 = vector.load %arg6[%c0_25, %c0_26] : memref<1x4xf32, #tpu.memory_space<vmem>>, vector<1x4xf32>
    %48 = vector.broadcast %47 : vector<1x4xf32> to vector<18x4xf32>
    %49 = arith.mulf %10, %48 : vector<18x4xf32>
    %c0_27 = arith.constant 0 : index
    %c0_28 = arith.constant 0 : index
    %50 = vector.load %arg7[%c0_27, %c0_28] : memref<1x4xf32, #tpu.memory_space<vmem>>, vector<1x4xf32>
    %51 = vector.broadcast %50 : vector<1x4xf32> to vector<18x4xf32>
    %52 = arith.addf %49, %51 : vector<18x4xf32>
    %cst_29 = arith.constant 0.000000e+00 : f32
    %53 = vector.broadcast %cst_29 : f32 to vector<18x4xf32>
    %54 = arith.maximumf %52, %53 : vector<18x4xf32>
    %cst_30 = arith.constant 0.000000e+00 : f32
    %55 = vector.shape_cast %22 : vector<18x1xi1> to vector<18x1xi1>
    %56 = vector.broadcast %55 : vector<18x1xi1> to vector<18x4xi1>
    %57 = vector.broadcast %cst_30 : f32 to vector<18x4xf32>
    %58 = arith.select %56, %54, %57 : vector<18x4xi1>, vector<18x4xf32>
    %cst_31 = arith.constant 0.000000e+00 : f32
    %59 = vector.broadcast %cst_31 : f32 to vector<16x4xf32>
    %60 = vector.extract_strided_slice %34 {offsets = [0, 0], sizes = [16, 4], strides = [1, 1]} : vector<18x4xf32> to vector<16x4xf32>
    %c0_32 = arith.constant 0 : index
    %c0_33 = arith.constant 0 : index
    %c0_34 = arith.constant 0 : index
    %c0_35 = arith.constant 0 : index
    %61 = vector.load %arg5[%c0_32, %c0_33, %c0_34, %c0_35] : memref<3x3x4x4xf32, #tpu.memory_space<vmem>>, vector<1x1x4x4xf32>
    %62 = vector.shape_cast %61 : vector<1x1x4x4xf32> to vector<4x4xf32>
    %cst_36 = arith.constant dense<0.000000e+00> : vector<16x4xf32>
    %63 = tpu.matmul %60, %62, %cst_36 {dimension_numbers = #tpu.dot_dimension_numbers<[1], [0], [0], [1], [0, 0, 1, 1], [], []>} : vector<16x4xf32>, vector<4x4xf32>, vector<16x4xf32> -> vector<16x4xf32>
    %64 = arith.addf %59, %63 : vector<16x4xf32>
    %65 = vector.extract_strided_slice %34 {offsets = [1, 0], sizes = [16, 4], strides = [1, 1]} : vector<18x4xf32> to vector<16x4xf32>
    %c0_37 = arith.constant 0 : index
    %c1 = arith.constant 1 : index
    %c0_38 = arith.constant 0 : index
    %c0_39 = arith.constant 0 : index
    %66 = vector.load %arg5[%c0_37, %c1, %c0_38, %c0_39] : memref<3x3x4x4xf32, #tpu.memory_space<vmem>>, vector<1x1x4x4xf32>
    %67 = vector.shape_cast %66 : vector<1x1x4x4xf32> to vector<4x4xf32>
    %cst_40 = arith.constant dense<0.000000e+00> : vector<16x4xf32>
    %68 = tpu.matmul %65, %67, %cst_40 {dimension_numbers = #tpu.dot_dimension_numbers<[1], [0], [0], [1], [0, 0, 1, 1], [], []>} : vector<16x4xf32>, vector<4x4xf32>, vector<16x4xf32> -> vector<16x4xf32>
    %69 = arith.addf %64, %68 : vector<16x4xf32>
    %70 = vector.extract_strided_slice %34 {offsets = [2, 0], sizes = [16, 4], strides = [1, 1]} : vector<18x4xf32> to vector<16x4xf32>
    %c0_41 = arith.constant 0 : index
    %c2 = arith.constant 2 : index
    %c0_42 = arith.constant 0 : index
    %c0_43 = arith.constant 0 : index
    %71 = vector.load %arg5[%c0_41, %c2, %c0_42, %c0_43] : memref<3x3x4x4xf32, #tpu.memory_space<vmem>>, vector<1x1x4x4xf32>
    %72 = vector.shape_cast %71 : vector<1x1x4x4xf32> to vector<4x4xf32>
    %cst_44 = arith.constant dense<0.000000e+00> : vector<16x4xf32>
    %73 = tpu.matmul %70, %72, %cst_44 {dimension_numbers = #tpu.dot_dimension_numbers<[1], [0], [0], [1], [0, 0, 1, 1], [], []>} : vector<16x4xf32>, vector<4x4xf32>, vector<16x4xf32> -> vector<16x4xf32>
    %74 = arith.addf %69, %73 : vector<16x4xf32>
    %75 = vector.extract_strided_slice %46 {offsets = [0, 0], sizes = [16, 4], strides = [1, 1]} : vector<18x4xf32> to vector<16x4xf32>
    %c1_45 = arith.constant 1 : index
    %c0_46 = arith.constant 0 : index
    %c0_47 = arith.constant 0 : index
    %c0_48 = arith.constant 0 : index
    %76 = vector.load %arg5[%c1_45, %c0_46, %c0_47, %c0_48] : memref<3x3x4x4xf32, #tpu.memory_space<vmem>>, vector<1x1x4x4xf32>
    %77 = vector.shape_cast %76 : vector<1x1x4x4xf32> to vector<4x4xf32>
    %cst_49 = arith.constant dense<0.000000e+00> : vector<16x4xf32>
    %78 = tpu.matmul %75, %77, %cst_49 {dimension_numbers = #tpu.dot_dimension_numbers<[1], [0], [0], [1], [0, 0, 1, 1], [], []>} : vector<16x4xf32>, vector<4x4xf32>, vector<16x4xf32> -> vector<16x4xf32>
    %79 = arith.addf %74, %78 : vector<16x4xf32>
    %80 = vector.extract_strided_slice %46 {offsets = [1, 0], sizes = [16, 4], strides = [1, 1]} : vector<18x4xf32> to vector<16x4xf32>
    %c1_50 = arith.constant 1 : index
    %c1_51 = arith.constant 1 : index
    %c0_52 = arith.constant 0 : index
    %c0_53 = arith.constant 0 : index
    %81 = vector.load %arg5[%c1_50, %c1_51, %c0_52, %c0_53] : memref<3x3x4x4xf32, #tpu.memory_space<vmem>>, vector<1x1x4x4xf32>
    %82 = vector.shape_cast %81 : vector<1x1x4x4xf32> to vector<4x4xf32>
    %cst_54 = arith.constant dense<0.000000e+00> : vector<16x4xf32>
    %83 = tpu.matmul %80, %82, %cst_54 {dimension_numbers = #tpu.dot_dimension_numbers<[1], [0], [0], [1], [0, 0, 1, 1], [], []>} : vector<16x4xf32>, vector<4x4xf32>, vector<16x4xf32> -> vector<16x4xf32>
    %84 = arith.addf %79, %83 : vector<16x4xf32>
    %85 = vector.extract_strided_slice %46 {offsets = [2, 0], sizes = [16, 4], strides = [1, 1]} : vector<18x4xf32> to vector<16x4xf32>
    %c1_55 = arith.constant 1 : index
    %c2_56 = arith.constant 2 : index
    %c0_57 = arith.constant 0 : index
    %c0_58 = arith.constant 0 : index
    %86 = vector.load %arg5[%c1_55, %c2_56, %c0_57, %c0_58] : memref<3x3x4x4xf32, #tpu.memory_space<vmem>>, vector<1x1x4x4xf32>
    %87 = vector.shape_cast %86 : vector<1x1x4x4xf32> to vector<4x4xf32>
    %cst_59 = arith.constant dense<0.000000e+00> : vector<16x4xf32>
    %88 = tpu.matmul %85, %87, %cst_59 {dimension_numbers = #tpu.dot_dimension_numbers<[1], [0], [0], [1], [0, 0, 1, 1], [], []>} : vector<16x4xf32>, vector<4x4xf32>, vector<16x4xf32> -> vector<16x4xf32>
    %89 = arith.addf %84, %88 : vector<16x4xf32>
    %90 = vector.extract_strided_slice %58 {offsets = [0, 0], sizes = [16, 4], strides = [1, 1]} : vector<18x4xf32> to vector<16x4xf32>
    %c2_60 = arith.constant 2 : index
    %c0_61 = arith.constant 0 : index
    %c0_62 = arith.constant 0 : index
    %c0_63 = arith.constant 0 : index
    %91 = vector.load %arg5[%c2_60, %c0_61, %c0_62, %c0_63] : memref<3x3x4x4xf32, #tpu.memory_space<vmem>>, vector<1x1x4x4xf32>
    %92 = vector.shape_cast %91 : vector<1x1x4x4xf32> to vector<4x4xf32>
    %cst_64 = arith.constant dense<0.000000e+00> : vector<16x4xf32>
    %93 = tpu.matmul %90, %92, %cst_64 {dimension_numbers = #tpu.dot_dimension_numbers<[1], [0], [0], [1], [0, 0, 1, 1], [], []>} : vector<16x4xf32>, vector<4x4xf32>, vector<16x4xf32> -> vector<16x4xf32>
    %94 = arith.addf %89, %93 : vector<16x4xf32>
    %95 = vector.extract_strided_slice %58 {offsets = [1, 0], sizes = [16, 4], strides = [1, 1]} : vector<18x4xf32> to vector<16x4xf32>
    %c2_65 = arith.constant 2 : index
    %c1_66 = arith.constant 1 : index
    %c0_67 = arith.constant 0 : index
    %c0_68 = arith.constant 0 : index
    %96 = vector.load %arg5[%c2_65, %c1_66, %c0_67, %c0_68] : memref<3x3x4x4xf32, #tpu.memory_space<vmem>>, vector<1x1x4x4xf32>
    %97 = vector.shape_cast %96 : vector<1x1x4x4xf32> to vector<4x4xf32>
    %cst_69 = arith.constant dense<0.000000e+00> : vector<16x4xf32>
    %98 = tpu.matmul %95, %97, %cst_69 {dimension_numbers = #tpu.dot_dimension_numbers<[1], [0], [0], [1], [0, 0, 1, 1], [], []>} : vector<16x4xf32>, vector<4x4xf32>, vector<16x4xf32> -> vector<16x4xf32>
    %99 = arith.addf %94, %98 : vector<16x4xf32>
    %100 = vector.extract_strided_slice %58 {offsets = [2, 0], sizes = [16, 4], strides = [1, 1]} : vector<18x4xf32> to vector<16x4xf32>
    %c2_70 = arith.constant 2 : index
    %c2_71 = arith.constant 2 : index
    %c0_72 = arith.constant 0 : index
    %c0_73 = arith.constant 0 : index
    %101 = vector.load %arg5[%c2_70, %c2_71, %c0_72, %c0_73] : memref<3x3x4x4xf32, #tpu.memory_space<vmem>>, vector<1x1x4x4xf32>
    %102 = vector.shape_cast %101 : vector<1x1x4x4xf32> to vector<4x4xf32>
    %cst_74 = arith.constant dense<0.000000e+00> : vector<16x4xf32>
    %103 = tpu.matmul %100, %102, %cst_74 {dimension_numbers = #tpu.dot_dimension_numbers<[1], [0], [0], [1], [0, 0, 1, 1], [], []>} : vector<16x4xf32>, vector<4x4xf32>, vector<16x4xf32> -> vector<16x4xf32>
    %104 = arith.addf %99, %103 : vector<16x4xf32>
    %c0_75 = arith.constant 0 : index
    %c0_76 = arith.constant 0 : index
    %c0_77 = arith.constant 0 : index
    %c0_78 = arith.constant 0 : index
    %105 = vector.load %arg8[%c0_75, %c0_76, %c0_77, %c0_78] : memref<1x1x16x4xf32, #tpu.memory_space<vmem>>, vector<1x1x16x4xf32>
    %106 = vector.shape_cast %105 : vector<1x1x16x4xf32> to vector<16x4xf32>
    %107 = vector.shape_cast %104 : vector<16x4xf32> to vector<1x1x16x4xf32>
    tpu.vector_store %arg8[%c0_75, %c0_76, %c0_77, %c0_78], %107 {strides = array<i32>} : memref<1x1x16x4xf32, #tpu.memory_space<vmem>>, vector<1x1x16x4xf32>,
    %c0_79 = arith.constant 0 : index
    %c0_80 = arith.constant 0 : index
    %108 = vector.load %arg9[%c0_79, %c0_80] : memref<2x4xf32, #tpu.memory_space<vmem>>, vector<2x4xf32>
    %cst_81 = arith.constant dense<0.000000e+00> : vector<4xf32>
    %109 = vector.multi_reduction <add>, %104, %cst_81 [0] : vector<16x4xf32> to vector<4xf32>
    %110 = vector.shape_cast %109 : vector<4xf32> to vector<1x4xf32>
    %111 = arith.mulf %104, %104 : vector<16x4xf32>
    %cst_82 = arith.constant dense<0.000000e+00> : vector<4xf32>
    %112 = vector.multi_reduction <add>, %111, %cst_82 [0] : vector<16x4xf32> to vector<4xf32>
    %113 = vector.shape_cast %112 : vector<4xf32> to vector<1x4xf32>
    %114 = tpu.concatenate %110, %113 in 0 : vector<1x4xf32>, vector<1x4xf32> -> vector<2x4xf32>
    %115 = arith.addf %108, %114 : vector<2x4xf32>
    %c0_83 = arith.constant 0 : index
    %c0_84 = arith.constant 0 : index
    %116 = vector.load %arg9[%c0_83, %c0_84] : memref<2x4xf32, #tpu.memory_space<vmem>>, vector<2x4xf32>
    tpu.vector_store %arg9[%c0_83, %c0_84], %115 {strides = array<i32>} : memref<2x4xf32, #tpu.memory_space<vmem>>, vector<2x4xf32>,
    return
  }
  func.func @transform_0(%arg0: i32, %arg1: i32) -> (i32, i32, i32, i32) {
    %c0_i32 = arith.constant 0 : i32
    %0 = arith.addi %arg1, %c0_i32 : i32
    %c0_i32_0 = arith.constant 0 : i32
    %c0_i32_1 = arith.constant 0 : i32
    %c0_i32_2 = arith.constant 0 : i32
    return %arg0, %0, %c0_i32_0, %c0_i32_1 : i32, i32, i32, i32
  }
  func.func @transform_1(%arg0: i32, %arg1: i32) -> (i32, i32, i32, i32) {
    %c1_i32 = arith.constant 1 : i32
    %0 = arith.addi %arg1, %c1_i32 : i32
    %c0_i32 = arith.constant 0 : i32
    %c0_i32_0 = arith.constant 0 : i32
    %c0_i32_1 = arith.constant 0 : i32
    return %arg0, %0, %c0_i32, %c0_i32_0 : i32, i32, i32, i32
  }
  func.func @transform_2(%arg0: i32, %arg1: i32) -> (i32, i32, i32, i32) {
    %c2_i32 = arith.constant 2 : i32
    %0 = arith.addi %arg1, %c2_i32 : i32
    %c0_i32 = arith.constant 0 : i32
    %c0_i32_0 = arith.constant 0 : i32
    %c0_i32_1 = arith.constant 0 : i32
    return %arg0, %0, %c0_i32, %c0_i32_0 : i32, i32, i32, i32
  }
  func.func @transform_3(%arg0: i32, %arg1: i32) -> (i32, i32, i32, i32) {
    %c0_i32 = arith.constant 0 : i32
    %c0_i32_0 = arith.constant 0 : i32
    %c0_i32_1 = arith.constant 0 : i32
    %c0_i32_2 = arith.constant 0 : i32
    %c0_i32_3 = arith.constant 0 : i32
    return %c0_i32, %c0_i32_0, %c0_i32_1, %c0_i32_2 : i32, i32, i32, i32
  }
  func.func @transform_4(%arg0: i32, %arg1: i32) -> (i32, i32) {
    %c0_i32 = arith.constant 0 : i32
    %c0_i32_0 = arith.constant 0 : i32
    %c0_i32_1 = arith.constant 0 : i32
    return %c0_i32, %c0_i32_0 : i32, i32
  }
  func.func @transform_5(%arg0: i32, %arg1: i32) -> (i32, i32) {
    %c0_i32 = arith.constant 0 : i32
    %c0_i32_0 = arith.constant 0 : i32
    %c0_i32_1 = arith.constant 0 : i32
    return %c0_i32, %c0_i32_0 : i32, i32
  }
  func.func @transform_6(%arg0: i32, %arg1: i32) -> (i32, i32, i32, i32) {
    %c0_i32 = arith.constant 0 : i32
    %c0_i32_0 = arith.constant 0 : i32
    %c0_i32_1 = arith.constant 0 : i32
    return %arg0, %arg1, %c0_i32, %c0_i32_0 : i32, i32, i32, i32
  }
  func.func @transform_7(%arg0: i32, %arg1: i32) -> (i32, i32) {
    %c0_i32 = arith.constant 0 : i32
    %c0_i32_0 = arith.constant 0 : i32
    %c0_i32_1 = arith.constant 0 : i32
    return %c0_i32, %c0_i32_0 : i32, i32
  }
}

</mosaic_0001>

<llo_original>
// kernel: decoder_forward.5
$region0: #{decoder_forward.5}
  #allocation0 [shape = 'u32[]', space=smem, size = 0x4, offset = 0x4, fixed_abs, tag = 'smem constant byte address 0x4 - core index']
  #allocation1 [shape = 'u32[144,128]{1,0:T(1,128)}', space=vmem, size = 0x12000, scoped, tag = 'internal scratch']
  %s0 = inlined_call_operand.vmem [shape: f32[2,9,9,8], index: 0, kind: input, shape index: {}, may-alias: {0,1}]
  %s1 = inlined_call_operand.vmem [shape: f32[2,9,9,8], index: 1, kind: input, shape index: {}, may-alias: {0,1}]
  %s2 = inlined_call_operand.vmem [shape: f32[2,16,16,4], index: 2, kind: input, shape index: {}]
  %s3 = inlined_call_operand.vmem [shape: f32[3,3,8,8], index: 3, kind: input, shape index: {}]
  %s4 = inlined_call_operand.vmem [shape: f32[1,8], index: 4, kind: input, shape index: {}]
  %s5 = inlined_call_operand.vmem [shape: f32[4,4], index: 5, kind: input, shape index: {}]
  %s6 = inlined_call_operand.vmem [shape: f32[2,16,2,8,8], index: 6, kind: output, shape index: {0}]
  %s7 = inlined_call_operand.vmem [shape: f32[2,8], index: 7, kind: output, shape index: {1}]
  %8 = xla_tuple %s6, %s7
  %s9 = sld [smem:[#allocation0]]
  $region69: #{decoder_forward.5} parent=0
    _
  %s11 = ssub.s32 1, %s9
  %s12 = scalar_select 0, %s11, %s9
  loop: start=0, step=1, limit=18
  $region2: #{decoder_forward.5} parent=0 // loop_pre_header
    _
  $region3: #{decoder_forward.5} parent=0 // loop_header
    %s14 = sphi 0, %s18
    %p15 = scmp.ge.s32.totalorder %s14, 18
    %s21 = sphi 0, %s33
    %s22 = sphi 0, %s29
    %s23 = sphi 0, %s21
    %s24 = sphi 0, %s22
    %s25 = sphi 0, %s23
    %s26 = sphi 0, %s24
    %s38 = sphi 0, %s40
    %s41 = sphi 0, %s38
    %s42 = sphi 0, %s41
    %s58 = sphi 0, %s42
    %s68 = sphi 0, %s70
    %s71 = sphi 0, %s68
    %s72 = sphi 0, %s71
    %s88 = sphi 0, %s72
    %s96 = sphi 0, %s98
    %s99 = sphi 0, %s96
    %s100 = sphi 0, %s99
    %s116 = sphi 0, %s100
    %s120 = sphi 0, %s120
    %s122 = sphi 0, %s120
    %s123 = sphi 0, %s122
    %s137 = sphi 0, %s123
    %s141 = sphi 0, %s141
    %s143 = sphi 0, %s141
    %s144 = sphi 0, %s143
    %s158 = sphi 0, %s144
    %s162 = sphi 0, %s162
    %s164 = sphi 0, %s162
    %s165 = sphi 0, %s164
    %s179 = sphi 0, %s165
    %s187 = sphi 0, %s189
    %s190 = sphi 0, %s187
    %s191 = sphi 0, %s190
    %s207 = sphi 0, %s191
    %s211 = sphi 0, %s211
    %s213 = sphi 0, %s211
    %s214 = sphi 0, %s213
    %s228 = sphi 0, %s214
  $region4: #{decoder_forward.5} parent=0 // loop_header_branch
    %17 = sbr.rel (%p15) target = $region8
  $region5: #{decoder_forward.5} parent=0 // loop_body
    %s19 = ssub.s32 %s14, 1
    %s20 = ssub.s32 %s14, 2
    %s27 = sadd.s32 1, %s22
    %p28 = scmp.ge.s32.totalorder %s27, 8
    %s29 = scalar_select %p28, 0, %s27
    %s30 = sadd.s32 1, %s21
    %s31 = scalar_select %p28, %s30, %s21
    %p32 = scmp.ge.s32.totalorder %s31, 2
    %s33 = scalar_select %p32, 0, %s31
    %s34 = ssub.s32 %s21, %s33
    %s35 = ssub.s32 %s22, %s29
    %s36 = sor.u32 %s34, %s35
    %p37 = scmp.eq.s32.totalorder %s36, 0
    %s39 = sadd.s32 %s38, 1
    %s40 = scalar_select %p37, %s38, %s39
    %p43 = pneg %p37
    %p44 = scmp.eq.s32.totalorder %s14, 15
    %p45 = por %p43, %p44
    %p46 = scmp.ne.s32.totalorder %s38, %s41
    %p47 = scmp.eq.s32.totalorder %s14, 0
    %p48 = por %p46, %p47
    %p49 = scmp.ne.s32.totalorder %s38, %s41
    %p50 = scmp.eq.s32.totalorder %s19, 15
    %p51 = por %p49, %p50
    %p52 = scmp.ne.s32.totalorder %s41, %s42
    %p53 = scmp.eq.s32.totalorder %s19, 0
    %p54 = por %p52, %p53
    %p55 = scmp.ne.s32.totalorder %s41, %s42
    %p56 = scmp.eq.s32.totalorder %s20, 15
    %p57 = por %p55, %p56
    %p59 = scmp.ne.s32.totalorder %s42, %s58
    %p60 = scmp.eq.s32.totalorder %s20, 0
    %p61 = por %p59, %p60
    %s62 = sadd.s32 %s22, 1
    %s63 = sadd.s32 %s29, 1
    %s64 = ssub.s32 %s21, %s33
    %s65 = ssub.s32 %s62, %s63
    %s66 = sor.u32 %s64, %s65
    %p67 = scmp.eq.s32.totalorder %s66, 0
    %s69 = sadd.s32 %s68, 1
    %s70 = scalar_select %p67, %s68, %s69
    %p73 = pneg %p67
    %p74 = scmp.eq.s32.totalorder %s14, 15
    %p75 = por %p73, %p74
    %p76 = scmp.ne.s32.totalorder %s68, %s71
    %p77 = scmp.eq.s32.totalorder %s14, 0
    %p78 = por %p76, %p77
    %p79 = scmp.ne.s32.totalorder %s68, %s71
    %p80 = scmp.eq.s32.totalorder %s19, 15
    %p81 = por %p79, %p80
    %p82 = scmp.ne.s32.totalorder %s71, %s72
    %p83 = scmp.eq.s32.totalorder %s19, 0
    %p84 = por %p82, %p83
    %p85 = scmp.ne.s32.totalorder %s71, %s72
    %p86 = scmp.eq.s32.totalorder %s20, 15
    %p87 = por %p85, %p86
    %p89 = scmp.ne.s32.totalorder %s72, %s88
    %p90 = scmp.eq.s32.totalorder %s20, 0
    %p91 = por %p89, %p90
    %s92 = ssub.s32 %s21, %s33
    %s93 = ssub.s32 %s22, %s29
    %s94 = sor.u32 %s92, %s93
    %p95 = scmp.eq.s32.totalorder %s94, 0
    %s97 = sadd.s32 %s96, 1
    %s98 = scalar_select %p95, %s96, %s97
    %p101 = pneg %p95
    %p102 = scmp.eq.s32.totalorder %s14, 15
    %p103 = por %p101, %p102
    %p104 = scmp.ne.s32.totalorder %s96, %s99
    %p105 = scmp.eq.s32.totalorder %s14, 0
    %p106 = por %p104, %p105
    %p107 = scmp.ne.s32.totalorder %s96, %s99
    %p108 = scmp.eq.s32.totalorder %s19, 15
    %p109 = por %p107, %p108
    %p110 = scmp.ne.s32.totalorder %s99, %s100
    %p111 = scmp.eq.s32.totalorder %s19, 0
    %p112 = por %p110, %p111
    %p113 = scmp.ne.s32.totalorder %s99, %s100
    %p114 = scmp.eq.s32.totalorder %s20, 15
    %p115 = por %p113, %p114
    %p117 = scmp.ne.s32.totalorder %s100, %s116
    %p118 = scmp.eq.s32.totalorder %s20, 0
    %p119 = por %p117, %p118
    %s121 = sadd.s32 %s120, 1
    %p124 = scmp.eq.s32.totalorder %s14, 15
    %p125 = scmp.ne.s32.totalorder %s120, %s122
    %p126 = scmp.eq.s32.totalorder %s14, 0
    %p127 = por %p125, %p126
    %p128 = scmp.ne.s32.totalorder %s120, %s122
    %p129 = scmp.eq.s32.totalorder %s19, 15
    %p130 = por %p128, %p129
    %p131 = scmp.ne.s32.totalorder %s122, %s123
    %p132 = scmp.eq.s32.totalorder %s19, 0
    %p133 = por %p131, %p132
    %p134 = scmp.ne.s32.totalorder %s122, %s123
    %p135 = scmp.eq.s32.totalorder %s20, 15
    %p136 = por %p134, %p135
    %p138 = scmp.ne.s32.totalorder %s123, %s137
    %p139 = scmp.eq.s32.totalorder %s20, 0
    %p140 = por %p138, %p139
    %s142 = sadd.s32 %s141, 1
    %p145 = scmp.eq.s32.totalorder %s14, 15
    %p146 = scmp.ne.s32.totalorder %s141, %s143
    %p147 = scmp.eq.s32.totalorder %s14, 0
    %p148 = por %p146, %p147
    %p149 = scmp.ne.s32.totalorder %s141, %s143
    %p150 = scmp.eq.s32.totalorder %s19, 15
    %p151 = por %p149, %p150
    %p152 = scmp.ne.s32.totalorder %s143, %s144
    %p153 = scmp.eq.s32.totalorder %s19, 0
    %p154 = por %p152, %p153
    %p155 = scmp.ne.s32.totalorder %s143, %s144
    %p156 = scmp.eq.s32.totalorder %s20, 15
    %p157 = por %p155, %p156
    %p159 = scmp.ne.s32.totalorder %s144, %s158
    %p160 = scmp.eq.s32.totalorder %s20, 0
    %p161 = por %p159, %p160
    %s163 = sadd.s32 %s162, 1
    %p166 = scmp.eq.s32.totalorder %s14, 15
    %p167 = scmp.ne.s32.totalorder %s162, %s164
    %p168 = scmp.eq.s32.totalorder %s14, 0
    %p169 = por %p167, %p168
    %p170 = scmp.ne.s32.totalorder %s162, %s164
    %p171 = scmp.eq.s32.totalorder %s19, 15
    %p172 = por %p170, %p171
    %p173 = scmp.ne.s32.totalorder %s164, %s165
    %p174 = scmp.eq.s32.totalorder %s19, 0
    %p175 = por %p173, %p174
    %p176 = scmp.ne.s32.totalorder %s164, %s165
    %p177 = scmp.eq.s32.totalorder %s20, 15
    %p178 = por %p176, %p177
    %p180 = scmp.ne.s32.totalorder %s165, %s179
    %p181 = scmp.eq.s32.totalorder %s20, 0
    %p182 = por %p180, %p181
    %s183 = ssub.s32 %s21, %s33
    %s184 = ssub.s32 %s22, %s29
    %s185 = sor.u32 %s183, %s184
    %p186 = scmp.eq.s32.totalorder %s185, 0
    %s188 = sadd.s32 %s187, 1
    %s189 = scalar_select %p186, %s187, %s188
    %p192 = pneg %p186
    %p193 = scmp.eq.s32.totalorder %s14, 15
    %p194 = por %p192, %p193
    %p195 = scmp.ne.s32.totalorder %s187, %s190
    %p196 = scmp.eq.s32.totalorder %s14, 0
    %p197 = por %p195, %p196
    %p198 = scmp.ne.s32.totalorder %s187, %s190
    %p199 = scmp.eq.s32.totalorder %s19, 15
    %p200 = por %p198, %p199
    %p201 = scmp.ne.s32.totalorder %s190, %s191
    %p202 = scmp.eq.s32.totalorder %s19, 0
    %p203 = por %p201, %p202
    %p204 = scmp.ne.s32.totalorder %s190, %s191
    %p205 = scmp.eq.s32.totalorder %s20, 15
    %p206 = por %p204, %p205
    %p208 = scmp.ne.s32.totalorder %s191, %s207
    %p209 = scmp.eq.s32.totalorder %s20, 0
    %p210 = por %p208, %p209
    %s212 = sadd.s32 %s211, 1
    %p215 = scmp.eq.s32.totalorder %s14, 15
    %p216 = scmp.ne.s32.totalorder %s211, %s213
    %p217 = scmp.eq.s32.totalorder %s14, 0
    %p218 = por %p216, %p217
    %p219 = scmp.ne.s32.totalorder %s211, %s213
    %p220 = scmp.eq.s32.totalorder %s19, 15
    %p221 = por %p219, %p220
    %p222 = scmp.ne.s32.totalorder %s213, %s214
    %p223 = scmp.eq.s32.totalorder %s19, 0
    %p224 = por %p222, %p223
    %p225 = scmp.ne.s32.totalorder %s213, %s214
    %p226 = scmp.eq.s32.totalorder %s20, 15
    %p227 = por %p225, %p226
    %p229 = scmp.ne.s32.totalorder %s214, %s228
    %p230 = scmp.eq.s32.totalorder %s20, 0
    %p231 = por %p229, %p230
    %p232 = scmp.le.s32.totalorder 1, %s14
    %p233 = scmp.lt.s32.totalorder %s14, 17
    %p234 = pnand %p232, %p233
    %p235 = pneg %p234
    // Predicated region
    $region9: #{decoder_forward.5} parent=5 // pred_check
      _
    $region10: #{decoder_forward.5} parent=5 // pred_check_branch
      %237 = sbr.rel (%p234) target = $region12
    $region11: #{decoder_forward.5} parent=5 // pred_region
      %s238 = ssub.s32 %s14, 1
      // Predicated region
      $region13: #{decoder_forward.5} parent=11 // pred_check
        %p239 = pneg %p133
      $region14: #{decoder_forward.5} parent=11 // pred_check_branch
        %241 = sbr.rel (%p239) target = $region16
      $region15: #{decoder_forward.5} parent=11 // pred_region
        _
      $region16: #{decoder_forward.5} parent=11 // pred_fallthru
        _
      // Predicated region
      $region17: #{decoder_forward.5} parent=11 // pred_check
        %p242 = pneg %p154
      $region18: #{decoder_forward.5} parent=11 // pred_check_branch
        %244 = sbr.rel (%p242) target = $region20
      $region19: #{decoder_forward.5} parent=11 // pred_region
        _
      $region20: #{decoder_forward.5} parent=11 // pred_fallthru
        _
      // Predicated region
      $region21: #{decoder_forward.5} parent=11 // pred_check
        %p245 = pneg %p175
      $region22: #{decoder_forward.5} parent=11 // pred_check_branch
        %247 = sbr.rel (%p245) target = $region24
      $region23: #{decoder_forward.5} parent=11 // pred_region
        _
      $region24: #{decoder_forward.5} parent=11 // pred_fallthru
        _
    $region12: #{decoder_forward.5} parent=5 // pred_fallthru
      _
    %p248 = scmp.lt.s32.totalorder %s14, 16
    // Predicated region
    $region25: #{decoder_forward.5} parent=5 // pred_check
      %p249 = pneg %p248
    $region26: #{decoder_forward.5} parent=5 // pred_check_branch
      %251 = sbr.rel (%p249) target = $region28
    $region27: #{decoder_forward.5} parent=5 // pred_region
      // Predicated region
      $region29: #{decoder_forward.5} parent=27 // pred_check
        %p252 = pneg %p48
      $region30: #{decoder_forward.5} parent=27 // pred_check_branch
        %254 = sbr.rel (%p252) target = $region32
      $region31: #{decoder_forward.5} parent=27 // pred_region
        %p255 = scmp.lt.s32.totalorder %s21, 1
        %s256 = scalar_select %p255, %s21, 1
        %p257 = scmp.lt.s32.totalorder %s22, 8
        %s258 = scalar_select %p257, %s22, 8
        %s259 = smul.addr %s258, 2
        %s260 = smul.addr %s256, 18
        %s261 = sadd.s32 %s259, %s260
        %s262 = smul.addr %s261, 8
        %s263 = scalar_lea.vmem %s0, %s262
      $region32: #{decoder_forward.5} parent=27 // pred_fallthru
        _
      // Predicated region
      $region33: #{decoder_forward.5} parent=27 // pred_check
        %p264 = pneg %p78
      $region34: #{decoder_forward.5} parent=27 // pred_check_branch
        %266 = sbr.rel (%p264) target = $region36
      $region35: #{decoder_forward.5} parent=27 // pred_region
        %s267 = sadd.s32 %s22, 1
        %p268 = scmp.lt.s32.totalorder %s21, 1
        %s269 = scalar_select %p268, %s21, 1
        %p270 = scmp.lt.s32.totalorder %s267, 8
        %s271 = scalar_select %p270, %s267, 8
        %s272 = smul.addr %s271, 2
        %s273 = smul.addr %s269, 18
        %s274 = sadd.s32 %s272, %s273
        %s275 = smul.addr %s274, 8
        %s276 = scalar_lea.vmem %s1, %s275
        %s277 = sadd.s32 %s22, 1
      $region36: #{decoder_forward.5} parent=27 // pred_fallthru
        _
      // Predicated region
      $region37: #{decoder_forward.5} parent=27 // pred_check
        %p278 = pneg %p106
      $region38: #{decoder_forward.5} parent=27 // pred_check_branch
        %280 = sbr.rel (%p278) target = $region40
      $region39: #{decoder_forward.5} parent=27 // pred_region
        %s281 = smul.u32 2, %s22
        %p282 = scmp.lt.s32.totalorder %s21, 1
        %s283 = scalar_select %p282, %s21, 1
        %p284 = scmp.lt.s32.totalorder %s281, 15
        %s285 = scalar_select %p284, %s281, 15
        %s286 = smul.addr %s285, 2
        %s287 = smul.addr %s283, 32
        %s288 = sadd.s32 %s286, %s287
        %s289 = smul.addr %s288, 8
        %s290 = scalar_lea.vmem %s2, %s289
        %s291 = smul.u32 2, %s22
      $region40: #{decoder_forward.5} parent=27 // pred_fallthru
        _
    $region28: #{decoder_forward.5} parent=5 // pred_fallthru
      _
    %p292 = scmp.le.s32.totalorder 1, %s14
    %p293 = scmp.lt.s32.totalorder %s14, 17
    %p294 = pnand %p292, %p293
    %p295 = pneg %p294
    // Predicated region
    $region41: #{decoder_forward.5} parent=5 // pred_check
      _
    $region42: #{decoder_forward.5} parent=5 // pred_check_branch
      %297 = sbr.rel (%p294) target = $region44
    $region43: #{decoder_forward.5} parent=5 // pred_region
      %s298 = ssub.s32 %s14, 1
      %p299 = scmp.lt.s32.totalorder %s23, 1
      %s300 = scalar_select %p299, %s23, 1
      %p301 = scmp.lt.s32.totalorder %s24, 8
      %s302 = scalar_select %p301, %s24, 8
      %s303 = smul.addr %s302, 2
      %s304 = smul.addr %s300, 18
      %s305 = sadd.s32 %s303, %s304
      %s306 = smul.addr %s305, 8
      %s307 = scalar_lea.vmem %s0, %s306
      %p308 = pneg %p54
      %p309 = pneg %p51
      %s310 = sadd.s32 %s24, 1
      %p311 = scmp.lt.s32.totalorder %s23, 1
      %s312 = scalar_select %p311, %s23, 1
      %p313 = scmp.lt.s32.totalorder %s310, 8
      %s314 = scalar_select %p313, %s310, 8
      %s315 = smul.addr %s314, 2
      %s316 = smul.addr %s312, 18
      %s317 = sadd.s32 %s315, %s316
      %s318 = smul.addr %s317, 8
      %s319 = scalar_lea.vmem %s1, %s318
      %p320 = pneg %p84
      %p321 = pneg %p81
      %s322 = smul.u32 2, %s24
      %p323 = scmp.lt.s32.totalorder %s23, 1
      %s324 = scalar_select %p323, %s23, 1
      %p325 = scmp.lt.s32.totalorder %s322, 15
      %s326 = scalar_select %p325, %s322, 15
      %s327 = smul.addr %s326, 2
      %s328 = smul.addr %s324, 32
      %s329 = sadd.s32 %s327, %s328
      %s330 = smul.addr %s329, 8
      %s331 = scalar_lea.vmem %s2, %s330
      %p332 = pneg %p112
      %p333 = pneg %p109
      %p334 = pneg %p133
      %p335 = pneg %p130
      %p336 = pneg %p154
      %p337 = pneg %p151
      %p338 = pneg %p175
      %p339 = pneg %p172
      %p340 = pneg %p203
      %p341 = pneg %p200
      %s342 = smul.u32 2, %s24
      %p343 = scmp.lt.s32.totalorder %s23, 1
      %s344 = scalar_select %p343, %s23, 1
      %p345 = scmp.lt.s32.totalorder %s342, 15
      %s346 = scalar_select %p345, %s342, 15
      %s347 = smul.addr %s346, 2
      %s348 = smul.addr %s344, 32
      %s349 = sadd.s32 %s347, %s348
      %s350 = smul.addr %s349, 8
      %s351 = scalar_lea.vmem %s6, %s350
      %p352 = pneg %p224
      %p353 = pneg %p221
      %p354 = scmp.lt.s32.totalorder %s23, 1
      %s355 = scalar_select %p354, %s23, 1
      %p356 = scmp.lt.s32.totalorder %s24, 8
      %s357 = scalar_select %p356, %s24, 8
      %s358 = smul.addr %s357, 2
      %s359 = smul.addr %s355, 18
      %s360 = sadd.s32 %s358, %s359
      %s361 = smul.addr %s360, 8
      %s362 = scalar_lea.vmem %s0, %s361
      %s363 = sadd.s32 %s24, 1
      %p364 = scmp.lt.s32.totalorder %s23, 1
      %s365 = scalar_select %p364, %s23, 1
      %p366 = scmp.lt.s32.totalorder %s363, 8
      %s367 = scalar_select %p366, %s363, 8
      %s368 = smul.addr %s367, 2
      %s369 = smul.addr %s365, 18
      %s370 = sadd.s32 %s368, %s369
      %s371 = smul.addr %s370, 8
      %s372 = scalar_lea.vmem %s1, %s371
      %s373 = sadd.s32 %s24, 1
      %s374 = smul.u32 2, %s24
      %p375 = scmp.lt.s32.totalorder %s23, 1
      %s376 = scalar_select %p375, %s23, 1
      %p377 = scmp.lt.s32.totalorder %s374, 15
      %s378 = scalar_select %p377, %s374, 15
      %s379 = smul.addr %s378, 2
      %s380 = smul.addr %s376, 32
      %s381 = sadd.s32 %s379, %s380
      %s382 = smul.addr %s381, 8
      %s383 = scalar_lea.vmem %s2, %s382
      %s384 = smul.u32 2, %s24
      %s385 = smul.u32 2, %s24
      %p386 = scmp.lt.s32.totalorder %s23, 1
      %s387 = scalar_select %p386, %s23, 1
      %p388 = scmp.lt.s32.totalorder %s385, 15
      %s389 = scalar_select %p388, %s385, 15
      %s390 = smul.addr %s389, 2
      %s391 = smul.addr %s387, 32
      %s392 = sadd.s32 %s390, %s391
      %s393 = smul.addr %s392, 8
      %s394 = scalar_lea.vmem %s6, %s393
      %s395 = smul.u32 2, %s24
      %p396 = scmp.eq.s32.totalorder %s23, 0
      %p397 = scmp.eq.s32.totalorder %s24, 0
      %p398 = pnand %p396, %p397
      %p399 = pneg %p398
      // Predicated region
      $region45: #{decoder_forward.5} parent=43 // pred_check
        _
      $region46: #{decoder_forward.5} parent=43 // pred_check_branch
        %401 = sbr.rel (%p398) target = $region48
      $region47: #{decoder_forward.5} parent=43 // pred_region
        %vm402 = vcmask 58368
        %403 = vst.msk [vmem:[%s7] sm:$0x3] %vm402, 0.0
      $region48: #{decoder_forward.5} parent=43 // pred_fallthru
        _
      %v404 = vld [vmem:[%s362] sm:$0xff]
      %v405 = vld [vmem:[%s362 + $0x8] sm:$0x1]
      %v406 = vld [vmem:[%s372] sm:$0xff]
      %v407 = vld [vmem:[%s372 + $0x8] sm:$0x1]
      %v408 = vld [vmem:[%s4] sm:$0x1]
      %s409 = scalar_lea.vmem %s3, 32
      %v410 = vld [vmem:[%s409] sm:$0xff]
      %v412 = vlaneseq
      %v413 = vshrl.u32 %v412, 7
      %v414 = vsub.s32 0, %v413
      %v415 = vrot.slane %v408, %v414
      %vm417 = vcmask 64512
      %v419 = vsel %vm417, %v404, 0
      %421 = vmatprep.subr.mxu0 0.0
      %422 = vmatpush1.msra.mxu0 0.0
      %423 = vmatprep.subr.mxu0 0.0
      %424 = vmatpush1.msra.mxu0 0.0
      %425 = vmatprep.subr.mxu0 0.0
      %426 = vmatpush1.msra.mxu0 0.0
      %427 = vmatprep.subr.mxu0 0.0
      %428 = vmatpush1.msra.mxu0 0.0
      %429 = vmatprep.subr.mxu0 0.0
      %430 = vmatpush1.msra.mxu0 0.0
      %431 = vmatprep.subr.mxu0 0.0
      %432 = vmatpush1.msra.mxu0 0.0
      %433 = vmatprep.subr.mxu0 0.0
      %434 = vmatpush1.msra.mxu0 0.0
      %435 = vmatprep.subr.mxu0 0.0
      %436 = vmatpush1.msra.mxu0 0.0
      %437 = vmatprep.subr.mxu0 0.0
      %438 = vmatpush1.msra.mxu0 0.0
      %439 = vmatprep.subr.mxu0 0.0
      %440 = vmatpush1.msra.mxu0 0.0
      %441 = vmatprep.subr.mxu0 0.0
      %442 = vmatpush1.msra.mxu0 0.0
      %443 = vmatprep.subr.mxu0 0.0
      %444 = vmatpush1.msra.mxu0 0.0
      %445 = vmatprep.subr.mxu0 0.0
      %446 = vmatpush1.msra.mxu0 0.0
      %447 = vmatprep.subr.mxu0 0.0
      %448 = vmatpush1.msra.mxu0 0.0
      %449 = vmatprep.subr.mxu0 0.0
      %450 = vmatpush1.msra.mxu0 0.0
      %451 = vmatprep.subr.mxu0 0.0
      %452 = vmatpush1.msra.mxu0 %v410
      %453 = vmatprep.subr.mxu0 0.0
      %454 = vmatpush2.msra.mxu0 0.0
      %455 = vmatprep.subr.mxu0 0.0
      %456 = vmatpush2.msra.mxu0 0.0
      %457 = vmatprep.subr.mxu0 0.0
      %458 = vmatpush2.msra.mxu0 0.0
      %459 = vmatprep.subr.mxu0 0.0
      %460 = vmatpush2.msra.mxu0 0.0
      %461 = vmatprep.subr.mxu0 0.0
      %462 = vmatpush2.msra.mxu0 0.0
      %463 = vmatprep.subr.mxu0 0.0
      %464 = vmatpush2.msra.mxu0 0.0
      %465 = vmatprep.subr.mxu0 0.0
      %466 = vmatpush2.msra.mxu0 0.0
      %467 = vmatprep.subr.mxu0 0.0
      %468 = vmatpush2.msra.mxu0 0.0
      %469 = vmatprep.subr.mxu0 0.0
      %470 = vmatpush2.msra.mxu0 0.0
      %471 = vmatprep.subr.mxu0 0.0
      %472 = vmatpush2.msra.mxu0 0.0
      %473 = vmatprep.subr.mxu0 0.0
      %474 = vmatpush2.msra.mxu0 0.0
      %475 = vmatprep.subr.mxu0 0.0
      %476 = vmatpush2.msra.mxu0 0.0
      %477 = vmatprep.subr.mxu0 0.0
      %478 = vmatpush2.msra.mxu0 0.0
      %479 = vmatprep.subr.mxu0 0.0
      %480 = vmatpush2.msra.mxu0 0.0
      %481 = vmatprep.subr.mxu0 0.0
      %482 = vmatpush2.msra.mxu0 0.0
      %483 = vmatprep.subr.mxu0 0.0
      %484 = vmatpush2.msra.mxu0 0.0
      %485 = vmatprep.mubr.f32.mxu0 0.0
      %486 = vmatmul.mubr.f32.gmra.mxu0 %v419
      %v487 = vpop.f32.mrf.mxu0
      %v488 = vadd.f32 %v415, %v487
      %v489 = vpop.f32.mrf.mxu0
      %490 = vdwg.mxu0
      %s491 = scalar_lea.vmem %s3, 24
      %v492 = vld [vmem:[%s491] sm:$0xff]
      %s493 = scalar_lea.vmem %s3, 40
      %v494 = vld [vmem:[%s493] sm:$0xff]
      %495 = vmatprep.subr.mxu0 0.0
      %496 = vmatpush1.msra.mxu0 0.0
      %497 = vmatprep.subr.mxu0 0.0
      %498 = vmatpush1.msra.mxu0 0.0
      %499 = vmatprep.subr.mxu0 0.0
      %500 = vmatpush1.msra.mxu0 0.0
      %501 = vmatprep.subr.mxu0 0.0
      %502 = vmatpush1.msra.mxu0 0.0
      %503 = vmatprep.subr.mxu0 0.0
      %504 = vmatpush1.msra.mxu0 0.0
      %505 = vmatprep.subr.mxu0 0.0
      %506 = vmatpush1.msra.mxu0 0.0
      %507 = vmatprep.subr.mxu0 0.0
      %508 = vmatpush1.msra.mxu0 0.0
      %509 = vmatprep.subr.mxu0 0.0
      %510 = vmatpush1.msra.mxu0 0.0
      %511 = vmatprep.subr.mxu0 0.0
      %512 = vmatpush1.msra.mxu0 0.0
      %513 = vmatprep.subr.mxu0 0.0
      %514 = vmatpush1.msra.mxu0 0.0
      %515 = vmatprep.subr.mxu0 0.0
      %516 = vmatpush1.msra.mxu0 0.0
      %517 = vmatprep.subr.mxu0 0.0
      %518 = vmatpush1.msra.mxu0 0.0
      %519 = vmatprep.subr.mxu0 0.0
      %520 = vmatpush1.msra.mxu0 0.0
      %521 = vmatprep.subr.mxu0 0.0
      %522 = vmatpush1.msra.mxu0 0.0
      %523 = vmatprep.subr.mxu0 0.0
      %524 = vmatpush1.msra.mxu0 0.0
      %525 = vmatprep.subr.mxu0 0.0
      %526 = vmatpush1.msra.mxu0 %v494
      %527 = vmatprep.subr.mxu0 0.0
      %528 = vmatpush2.msra.mxu0 0.0
      %529 = vmatprep.subr.mxu0 0.0
      %530 = vmatpush2.msra.mxu0 0.0
      %531 = vmatprep.subr.mxu0 0.0
      %532 = vmatpush2.msra.mxu0 0.0
      %533 = vmatprep.subr.mxu0 0.0
      %534 = vmatpush2.msra.mxu0 0.0
      %535 = vmatprep.subr.mxu0 0.0
      %536 = vmatpush2.msra.mxu0 0.0
      %537 = vmatprep.subr.mxu0 0.0
      %538 = vmatpush2.msra.mxu0 0.0
      %539 = vmatprep.subr.mxu0 0.0
      %540 = vmatpush2.msra.mxu0 0.0
      %541 = vmatprep.subr.mxu0 0.0
      %542 = vmatpush2.msra.mxu0 0.0
      %543 = vmatprep.subr.mxu0 0.0
      %544 = vmatpush2.msra.mxu0 0.0
      %545 = vmatprep.subr.mxu0 0.0
      %546 = vmatpush2.msra.mxu0 0.0
      %547 = vmatprep.subr.mxu0 0.0
      %548 = vmatpush2.msra.mxu0 0.0
      %549 = vmatprep.subr.mxu0 0.0
      %550 = vmatpush2.msra.mxu0 0.0
      %551 = vmatprep.subr.mxu0 0.0
      %552 = vmatpush2.msra.mxu0 0.0
      %553 = vmatprep.subr.mxu0 0.0
      %554 = vmatpush2.msra.mxu0 0.0
      %555 = vmatprep.subr.mxu0 0.0
      %556 = vmatpush2.msra.mxu0 0.0
      %557 = vmatprep.subr.mxu0 0.0
      %558 = vmatpush2.msra.mxu0 0.0
      %559 = vmatprep.mubr.f32.mxu0 0.0
      %560 = vmatmul.mubr.f32.gmra.mxu0 %v419
      %v561 = vpop.f32.mrf.mxu0
      %v562 = vadd.f32 0.0, %v561
      %v563 = vpop.f32.mrf.mxu0
      %564 = vdwg.mxu0
      %vm566 = vcmask 1046528
      %v567 = vrot.slane %v404, 1
      %v568 = vrot.slane %v405, 1
      %v569 = vsel %vm566, %v567, %v568
      %v570 = vsel %vm417, %v569, 0
      %572 = vmatprep.subr.mxu0 0.0
      %573 = vmatpush1.msra.mxu0 0.0
      %574 = vmatprep.subr.mxu0 0.0
      %575 = vmatpush1.msra.mxu0 0.0
      %576 = vmatprep.subr.mxu0 0.0
      %577 = vmatpush1.msra.mxu0 0.0
      %578 = vmatprep.subr.mxu0 0.0
      %579 = vmatpush1.msra.mxu0 0.0
      %580 = vmatprep.subr.mxu0 0.0
      %581 = vmatpush1.msra.mxu0 0.0
      %582 = vmatprep.subr.mxu0 0.0
      %583 = vmatpush1.msra.mxu0 0.0
      %584 = vmatprep.subr.mxu0 0.0
      %585 = vmatpush1.msra.mxu0 0.0
      %586 = vmatprep.subr.mxu0 0.0
      %587 = vmatpush1.msra.mxu0 0.0
      %588 = vmatprep.subr.mxu0 0.0
      %589 = vmatpush1.msra.mxu0 0.0
      %590 = vmatprep.subr.mxu0 0.0
      %591 = vmatpush1.msra.mxu0 0.0
      %592 = vmatprep.subr.mxu0 0.0
      %593 = vmatpush1.msra.mxu0 0.0
      %594 = vmatprep.subr.mxu0 0.0
      %595 = vmatpush1.msra.mxu0 0.0
      %596 = vmatprep.subr.mxu0 0.0
      %597 = vmatpush1.msra.mxu0 0.0
      %598 = vmatprep.subr.mxu0 0.0
      %599 = vmatpush1.msra.mxu0 0.0
      %600 = vmatprep.subr.mxu0 0.0
      %601 = vmatpush1.msra.mxu0 0.0
      %602 = vmatprep.subr.mxu0 0.0
      %603 = vmatpush1.msra.mxu0 %v492
      %604 = vmatprep.subr.mxu0 0.0
      %605 = vmatpush2.msra.mxu0 0.0
      %606 = vmatprep.subr.mxu0 0.0
      %607 = vmatpush2.msra.mxu0 0.0
      %608 = vmatprep.subr.mxu0 0.0
      %609 = vmatpush2.msra.mxu0 0.0
      %610 = vmatprep.subr.mxu0 0.0
      %611 = vmatpush2.msra.mxu0 0.0
      %612 = vmatprep.subr.mxu0 0.0
      %613 = vmatpush2.msra.mxu0 0.0
      %614 = vmatprep.subr.mxu0 0.0
      %615 = vmatpush2.msra.mxu0 0.0
      %616 = vmatprep.subr.mxu0 0.0
      %617 = vmatpush2.msra.mxu0 0.0
      %618 = vmatprep.subr.mxu0 0.0
      %619 = vmatpush2.msra.mxu0 0.0
      %620 = vmatprep.subr.mxu0 0.0
      %621 = vmatpush2.msra.mxu0 0.0
      %622 = vmatprep.subr.mxu0 0.0
      %623 = vmatpush2.msra.mxu0 0.0
      %624 = vmatprep.subr.mxu0 0.0
      %625 = vmatpush2.msra.mxu0 0.0
      %626 = vmatprep.subr.mxu0 0.0
      %627 = vmatpush2.msra.mxu0 0.0
      %628 = vmatprep.subr.mxu0 0.0
      %629 = vmatpush2.msra.mxu0 0.0
      %630 = vmatprep.subr.mxu0 0.0
      %631 = vmatpush2.msra.mxu0 0.0
      %632 = vmatprep.subr.mxu0 0.0
      %633 = vmatpush2.msra.mxu0 0.0
      %634 = vmatprep.subr.mxu0 0.0
      %635 = vmatpush2.msra.mxu0 0.0
      %636 = vmatprep.mubr.f32.mxu0 0.0
      %637 = vmatmul.mubr.f32.gmra.mxu0 %v570
      %v638 = vpop.f32.mrf.mxu0
      %v639 = vadd.f32 %v562, %v638
      %v640 = vpop.f32.mrf.mxu0
      %641 = vdwg.mxu0
      %v642 = vadd.f32 %v639, %v415
      %s643 = scalar_lea.vmem %s3, 8
      %v644 = vld [vmem:[%s643] sm:$0xff]
      %s645 = scalar_lea.vmem %s3, 56
      %v646 = vld [vmem:[%s645] sm:$0xff]
      %647 = vmatprep.subr.mxu0 0.0
      %648 = vmatpush1.msra.mxu0 0.0
      %649 = vmatprep.subr.mxu0 0.0
      %650 = vmatpush1.msra.mxu0 0.0
      %651 = vmatprep.subr.mxu0 0.0
      %652 = vmatpush1.msra.mxu0 0.0
      %653 = vmatprep.subr.mxu0 0.0
      %654 = vmatpush1.msra.mxu0 0.0
      %655 = vmatprep.subr.mxu0 0.0
      %656 = vmatpush1.msra.mxu0 0.0
      %657 = vmatprep.subr.mxu0 0.0
      %658 = vmatpush1.msra.mxu0 0.0
      %659 = vmatprep.subr.mxu0 0.0
      %660 = vmatpush1.msra.mxu0 0.0
      %661 = vmatprep.subr.mxu0 0.0
      %662 = vmatpush1.msra.mxu0 0.0
      %663 = vmatprep.subr.mxu0 0.0
      %664 = vmatpush1.msra.mxu0 0.0
      %665 = vmatprep.subr.mxu0 0.0
      %666 = vmatpush1.msra.mxu0 0.0
      %667 = vmatprep.subr.mxu0 0.0
      %668 = vmatpush1.msra.mxu0 0.0
      %669 = vmatprep.subr.mxu0 0.0
      %670 = vmatpush1.msra.mxu0 0.0
      %671 = vmatprep.subr.mxu0 0.0
      %672 = vmatpush1.msra.mxu0 0.0
      %673 = vmatprep.subr.mxu0 0.0
      %674 = vmatpush1.msra.mxu0 0.0
      %675 = vmatprep.subr.mxu0 0.0
      %676 = vmatpush1.msra.mxu0 0.0
      %677 = vmatprep.subr.mxu0 0.0
      %678 = vmatpush1.msra.mxu0 %v646
      %679 = vmatprep.subr.mxu0 0.0
      %680 = vmatpush2.msra.mxu0 0.0
      %681 = vmatprep.subr.mxu0 0.0
      %682 = vmatpush2.msra.mxu0 0.0
      %683 = vmatprep.subr.mxu0 0.0
      %684 = vmatpush2.msra.mxu0 0.0
      %685 = vmatprep.subr.mxu0 0.0
      %686 = vmatpush2.msra.mxu0 0.0
      %687 = vmatprep.subr.mxu0 0.0
      %688 = vmatpush2.msra.mxu0 0.0
      %689 = vmatprep.subr.mxu0 0.0
      %690 = vmatpush2.msra.mxu0 0.0
      %691 = vmatprep.subr.mxu0 0.0
      %692 = vmatpush2.msra.mxu0 0.0
      %693 = vmatprep.subr.mxu0 0.0
      %694 = vmatpush2.msra.mxu0 0.0
      %695 = vmatprep.subr.mxu0 0.0
      %696 = vmatpush2.msra.mxu0 0.0
      %697 = vmatprep.subr.mxu0 0.0
      %698 = vmatpush2.msra.mxu0 0.0
      %699 = vmatprep.subr.mxu0 0.0
      %700 = vmatpush2.msra.mxu0 0.0
      %701 = vmatprep.subr.mxu0 0.0
      %702 = vmatpush2.msra.mxu0 0.0
      %703 = vmatprep.subr.mxu0 0.0
      %704 = vmatpush2.msra.mxu0 0.0
      %705 = vmatprep.subr.mxu0 0.0
      %706 = vmatpush2.msra.mxu0 0.0
      %707 = vmatprep.subr.mxu0 0.0
      %708 = vmatpush2.msra.mxu0 0.0
      %709 = vmatprep.subr.mxu0 0.0
      %710 = vmatpush2.msra.mxu0 0.0
      %711 = vmatprep.mubr.f32.mxu0 0.0
      %712 = vmatmul.mubr.f32.gmra.mxu0 %v419
      %v713 = vpop.f32.mrf.mxu0
      %v714 = vadd.f32 0.0, %v713
      %v715 = vpop.f32.mrf.mxu0
      %716 = vdwg.mxu0
      %v718 = vsel %vm417, %v406, 0
      %720 = vmatprep.subr.mxu0 0.0
      %721 = vmatpush1.msra.mxu0 0.0
      %722 = vmatprep.subr.mxu0 0.0
      %723 = vmatpush1.msra.mxu0 0.0
      %724 = vmatprep.subr.mxu0 0.0
      %725 = vmatpush1.msra.mxu0 0.0
      %726 = vmatprep.subr.mxu0 0.0
      %727 = vmatpush1.msra.mxu0 0.0
      %728 = vmatprep.subr.mxu0 0.0
      %729 = vmatpush1.msra.mxu0 0.0
      %730 = vmatprep.subr.mxu0 0.0
      %731 = vmatpush1.msra.mxu0 0.0
      %732 = vmatprep.subr.mxu0 0.0
      %733 = vmatpush1.msra.mxu0 0.0
      %734 = vmatprep.subr.mxu0 0.0
      %735 = vmatpush1.msra.mxu0 0.0
      %736 = vmatprep.subr.mxu0 0.0
      %737 = vmatpush1.msra.mxu0 0.0
      %738 = vmatprep.subr.mxu0 0.0
      %739 = vmatpush1.msra.mxu0 0.0
      %740 = vmatprep.subr.mxu0 0.0
      %741 = vmatpush1.msra.mxu0 0.0
      %742 = vmatprep.subr.mxu0 0.0
      %743 = vmatpush1.msra.mxu0 0.0
      %744 = vmatprep.subr.mxu0 0.0
      %745 = vmatpush1.msra.mxu0 0.0
      %746 = vmatprep.subr.mxu0 0.0
      %747 = vmatpush1.msra.mxu0 0.0
      %748 = vmatprep.subr.mxu0 0.0
      %749 = vmatpush1.msra.mxu0 0.0
      %750 = vmatprep.subr.mxu0 0.0
      %751 = vmatpush1.msra.mxu0 %v644
      %752 = vmatprep.subr.mxu0 0.0
      %753 = vmatpush2.msra.mxu0 0.0
      %754 = vmatprep.subr.mxu0 0.0
      %755 = vmatpush2.msra.mxu0 0.0
      %756 = vmatprep.subr.mxu0 0.0
      %757 = vmatpush2.msra.mxu0 0.0
      %758 = vmatprep.subr.mxu0 0.0
      %759 = vmatpush2.msra.mxu0 0.0
      %760 = vmatprep.subr.mxu0 0.0
      %761 = vmatpush2.msra.mxu0 0.0
      %762 = vmatprep.subr.mxu0 0.0
      %763 = vmatpush2.msra.mxu0 0.0
      %764 = vmatprep.subr.mxu0 0.0
      %765 = vmatpush2.msra.mxu0 0.0
      %766 = vmatprep.subr.mxu0 0.0
      %767 = vmatpush2.msra.mxu0 0.0
      %768 = vmatprep.subr.mxu0 0.0
      %769 = vmatpush2.msra.mxu0 0.0
      %770 = vmatprep.subr.mxu0 0.0
      %771 = vmatpush2.msra.mxu0 0.0
      %772 = vmatprep.subr.mxu0 0.0
      %773 = vmatpush2.msra.mxu0 0.0
      %774 = vmatprep.subr.mxu0 0.0
      %775 = vmatpush2.msra.mxu0 0.0
      %776 = vmatprep.subr.mxu0 0.0
      %777 = vmatpush2.msra.mxu0 0.0
      %778 = vmatprep.subr.mxu0 0.0
      %779 = vmatpush2.msra.mxu0 0.0
      %780 = vmatprep.subr.mxu0 0.0
      %781 = vmatpush2.msra.mxu0 0.0
      %782 = vmatprep.subr.mxu0 0.0
      %783 = vmatpush2.msra.mxu0 0.0
      %784 = vmatprep.mubr.f32.mxu0 0.0
      %785 = vmatmul.mubr.f32.gmra.mxu0 %v718
      %v786 = vpop.f32.mrf.mxu0
      %v787 = vadd.f32 %v714, %v786
      %v788 = vpop.f32.mrf.mxu0
      %789 = vdwg.mxu0
      %v790 = vadd.f32 %v787, %v415
      %v791 = vld [vmem:[%s3] sm:$0xff]
      %s792 = scalar_lea.vmem %s3, 16
      %v793 = vld [vmem:[%s792] sm:$0xff]
      %794 = vmatprep.subr.mxu0 0.0
      %795 = vmatpush1.msra.mxu0 0.0
      %796 = vmatprep.subr.mxu0 0.0
      %797 = vmatpush1.msra.mxu0 0.0
      %798 = vmatprep.subr.mxu0 0.0
      %799 = vmatpush1.msra.mxu0 0.0
      %800 = vmatprep.subr.mxu0 0.0
      %801 = vmatpush1.msra.mxu0 0.0
      %802 = vmatprep.subr.mxu0 0.0
      %803 = vmatpush1.msra.mxu0 0.0
      %804 = vmatprep.subr.mxu0 0.0
      %805 = vmatpush1.msra.mxu0 0.0
      %806 = vmatprep.subr.mxu0 0.0
      %807 = vmatpush1.msra.mxu0 0.0
      %808 = vmatprep.subr.mxu0 0.0
      %809 = vmatpush1.msra.mxu0 0.0
      %810 = vmatprep.subr.mxu0 0.0
      %811 = vmatpush1.msra.mxu0 0.0
      %812 = vmatprep.subr.mxu0 0.0
      %813 = vmatpush1.msra.mxu0 0.0
      %814 = vmatprep.subr.mxu0 0.0
      %815 = vmatpush1.msra.mxu0 0.0
      %816 = vmatprep.subr.mxu0 0.0
      %817 = vmatpush1.msra.mxu0 0.0
      %818 = vmatprep.subr.mxu0 0.0
      %819 = vmatpush1.msra.mxu0 0.0
      %820 = vmatprep.subr.mxu0 0.0
      %821 = vmatpush1.msra.mxu0 0.0
      %822 = vmatprep.subr.mxu0 0.0
      %823 = vmatpush1.msra.mxu0 0.0
      %824 = vmatprep.subr.mxu0 0.0
      %825 = vmatpush1.msra.mxu0 %v793
      %826 = vmatprep.subr.mxu0 0.0
      %827 = vmatpush2.msra.mxu0 0.0
      %828 = vmatprep.subr.mxu0 0.0
      %829 = vmatpush2.msra.mxu0 0.0
      %830 = vmatprep.subr.mxu0 0.0
      %831 = vmatpush2.msra.mxu0 0.0
      %832 = vmatprep.subr.mxu0 0.0
      %833 = vmatpush2.msra.mxu0 0.0
      %834 = vmatprep.subr.mxu0 0.0
      %835 = vmatpush2.msra.mxu0 0.0
      %836 = vmatprep.subr.mxu0 0.0
      %837 = vmatpush2.msra.mxu0 0.0
      %838 = vmatprep.subr.mxu0 0.0
      %839 = vmatpush2.msra.mxu0 0.0
      %840 = vmatprep.subr.mxu0 0.0
      %841 = vmatpush2.msra.mxu0 0.0
      %842 = vmatprep.subr.mxu0 0.0
      %843 = vmatpush2.msra.mxu0 0.0
      %844 = vmatprep.subr.mxu0 0.0
      %845 = vmatpush2.msra.mxu0 0.0
      %846 = vmatprep.subr.mxu0 0.0
      %847 = vmatpush2.msra.mxu0 0.0
      %848 = vmatprep.subr.mxu0 0.0
      %849 = vmatpush2.msra.mxu0 0.0
      %850 = vmatprep.subr.mxu0 0.0
      %851 = vmatpush2.msra.mxu0 0.0
      %852 = vmatprep.subr.mxu0 0.0
      %853 = vmatpush2.msra.mxu0 0.0
      %854 = vmatprep.subr.mxu0 0.0
      %855 = vmatpush2.msra.mxu0 0.0
      %856 = vmatprep.subr.mxu0 0.0
      %857 = vmatpush2.msra.mxu0 0.0
      %858 = vmatprep.mubr.f32.mxu0 0.0
      %859 = vmatmul.mubr.f32.gmra.mxu0 %v718
      %v860 = vpop.f32.mrf.mxu0
      %v861 = vadd.f32 0.0, %v860
      %v862 = vpop.f32.mrf.mxu0
      %863 = vdwg.mxu0
      %v865 = vrot.slane %v406, 1
      %v866 = vrot.slane %v407, 1
      %v867 = vsel %vm566, %v865, %v866
      %v868 = vsel %vm417, %v867, 0
      %870 = vmatprep.subr.mxu0 0.0
      %871 = vmatpush1.msra.mxu0 0.0
      %872 = vmatprep.subr.mxu0 0.0
      %873 = vmatpush1.msra.mxu0 0.0
      %874 = vmatprep.subr.mxu0 0.0
      %875 = vmatpush1.msra.mxu0 0.0
      %876 = vmatprep.subr.mxu0 0.0
      %877 = vmatpush1.msra.mxu0 0.0
      %878 = vmatprep.subr.mxu0 0.0
      %879 = vmatpush1.msra.mxu0 0.0
      %880 = vmatprep.subr.mxu0 0.0
      %881 = vmatpush1.msra.mxu0 0.0
      %882 = vmatprep.subr.mxu0 0.0
      %883 = vmatpush1.msra.mxu0 0.0
      %884 = vmatprep.subr.mxu0 0.0
      %885 = vmatpush1.msra.mxu0 0.0
      %886 = vmatprep.subr.mxu0 0.0
      %887 = vmatpush1.msra.mxu0 0.0
      %888 = vmatprep.subr.mxu0 0.0
      %889 = vmatpush1.msra.mxu0 0.0
      %890 = vmatprep.subr.mxu0 0.0
      %891 = vmatpush1.msra.mxu0 0.0
      %892 = vmatprep.subr.mxu0 0.0
      %893 = vmatpush1.msra.mxu0 0.0
      %894 = vmatprep.subr.mxu0 0.0
      %895 = vmatpush1.msra.mxu0 0.0
      %896 = vmatprep.subr.mxu0 0.0
      %897 = vmatpush1.msra.mxu0 0.0
      %898 = vmatprep.subr.mxu0 0.0
      %899 = vmatpush1.msra.mxu0 0.0
      %900 = vmatprep.subr.mxu0 0.0
      %901 = vmatpush1.msra.mxu0 %v791
      %902 = vmatprep.subr.mxu0 0.0
      %903 = vmatpush2.msra.mxu0 0.0
      %904 = vmatprep.subr.mxu0 0.0
      %905 = vmatpush2.msra.mxu0 0.0
      %906 = vmatprep.subr.mxu0 0.0
      %907 = vmatpush2.msra.mxu0 0.0
      %908 = vmatprep.subr.mxu0 0.0
      %909 = vmatpush2.msra.mxu0 0.0
      %910 = vmatprep.subr.mxu0 0.0
      %911 = vmatpush2.msra.mxu0 0.0
      %912 = vmatprep.subr.mxu0 0.0
      %913 = vmatpush2.msra.mxu0 0.0
      %914 = vmatprep.subr.mxu0 0.0
      %915 = vmatpush2.msra.mxu0 0.0
      %916 = vmatprep.subr.mxu0 0.0
      %917 = vmatpush2.msra.mxu0 0.0
      %918 = vmatprep.subr.mxu0 0.0
      %919 = vmatpush2.msra.mxu0 0.0
      %920 = vmatprep.subr.mxu0 0.0
      %921 = vmatpush2.msra.mxu0 0.0
      %922 = vmatprep.subr.mxu0 0.0
      %923 = vmatpush2.msra.mxu0 0.0
      %924 = vmatprep.subr.mxu0 0.0
      %925 = vmatpush2.msra.mxu0 0.0
      %926 = vmatprep.subr.mxu0 0.0
      %927 = vmatpush2.msra.mxu0 0.0
      %928 = vmatprep.subr.mxu0 0.0
      %929 = vmatpush2.msra.mxu0 0.0
      %930 = vmatprep.subr.mxu0 0.0
      %931 = vmatpush2.msra.mxu0 0.0
      %932 = vmatprep.subr.mxu0 0.0
      %933 = vmatpush2.msra.mxu0 0.0
      %934 = vmatprep.mubr.f32.mxu0 0.0
      %935 = vmatmul.mubr.f32.gmra.mxu0 %v868
      %v936 = vpop.f32.mrf.mxu0
      %v937 = vadd.f32 %v861, %v936
      %v938 = vpop.f32.mrf.mxu0
      %939 = vdwg.mxu0
      %s940 = scalar_lea.vmem %s3, 48
      %v941 = vld [vmem:[%s940] sm:$0xff]
      %942 = vmatprep.subr.mxu0 0.0
      %943 = vmatpush1.msra.mxu0 0.0
      %944 = vmatprep.subr.mxu0 0.0
      %945 = vmatpush1.msra.mxu0 0.0
      %946 = vmatprep.subr.mxu0 0.0
      %947 = vmatpush1.msra.mxu0 0.0
      %948 = vmatprep.subr.mxu0 0.0
      %949 = vmatpush1.msra.mxu0 0.0
      %950 = vmatprep.subr.mxu0 0.0
      %951 = vmatpush1.msra.mxu0 0.0
      %952 = vmatprep.subr.mxu0 0.0
      %953 = vmatpush1.msra.mxu0 0.0
      %954 = vmatprep.subr.mxu0 0.0
      %955 = vmatpush1.msra.mxu0 0.0
      %956 = vmatprep.subr.mxu0 0.0
      %957 = vmatpush1.msra.mxu0 0.0
      %958 = vmatprep.subr.mxu0 0.0
      %959 = vmatpush1.msra.mxu0 0.0
      %960 = vmatprep.subr.mxu0 0.0
      %961 = vmatpush1.msra.mxu0 0.0
      %962 = vmatprep.subr.mxu0 0.0
      %963 = vmatpush1.msra.mxu0 0.0
      %964 = vmatprep.subr.mxu0 0.0
      %965 = vmatpush1.msra.mxu0 0.0
      %966 = vmatprep.subr.mxu0 0.0
      %967 = vmatpush1.msra.mxu0 0.0
      %968 = vmatprep.subr.mxu0 0.0
      %969 = vmatpush1.msra.mxu0 0.0
      %970 = vmatprep.subr.mxu0 0.0
      %971 = vmatpush1.msra.mxu0 0.0
      %972 = vmatprep.subr.mxu0 0.0
      %973 = vmatpush1.msra.mxu0 %v941
      %974 = vmatprep.subr.mxu0 0.0
      %975 = vmatpush2.msra.mxu0 0.0
      %976 = vmatprep.subr.mxu0 0.0
      %977 = vmatpush2.msra.mxu0 0.0
      %978 = vmatprep.subr.mxu0 0.0
      %979 = vmatpush2.msra.mxu0 0.0
      %980 = vmatprep.subr.mxu0 0.0
      %981 = vmatpush2.msra.mxu0 0.0
      %982 = vmatprep.subr.mxu0 0.0
      %983 = vmatpush2.msra.mxu0 0.0
      %984 = vmatprep.subr.mxu0 0.0
      %985 = vmatpush2.msra.mxu0 0.0
      %986 = vmatprep.subr.mxu0 0.0
      %987 = vmatpush2.msra.mxu0 0.0
      %988 = vmatprep.subr.mxu0 0.0
      %989 = vmatpush2.msra.mxu0 0.0
      %990 = vmatprep.subr.mxu0 0.0
      %991 = vmatpush2.msra.mxu0 0.0
      %992 = vmatprep.subr.mxu0 0.0
      %993 = vmatpush2.msra.mxu0 0.0
      %994 = vmatprep.subr.mxu0 0.0
      %995 = vmatpush2.msra.mxu0 0.0
      %996 = vmatprep.subr.mxu0 0.0
      %997 = vmatpush2.msra.mxu0 0.0
      %998 = vmatprep.subr.mxu0 0.0
      %999 = vmatpush2.msra.mxu0 0.0
      %1000 = vmatprep.subr.mxu0 0.0
      %1001 = vmatpush2.msra.mxu0 0.0
      %1002 = vmatprep.subr.mxu0 0.0
      %1003 = vmatpush2.msra.mxu0 0.0
      %1004 = vmatprep.subr.mxu0 0.0
      %1005 = vmatpush2.msra.mxu0 0.0
      %1006 = vmatprep.mubr.f32.mxu0 0.0
      %1007 = vmatmul.mubr.f32.gmra.mxu0 %v570
      %v1008 = vpop.f32.mrf.mxu0
      %v1009 = vadd.f32 0.0, %v1008
      %v1010 = vpop.f32.mrf.mxu0
      %1011 = vdwg.mxu0
      %v1012 = vadd.f32 %v937, %v1009
      %s1013 = scalar_lea.vmem %s3, 64
      %v1014 = vld [vmem:[%s1013] sm:$0xff]
      %1015 = vmatprep.subr.mxu0 0.0
      %1016 = vmatpush1.msra.mxu0 0.0
      %1017 = vmatprep.subr.mxu0 0.0
      %1018 = vmatpush1.msra.mxu0 0.0
      %1019 = vmatprep.subr.mxu0 0.0
      %1020 = vmatpush1.msra.mxu0 0.0
      %1021 = vmatprep.subr.mxu0 0.0
      %1022 = vmatpush1.msra.mxu0 0.0
      %1023 = vmatprep.subr.mxu0 0.0
      %1024 = vmatpush1.msra.mxu0 0.0
      %1025 = vmatprep.subr.mxu0 0.0
      %1026 = vmatpush1.msra.mxu0 0.0
      %1027 = vmatprep.subr.mxu0 0.0
      %1028 = vmatpush1.msra.mxu0 0.0
      %1029 = vmatprep.subr.mxu0 0.0
      %1030 = vmatpush1.msra.mxu0 0.0
      %1031 = vmatprep.subr.mxu0 0.0
      %1032 = vmatpush1.msra.mxu0 0.0
      %1033 = vmatprep.subr.mxu0 0.0
      %1034 = vmatpush1.msra.mxu0 0.0
      %1035 = vmatprep.subr.mxu0 0.0
      %1036 = vmatpush1.msra.mxu0 0.0
      %1037 = vmatprep.subr.mxu0 0.0
      %1038 = vmatpush1.msra.mxu0 0.0
      %1039 = vmatprep.subr.mxu0 0.0
      %1040 = vmatpush1.msra.mxu0 0.0
      %1041 = vmatprep.subr.mxu0 0.0
      %1042 = vmatpush1.msra.mxu0 0.0
      %1043 = vmatprep.subr.mxu0 0.0
      %1044 = vmatpush1.msra.mxu0 0.0
      %1045 = vmatprep.subr.mxu0 0.0
      %1046 = vmatpush1.msra.mxu0 %v1014
      %1047 = vmatprep.subr.mxu0 0.0
      %1048 = vmatpush2.msra.mxu0 0.0
      %1049 = vmatprep.subr.mxu0 0.0
      %1050 = vmatpush2.msra.mxu0 0.0
      %1051 = vmatprep.subr.mxu0 0.0
      %1052 = vmatpush2.msra.mxu0 0.0
      %1053 = vmatprep.subr.mxu0 0.0
      %1054 = vmatpush2.msra.mxu0 0.0
      %1055 = vmatprep.subr.mxu0 0.0
      %1056 = vmatpush2.msra.mxu0 0.0
      %1057 = vmatprep.subr.mxu0 0.0
      %1058 = vmatpush2.msra.mxu0 0.0
      %1059 = vmatprep.subr.mxu0 0.0
      %1060 = vmatpush2.msra.mxu0 0.0
      %1061 = vmatprep.subr.mxu0 0.0
      %1062 = vmatpush2.msra.mxu0 0.0
      %1063 = vmatprep.subr.mxu0 0.0
      %1064 = vmatpush2.msra.mxu0 0.0
      %1065 = vmatprep.subr.mxu0 0.0
      %1066 = vmatpush2.msra.mxu0 0.0
      %1067 = vmatprep.subr.mxu0 0.0
      %1068 = vmatpush2.msra.mxu0 0.0
      %1069 = vmatprep.subr.mxu0 0.0
      %1070 = vmatpush2.msra.mxu0 0.0
      %1071 = vmatprep.subr.mxu0 0.0
      %1072 = vmatpush2.msra.mxu0 0.0
      %1073 = vmatprep.subr.mxu0 0.0
      %1074 = vmatpush2.msra.mxu0 0.0
      %1075 = vmatprep.subr.mxu0 0.0
      %1076 = vmatpush2.msra.mxu0 0.0
      %1077 = vmatprep.subr.mxu0 0.0
      %1078 = vmatpush2.msra.mxu0 0.0
      %1079 = vmatprep.mubr.f32.mxu0 0.0
      %1080 = vmatmul.mubr.f32.gmra.mxu0 %v419
      %v1081 = vpop.f32.mrf.mxu0
      %v1082 = vadd.f32 0.0, %v1081
      %v1083 = vpop.f32.mrf.mxu0
      %1084 = vdwg.mxu0
      %v1085 = vadd.f32 %v1012, %v1082
      %v1086 = vadd.f32 %v1085, %v415
      %1087 = vst.msk [vmem:[%s394] sm:$0xff] %vm417, %v488
      %s1088 = scalar_lea.vmem %s394, 8
      %1089 = vst.msk [vmem:[%s1088] sm:$0xff] %vm417, %v642
      %s1090 = scalar_lea.vmem %s394, 16
      %1091 = vst.msk [vmem:[%s1090] sm:$0xff] %vm417, %v790
      %s1092 = scalar_lea.vmem %s394, 24
      %1093 = vst.msk [vmem:[%s1092] sm:$0xff] %vm417, %v1086
      %v1094 = vsel %vm417, %v488, 0.0
      %v1095 = vrot.slane %v1094, 4
      %v1096 = vadd.f32 %v1094, %v1095
      %v1097 = vrot.slane %v1096, 2
      %v1098 = vadd.f32 %v1096, %v1097
      %v1099 = vrot.slane %v1098, 1
      %v1100 = vadd.f32 %v1098, %v1099
      %v1101 = vsel %vm417, %v642, 0.0
      %v1102 = vrot.slane %v1101, 4
      %v1103 = vadd.f32 %v1101, %v1102
      %v1104 = vrot.slane %v1103, 2
      %v1105 = vadd.f32 %v1103, %v1104
      %v1106 = vrot.slane %v1105, 1
      %v1107 = vadd.f32 %v1105, %v1106
      %v1108 = vadd.f32 %v1100, %v1107
      %v1109 = vsel %vm417, %v790, 0.0
      %v1110 = vrot.slane %v1109, 4
      %v1111 = vadd.f32 %v1109, %v1110
      %v1112 = vrot.slane %v1111, 2
      %v1113 = vadd.f32 %v1111, %v1112
      %v1114 = vrot.slane %v1113, 1
      %v1115 = vadd.f32 %v1113, %v1114
      %v1116 = vadd.f32 %v1108, %v1115
      %v1117 = vsel %vm417, %v1086, 0.0
      %v1118 = vrot.slane %v1117, 4
      %v1119 = vadd.f32 %v1117, %v1118
      %v1120 = vrot.slane %v1119, 2
      %v1121 = vadd.f32 %v1119, %v1120
      %v1122 = vrot.slane %v1121, 1
      %v1123 = vadd.f32 %v1121, %v1122
      %v1124 = vadd.f32 %v1116, %v1123
      %v1125 = vmul.f32 %v488, %v488
      %v1126 = vsel %vm417, %v1125, 0.0
      %v1127 = vrot.slane %v1126, 4
      %v1128 = vadd.f32 %v1126, %v1127
      %v1129 = vrot.slane %v1128, 2
      %v1130 = vadd.f32 %v1128, %v1129
      %v1131 = vrot.slane %v1130, 1
      %v1132 = vadd.f32 %v1130, %v1131
      %v1133 = vmul.f32 %v642, %v642
      %v1134 = vsel %vm417, %v1133, 0.0
      %v1135 = vrot.slane %v1134, 4
      %v1136 = vadd.f32 %v1134, %v1135
      %v1137 = vrot.slane %v1136, 2
      %v1138 = vadd.f32 %v1136, %v1137
      %v1139 = vrot.slane %v1138, 1
      %v1140 = vadd.f32 %v1138, %v1139
      %v1141 = vadd.f32 %v1132, %v1140
      %v1142 = vmul.f32 %v790, %v790
      %v1143 = vsel %vm417, %v1142, 0.0
      %v1144 = vrot.slane %v1143, 4
      %v1145 = vadd.f32 %v1143, %v1144
      %v1146 = vrot.slane %v1145, 2
      %v1147 = vadd.f32 %v1145, %v1146
      %v1148 = vrot.slane %v1147, 1
      %v1149 = vadd.f32 %v1147, %v1148
      %v1150 = vadd.f32 %v1141, %v1149
      %v1151 = vmul.f32 %v1086, %v1086
      %v1152 = vsel %vm417, %v1151, 0.0
      %v1153 = vrot.slane %v1152, 4
      %v1154 = vadd.f32 %v1152, %v1153
      %v1155 = vrot.slane %v1154, 2
      %v1156 = vadd.f32 %v1154, %v1155
      %v1157 = vrot.slane %v1156, 1
      %v1158 = vadd.f32 %v1156, %v1157
      %v1159 = vadd.f32 %v1150, %v1158
      %v1160 = vld [vmem:[%s383] sm:$0xff]
      %v1161 = vld [vmem:[%s383 + $0x8] sm:$0xff]
      %v1162 = vld [vmem:[%s5] sm:$0xf]
      %vm1163 = vcmask 31744
      %v1165 = vsel %vm1163, %v1160, 0
      %v1168 = vsel %vm1163, %v1161, 0
      %vm1170 = vcmask 1043456
      %v1172 = vsel %vm1170, %v1162, 0
      %1174 = vmatprep.subr.mxu0 0.0
      %1175 = vmatpush1.msra.mxu0 0.0
      %1176 = vmatprep.subr.mxu0 0.0
      %1177 = vmatpush1.msra.mxu0 0.0
      %1178 = vmatprep.subr.mxu0 0.0
      %1179 = vmatpush1.msra.mxu0 0.0
      %1180 = vmatprep.subr.mxu0 0.0
      %1181 = vmatpush1.msra.mxu0 0.0
      %1182 = vmatprep.subr.mxu0 0.0
      %1183 = vmatpush1.msra.mxu0 0.0
      %1184 = vmatprep.subr.mxu0 0.0
      %1185 = vmatpush1.msra.mxu0 0.0
      %1186 = vmatprep.subr.mxu0 0.0
      %1187 = vmatpush1.msra.mxu0 0.0
      %1188 = vmatprep.subr.mxu0 0.0
      %1189 = vmatpush1.msra.mxu0 0.0
      %1190 = vmatprep.subr.mxu0 0.0
      %1191 = vmatpush1.msra.mxu0 0.0
      %1192 = vmatprep.subr.mxu0 0.0
      %1193 = vmatpush1.msra.mxu0 0.0
      %1194 = vmatprep.subr.mxu0 0.0
      %1195 = vmatpush1.msra.mxu0 0.0
      %1196 = vmatprep.subr.mxu0 0.0
      %1197 = vmatpush1.msra.mxu0 0.0
      %1198 = vmatprep.subr.mxu0 0.0
      %1199 = vmatpush1.msra.mxu0 0.0
      %1200 = vmatprep.subr.mxu0 0.0
      %1201 = vmatpush1.msra.mxu0 0.0
      %1202 = vmatprep.subr.mxu0 0.0
      %1203 = vmatpush1.msra.mxu0 0.0
      %1204 = vmatprep.subr.mxu0 0.0
      %1205 = vmatpush1.msra.mxu0 %v1172
      %1206 = vmatprep.subr.mxu0 0.0
      %1207 = vmatpush2.msra.mxu0 0.0
      %1208 = vmatprep.subr.mxu0 0.0
      %1209 = vmatpush2.msra.mxu0 0.0
      %1210 = vmatprep.subr.mxu0 0.0
      %1211 = vmatpush2.msra.mxu0 0.0
      %1212 = vmatprep.subr.mxu0 0.0
      %1213 = vmatpush2.msra.mxu0 0.0
      %1214 = vmatprep.subr.mxu0 0.0
      %1215 = vmatpush2.msra.mxu0 0.0
      %1216 = vmatprep.subr.mxu0 0.0
      %1217 = vmatpush2.msra.mxu0 0.0
      %1218 = vmatprep.subr.mxu0 0.0
      %1219 = vmatpush2.msra.mxu0 0.0
      %1220 = vmatprep.subr.mxu0 0.0
      %1221 = vmatpush2.msra.mxu0 0.0
      %1222 = vmatprep.subr.mxu0 0.0
      %1223 = vmatpush2.msra.mxu0 0.0
      %1224 = vmatprep.subr.mxu0 0.0
      %1225 = vmatpush2.msra.mxu0 0.0
      %1226 = vmatprep.subr.mxu0 0.0
      %1227 = vmatpush2.msra.mxu0 0.0
      %1228 = vmatprep.subr.mxu0 0.0
      %1229 = vmatpush2.msra.mxu0 0.0
      %1230 = vmatprep.subr.mxu0 0.0
      %1231 = vmatpush2.msra.mxu0 0.0
      %1232 = vmatprep.subr.mxu0 0.0
      %1233 = vmatpush2.msra.mxu0 0.0
      %1234 = vmatprep.subr.mxu0 0.0
      %1235 = vmatpush2.msra.mxu0 0.0
      %1236 = vmatprep.subr.mxu0 0.0
      %1237 = vmatpush2.msra.mxu0 0.0
      %1238 = vmatprep.mubr.f32.mxu0 0.0
      %1239 = vmatmul.mubr.f32.gmra.mxu0 %v1165
      %v1240 = vpop.f32.mrf.mxu0
      %v1241 = vadd.f32 0.0, %v1240
      %v1242 = vpop.f32.mrf.mxu0
      %1243 = vmatprep.mubr.f32.mxu0 0.0
      %1244 = vmatmul.mubr.f32.gmra.mxu0 %v1168
      %v1245 = vpop.f32.mrf.mxu0
      %v1246 = vadd.f32 0.0, %v1245
      %v1247 = vpop.f32.mrf.mxu0
      %1248 = vdwg.mxu0
      %s1249 = scalar_lea.vmem %s383, 16
      %v1250 = vld [vmem:[%s1249] sm:$0xff]
      %v1251 = vld [vmem:[%s1249 + $0x8] sm:$0xff]
      %v1253 = vsel %vm1163, %v1250, 0
      %v1256 = vsel %vm1163, %v1251, 0
      %1258 = vmatprep.subr.mxu0 0.0
      %1259 = vmatpush1.msra.mxu0 0.0
      %1260 = vmatprep.subr.mxu0 0.0
      %1261 = vmatpush1.msra.mxu0 0.0
      %1262 = vmatprep.subr.mxu0 0.0
      %1263 = vmatpush1.msra.mxu0 0.0
      %1264 = vmatprep.subr.mxu0 0.0
      %1265 = vmatpush1.msra.mxu0 0.0
      %1266 = vmatprep.subr.mxu0 0.0
      %1267 = vmatpush1.msra.mxu0 0.0
      %1268 = vmatprep.subr.mxu0 0.0
      %1269 = vmatpush1.msra.mxu0 0.0
      %1270 = vmatprep.subr.mxu0 0.0
      %1271 = vmatpush1.msra.mxu0 0.0
      %1272 = vmatprep.subr.mxu0 0.0
      %1273 = vmatpush1.msra.mxu0 0.0
      %1274 = vmatprep.subr.mxu0 0.0
      %1275 = vmatpush1.msra.mxu0 0.0
      %1276 = vmatprep.subr.mxu0 0.0
      %1277 = vmatpush1.msra.mxu0 0.0
      %1278 = vmatprep.subr.mxu0 0.0
      %1279 = vmatpush1.msra.mxu0 0.0
      %1280 = vmatprep.subr.mxu0 0.0
      %1281 = vmatpush1.msra.mxu0 0.0
      %1282 = vmatprep.subr.mxu0 0.0
      %1283 = vmatpush1.msra.mxu0 0.0
      %1284 = vmatprep.subr.mxu0 0.0
      %1285 = vmatpush1.msra.mxu0 0.0
      %1286 = vmatprep.subr.mxu0 0.0
      %1287 = vmatpush1.msra.mxu0 0.0
      %1288 = vmatprep.subr.mxu0 0.0
      %1289 = vmatpush1.msra.mxu0 %v1172
      %1290 = vmatprep.subr.mxu0 0.0
      %1291 = vmatpush2.msra.mxu0 0.0
      %1292 = vmatprep.subr.mxu0 0.0
      %1293 = vmatpush2.msra.mxu0 0.0
      %1294 = vmatprep.subr.mxu0 0.0
      %1295 = vmatpush2.msra.mxu0 0.0
      %1296 = vmatprep.subr.mxu0 0.0
      %1297 = vmatpush2.msra.mxu0 0.0
      %1298 = vmatprep.subr.mxu0 0.0
      %1299 = vmatpush2.msra.mxu0 0.0
      %1300 = vmatprep.subr.mxu0 0.0
      %1301 = vmatpush2.msra.mxu0 0.0
      %1302 = vmatprep.subr.mxu0 0.0
      %1303 = vmatpush2.msra.mxu0 0.0
      %1304 = vmatprep.subr.mxu0 0.0
      %1305 = vmatpush2.msra.mxu0 0.0
      %1306 = vmatprep.subr.mxu0 0.0
      %1307 = vmatpush2.msra.mxu0 0.0
      %1308 = vmatprep.subr.mxu0 0.0
      %1309 = vmatpush2.msra.mxu0 0.0
      %1310 = vmatprep.subr.mxu0 0.0
      %1311 = vmatpush2.msra.mxu0 0.0
      %1312 = vmatprep.subr.mxu0 0.0
      %1313 = vmatpush2.msra.mxu0 0.0
      %1314 = vmatprep.subr.mxu0 0.0
      %1315 = vmatpush2.msra.mxu0 0.0
      %1316 = vmatprep.subr.mxu0 0.0
      %1317 = vmatpush2.msra.mxu0 0.0
      %1318 = vmatprep.subr.mxu0 0.0
      %1319 = vmatpush2.msra.mxu0 0.0
      %1320 = vmatprep.subr.mxu0 0.0
      %1321 = vmatpush2.msra.mxu0 0.0
      %1322 = vmatprep.mubr.f32.mxu0 0.0
      %1323 = vmatmul.mubr.f32.gmra.mxu0 %v1253
      %v1324 = vpop.f32.mrf.mxu0
      %v1325 = vadd.f32 0.0, %v1324
      %v1326 = vpop.f32.mrf.mxu0
      %1327 = vmatprep.mubr.f32.mxu0 0.0
      %1328 = vmatmul.mubr.f32.gmra.mxu0 %v1256
      %v1329 = vpop.f32.mrf.mxu0
      %v1330 = vadd.f32 0.0, %v1329
      %v1331 = vpop.f32.mrf.mxu0
      %1332 = vdwg.mxu0
      %v1333 = vsel %vm1163, %v1241, 0.0
      %v1334 = vsel %vm1163, %v1246, 0.0
      %v1335 = vadd.f32 %v1333, %v1334
      %v1336 = vrot.slane %v1335, 4
      %v1337 = vadd.f32 %v1335, %v1336
      %v1338 = vrot.slane %v1337, 2
      %v1339 = vadd.f32 %v1337, %v1338
      %v1340 = vrot.slane %v1339, 1
      %v1341 = vadd.f32 %v1339, %v1340
      %v1342 = vsel %vm1163, %v1325, 0.0
      %v1343 = vsel %vm1163, %v1330, 0.0
      %v1344 = vadd.f32 %v1342, %v1343
      %v1345 = vrot.slane %v1344, 4
      %v1346 = vadd.f32 %v1344, %v1345
      %v1347 = vrot.slane %v1346, 2
      %v1348 = vadd.f32 %v1346, %v1347
      %v1349 = vrot.slane %v1348, 1
      %v1350 = vadd.f32 %v1348, %v1349
      %v1351 = vadd.f32 %v1341, %v1350
      %v1352 = vmul.f32 %v1241, %v1241
      %v1353 = vmul.f32 %v1246, %v1246
      %v1354 = vsel %vm1163, %v1352, 0.0
      %v1355 = vsel %vm1163, %v1353, 0.0
      %v1356 = vadd.f32 %v1354, %v1355
      %v1357 = vrot.slane %v1356, 4
      %v1358 = vadd.f32 %v1356, %v1357
      %v1359 = vrot.slane %v1358, 2
      %v1360 = vadd.f32 %v1358, %v1359
      %v1361 = vrot.slane %v1360, 1
      %v1362 = vadd.f32 %v1360, %v1361
      %v1363 = vmul.f32 %v1325, %v1325
      %v1364 = vmul.f32 %v1330, %v1330
      %v1365 = vsel %vm1163, %v1363, 0.0
      %v1366 = vsel %vm1163, %v1364, 0.0
      %v1367 = vadd.f32 %v1365, %v1366
      %v1368 = vrot.slane %v1367, 4
      %v1369 = vadd.f32 %v1367, %v1368
      %v1370 = vrot.slane %v1369, 2
      %v1371 = vadd.f32 %v1369, %v1370
      %v1372 = vrot.slane %v1371, 1
      %v1373 = vadd.f32 %v1371, %v1372
      %v1374 = vadd.f32 %v1362, %v1373
      %v1375 = vld [vmem:[%s7] sm:$0x3]
      %1377 = vrot.lane.b32.xlu0 %v1124, 124
      %v1378 = vpop.permute.xlu0 %1377
      %1381 = vrot.lane.b32.xlu0 %v1351, 4
      %v1382 = vpop.permute.xlu0 %1381
      %v1384 = vsel %vm1163, %v1378, %v1382
      %1386 = vrot.lane.b32.xlu0 %v1159, 124
      %v1387 = vpop.permute.xlu0 %1386
      %1390 = vrot.lane.b32.xlu0 %v1374, 4
      %v1391 = vpop.permute.xlu0 %1390
      %v1393 = vsel %vm1163, %v1387, %v1391
      %v1395 = vrot.slane %v1393, 7
      %vm1397 = vcmask 1040384
      %v1398 = vsel %vm1397, %v1384, %v1395
      %v1399 = vadd.f32 %v1375, %v1398
      %vm1400 = vcmask 58368
      %1401 = vst.msk [vmem:[%s7] sm:$0x3] %vm1400, %v1399
      %s1402 = smul.u32 2, %s24
      %p1403 = scmp.lt.s32.totalorder %s23, 1
      %s1404 = scalar_select %p1403, %s23, 1
      %p1405 = scmp.lt.s32.totalorder %s1402, 15
      %s1406 = scalar_select %p1405, %s1402, 15
      %s1407 = smul.addr %s1406, 2
      %s1408 = smul.addr %s1404, 32
      %s1409 = sadd.s32 %s1407, %s1408
      %s1410 = smul.addr %s1409, 8
      %s1411 = scalar_lea.vmem %s6, %s1410
      // Predicated region
      $region49: #{decoder_forward.5} parent=43 // pred_check
        %p1412 = pneg %p200
      $region50: #{decoder_forward.5} parent=43 // pred_check_branch
        %1414 = sbr.rel (%p1412) target = $region52
      $region51: #{decoder_forward.5} parent=43 // pred_region
        %s1415 = smul.u32 2, %s24
      $region52: #{decoder_forward.5} parent=43 // pred_fallthru
        _
      // Predicated region
      $region53: #{decoder_forward.5} parent=43 // pred_check
        %p1416 = pneg %p221
      $region54: #{decoder_forward.5} parent=43 // pred_check_branch
        %1418 = sbr.rel (%p1416) target = $region56
      $region55: #{decoder_forward.5} parent=43 // pred_region
        _
      $region56: #{decoder_forward.5} parent=43 // pred_fallthru
        _
      // Predicated region
      $region57: #{decoder_forward.5} parent=43 // pred_check
        %p1419 = pneg %p221
      $region58: #{decoder_forward.5} parent=43 // pred_check_branch
        %1421 = sbr.rel (%p1419) target = $region60
      $region59: #{decoder_forward.5} parent=43 // pred_region
        _
      $region60: #{decoder_forward.5} parent=43 // pred_fallthru
        _
    $region44: #{decoder_forward.5} parent=5 // pred_fallthru
      _
    %p1422 = scmp.le.s32.totalorder 2, %s14
    // Predicated region
    $region61: #{decoder_forward.5} parent=5 // pred_check
      %p1423 = pneg %p1422
    $region62: #{decoder_forward.5} parent=5 // pred_check_branch
      %1425 = sbr.rel (%p1423) target = $region64
    $region63: #{decoder_forward.5} parent=5 // pred_region
      %s1426 = ssub.s32 %s14, 2
      // Predicated region
      $region65: #{decoder_forward.5} parent=63 // pred_check
        %p1427 = pneg %p206
      $region66: #{decoder_forward.5} parent=63 // pred_check_branch
        %1429 = sbr.rel (%p1427) target = $region68
      $region67: #{decoder_forward.5} parent=63 // pred_region
        %s1430 = smul.u32 2, %s26
        %p1431 = scmp.lt.s32.totalorder %s25, 1
        %s1432 = scalar_select %p1431, %s25, 1
        %p1433 = scmp.lt.s32.totalorder %s1430, 15
        %s1434 = scalar_select %p1433, %s1430, 15
        %s1435 = smul.addr %s1434, 2
        %s1436 = smul.addr %s1432, 32
        %s1437 = sadd.s32 %s1435, %s1436
        %s1438 = smul.addr %s1437, 8
        %s1439 = scalar_lea.vmem %s6, %s1438
      $region68: #{decoder_forward.5} parent=63 // pred_fallthru
        _
    $region64: #{decoder_forward.5} parent=5 // pred_fallthru
      _
  $region6: #{decoder_forward.5} parent=0 // loop_footer
    %s18 = sadd.s32 1, %s14
  $region7: #{decoder_forward.5} parent=0 // loop_footer_branch
    %13 = sbr.rel target = $region3
  $region8: #{decoder_forward.5} parent=0 // loop_exit
    _

// kernel: decoder_forward.7
$region0: #{decoder_forward.7}
  #allocation0 [shape = 'u32[]', space=smem, size = 0x4, offset = 0x4, fixed_abs, tag = 'smem constant byte address 0x4 - core index']
  #allocation1 [shape = 'u32[144,128]{1,0:T(1,128)}', space=vmem, size = 0x12000, scoped, tag = 'internal scratch']
  %s0 = inlined_call_operand.vmem [shape: f32[2,18,18,8], index: 0, kind: input, shape index: {}, may-alias: {0,1,2}]
  %s1 = inlined_call_operand.vmem [shape: f32[2,18,18,8], index: 1, kind: input, shape index: {}, may-alias: {0,1,2}]
  %s2 = inlined_call_operand.vmem [shape: f32[2,18,18,8], index: 2, kind: input, shape index: {}, may-alias: {0,1,2}]
  %s3 = inlined_call_operand.vmem [shape: f32[3,3,8,4], index: 3, kind: input, shape index: {}]
  %s4 = inlined_call_operand.vmem [shape: f32[2,16,16,4], index: 4, kind: output, shape index: {0}]
  %s5 = inlined_call_operand.vmem [shape: f32[2,4], index: 5, kind: output, shape index: {1}]
  %6 = xla_tuple %s4, %s5
  %s7 = sld [smem:[#allocation0]]
  $region61: #{decoder_forward.7} parent=0
    _
  %s9 = ssub.s32 1, %s7
  %s10 = scalar_select 0, %s9, %s7
  loop: start=0, step=1, limit=34
  $region2: #{decoder_forward.7} parent=0 // loop_pre_header
    _
  $region3: #{decoder_forward.7} parent=0 // loop_header
    %s12 = sphi 0, %s16
    %p13 = scmp.ge.s32.totalorder %s12, 34
    %s19 = sphi 0, %s31
    %s20 = sphi 0, %s27
    %s21 = sphi 0, %s19
    %s22 = sphi 0, %s20
    %s23 = sphi 0, %s21
    %s24 = sphi 0, %s22
    %s36 = sphi 0, %s38
    %s39 = sphi 0, %s36
    %s40 = sphi 0, %s39
    %s56 = sphi 0, %s40
    %s66 = sphi 0, %s68
    %s69 = sphi 0, %s66
    %s70 = sphi 0, %s69
    %s86 = sphi 0, %s70
    %s96 = sphi 0, %s98
    %s99 = sphi 0, %s96
    %s100 = sphi 0, %s99
    %s116 = sphi 0, %s100
    %s120 = sphi 0, %s120
    %s122 = sphi 0, %s120
    %s123 = sphi 0, %s122
    %s137 = sphi 0, %s123
    %s145 = sphi 0, %s147
    %s148 = sphi 0, %s145
    %s149 = sphi 0, %s148
    %s165 = sphi 0, %s149
    %s169 = sphi 0, %s169
    %s171 = sphi 0, %s169
    %s172 = sphi 0, %s171
    %s186 = sphi 0, %s172
  $region4: #{decoder_forward.7} parent=0 // loop_header_branch
    %15 = sbr.rel (%p13) target = $region8
  $region5: #{decoder_forward.7} parent=0 // loop_body
    %s17 = ssub.s32 %s12, 1
    %s18 = ssub.s32 %s12, 2
    %s25 = sadd.s32 1, %s20
    %p26 = scmp.ge.s32.totalorder %s25, 16
    %s27 = scalar_select %p26, 0, %s25
    %s28 = sadd.s32 1, %s19
    %s29 = scalar_select %p26, %s28, %s19
    %p30 = scmp.ge.s32.totalorder %s29, 2
    %s31 = scalar_select %p30, 0, %s29
    %s32 = ssub.s32 %s19, %s31
    %s33 = ssub.s32 %s20, %s27
    %s34 = sor.u32 %s32, %s33
    %p35 = scmp.eq.s32.totalorder %s34, 0
    %s37 = sadd.s32 %s36, 1
    %s38 = scalar_select %p35, %s36, %s37
    %p41 = pneg %p35
    %p42 = scmp.eq.s32.totalorder %s12, 31
    %p43 = por %p41, %p42
    %p44 = scmp.ne.s32.totalorder %s36, %s39
    %p45 = scmp.eq.s32.totalorder %s12, 0
    %p46 = por %p44, %p45
    %p47 = scmp.ne.s32.totalorder %s36, %s39
    %p48 = scmp.eq.s32.totalorder %s17, 31
    %p49 = por %p47, %p48
    %p50 = scmp.ne.s32.totalorder %s39, %s40
    %p51 = scmp.eq.s32.totalorder %s17, 0
    %p52 = por %p50, %p51
    %p53 = scmp.ne.s32.totalorder %s39, %s40
    %p54 = scmp.eq.s32.totalorder %s18, 31
    %p55 = por %p53, %p54
    %p57 = scmp.ne.s32.totalorder %s40, %s56
    %p58 = scmp.eq.s32.totalorder %s18, 0
    %p59 = por %p57, %p58
    %s60 = sadd.s32 %s20, 1
    %s61 = sadd.s32 %s27, 1
    %s62 = ssub.s32 %s19, %s31
    %s63 = ssub.s32 %s60, %s61
    %s64 = sor.u32 %s62, %s63
    %p65 = scmp.eq.s32.totalorder %s64, 0
    %s67 = sadd.s32 %s66, 1
    %s68 = scalar_select %p65, %s66, %s67
    %p71 = pneg %p65
    %p72 = scmp.eq.s32.totalorder %s12, 31
    %p73 = por %p71, %p72
    %p74 = scmp.ne.s32.totalorder %s66, %s69
    %p75 = scmp.eq.s32.totalorder %s12, 0
    %p76 = por %p74, %p75
    %p77 = scmp.ne.s32.totalorder %s66, %s69
    %p78 = scmp.eq.s32.totalorder %s17, 31
    %p79 = por %p77, %p78
    %p80 = scmp.ne.s32.totalorder %s69, %s70
    %p81 = scmp.eq.s32.totalorder %s17, 0
    %p82 = por %p80, %p81
    %p83 = scmp.ne.s32.totalorder %s69, %s70
    %p84 = scmp.eq.s32.totalorder %s18, 31
    %p85 = por %p83, %p84
    %p87 = scmp.ne.s32.totalorder %s70, %s86
    %p88 = scmp.eq.s32.totalorder %s18, 0
    %p89 = por %p87, %p88
    %s90 = sadd.s32 %s20, 2
    %s91 = sadd.s32 %s27, 2
    %s92 = ssub.s32 %s19, %s31
    %s93 = ssub.s32 %s90, %s91
    %s94 = sor.u32 %s92, %s93
    %p95 = scmp.eq.s32.totalorder %s94, 0
    %s97 = sadd.s32 %s96, 1
    %s98 = scalar_select %p95, %s96, %s97
    %p101 = pneg %p95
    %p102 = scmp.eq.s32.totalorder %s12, 31
    %p103 = por %p101, %p102
    %p104 = scmp.ne.s32.totalorder %s96, %s99
    %p105 = scmp.eq.s32.totalorder %s12, 0
    %p106 = por %p104, %p105
    %p107 = scmp.ne.s32.totalorder %s96, %s99
    %p108 = scmp.eq.s32.totalorder %s17, 31
    %p109 = por %p107, %p108
    %p110 = scmp.ne.s32.totalorder %s99, %s100
    %p111 = scmp.eq.s32.totalorder %s17, 0
    %p112 = por %p110, %p111
    %p113 = scmp.ne.s32.totalorder %s99, %s100
    %p114 = scmp.eq.s32.totalorder %s18, 31
    %p115 = por %p113, %p114
    %p117 = scmp.ne.s32.totalorder %s100, %s116
    %p118 = scmp.eq.s32.totalorder %s18, 0
    %p119 = por %p117, %p118
    %s121 = sadd.s32 %s120, 1
    %p124 = scmp.eq.s32.totalorder %s12, 31
    %p125 = scmp.ne.s32.totalorder %s120, %s122
    %p126 = scmp.eq.s32.totalorder %s12, 0
    %p127 = por %p125, %p126
    %p128 = scmp.ne.s32.totalorder %s120, %s122
    %p129 = scmp.eq.s32.totalorder %s17, 31
    %p130 = por %p128, %p129
    %p131 = scmp.ne.s32.totalorder %s122, %s123
    %p132 = scmp.eq.s32.totalorder %s17, 0
    %p133 = por %p131, %p132
    %p134 = scmp.ne.s32.totalorder %s122, %s123
    %p135 = scmp.eq.s32.totalorder %s18, 31
    %p136 = por %p134, %p135
    %p138 = scmp.ne.s32.totalorder %s123, %s137
    %p139 = scmp.eq.s32.totalorder %s18, 0
    %p140 = por %p138, %p139
    %s141 = ssub.s32 %s19, %s31
    %s142 = ssub.s32 %s20, %s27
    %s143 = sor.u32 %s141, %s142
    %p144 = scmp.eq.s32.totalorder %s143, 0
    %s146 = sadd.s32 %s145, 1
    %s147 = scalar_select %p144, %s145, %s146
    %p150 = pneg %p144
    %p151 = scmp.eq.s32.totalorder %s12, 31
    %p152 = por %p150, %p151
    %p153 = scmp.ne.s32.totalorder %s145, %s148
    %p154 = scmp.eq.s32.totalorder %s12, 0
    %p155 = por %p153, %p154
    %p156 = scmp.ne.s32.totalorder %s145, %s148
    %p157 = scmp.eq.s32.totalorder %s17, 31
    %p158 = por %p156, %p157
    %p159 = scmp.ne.s32.totalorder %s148, %s149
    %p160 = scmp.eq.s32.totalorder %s17, 0
    %p161 = por %p159, %p160
    %p162 = scmp.ne.s32.totalorder %s148, %s149
    %p163 = scmp.eq.s32.totalorder %s18, 31
    %p164 = por %p162, %p163
    %p166 = scmp.ne.s32.totalorder %s149, %s165
    %p167 = scmp.eq.s32.totalorder %s18, 0
    %p168 = por %p166, %p167
    %s170 = sadd.s32 %s169, 1
    %p173 = scmp.eq.s32.totalorder %s12, 31
    %p174 = scmp.ne.s32.totalorder %s169, %s171
    %p175 = scmp.eq.s32.totalorder %s12, 0
    %p176 = por %p174, %p175
    %p177 = scmp.ne.s32.totalorder %s169, %s171
    %p178 = scmp.eq.s32.totalorder %s17, 31
    %p179 = por %p177, %p178
    %p180 = scmp.ne.s32.totalorder %s171, %s172
    %p181 = scmp.eq.s32.totalorder %s17, 0
    %p182 = por %p180, %p181
    %p183 = scmp.ne.s32.totalorder %s171, %s172
    %p184 = scmp.eq.s32.totalorder %s18, 31
    %p185 = por %p183, %p184
    %p187 = scmp.ne.s32.totalorder %s172, %s186
    %p188 = scmp.eq.s32.totalorder %s18, 0
    %p189 = por %p187, %p188
    %p190 = scmp.le.s32.totalorder 1, %s12
    %p191 = scmp.lt.s32.totalorder %s12, 33
    %p192 = pnand %p190, %p191
    %p193 = pneg %p192
    // Predicated region
    $region9: #{decoder_forward.7} parent=5 // pred_check
      _
    $region10: #{decoder_forward.7} parent=5 // pred_check_branch
      %195 = sbr.rel (%p192) target = $region12
    $region11: #{decoder_forward.7} parent=5 // pred_region
      %s196 = ssub.s32 %s12, 1
      // Predicated region
      $region13: #{decoder_forward.7} parent=11 // pred_check
        %p197 = pneg %p133
      $region14: #{decoder_forward.7} parent=11 // pred_check_branch
        %199 = sbr.rel (%p197) target = $region16
      $region15: #{decoder_forward.7} parent=11 // pred_region
        _
      $region16: #{decoder_forward.7} parent=11 // pred_fallthru
        _
    $region12: #{decoder_forward.7} parent=5 // pred_fallthru
      _
    %p200 = scmp.lt.s32.totalorder %s12, 32
    // Predicated region
    $region17: #{decoder_forward.7} parent=5 // pred_check
      %p201 = pneg %p200
    $region18: #{decoder_forward.7} parent=5 // pred_check_branch
      %203 = sbr.rel (%p201) target = $region20
    $region19: #{decoder_forward.7} parent=5 // pred_region
      // Predicated region
      $region21: #{decoder_forward.7} parent=19 // pred_check
        %p204 = pneg %p46
      $region22: #{decoder_forward.7} parent=19 // pred_check_branch
        %206 = sbr.rel (%p204) target = $region24
      $region23: #{decoder_forward.7} parent=19 // pred_region
        %p207 = scmp.lt.s32.totalorder %s19, 1
        %s208 = scalar_select %p207, %s19, 1
        %p209 = scmp.lt.s32.totalorder %s20, 17
        %s210 = scalar_select %p209, %s20, 17
        %s211 = smul.addr %s210, 3
        %s212 = smul.addr %s208, 54
        %s213 = sadd.s32 %s211, %s212
        %s214 = smul.addr %s213, 8
        %s215 = scalar_lea.vmem %s0, %s214
      $region24: #{decoder_forward.7} parent=19 // pred_fallthru
        _
      // Predicated region
      $region25: #{decoder_forward.7} parent=19 // pred_check
        %p216 = pneg %p76
      $region26: #{decoder_forward.7} parent=19 // pred_check_branch
        %218 = sbr.rel (%p216) target = $region28
      $region27: #{decoder_forward.7} parent=19 // pred_region
        %s219 = sadd.s32 %s20, 1
        %p220 = scmp.lt.s32.totalorder %s19, 1
        %s221 = scalar_select %p220, %s19, 1
        %p222 = scmp.lt.s32.totalorder %s219, 17
        %s223 = scalar_select %p222, %s219, 17
        %s224 = smul.addr %s223, 3
        %s225 = smul.addr %s221, 54
        %s226 = sadd.s32 %s224, %s225
        %s227 = smul.addr %s226, 8
        %s228 = scalar_lea.vmem %s1, %s227
        %s229 = sadd.s32 %s20, 1
      $region28: #{decoder_forward.7} parent=19 // pred_fallthru
        _
      // Predicated region
      $region29: #{decoder_forward.7} parent=19 // pred_check
        %p230 = pneg %p106
      $region30: #{decoder_forward.7} parent=19 // pred_check_branch
        %232 = sbr.rel (%p230) target = $region32
      $region31: #{decoder_forward.7} parent=19 // pred_region
        %s233 = sadd.s32 %s20, 2
        %p234 = scmp.lt.s32.totalorder %s19, 1
        %s235 = scalar_select %p234, %s19, 1
        %p236 = scmp.lt.s32.totalorder %s233, 17
        %s237 = scalar_select %p236, %s233, 17
        %s238 = smul.addr %s237, 3
        %s239 = smul.addr %s235, 54
        %s240 = sadd.s32 %s238, %s239
        %s241 = smul.addr %s240, 8
        %s242 = scalar_lea.vmem %s2, %s241
        %s243 = sadd.s32 %s20, 2
      $region32: #{decoder_forward.7} parent=19 // pred_fallthru
        _
    $region20: #{decoder_forward.7} parent=5 // pred_fallthru
      _
    %p244 = scmp.le.s32.totalorder 1, %s12
    %p245 = scmp.lt.s32.totalorder %s12, 33
    %p246 = pnand %p244, %p245
    %p247 = pneg %p246
    // Predicated region
    $region33: #{decoder_forward.7} parent=5 // pred_check
      _
    $region34: #{decoder_forward.7} parent=5 // pred_check_branch
      %249 = sbr.rel (%p246) target = $region36
    $region35: #{decoder_forward.7} parent=5 // pred_region
      %s250 = ssub.s32 %s12, 1
      %p251 = scmp.lt.s32.totalorder %s21, 1
      %s252 = scalar_select %p251, %s21, 1
      %p253 = scmp.lt.s32.totalorder %s22, 17
      %s254 = scalar_select %p253, %s22, 17
      %s255 = smul.addr %s254, 3
      %s256 = smul.addr %s252, 54
      %s257 = sadd.s32 %s255, %s256
      %s258 = smul.addr %s257, 8
      %s259 = scalar_lea.vmem %s0, %s258
      %p260 = pneg %p52
      %p261 = pneg %p49
      %s262 = sadd.s32 %s22, 1
      %p263 = scmp.lt.s32.totalorder %s21, 1
      %s264 = scalar_select %p263, %s21, 1
      %p265 = scmp.lt.s32.totalorder %s262, 17
      %s266 = scalar_select %p265, %s262, 17
      %s267 = smul.addr %s266, 3
      %s268 = smul.addr %s264, 54
      %s269 = sadd.s32 %s267, %s268
      %s270 = smul.addr %s269, 8
      %s271 = scalar_lea.vmem %s1, %s270
      %p272 = pneg %p82
      %p273 = pneg %p79
      %s274 = sadd.s32 %s22, 2
      %p275 = scmp.lt.s32.totalorder %s21, 1
      %s276 = scalar_select %p275, %s21, 1
      %p277 = scmp.lt.s32.totalorder %s274, 17
      %s278 = scalar_select %p277, %s274, 17
      %s279 = smul.addr %s278, 3
      %s280 = smul.addr %s276, 54
      %s281 = sadd.s32 %s279, %s280
      %s282 = smul.addr %s281, 8
      %s283 = scalar_lea.vmem %s2, %s282
      %p284 = pneg %p112
      %p285 = pneg %p109
      %p286 = pneg %p133
      %p287 = pneg %p130
      %p288 = pneg %p161
      %p289 = pneg %p158
      %p290 = scmp.lt.s32.totalorder %s21, 1
      %s291 = scalar_select %p290, %s21, 1
      %p292 = scmp.lt.s32.totalorder %s22, 15
      %s293 = scalar_select %p292, %s22, 15
      %s294 = smul.addr %s293, 2
      %s295 = smul.addr %s291, 32
      %s296 = sadd.s32 %s294, %s295
      %s297 = smul.addr %s296, 8
      %s298 = scalar_lea.vmem %s4, %s297
      %p299 = pneg %p182
      %p300 = pneg %p179
      %p301 = scmp.lt.s32.totalorder %s21, 1
      %s302 = scalar_select %p301, %s21, 1
      %p303 = scmp.lt.s32.totalorder %s22, 17
      %s304 = scalar_select %p303, %s22, 17
      %s305 = smul.addr %s304, 3
      %s306 = smul.addr %s302, 54
      %s307 = sadd.s32 %s305, %s306
      %s308 = smul.addr %s307, 8
      %s309 = scalar_lea.vmem %s0, %s308
      %s310 = sadd.s32 %s22, 1
      %p311 = scmp.lt.s32.totalorder %s21, 1
      %s312 = scalar_select %p311, %s21, 1
      %p313 = scmp.lt.s32.totalorder %s310, 17
      %s314 = scalar_select %p313, %s310, 17
      %s315 = smul.addr %s314, 3
      %s316 = smul.addr %s312, 54
      %s317 = sadd.s32 %s315, %s316
      %s318 = smul.addr %s317, 8
      %s319 = scalar_lea.vmem %s1, %s318
      %s320 = sadd.s32 %s22, 1
      %s321 = sadd.s32 %s22, 2
      %p322 = scmp.lt.s32.totalorder %s21, 1
      %s323 = scalar_select %p322, %s21, 1
      %p324 = scmp.lt.s32.totalorder %s321, 17
      %s325 = scalar_select %p324, %s321, 17
      %s326 = smul.addr %s325, 3
      %s327 = smul.addr %s323, 54
      %s328 = sadd.s32 %s326, %s327
      %s329 = smul.addr %s328, 8
      %s330 = scalar_lea.vmem %s2, %s329
      %s331 = sadd.s32 %s22, 2
      %p332 = scmp.lt.s32.totalorder %s21, 1
      %s333 = scalar_select %p332, %s21, 1
      %p334 = scmp.lt.s32.totalorder %s22, 15
      %s335 = scalar_select %p334, %s22, 15
      %s336 = smul.addr %s335, 2
      %s337 = smul.addr %s333, 32
      %s338 = sadd.s32 %s336, %s337
      %s339 = smul.addr %s338, 8
      %s340 = scalar_lea.vmem %s4, %s339
      %p341 = scmp.eq.s32.totalorder %s21, 0
      %p342 = scmp.eq.s32.totalorder %s22, 0
      %p343 = pnand %p341, %p342
      %p344 = pneg %p343
      // Predicated region
      $region37: #{decoder_forward.7} parent=35 // pred_check
        _
      $region38: #{decoder_forward.7} parent=35 // pred_check_branch
        %346 = sbr.rel (%p343) target = $region40
      $region39: #{decoder_forward.7} parent=35 // pred_region
        %vm347 = vcmask 25600
        %348 = vst.msk [vmem:[%s5] sm:$0x3] %vm347, 0.0
      $region40: #{decoder_forward.7} parent=35 // pred_fallthru
        _
      %v349 = vld [vmem:[%s309] sm:$0xff]
      %v350 = vld [vmem:[%s309 + $0x8] sm:$0xff]
      %v351 = vld [vmem:[%s309 + $0x10] sm:$0x3]
      %v352 = vld [vmem:[%s319] sm:$0xff]
      %v353 = vld [vmem:[%s319 + $0x8] sm:$0xff]
      %v354 = vld [vmem:[%s319 + $0x10] sm:$0x3]
      %v355 = vld [vmem:[%s330] sm:$0xff]
      %v356 = vld [vmem:[%s330 + $0x8] sm:$0xff]
      %v357 = vld [vmem:[%s330 + $0x10] sm:$0x3]
      %v358 = vld [vmem:[%s3] sm:$0xff]
      %s359 = scalar_lea.vmem %s3, 8
      %v360 = vld [vmem:[%s359] sm:$0xff]
      %vm364 = vcmask 1046528
      %v365 = vrot.slane %v349, 1
      %v366 = vrot.slane %v350, 1
      %v367 = vsel %vm364, %v365, %v366
      %v368 = vrot.slane %v351, 1
      %v369 = vsel %vm364, %v366, %v368
      %vm370 = vcmask 64512
      %v371 = vsel %vm370, %v367, 0
      %v373 = vsel %vm370, %v369, 0
      %375 = vmatprep.subr.mxu0 0.0
      %376 = vmatpush1.msra.mxu0 0.0
      %377 = vmatprep.subr.mxu0 0.0
      %378 = vmatpush1.msra.mxu0 0.0
      %379 = vmatprep.subr.mxu0 0.0
      %380 = vmatpush1.msra.mxu0 0.0
      %381 = vmatprep.subr.mxu0 0.0
      %382 = vmatpush1.msra.mxu0 0.0
      %383 = vmatprep.subr.mxu0 0.0
      %384 = vmatpush1.msra.mxu0 0.0
      %385 = vmatprep.subr.mxu0 0.0
      %386 = vmatpush1.msra.mxu0 0.0
      %387 = vmatprep.subr.mxu0 0.0
      %388 = vmatpush1.msra.mxu0 0.0
      %389 = vmatprep.subr.mxu0 0.0
      %390 = vmatpush1.msra.mxu0 0.0
      %391 = vmatprep.subr.mxu0 0.0
      %392 = vmatpush1.msra.mxu0 0.0
      %393 = vmatprep.subr.mxu0 0.0
      %394 = vmatpush1.msra.mxu0 0.0
      %395 = vmatprep.subr.mxu0 0.0
      %396 = vmatpush1.msra.mxu0 0.0
      %397 = vmatprep.subr.mxu0 0.0
      %398 = vmatpush1.msra.mxu0 0.0
      %399 = vmatprep.subr.mxu0 0.0
      %400 = vmatpush1.msra.mxu0 0.0
      %401 = vmatprep.subr.mxu0 0.0
      %402 = vmatpush1.msra.mxu0 0.0
      %403 = vmatprep.subr.mxu0 0.0
      %404 = vmatpush1.msra.mxu0 0.0
      %405 = vmatprep.subr.mxu0 0.0
      %406 = vmatpush1.msra.mxu0 %v360
      %407 = vmatprep.subr.mxu0 0.0
      %408 = vmatpush2.msra.mxu0 0.0
      %409 = vmatprep.subr.mxu0 0.0
      %410 = vmatpush2.msra.mxu0 0.0
      %411 = vmatprep.subr.mxu0 0.0
      %412 = vmatpush2.msra.mxu0 0.0
      %413 = vmatprep.subr.mxu0 0.0
      %414 = vmatpush2.msra.mxu0 0.0
      %415 = vmatprep.subr.mxu0 0.0
      %416 = vmatpush2.msra.mxu0 0.0
      %417 = vmatprep.subr.mxu0 0.0
      %418 = vmatpush2.msra.mxu0 0.0
      %419 = vmatprep.subr.mxu0 0.0
      %420 = vmatpush2.msra.mxu0 0.0
      %421 = vmatprep.subr.mxu0 0.0
      %422 = vmatpush2.msra.mxu0 0.0
      %423 = vmatprep.subr.mxu0 0.0
      %424 = vmatpush2.msra.mxu0 0.0
      %425 = vmatprep.subr.mxu0 0.0
      %426 = vmatpush2.msra.mxu0 0.0
      %427 = vmatprep.subr.mxu0 0.0
      %428 = vmatpush2.msra.mxu0 0.0
      %429 = vmatprep.subr.mxu0 0.0
      %430 = vmatpush2.msra.mxu0 0.0
      %431 = vmatprep.subr.mxu0 0.0
      %432 = vmatpush2.msra.mxu0 0.0
      %433 = vmatprep.subr.mxu0 0.0
      %434 = vmatpush2.msra.mxu0 0.0
      %435 = vmatprep.subr.mxu0 0.0
      %436 = vmatpush2.msra.mxu0 0.0
      %437 = vmatprep.subr.mxu0 0.0
      %438 = vmatpush2.msra.mxu0 0.0
      %439 = vmatprep.mubr.f32.mxu0 0.0
      %440 = vmatmul.mubr.f32.gmra.mxu0 %v371
      %v441 = vpop.f32.mrf.mxu0
      %v442 = vadd.f32 0.0, %v441
      %v443 = vpop.f32.mrf.mxu0
      %444 = vmatprep.mubr.f32.mxu0 0.0
      %445 = vmatmul.mubr.f32.gmra.mxu0 %v373
      %v446 = vpop.f32.mrf.mxu0
      %v447 = vadd.f32 0.0, %v446
      %v448 = vpop.f32.mrf.mxu0
      %449 = vdwg.mxu0
      %v450 = vsel %vm370, %v349, 0
      %v452 = vsel %vm370, %v350, 0
      %454 = vmatprep.subr.mxu0 0.0
      %455 = vmatpush1.msra.mxu0 0.0
      %456 = vmatprep.subr.mxu0 0.0
      %457 = vmatpush1.msra.mxu0 0.0
      %458 = vmatprep.subr.mxu0 0.0
      %459 = vmatpush1.msra.mxu0 0.0
      %460 = vmatprep.subr.mxu0 0.0
      %461 = vmatpush1.msra.mxu0 0.0
      %462 = vmatprep.subr.mxu0 0.0
      %463 = vmatpush1.msra.mxu0 0.0
      %464 = vmatprep.subr.mxu0 0.0
      %465 = vmatpush1.msra.mxu0 0.0
      %466 = vmatprep.subr.mxu0 0.0
      %467 = vmatpush1.msra.mxu0 0.0
      %468 = vmatprep.subr.mxu0 0.0
      %469 = vmatpush1.msra.mxu0 0.0
      %470 = vmatprep.subr.mxu0 0.0
      %471 = vmatpush1.msra.mxu0 0.0
      %472 = vmatprep.subr.mxu0 0.0
      %473 = vmatpush1.msra.mxu0 0.0
      %474 = vmatprep.subr.mxu0 0.0
      %475 = vmatpush1.msra.mxu0 0.0
      %476 = vmatprep.subr.mxu0 0.0
      %477 = vmatpush1.msra.mxu0 0.0
      %478 = vmatprep.subr.mxu0 0.0
      %479 = vmatpush1.msra.mxu0 0.0
      %480 = vmatprep.subr.mxu0 0.0
      %481 = vmatpush1.msra.mxu0 0.0
      %482 = vmatprep.subr.mxu0 0.0
      %483 = vmatpush1.msra.mxu0 0.0
      %484 = vmatprep.subr.mxu0 0.0
      %485 = vmatpush1.msra.mxu0 %v358
      %486 = vmatprep.subr.mxu0 0.0
      %487 = vmatpush2.msra.mxu0 0.0
      %488 = vmatprep.subr.mxu0 0.0
      %489 = vmatpush2.msra.mxu0 0.0
      %490 = vmatprep.subr.mxu0 0.0
      %491 = vmatpush2.msra.mxu0 0.0
      %492 = vmatprep.subr.mxu0 0.0
      %493 = vmatpush2.msra.mxu0 0.0
      %494 = vmatprep.subr.mxu0 0.0
      %495 = vmatpush2.msra.mxu0 0.0
      %496 = vmatprep.subr.mxu0 0.0
      %497 = vmatpush2.msra.mxu0 0.0
      %498 = vmatprep.subr.mxu0 0.0
      %499 = vmatpush2.msra.mxu0 0.0
      %500 = vmatprep.subr.mxu0 0.0
      %501 = vmatpush2.msra.mxu0 0.0
      %502 = vmatprep.subr.mxu0 0.0
      %503 = vmatpush2.msra.mxu0 0.0
      %504 = vmatprep.subr.mxu0 0.0
      %505 = vmatpush2.msra.mxu0 0.0
      %506 = vmatprep.subr.mxu0 0.0
      %507 = vmatpush2.msra.mxu0 0.0
      %508 = vmatprep.subr.mxu0 0.0
      %509 = vmatpush2.msra.mxu0 0.0
      %510 = vmatprep.subr.mxu0 0.0
      %511 = vmatpush2.msra.mxu0 0.0
      %512 = vmatprep.subr.mxu0 0.0
      %513 = vmatpush2.msra.mxu0 0.0
      %514 = vmatprep.subr.mxu0 0.0
      %515 = vmatpush2.msra.mxu0 0.0
      %516 = vmatprep.subr.mxu0 0.0
      %517 = vmatpush2.msra.mxu0 0.0
      %518 = vmatprep.mubr.f32.mxu0 0.0
      %519 = vmatmul.mubr.f32.gmra.mxu0 %v450
      %v520 = vpop.f32.mrf.mxu0
      %v521 = vadd.f32 %v442, %v520
      %v522 = vpop.f32.mrf.mxu0
      %523 = vmatprep.mubr.f32.mxu0 0.0
      %524 = vmatmul.mubr.f32.gmra.mxu0 %v452
      %v525 = vpop.f32.mrf.mxu0
      %v526 = vadd.f32 %v447, %v525
      %v527 = vpop.f32.mrf.mxu0
      %528 = vdwg.mxu0
      %s529 = scalar_lea.vmem %s3, 16
      %v530 = vld [vmem:[%s529] sm:$0xff]
      %vm531 = vcmask 1045504
      %v532 = vrot.slane %v349, 2
      %v533 = vrot.slane %v350, 2
      %v534 = vsel %vm531, %v532, %v533
      %v535 = vrot.slane %v351, 2
      %v536 = vsel %vm531, %v533, %v535
      %v537 = vsel %vm370, %v534, 0
      %v539 = vsel %vm370, %v536, 0
      %541 = vmatprep.subr.mxu0 0.0
      %542 = vmatpush1.msra.mxu0 0.0
      %543 = vmatprep.subr.mxu0 0.0
      %544 = vmatpush1.msra.mxu0 0.0
      %545 = vmatprep.subr.mxu0 0.0
      %546 = vmatpush1.msra.mxu0 0.0
      %547 = vmatprep.subr.mxu0 0.0
      %548 = vmatpush1.msra.mxu0 0.0
      %549 = vmatprep.subr.mxu0 0.0
      %550 = vmatpush1.msra.mxu0 0.0
      %551 = vmatprep.subr.mxu0 0.0
      %552 = vmatpush1.msra.mxu0 0.0
      %553 = vmatprep.subr.mxu0 0.0
      %554 = vmatpush1.msra.mxu0 0.0
      %555 = vmatprep.subr.mxu0 0.0
      %556 = vmatpush1.msra.mxu0 0.0
      %557 = vmatprep.subr.mxu0 0.0
      %558 = vmatpush1.msra.mxu0 0.0
      %559 = vmatprep.subr.mxu0 0.0
      %560 = vmatpush1.msra.mxu0 0.0
      %561 = vmatprep.subr.mxu0 0.0
      %562 = vmatpush1.msra.mxu0 0.0
      %563 = vmatprep.subr.mxu0 0.0
      %564 = vmatpush1.msra.mxu0 0.0
      %565 = vmatprep.subr.mxu0 0.0
      %566 = vmatpush1.msra.mxu0 0.0
      %567 = vmatprep.subr.mxu0 0.0
      %568 = vmatpush1.msra.mxu0 0.0
      %569 = vmatprep.subr.mxu0 0.0
      %570 = vmatpush1.msra.mxu0 0.0
      %571 = vmatprep.subr.mxu0 0.0
      %572 = vmatpush1.msra.mxu0 %v530
      %573 = vmatprep.subr.mxu0 0.0
      %574 = vmatpush2.msra.mxu0 0.0
      %575 = vmatprep.subr.mxu0 0.0
      %576 = vmatpush2.msra.mxu0 0.0
      %577 = vmatprep.subr.mxu0 0.0
      %578 = vmatpush2.msra.mxu0 0.0
      %579 = vmatprep.subr.mxu0 0.0
      %580 = vmatpush2.msra.mxu0 0.0
      %581 = vmatprep.subr.mxu0 0.0
      %582 = vmatpush2.msra.mxu0 0.0
      %583 = vmatprep.subr.mxu0 0.0
      %584 = vmatpush2.msra.mxu0 0.0
      %585 = vmatprep.subr.mxu0 0.0
      %586 = vmatpush2.msra.mxu0 0.0
      %587 = vmatprep.subr.mxu0 0.0
      %588 = vmatpush2.msra.mxu0 0.0
      %589 = vmatprep.subr.mxu0 0.0
      %590 = vmatpush2.msra.mxu0 0.0
      %591 = vmatprep.subr.mxu0 0.0
      %592 = vmatpush2.msra.mxu0 0.0
      %593 = vmatprep.subr.mxu0 0.0
      %594 = vmatpush2.msra.mxu0 0.0
      %595 = vmatprep.subr.mxu0 0.0
      %596 = vmatpush2.msra.mxu0 0.0
      %597 = vmatprep.subr.mxu0 0.0
      %598 = vmatpush2.msra.mxu0 0.0
      %599 = vmatprep.subr.mxu0 0.0
      %600 = vmatpush2.msra.mxu0 0.0
      %601 = vmatprep.subr.mxu0 0.0
      %602 = vmatpush2.msra.mxu0 0.0
      %603 = vmatprep.subr.mxu0 0.0
      %604 = vmatpush2.msra.mxu0 0.0
      %605 = vmatprep.mubr.f32.mxu0 0.0
      %606 = vmatmul.mubr.f32.gmra.mxu0 %v537
      %v607 = vpop.f32.mrf.mxu0
      %v608 = vadd.f32 0.0, %v607
      %v609 = vpop.f32.mrf.mxu0
      %610 = vmatprep.mubr.f32.mxu0 0.0
      %611 = vmatmul.mubr.f32.gmra.mxu0 %v539
      %v612 = vpop.f32.mrf.mxu0
      %v613 = vadd.f32 0.0, %v612
      %v614 = vpop.f32.mrf.mxu0
      %615 = vdwg.mxu0
      %v616 = vadd.f32 %v521, %v608
      %v617 = vadd.f32 %v526, %v613
      %s618 = scalar_lea.vmem %s3, 24
      %v619 = vld [vmem:[%s618] sm:$0xff]
      %v621 = vsel %vm370, %v352, 0
      %v624 = vsel %vm370, %v353, 0
      %626 = vmatprep.subr.mxu0 0.0
      %627 = vmatpush1.msra.mxu0 0.0
      %628 = vmatprep.subr.mxu0 0.0
      %629 = vmatpush1.msra.mxu0 0.0
      %630 = vmatprep.subr.mxu0 0.0
      %631 = vmatpush1.msra.mxu0 0.0
      %632 = vmatprep.subr.mxu0 0.0
      %633 = vmatpush1.msra.mxu0 0.0
      %634 = vmatprep.subr.mxu0 0.0
      %635 = vmatpush1.msra.mxu0 0.0
      %636 = vmatprep.subr.mxu0 0.0
      %637 = vmatpush1.msra.mxu0 0.0
      %638 = vmatprep.subr.mxu0 0.0
      %639 = vmatpush1.msra.mxu0 0.0
      %640 = vmatprep.subr.mxu0 0.0
      %641 = vmatpush1.msra.mxu0 0.0
      %642 = vmatprep.subr.mxu0 0.0
      %643 = vmatpush1.msra.mxu0 0.0
      %644 = vmatprep.subr.mxu0 0.0
      %645 = vmatpush1.msra.mxu0 0.0
      %646 = vmatprep.subr.mxu0 0.0
      %647 = vmatpush1.msra.mxu0 0.0
      %648 = vmatprep.subr.mxu0 0.0
      %649 = vmatpush1.msra.mxu0 0.0
      %650 = vmatprep.subr.mxu0 0.0
      %651 = vmatpush1.msra.mxu0 0.0
      %652 = vmatprep.subr.mxu0 0.0
      %653 = vmatpush1.msra.mxu0 0.0
      %654 = vmatprep.subr.mxu0 0.0
      %655 = vmatpush1.msra.mxu0 0.0
      %656 = vmatprep.subr.mxu0 0.0
      %657 = vmatpush1.msra.mxu0 %v619
      %658 = vmatprep.subr.mxu0 0.0
      %659 = vmatpush2.msra.mxu0 0.0
      %660 = vmatprep.subr.mxu0 0.0
      %661 = vmatpush2.msra.mxu0 0.0
      %662 = vmatprep.subr.mxu0 0.0
      %663 = vmatpush2.msra.mxu0 0.0
      %664 = vmatprep.subr.mxu0 0.0
      %665 = vmatpush2.msra.mxu0 0.0
      %666 = vmatprep.subr.mxu0 0.0
      %667 = vmatpush2.msra.mxu0 0.0
      %668 = vmatprep.subr.mxu0 0.0
      %669 = vmatpush2.msra.mxu0 0.0
      %670 = vmatprep.subr.mxu0 0.0
      %671 = vmatpush2.msra.mxu0 0.0
      %672 = vmatprep.subr.mxu0 0.0
      %673 = vmatpush2.msra.mxu0 0.0
      %674 = vmatprep.subr.mxu0 0.0
      %675 = vmatpush2.msra.mxu0 0.0
      %676 = vmatprep.subr.mxu0 0.0
      %677 = vmatpush2.msra.mxu0 0.0
      %678 = vmatprep.subr.mxu0 0.0
      %679 = vmatpush2.msra.mxu0 0.0
      %680 = vmatprep.subr.mxu0 0.0
      %681 = vmatpush2.msra.mxu0 0.0
      %682 = vmatprep.subr.mxu0 0.0
      %683 = vmatpush2.msra.mxu0 0.0
      %684 = vmatprep.subr.mxu0 0.0
      %685 = vmatpush2.msra.mxu0 0.0
      %686 = vmatprep.subr.mxu0 0.0
      %687 = vmatpush2.msra.mxu0 0.0
      %688 = vmatprep.subr.mxu0 0.0
      %689 = vmatpush2.msra.mxu0 0.0
      %690 = vmatprep.mubr.f32.mxu0 0.0
      %691 = vmatmul.mubr.f32.gmra.mxu0 %v621
      %v692 = vpop.f32.mrf.mxu0
      %v693 = vadd.f32 0.0, %v692
      %v694 = vpop.f32.mrf.mxu0
      %695 = vmatprep.mubr.f32.mxu0 0.0
      %696 = vmatmul.mubr.f32.gmra.mxu0 %v624
      %v697 = vpop.f32.mrf.mxu0
      %v698 = vadd.f32 0.0, %v697
      %v699 = vpop.f32.mrf.mxu0
      %700 = vdwg.mxu0
      %v701 = vadd.f32 %v616, %v693
      %v702 = vadd.f32 %v617, %v698
      %s703 = scalar_lea.vmem %s3, 32
      %v704 = vld [vmem:[%s703] sm:$0xff]
      %v706 = vrot.slane %v352, 1
      %v707 = vrot.slane %v353, 1
      %v708 = vsel %vm364, %v706, %v707
      %v709 = vrot.slane %v354, 1
      %v710 = vsel %vm364, %v707, %v709
      %v711 = vsel %vm370, %v708, 0
      %v713 = vsel %vm370, %v710, 0
      %715 = vmatprep.subr.mxu0 0.0
      %716 = vmatpush1.msra.mxu0 0.0
      %717 = vmatprep.subr.mxu0 0.0
      %718 = vmatpush1.msra.mxu0 0.0
      %719 = vmatprep.subr.mxu0 0.0
      %720 = vmatpush1.msra.mxu0 0.0
      %721 = vmatprep.subr.mxu0 0.0
      %722 = vmatpush1.msra.mxu0 0.0
      %723 = vmatprep.subr.mxu0 0.0
      %724 = vmatpush1.msra.mxu0 0.0
      %725 = vmatprep.subr.mxu0 0.0
      %726 = vmatpush1.msra.mxu0 0.0
      %727 = vmatprep.subr.mxu0 0.0
      %728 = vmatpush1.msra.mxu0 0.0
      %729 = vmatprep.subr.mxu0 0.0
      %730 = vmatpush1.msra.mxu0 0.0
      %731 = vmatprep.subr.mxu0 0.0
      %732 = vmatpush1.msra.mxu0 0.0
      %733 = vmatprep.subr.mxu0 0.0
      %734 = vmatpush1.msra.mxu0 0.0
      %735 = vmatprep.subr.mxu0 0.0
      %736 = vmatpush1.msra.mxu0 0.0
      %737 = vmatprep.subr.mxu0 0.0
      %738 = vmatpush1.msra.mxu0 0.0
      %739 = vmatprep.subr.mxu0 0.0
      %740 = vmatpush1.msra.mxu0 0.0
      %741 = vmatprep.subr.mxu0 0.0
      %742 = vmatpush1.msra.mxu0 0.0
      %743 = vmatprep.subr.mxu0 0.0
      %744 = vmatpush1.msra.mxu0 0.0
      %745 = vmatprep.subr.mxu0 0.0
      %746 = vmatpush1.msra.mxu0 %v704
      %747 = vmatprep.subr.mxu0 0.0
      %748 = vmatpush2.msra.mxu0 0.0
      %749 = vmatprep.subr.mxu0 0.0
      %750 = vmatpush2.msra.mxu0 0.0
      %751 = vmatprep.subr.mxu0 0.0
      %752 = vmatpush2.msra.mxu0 0.0
      %753 = vmatprep.subr.mxu0 0.0
      %754 = vmatpush2.msra.mxu0 0.0
      %755 = vmatprep.subr.mxu0 0.0
      %756 = vmatpush2.msra.mxu0 0.0
      %757 = vmatprep.subr.mxu0 0.0
      %758 = vmatpush2.msra.mxu0 0.0
      %759 = vmatprep.subr.mxu0 0.0
      %760 = vmatpush2.msra.mxu0 0.0
      %761 = vmatprep.subr.mxu0 0.0
      %762 = vmatpush2.msra.mxu0 0.0
      %763 = vmatprep.subr.mxu0 0.0
      %764 = vmatpush2.msra.mxu0 0.0
      %765 = vmatprep.subr.mxu0 0.0
      %766 = vmatpush2.msra.mxu0 0.0
      %767 = vmatprep.subr.mxu0 0.0
      %768 = vmatpush2.msra.mxu0 0.0
      %769 = vmatprep.subr.mxu0 0.0
      %770 = vmatpush2.msra.mxu0 0.0
      %771 = vmatprep.subr.mxu0 0.0
      %772 = vmatpush2.msra.mxu0 0.0
      %773 = vmatprep.subr.mxu0 0.0
      %774 = vmatpush2.msra.mxu0 0.0
      %775 = vmatprep.subr.mxu0 0.0
      %776 = vmatpush2.msra.mxu0 0.0
      %777 = vmatprep.subr.mxu0 0.0
      %778 = vmatpush2.msra.mxu0 0.0
      %779 = vmatprep.mubr.f32.mxu0 0.0
      %780 = vmatmul.mubr.f32.gmra.mxu0 %v711
      %v781 = vpop.f32.mrf.mxu0
      %v782 = vadd.f32 0.0, %v781
      %v783 = vpop.f32.mrf.mxu0
      %784 = vmatprep.mubr.f32.mxu0 0.0
      %785 = vmatmul.mubr.f32.gmra.mxu0 %v713
      %v786 = vpop.f32.mrf.mxu0
      %v787 = vadd.f32 0.0, %v786
      %v788 = vpop.f32.mrf.mxu0
      %789 = vdwg.mxu0
      %v790 = vadd.f32 %v701, %v782
      %v791 = vadd.f32 %v702, %v787
      %s792 = scalar_lea.vmem %s3, 40
      %v793 = vld [vmem:[%s792] sm:$0xff]
      %v794 = vrot.slane %v352, 2
      %v795 = vrot.slane %v353, 2
      %v796 = vsel %vm531, %v794, %v795
      %v797 = vrot.slane %v354, 2
      %v798 = vsel %vm531, %v795, %v797
      %v799 = vsel %vm370, %v796, 0
      %v801 = vsel %vm370, %v798, 0
      %803 = vmatprep.subr.mxu0 0.0
      %804 = vmatpush1.msra.mxu0 0.0
      %805 = vmatprep.subr.mxu0 0.0
      %806 = vmatpush1.msra.mxu0 0.0
      %807 = vmatprep.subr.mxu0 0.0
      %808 = vmatpush1.msra.mxu0 0.0
      %809 = vmatprep.subr.mxu0 0.0
      %810 = vmatpush1.msra.mxu0 0.0
      %811 = vmatprep.subr.mxu0 0.0
      %812 = vmatpush1.msra.mxu0 0.0
      %813 = vmatprep.subr.mxu0 0.0
      %814 = vmatpush1.msra.mxu0 0.0
      %815 = vmatprep.subr.mxu0 0.0
      %816 = vmatpush1.msra.mxu0 0.0
      %817 = vmatprep.subr.mxu0 0.0
      %818 = vmatpush1.msra.mxu0 0.0
      %819 = vmatprep.subr.mxu0 0.0
      %820 = vmatpush1.msra.mxu0 0.0
      %821 = vmatprep.subr.mxu0 0.0
      %822 = vmatpush1.msra.mxu0 0.0
      %823 = vmatprep.subr.mxu0 0.0
      %824 = vmatpush1.msra.mxu0 0.0
      %825 = vmatprep.subr.mxu0 0.0
      %826 = vmatpush1.msra.mxu0 0.0
      %827 = vmatprep.subr.mxu0 0.0
      %828 = vmatpush1.msra.mxu0 0.0
      %829 = vmatprep.subr.mxu0 0.0
      %830 = vmatpush1.msra.mxu0 0.0
      %831 = vmatprep.subr.mxu0 0.0
      %832 = vmatpush1.msra.mxu0 0.0
      %833 = vmatprep.subr.mxu0 0.0
      %834 = vmatpush1.msra.mxu0 %v793
      %835 = vmatprep.subr.mxu0 0.0
      %836 = vmatpush2.msra.mxu0 0.0
      %837 = vmatprep.subr.mxu0 0.0
      %838 = vmatpush2.msra.mxu0 0.0
      %839 = vmatprep.subr.mxu0 0.0
      %840 = vmatpush2.msra.mxu0 0.0
      %841 = vmatprep.subr.mxu0 0.0
      %842 = vmatpush2.msra.mxu0 0.0
      %843 = vmatprep.subr.mxu0 0.0
      %844 = vmatpush2.msra.mxu0 0.0
      %845 = vmatprep.subr.mxu0 0.0
      %846 = vmatpush2.msra.mxu0 0.0
      %847 = vmatprep.subr.mxu0 0.0
      %848 = vmatpush2.msra.mxu0 0.0
      %849 = vmatprep.subr.mxu0 0.0
      %850 = vmatpush2.msra.mxu0 0.0
      %851 = vmatprep.subr.mxu0 0.0
      %852 = vmatpush2.msra.mxu0 0.0
      %853 = vmatprep.subr.mxu0 0.0
      %854 = vmatpush2.msra.mxu0 0.0
      %855 = vmatprep.subr.mxu0 0.0
      %856 = vmatpush2.msra.mxu0 0.0
      %857 = vmatprep.subr.mxu0 0.0
      %858 = vmatpush2.msra.mxu0 0.0
      %859 = vmatprep.subr.mxu0 0.0
      %860 = vmatpush2.msra.mxu0 0.0
      %861 = vmatprep.subr.mxu0 0.0
      %862 = vmatpush2.msra.mxu0 0.0
      %863 = vmatprep.subr.mxu0 0.0
      %864 = vmatpush2.msra.mxu0 0.0
      %865 = vmatprep.subr.mxu0 0.0
      %866 = vmatpush2.msra.mxu0 0.0
      %867 = vmatprep.mubr.f32.mxu0 0.0
      %868 = vmatmul.mubr.f32.gmra.mxu0 %v799
      %v869 = vpop.f32.mrf.mxu0
      %v870 = vadd.f32 0.0, %v869
      %v871 = vpop.f32.mrf.mxu0
      %872 = vmatprep.mubr.f32.mxu0 0.0
      %873 = vmatmul.mubr.f32.gmra.mxu0 %v801
      %v874 = vpop.f32.mrf.mxu0
      %v875 = vadd.f32 0.0, %v874
      %v876 = vpop.f32.mrf.mxu0
      %877 = vdwg.mxu0
      %v878 = vadd.f32 %v790, %v870
      %v879 = vadd.f32 %v791, %v875
      %s880 = scalar_lea.vmem %s3, 48
      %v881 = vld [vmem:[%s880] sm:$0xff]
      %v883 = vsel %vm370, %v355, 0
      %v886 = vsel %vm370, %v356, 0
      %888 = vmatprep.subr.mxu0 0.0
      %889 = vmatpush1.msra.mxu0 0.0
      %890 = vmatprep.subr.mxu0 0.0
      %891 = vmatpush1.msra.mxu0 0.0
      %892 = vmatprep.subr.mxu0 0.0
      %893 = vmatpush1.msra.mxu0 0.0
      %894 = vmatprep.subr.mxu0 0.0
      %895 = vmatpush1.msra.mxu0 0.0
      %896 = vmatprep.subr.mxu0 0.0
      %897 = vmatpush1.msra.mxu0 0.0
      %898 = vmatprep.subr.mxu0 0.0
      %899 = vmatpush1.msra.mxu0 0.0
      %900 = vmatprep.subr.mxu0 0.0
      %901 = vmatpush1.msra.mxu0 0.0
      %902 = vmatprep.subr.mxu0 0.0
      %903 = vmatpush1.msra.mxu0 0.0
      %904 = vmatprep.subr.mxu0 0.0
      %905 = vmatpush1.msra.mxu0 0.0
      %906 = vmatprep.subr.mxu0 0.0
      %907 = vmatpush1.msra.mxu0 0.0
      %908 = vmatprep.subr.mxu0 0.0
      %909 = vmatpush1.msra.mxu0 0.0
      %910 = vmatprep.subr.mxu0 0.0
      %911 = vmatpush1.msra.mxu0 0.0
      %912 = vmatprep.subr.mxu0 0.0
      %913 = vmatpush1.msra.mxu0 0.0
      %914 = vmatprep.subr.mxu0 0.0
      %915 = vmatpush1.msra.mxu0 0.0
      %916 = vmatprep.subr.mxu0 0.0
      %917 = vmatpush1.msra.mxu0 0.0
      %918 = vmatprep.subr.mxu0 0.0
      %919 = vmatpush1.msra.mxu0 %v881
      %920 = vmatprep.subr.mxu0 0.0
      %921 = vmatpush2.msra.mxu0 0.0
      %922 = vmatprep.subr.mxu0 0.0
      %923 = vmatpush2.msra.mxu0 0.0
      %924 = vmatprep.subr.mxu0 0.0
      %925 = vmatpush2.msra.mxu0 0.0
      %926 = vmatprep.subr.mxu0 0.0
      %927 = vmatpush2.msra.mxu0 0.0
      %928 = vmatprep.subr.mxu0 0.0
      %929 = vmatpush2.msra.mxu0 0.0
      %930 = vmatprep.subr.mxu0 0.0
      %931 = vmatpush2.msra.mxu0 0.0
      %932 = vmatprep.subr.mxu0 0.0
      %933 = vmatpush2.msra.mxu0 0.0
      %934 = vmatprep.subr.mxu0 0.0
      %935 = vmatpush2.msra.mxu0 0.0
      %936 = vmatprep.subr.mxu0 0.0
      %937 = vmatpush2.msra.mxu0 0.0
      %938 = vmatprep.subr.mxu0 0.0
      %939 = vmatpush2.msra.mxu0 0.0
      %940 = vmatprep.subr.mxu0 0.0
      %941 = vmatpush2.msra.mxu0 0.0
      %942 = vmatprep.subr.mxu0 0.0
      %943 = vmatpush2.msra.mxu0 0.0
      %944 = vmatprep.subr.mxu0 0.0
      %945 = vmatpush2.msra.mxu0 0.0
      %946 = vmatprep.subr.mxu0 0.0
      %947 = vmatpush2.msra.mxu0 0.0
      %948 = vmatprep.subr.mxu0 0.0
      %949 = vmatpush2.msra.mxu0 0.0
      %950 = vmatprep.subr.mxu0 0.0
      %951 = vmatpush2.msra.mxu0 0.0
      %952 = vmatprep.mubr.f32.mxu0 0.0
      %953 = vmatmul.mubr.f32.gmra.mxu0 %v883
      %v954 = vpop.f32.mrf.mxu0
      %v955 = vadd.f32 0.0, %v954
      %v956 = vpop.f32.mrf.mxu0
      %957 = vmatprep.mubr.f32.mxu0 0.0
      %958 = vmatmul.mubr.f32.gmra.mxu0 %v886
      %v959 = vpop.f32.mrf.mxu0
      %v960 = vadd.f32 0.0, %v959
      %v961 = vpop.f32.mrf.mxu0
      %962 = vdwg.mxu0
      %v963 = vadd.f32 %v878, %v955
      %v964 = vadd.f32 %v879, %v960
      %s965 = scalar_lea.vmem %s3, 56
      %v966 = vld [vmem:[%s965] sm:$0xff]
      %v968 = vrot.slane %v355, 1
      %v969 = vrot.slane %v356, 1
      %v970 = vsel %vm364, %v968, %v969
      %v971 = vrot.slane %v357, 1
      %v972 = vsel %vm364, %v969, %v971
      %v973 = vsel %vm370, %v970, 0
      %v975 = vsel %vm370, %v972, 0
      %977 = vmatprep.subr.mxu0 0.0
      %978 = vmatpush1.msra.mxu0 0.0
      %979 = vmatprep.subr.mxu0 0.0
      %980 = vmatpush1.msra.mxu0 0.0
      %981 = vmatprep.subr.mxu0 0.0
      %982 = vmatpush1.msra.mxu0 0.0
      %983 = vmatprep.subr.mxu0 0.0
      %984 = vmatpush1.msra.mxu0 0.0
      %985 = vmatprep.subr.mxu0 0.0
      %986 = vmatpush1.msra.mxu0 0.0
      %987 = vmatprep.subr.mxu0 0.0
      %988 = vmatpush1.msra.mxu0 0.0
      %989 = vmatprep.subr.mxu0 0.0
      %990 = vmatpush1.msra.mxu0 0.0
      %991 = vmatprep.subr.mxu0 0.0
      %992 = vmatpush1.msra.mxu0 0.0
      %993 = vmatprep.subr.mxu0 0.0
      %994 = vmatpush1.msra.mxu0 0.0
      %995 = vmatprep.subr.mxu0 0.0
      %996 = vmatpush1.msra.mxu0 0.0
      %997 = vmatprep.subr.mxu0 0.0
      %998 = vmatpush1.msra.mxu0 0.0
      %999 = vmatprep.subr.mxu0 0.0
      %1000 = vmatpush1.msra.mxu0 0.0
      %1001 = vmatprep.subr.mxu0 0.0
      %1002 = vmatpush1.msra.mxu0 0.0
      %1003 = vmatprep.subr.mxu0 0.0
      %1004 = vmatpush1.msra.mxu0 0.0
      %1005 = vmatprep.subr.mxu0 0.0
      %1006 = vmatpush1.msra.mxu0 0.0
      %1007 = vmatprep.subr.mxu0 0.0
      %1008 = vmatpush1.msra.mxu0 %v966
      %1009 = vmatprep.subr.mxu0 0.0
      %1010 = vmatpush2.msra.mxu0 0.0
      %1011 = vmatprep.subr.mxu0 0.0
      %1012 = vmatpush2.msra.mxu0 0.0
      %1013 = vmatprep.subr.mxu0 0.0
      %1014 = vmatpush2.msra.mxu0 0.0
      %1015 = vmatprep.subr.mxu0 0.0
      %1016 = vmatpush2.msra.mxu0 0.0
      %1017 = vmatprep.subr.mxu0 0.0
      %1018 = vmatpush2.msra.mxu0 0.0
      %1019 = vmatprep.subr.mxu0 0.0
      %1020 = vmatpush2.msra.mxu0 0.0
      %1021 = vmatprep.subr.mxu0 0.0
      %1022 = vmatpush2.msra.mxu0 0.0
      %1023 = vmatprep.subr.mxu0 0.0
      %1024 = vmatpush2.msra.mxu0 0.0
      %1025 = vmatprep.subr.mxu0 0.0
      %1026 = vmatpush2.msra.mxu0 0.0
      %1027 = vmatprep.subr.mxu0 0.0
      %1028 = vmatpush2.msra.mxu0 0.0
      %1029 = vmatprep.subr.mxu0 0.0
      %1030 = vmatpush2.msra.mxu0 0.0
      %1031 = vmatprep.subr.mxu0 0.0
      %1032 = vmatpush2.msra.mxu0 0.0
      %1033 = vmatprep.subr.mxu0 0.0
      %1034 = vmatpush2.msra.mxu0 0.0
      %1035 = vmatprep.subr.mxu0 0.0
      %1036 = vmatpush2.msra.mxu0 0.0
      %1037 = vmatprep.subr.mxu0 0.0
      %1038 = vmatpush2.msra.mxu0 0.0
      %1039 = vmatprep.subr.mxu0 0.0
      %1040 = vmatpush2.msra.mxu0 0.0
      %1041 = vmatprep.mubr.f32.mxu0 0.0
      %1042 = vmatmul.mubr.f32.gmra.mxu0 %v973
      %v1043 = vpop.f32.mrf.mxu0
      %v1044 = vadd.f32 0.0, %v1043
      %v1045 = vpop.f32.mrf.mxu0
      %1046 = vmatprep.mubr.f32.mxu0 0.0
      %1047 = vmatmul.mubr.f32.gmra.mxu0 %v975
      %v1048 = vpop.f32.mrf.mxu0
      %v1049 = vadd.f32 0.0, %v1048
      %v1050 = vpop.f32.mrf.mxu0
      %1051 = vdwg.mxu0
      %v1052 = vadd.f32 %v963, %v1044
      %v1053 = vadd.f32 %v964, %v1049
      %s1054 = scalar_lea.vmem %s3, 64
      %v1055 = vld [vmem:[%s1054] sm:$0xff]
      %v1056 = vrot.slane %v355, 2
      %v1057 = vrot.slane %v356, 2
      %v1058 = vsel %vm531, %v1056, %v1057
      %v1059 = vrot.slane %v357, 2
      %v1060 = vsel %vm531, %v1057, %v1059
      %v1061 = vsel %vm370, %v1058, 0
      %v1063 = vsel %vm370, %v1060, 0
      %1065 = vmatprep.subr.mxu0 0.0
      %1066 = vmatpush1.msra.mxu0 0.0
      %1067 = vmatprep.subr.mxu0 0.0
      %1068 = vmatpush1.msra.mxu0 0.0
      %1069 = vmatprep.subr.mxu0 0.0
      %1070 = vmatpush1.msra.mxu0 0.0
      %1071 = vmatprep.subr.mxu0 0.0
      %1072 = vmatpush1.msra.mxu0 0.0
      %1073 = vmatprep.subr.mxu0 0.0
      %1074 = vmatpush1.msra.mxu0 0.0
      %1075 = vmatprep.subr.mxu0 0.0
      %1076 = vmatpush1.msra.mxu0 0.0
      %1077 = vmatprep.subr.mxu0 0.0
      %1078 = vmatpush1.msra.mxu0 0.0
      %1079 = vmatprep.subr.mxu0 0.0
      %1080 = vmatpush1.msra.mxu0 0.0
      %1081 = vmatprep.subr.mxu0 0.0
      %1082 = vmatpush1.msra.mxu0 0.0
      %1083 = vmatprep.subr.mxu0 0.0
      %1084 = vmatpush1.msra.mxu0 0.0
      %1085 = vmatprep.subr.mxu0 0.0
      %1086 = vmatpush1.msra.mxu0 0.0
      %1087 = vmatprep.subr.mxu0 0.0
      %1088 = vmatpush1.msra.mxu0 0.0
      %1089 = vmatprep.subr.mxu0 0.0
      %1090 = vmatpush1.msra.mxu0 0.0
      %1091 = vmatprep.subr.mxu0 0.0
      %1092 = vmatpush1.msra.mxu0 0.0
      %1093 = vmatprep.subr.mxu0 0.0
      %1094 = vmatpush1.msra.mxu0 0.0
      %1095 = vmatprep.subr.mxu0 0.0
      %1096 = vmatpush1.msra.mxu0 %v1055
      %1097 = vmatprep.subr.mxu0 0.0
      %1098 = vmatpush2.msra.mxu0 0.0
      %1099 = vmatprep.subr.mxu0 0.0
      %1100 = vmatpush2.msra.mxu0 0.0
      %1101 = vmatprep.subr.mxu0 0.0
      %1102 = vmatpush2.msra.mxu0 0.0
      %1103 = vmatprep.subr.mxu0 0.0
      %1104 = vmatpush2.msra.mxu0 0.0
      %1105 = vmatprep.subr.mxu0 0.0
      %1106 = vmatpush2.msra.mxu0 0.0
      %1107 = vmatprep.subr.mxu0 0.0
      %1108 = vmatpush2.msra.mxu0 0.0
      %1109 = vmatprep.subr.mxu0 0.0
      %1110 = vmatpush2.msra.mxu0 0.0
      %1111 = vmatprep.subr.mxu0 0.0
      %1112 = vmatpush2.msra.mxu0 0.0
      %1113 = vmatprep.subr.mxu0 0.0
      %1114 = vmatpush2.msra.mxu0 0.0
      %1115 = vmatprep.subr.mxu0 0.0
      %1116 = vmatpush2.msra.mxu0 0.0
      %1117 = vmatprep.subr.mxu0 0.0
      %1118 = vmatpush2.msra.mxu0 0.0
      %1119 = vmatprep.subr.mxu0 0.0
      %1120 = vmatpush2.msra.mxu0 0.0
      %1121 = vmatprep.subr.mxu0 0.0
      %1122 = vmatpush2.msra.mxu0 0.0
      %1123 = vmatprep.subr.mxu0 0.0
      %1124 = vmatpush2.msra.mxu0 0.0
      %1125 = vmatprep.subr.mxu0 0.0
      %1126 = vmatpush2.msra.mxu0 0.0
      %1127 = vmatprep.subr.mxu0 0.0
      %1128 = vmatpush2.msra.mxu0 0.0
      %1129 = vmatprep.mubr.f32.mxu0 0.0
      %1130 = vmatmul.mubr.f32.gmra.mxu0 %v1061
      %v1131 = vpop.f32.mrf.mxu0
      %v1132 = vadd.f32 0.0, %v1131
      %v1133 = vpop.f32.mrf.mxu0
      %1134 = vmatprep.mubr.f32.mxu0 0.0
      %1135 = vmatmul.mubr.f32.gmra.mxu0 %v1063
      %v1136 = vpop.f32.mrf.mxu0
      %v1137 = vadd.f32 0.0, %v1136
      %v1138 = vpop.f32.mrf.mxu0
      %1139 = vdwg.mxu0
      %v1140 = vadd.f32 %v1052, %v1132
      %v1141 = vadd.f32 %v1053, %v1137
      %vm1142 = vcmask 31744
      %1143 = vst.msk [vmem:[%s340] sm:$0xff] %vm1142, %v1140
      %1144 = vst.msk [vmem:[%s340 + $0x8] sm:$0xff] %vm1142, %v1141
      %v1145 = vld [vmem:[%s5] sm:$0x3]
      %v1146 = vsel %vm1142, %v1140, 0.0
      %v1147 = vsel %vm1142, %v1141, 0.0
      %v1148 = vadd.f32 %v1146, %v1147
      %v1149 = vrot.slane %v1148, 4
      %v1150 = vadd.f32 %v1148, %v1149
      %v1151 = vrot.slane %v1150, 2
      %v1152 = vadd.f32 %v1150, %v1151
      %v1153 = vrot.slane %v1152, 1
      %v1154 = vadd.f32 %v1152, %v1153
      %v1155 = vmul.f32 %v1140, %v1140
      %v1156 = vmul.f32 %v1141, %v1141
      %v1157 = vsel %vm1142, %v1155, 0.0
      %v1158 = vsel %vm1142, %v1156, 0.0
      %v1159 = vadd.f32 %v1157, %v1158
      %v1160 = vrot.slane %v1159, 4
      %v1161 = vadd.f32 %v1159, %v1160
      %v1162 = vrot.slane %v1161, 2
      %v1163 = vadd.f32 %v1161, %v1162
      %v1164 = vrot.slane %v1163, 1
      %v1165 = vadd.f32 %v1163, %v1164
      %vm1166 = vcmask 1040384
      %v1167 = vsel %vm1166, %v1154, %v1165
      %v1168 = vadd.f32 %v1145, %v1167
      %vm1169 = vcmask 25600
      %1170 = vst.msk [vmem:[%s5] sm:$0x3] %vm1169, %v1168
      %p1171 = scmp.lt.s32.totalorder %s21, 1
      %s1172 = scalar_select %p1171, %s21, 1
      %p1173 = scmp.lt.s32.totalorder %s22, 15
      %s1174 = scalar_select %p1173, %s22, 15
      %s1175 = smul.addr %s1174, 2
      %s1176 = smul.addr %s1172, 32
      %s1177 = sadd.s32 %s1175, %s1176
      %s1178 = smul.addr %s1177, 8
      %s1179 = scalar_lea.vmem %s4, %s1178
      // Predicated region
      $region41: #{decoder_forward.7} parent=35 // pred_check
        %p1180 = pneg %p158
      $region42: #{decoder_forward.7} parent=35 // pred_check_branch
        %1182 = sbr.rel (%p1180) target = $region44
      $region43: #{decoder_forward.7} parent=35 // pred_region
        _
      $region44: #{decoder_forward.7} parent=35 // pred_fallthru
        _
      // Predicated region
      $region45: #{decoder_forward.7} parent=35 // pred_check
        %p1183 = pneg %p179
      $region46: #{decoder_forward.7} parent=35 // pred_check_branch
        %1185 = sbr.rel (%p1183) target = $region48
      $region47: #{decoder_forward.7} parent=35 // pred_region
        _
      $region48: #{decoder_forward.7} parent=35 // pred_fallthru
        _
      // Predicated region
      $region49: #{decoder_forward.7} parent=35 // pred_check
        %p1186 = pneg %p179
      $region50: #{decoder_forward.7} parent=35 // pred_check_branch
        %1188 = sbr.rel (%p1186) target = $region52
      $region51: #{decoder_forward.7} parent=35 // pred_region
        _
      $region52: #{decoder_forward.7} parent=35 // pred_fallthru
        _
    $region36: #{decoder_forward.7} parent=5 // pred_fallthru
      _
    %p1189 = scmp.le.s32.totalorder 2, %s12
    // Predicated region
    $region53: #{decoder_forward.7} parent=5 // pred_check
      %p1190 = pneg %p1189
    $region54: #{decoder_forward.7} parent=5 // pred_check_branch
      %1192 = sbr.rel (%p1190) target = $region56
    $region55: #{decoder_forward.7} parent=5 // pred_region
      %s1193 = ssub.s32 %s12, 2
      // Predicated region
      $region57: #{decoder_forward.7} parent=55 // pred_check
        %p1194 = pneg %p164
      $region58: #{decoder_forward.7} parent=55 // pred_check_branch
        %1196 = sbr.rel (%p1194) target = $region60
      $region59: #{decoder_forward.7} parent=55 // pred_region
        %p1197 = scmp.lt.s32.totalorder %s23, 1
        %s1198 = scalar_select %p1197, %s23, 1
        %p1199 = scmp.lt.s32.totalorder %s24, 15
        %s1200 = scalar_select %p1199, %s24, 15
        %s1201 = smul.addr %s1200, 2
        %s1202 = smul.addr %s1198, 32
        %s1203 = sadd.s32 %s1201, %s1202
        %s1204 = smul.addr %s1203, 8
        %s1205 = scalar_lea.vmem %s4, %s1204
      $region60: #{decoder_forward.7} parent=55 // pred_fallthru
        _
    $region56: #{decoder_forward.7} parent=5 // pred_fallthru
      _
  $region6: #{decoder_forward.7} parent=0 // loop_footer
    %s16 = sadd.s32 1, %s12
  $region7: #{decoder_forward.7} parent=0 // loop_footer_branch
    %11 = sbr.rel target = $region3
  $region8: #{decoder_forward.7} parent=0 // loop_exit
    _

// kernel: decoder_forward.6
$region0: #{decoder_forward.6}
  #allocation0 [shape = 'u32[]', space=smem, size = 0x4, offset = 0x4, fixed_abs, tag = 'smem constant byte address 0x4 - core index']
  #allocation1 [shape = 'u32[144,128]{1,0:T(1,128)}', space=vmem, size = 0x12000, scoped, tag = 'internal scratch']
  #allocation2 [shape = 'f32[1,1]{1,0:T(1,128)S(1)}', space=vmem, size = 0x200, scoped, tag = 'scoped memory for decoder_forward.6']
  %s0 = inlined_call_operand.vmem [shape: f32[512,8], index: 0, kind: input, shape index: {}]
  %s1 = inlined_call_operand.vmem [shape: f32[512,4], index: 1, kind: input, shape index: {}]
  %s2 = inlined_call_operand.vmem [shape: f32[4,4], index: 2, kind: input, shape index: {}]
  %s3 = inlined_call_operand.vmem [shape: f32[1,4], index: 3, kind: input, shape index: {}]
  %s4 = inlined_call_operand.<no memory space> [shape: f32[1,1], index: 4, kind: input, shape index: {}]
  %s5 = inlined_call_operand.vmem [shape: f32[1,4], index: 5, kind: input, shape index: {}]
  %s6 = inlined_call_operand.vmem [shape: f32[1,4], index: 6, kind: input, shape index: {}]
  %s7 = inlined_call_operand.vmem [shape: f32[1,4], index: 7, kind: input, shape index: {}]
  %s8 = inlined_call_operand.vmem [shape: f32[1,4], index: 8, kind: input, shape index: {}]
  %s9 = inlined_call_operand.vmem [shape: f32[512,8], index: 9, kind: output, shape index: {}]
  %s10 = sld [smem:[#allocation0]]
  $region46: #{decoder_forward.6} parent=0
    _
  %s12 = ssub.s32 1, %s10
  %s13 = scalar_select 0, %s12, %s10
  %v14 = vstv %s4
  %15 = vst [vmem:[#allocation2] sm:$0x1] %v14
  // Predicated region
  $region2: #{decoder_forward.6} parent=0 // pred_check
    _
  $region3: #{decoder_forward.6} parent=0 // pred_check_branch
    %17 = sbr.rel (0) target = $region5
  $region4: #{decoder_forward.6} parent=0 // pred_region
    _
  $region5: #{decoder_forward.6} parent=0 // pred_fallthru
    _
  // Predicated region
  $region6: #{decoder_forward.6} parent=0 // pred_check
    _
  $region7: #{decoder_forward.6} parent=0 // pred_check_branch
    %19 = sbr.rel (0) target = $region9
  $region8: #{decoder_forward.6} parent=0 // pred_region
    _
  $region9: #{decoder_forward.6} parent=0 // pred_fallthru
    _
  // Predicated region
  $region10: #{decoder_forward.6} parent=0 // pred_check
    _
  $region11: #{decoder_forward.6} parent=0 // pred_check_branch
    %21 = sbr.rel (0) target = $region13
  $region12: #{decoder_forward.6} parent=0 // pred_region
    _
  $region13: #{decoder_forward.6} parent=0 // pred_fallthru
    _
  // Predicated region
  $region14: #{decoder_forward.6} parent=0 // pred_check
    _
  $region15: #{decoder_forward.6} parent=0 // pred_check_branch
    %23 = sbr.rel (0) target = $region17
  $region16: #{decoder_forward.6} parent=0 // pred_region
    _
  $region17: #{decoder_forward.6} parent=0 // pred_fallthru
    _
  // Predicated region
  $region18: #{decoder_forward.6} parent=0 // pred_check
    _
  $region19: #{decoder_forward.6} parent=0 // pred_check_branch
    %25 = sbr.rel (0) target = $region21
  $region20: #{decoder_forward.6} parent=0 // pred_region
    _
  $region21: #{decoder_forward.6} parent=0 // pred_fallthru
    _
  // Predicated region
  $region22: #{decoder_forward.6} parent=0 // pred_check
    _
  $region23: #{decoder_forward.6} parent=0 // pred_check_branch
    %27 = sbr.rel (0) target = $region25
  $region24: #{decoder_forward.6} parent=0 // pred_region
    _
  $region25: #{decoder_forward.6} parent=0 // pred_fallthru
    _
  // Predicated region
  $region26: #{decoder_forward.6} parent=0 // pred_check
    _
  $region27: #{decoder_forward.6} parent=0 // pred_check_branch
    %29 = sbr.rel (0) target = $region29
  $region28: #{decoder_forward.6} parent=0 // pred_region
    _
  $region29: #{decoder_forward.6} parent=0 // pred_fallthru
    _
  // Predicated region
  $region30: #{decoder_forward.6} parent=0 // pred_check
    _
  $region31: #{decoder_forward.6} parent=0 // pred_check_branch
    %31 = sbr.rel (0) target = $region33
  $region32: #{decoder_forward.6} parent=0 // pred_region
    _
  $region33: #{decoder_forward.6} parent=0 // pred_fallthru
    _
  // Predicated region
  $region34: #{decoder_forward.6} parent=0 // pred_check
    _
  $region35: #{decoder_forward.6} parent=0 // pred_check_branch
    %33 = sbr.rel (0) target = $region37
  $region36: #{decoder_forward.6} parent=0 // pred_region
    _
  $region37: #{decoder_forward.6} parent=0 // pred_fallthru
    _
  %v34 = vld [vmem:[%s0] sm:$0xff]
  %v35 = vld [vmem:[%s0 + $0x8] sm:$0xff]
  %v36 = vld [vmem:[%s0 + $0x10] sm:$0xff]
  %v37 = vld [vmem:[%s0 + $0x18] sm:$0xff]
  %v38 = vld [vmem:[%s0 + $0x20] sm:$0xff]
  %v39 = vld [vmem:[%s0 + $0x28] sm:$0xff]
  %v40 = vld [vmem:[%s0 + $0x30] sm:$0xff]
  %v41 = vld [vmem:[%s0 + $0x38] sm:$0xff]
  %v42 = vld [vmem:[%s0 + $0x40] sm:$0xff]
  %v43 = vld [vmem:[%s0 + $0x48] sm:$0xff]
  %v44 = vld [vmem:[%s0 + $0x50] sm:$0xff]
  %v45 = vld [vmem:[%s0 + $0x58] sm:$0xff]
  %v46 = vld [vmem:[%s0 + $0x60] sm:$0xff]
  %v47 = vld [vmem:[%s0 + $0x68] sm:$0xff]
  %v48 = vld [vmem:[%s0 + $0x70] sm:$0xff]
  %v49 = vld [vmem:[%s0 + $0x78] sm:$0xff]
  %v50 = vld [vmem:[%s0 + $0x80] sm:$0xff]
  %v51 = vld [vmem:[%s0 + $0x88] sm:$0xff]
  %v52 = vld [vmem:[%s0 + $0x90] sm:$0xff]
  %v53 = vld [vmem:[%s0 + $0x98] sm:$0xff]
  %v54 = vld [vmem:[%s0 + $0xa0] sm:$0xff]
  %v55 = vld [vmem:[%s0 + $0xa8] sm:$0xff]
  %v56 = vld [vmem:[%s0 + $0xb0] sm:$0xff]
  %v57 = vld [vmem:[%s0 + $0xb8] sm:$0xff]
  %v58 = vld [vmem:[%s0 + $0xc0] sm:$0xff]
  %v59 = vld [vmem:[%s0 + $0xc8] sm:$0xff]
  %v60 = vld [vmem:[%s0 + $0xd0] sm:$0xff]
  %v61 = vld [vmem:[%s0 + $0xd8] sm:$0xff]
  %v62 = vld [vmem:[%s0 + $0xe0] sm:$0xff]
  %v63 = vld [vmem:[%s0 + $0xe8] sm:$0xff]
  %v64 = vld [vmem:[%s0 + $0xf0] sm:$0xff]
  %v65 = vld [vmem:[%s0 + $0xf8] sm:$0xff]
  %v66 = vld [vmem:[%s0 + $0x100] sm:$0xff]
  %v67 = vld [vmem:[%s0 + $0x108] sm:$0xff]
  %v68 = vld [vmem:[%s0 + $0x110] sm:$0xff]
  %v69 = vld [vmem:[%s0 + $0x118] sm:$0xff]
  %v70 = vld [vmem:[%s0 + $0x120] sm:$0xff]
  %v71 = vld [vmem:[%s0 + $0x128] sm:$0xff]
  %v72 = vld [vmem:[%s0 + $0x130] sm:$0xff]
  %v73 = vld [vmem:[%s0 + $0x138] sm:$0xff]
  %v74 = vld [vmem:[%s0 + $0x140] sm:$0xff]
  %v75 = vld [vmem:[%s0 + $0x148] sm:$0xff]
  %v76 = vld [vmem:[%s0 + $0x150] sm:$0xff]
  %v77 = vld [vmem:[%s0 + $0x158] sm:$0xff]
  %v78 = vld [vmem:[%s0 + $0x160] sm:$0xff]
  %v79 = vld [vmem:[%s0 + $0x168] sm:$0xff]
  %v80 = vld [vmem:[%s0 + $0x170] sm:$0xff]
  %v81 = vld [vmem:[%s0 + $0x178] sm:$0xff]
  %v82 = vld [vmem:[%s0 + $0x180] sm:$0xff]
  %v83 = vld [vmem:[%s0 + $0x188] sm:$0xff]
  %v84 = vld [vmem:[%s0 + $0x190] sm:$0xff]
  %v85 = vld [vmem:[%s0 + $0x198] sm:$0xff]
  %v86 = vld [vmem:[%s0 + $0x1a0] sm:$0xff]
  %v87 = vld [vmem:[%s0 + $0x1a8] sm:$0xff]
  %v88 = vld [vmem:[%s0 + $0x1b0] sm:$0xff]
  %v89 = vld [vmem:[%s0 + $0x1b8] sm:$0xff]
  %v90 = vld [vmem:[%s0 + $0x1c0] sm:$0xff]
  %v91 = vld [vmem:[%s0 + $0x1c8] sm:$0xff]
  %v92 = vld [vmem:[%s0 + $0x1d0] sm:$0xff]
  %v93 = vld [vmem:[%s0 + $0x1d8] sm:$0xff]
  %v94 = vld [vmem:[%s0 + $0x1e0] sm:$0xff]
  %v95 = vld [vmem:[%s0 + $0x1e8] sm:$0xff]
  %v96 = vld [vmem:[%s0 + $0x1f0] sm:$0xff]
  %v97 = vld [vmem:[%s0 + $0x1f8] sm:$0xff]
  %v98 = vld [vmem:[%s1] sm:$0xff]
  %v99 = vld [vmem:[%s1 + $0x8] sm:$0xff]
  %v100 = vld [vmem:[%s1 + $0x10] sm:$0xff]
  %v101 = vld [vmem:[%s1 + $0x18] sm:$0xff]
  %v102 = vld [vmem:[%s1 + $0x20] sm:$0xff]
  %v103 = vld [vmem:[%s1 + $0x28] sm:$0xff]
  %v104 = vld [vmem:[%s1 + $0x30] sm:$0xff]
  %v105 = vld [vmem:[%s1 + $0x38] sm:$0xff]
  %v106 = vld [vmem:[%s1 + $0x40] sm:$0xff]
  %v107 = vld [vmem:[%s1 + $0x48] sm:$0xff]
  %v108 = vld [vmem:[%s1 + $0x50] sm:$0xff]
  %v109 = vld [vmem:[%s1 + $0x58] sm:$0xff]
  %v110 = vld [vmem:[%s1 + $0x60] sm:$0xff]
  %v111 = vld [vmem:[%s1 + $0x68] sm:$0xff]
  %v112 = vld [vmem:[%s1 + $0x70] sm:$0xff]
  %v113 = vld [vmem:[%s1 + $0x78] sm:$0xff]
  %v114 = vld [vmem:[%s1 + $0x80] sm:$0xff]
  %v115 = vld [vmem:[%s1 + $0x88] sm:$0xff]
  %v116 = vld [vmem:[%s1 + $0x90] sm:$0xff]
  %v117 = vld [vmem:[%s1 + $0x98] sm:$0xff]
  %v118 = vld [vmem:[%s1 + $0xa0] sm:$0xff]
  %v119 = vld [vmem:[%s1 + $0xa8] sm:$0xff]
  %v120 = vld [vmem:[%s1 + $0xb0] sm:$0xff]
  %v121 = vld [vmem:[%s1 + $0xb8] sm:$0xff]
  %v122 = vld [vmem:[%s1 + $0xc0] sm:$0xff]
  %v123 = vld [vmem:[%s1 + $0xc8] sm:$0xff]
  %v124 = vld [vmem:[%s1 + $0xd0] sm:$0xff]
  %v125 = vld [vmem:[%s1 + $0xd8] sm:$0xff]
  %v126 = vld [vmem:[%s1 + $0xe0] sm:$0xff]
  %v127 = vld [vmem:[%s1 + $0xe8] sm:$0xff]
  %v128 = vld [vmem:[%s1 + $0xf0] sm:$0xff]
  %v129 = vld [vmem:[%s1 + $0xf8] sm:$0xff]
  %v130 = vld [vmem:[%s1 + $0x100] sm:$0xff]
  %v131 = vld [vmem:[%s1 + $0x108] sm:$0xff]
  %v132 = vld [vmem:[%s1 + $0x110] sm:$0xff]
  %v133 = vld [vmem:[%s1 + $0x118] sm:$0xff]
  %v134 = vld [vmem:[%s1 + $0x120] sm:$0xff]
  %v135 = vld [vmem:[%s1 + $0x128] sm:$0xff]
  %v136 = vld [vmem:[%s1 + $0x130] sm:$0xff]
  %v137 = vld [vmem:[%s1 + $0x138] sm:$0xff]
  %v138 = vld [vmem:[%s1 + $0x140] sm:$0xff]
  %v139 = vld [vmem:[%s1 + $0x148] sm:$0xff]
  %v140 = vld [vmem:[%s1 + $0x150] sm:$0xff]
  %v141 = vld [vmem:[%s1 + $0x158] sm:$0xff]
  %v142 = vld [vmem:[%s1 + $0x160] sm:$0xff]
  %v143 = vld [vmem:[%s1 + $0x168] sm:$0xff]
  %v144 = vld [vmem:[%s1 + $0x170] sm:$0xff]
  %v145 = vld [vmem:[%s1 + $0x178] sm:$0xff]
  %v146 = vld [vmem:[%s1 + $0x180] sm:$0xff]
  %v147 = vld [vmem:[%s1 + $0x188] sm:$0xff]
  %v148 = vld [vmem:[%s1 + $0x190] sm:$0xff]
  %v149 = vld [vmem:[%s1 + $0x198] sm:$0xff]
  %v150 = vld [vmem:[%s1 + $0x1a0] sm:$0xff]
  %v151 = vld [vmem:[%s1 + $0x1a8] sm:$0xff]
  %v152 = vld [vmem:[%s1 + $0x1b0] sm:$0xff]
  %v153 = vld [vmem:[%s1 + $0x1b8] sm:$0xff]
  %v154 = vld [vmem:[%s1 + $0x1c0] sm:$0xff]
  %v155 = vld [vmem:[%s1 + $0x1c8] sm:$0xff]
  %v156 = vld [vmem:[%s1 + $0x1d0] sm:$0xff]
  %v157 = vld [vmem:[%s1 + $0x1d8] sm:$0xff]
  %v158 = vld [vmem:[%s1 + $0x1e0] sm:$0xff]
  %v159 = vld [vmem:[%s1 + $0x1e8] sm:$0xff]
  %v160 = vld [vmem:[%s1 + $0x1f0] sm:$0xff]
  %v161 = vld [vmem:[%s1 + $0x1f8] sm:$0xff]
  %v162 = vld [vmem:[%s2] sm:$0xf]
  %vm163 = vcmask 31744
  %v165 = vsel %vm163, %v98, 0
  %v168 = vsel %vm163, %v99, 0
  %v171 = vsel %vm163, %v100, 0
  %v174 = vsel %vm163, %v101, 0
  %v177 = vsel %vm163, %v102, 0
  %v180 = vsel %vm163, %v103, 0
  %v183 = vsel %vm163, %v104, 0
  %v186 = vsel %vm163, %v105, 0
  %v189 = vsel %vm163, %v106, 0
  %v192 = vsel %vm163, %v107, 0
  %v195 = vsel %vm163, %v108, 0
  %v198 = vsel %vm163, %v109, 0
  %v201 = vsel %vm163, %v110, 0
  %v204 = vsel %vm163, %v111, 0
  %v207 = vsel %vm163, %v112, 0
  %v210 = vsel %vm163, %v113, 0
  %v213 = vsel %vm163, %v114, 0
  %v216 = vsel %vm163, %v115, 0
  %v219 = vsel %vm163, %v116, 0
  %v222 = vsel %vm163, %v117, 0
  %v225 = vsel %vm163, %v118, 0
  %v228 = vsel %vm163, %v119, 0
  %v231 = vsel %vm163, %v120, 0
  %v234 = vsel %vm163, %v121, 0
  %v237 = vsel %vm163, %v122, 0
  %v240 = vsel %vm163, %v123, 0
  %v243 = vsel %vm163, %v124, 0
  %v246 = vsel %vm163, %v125, 0
  %v249 = vsel %vm163, %v126, 0
  %v252 = vsel %vm163, %v127, 0
  %v255 = vsel %vm163, %v128, 0
  %v258 = vsel %vm163, %v129, 0
  %v261 = vsel %vm163, %v130, 0
  %v264 = vsel %vm163, %v131, 0
  %v267 = vsel %vm163, %v132, 0
  %v270 = vsel %vm163, %v133, 0
  %v273 = vsel %vm163, %v134, 0
  %v276 = vsel %vm163, %v135, 0
  %v279 = vsel %vm163, %v136, 0
  %v282 = vsel %vm163, %v137, 0
  %v285 = vsel %vm163, %v138, 0
  %v288 = vsel %vm163, %v139, 0
  %v291 = vsel %vm163, %v140, 0
  %v294 = vsel %vm163, %v141, 0
  %v297 = vsel %vm163, %v142, 0
  %v300 = vsel %vm163, %v143, 0
  %v303 = vsel %vm163, %v144, 0
  %v306 = vsel %vm163, %v145, 0
  %v309 = vsel %vm163, %v146, 0
  %v312 = vsel %vm163, %v147, 0
  %v315 = vsel %vm163, %v148, 0
  %v318 = vsel %vm163, %v149, 0
  %v321 = vsel %vm163, %v150, 0
  %v324 = vsel %vm163, %v151, 0
  %v327 = vsel %vm163, %v152, 0
  %v330 = vsel %vm163, %v153, 0
  %v333 = vsel %vm163, %v154, 0
  %v336 = vsel %vm163, %v155, 0
  %v339 = vsel %vm163, %v156, 0
  %v342 = vsel %vm163, %v157, 0
  %v345 = vsel %vm163, %v158, 0
  %v348 = vsel %vm163, %v159, 0
  %v351 = vsel %vm163, %v160, 0
  %v354 = vsel %vm163, %v161, 0
  %vm356 = vcmask 1043456
  %v358 = vsel %vm356, %v162, 0
  %360 = vmatprep.subr.mxu0 0.0
  %361 = vmatpush1.msra.mxu0 0.0
  %362 = vmatprep.subr.mxu0 0.0
  %363 = vmatpush1.msra.mxu0 0.0
  %364 = vmatprep.subr.mxu0 0.0
  %365 = vmatpush1.msra.mxu0 0.0
  %366 = vmatprep.subr.mxu0 0.0
  %367 = vmatpush1.msra.mxu0 0.0
  %368 = vmatprep.subr.mxu0 0.0
  %369 = vmatpush1.msra.mxu0 0.0
  %370 = vmatprep.subr.mxu0 0.0
  %371 = vmatpush1.msra.mxu0 0.0
  %372 = vmatprep.subr.mxu0 0.0
  %373 = vmatpush1.msra.mxu0 0.0
  %374 = vmatprep.subr.mxu0 0.0
  %375 = vmatpush1.msra.mxu0 0.0
  %376 = vmatprep.subr.mxu0 0.0
  %377 = vmatpush1.msra.mxu0 0.0
  %378 = vmatprep.subr.mxu0 0.0
  %379 = vmatpush1.msra.mxu0 0.0
  %380 = vmatprep.subr.mxu0 0.0
  %381 = vmatpush1.msra.mxu0 0.0
  %382 = vmatprep.subr.mxu0 0.0
  %383 = vmatpush1.msra.mxu0 0.0
  %384 = vmatprep.subr.mxu0 0.0
  %385 = vmatpush1.msra.mxu0 0.0
  %386 = vmatprep.subr.mxu0 0.0
  %387 = vmatpush1.msra.mxu0 0.0
  %388 = vmatprep.subr.mxu0 0.0
  %389 = vmatpush1.msra.mxu0 0.0
  %390 = vmatprep.subr.mxu0 0.0
  %391 = vmatpush1.msra.mxu0 %v358
  %392 = vmatprep.subr.mxu0 0.0
  %393 = vmatpush2.msra.mxu0 0.0
  %394 = vmatprep.subr.mxu0 0.0
  %395 = vmatpush2.msra.mxu0 0.0
  %396 = vmatprep.subr.mxu0 0.0
  %397 = vmatpush2.msra.mxu0 0.0
  %398 = vmatprep.subr.mxu0 0.0
  %399 = vmatpush2.msra.mxu0 0.0
  %400 = vmatprep.subr.mxu0 0.0
  %401 = vmatpush2.msra.mxu0 0.0
  %402 = vmatprep.subr.mxu0 0.0
  %403 = vmatpush2.msra.mxu0 0.0
  %404 = vmatprep.subr.mxu0 0.0
  %405 = vmatpush2.msra.mxu0 0.0
  %406 = vmatprep.subr.mxu0 0.0
  %407 = vmatpush2.msra.mxu0 0.0
  %408 = vmatprep.subr.mxu0 0.0
  %409 = vmatpush2.msra.mxu0 0.0
  %410 = vmatprep.subr.mxu0 0.0
  %411 = vmatpush2.msra.mxu0 0.0
  %412 = vmatprep.subr.mxu0 0.0
  %413 = vmatpush2.msra.mxu0 0.0
  %414 = vmatprep.subr.mxu0 0.0
  %415 = vmatpush2.msra.mxu0 0.0
  %416 = vmatprep.subr.mxu0 0.0
  %417 = vmatpush2.msra.mxu0 0.0
  %418 = vmatprep.subr.mxu0 0.0
  %419 = vmatpush2.msra.mxu0 0.0
  %420 = vmatprep.subr.mxu0 0.0
  %421 = vmatpush2.msra.mxu0 0.0
  %422 = vmatprep.subr.mxu0 0.0
  %423 = vmatpush2.msra.mxu0 0.0
  %424 = vmatprep.mubr.f32.mxu0 0.0
  %425 = vmatmul.mubr.f32.gmra.mxu0 %v165
  %v426 = vpop.f32.mrf.mxu0
  %v427 = vadd.f32 0.0, %v426
  %v428 = vpop.f32.mrf.mxu0
  %429 = vmatprep.mubr.f32.mxu0 0.0
  %430 = vmatmul.mubr.f32.gmra.mxu0 %v168
  %v431 = vpop.f32.mrf.mxu0
  %v432 = vadd.f32 0.0, %v431
  %v433 = vpop.f32.mrf.mxu0
  %434 = vmatprep.mubr.f32.mxu0 0.0
  %435 = vmatmul.mubr.f32.gmra.mxu0 %v171
  %v436 = vpop.f32.mrf.mxu0
  %v437 = vadd.f32 0.0, %v436
  %v438 = vpop.f32.mrf.mxu0
  %439 = vmatprep.mubr.f32.mxu0 0.0
  %440 = vmatmul.mubr.f32.gmra.mxu0 %v174
  %v441 = vpop.f32.mrf.mxu0
  %v442 = vadd.f32 0.0, %v441
  %v443 = vpop.f32.mrf.mxu0
  %444 = vmatprep.mubr.f32.mxu0 0.0
  %445 = vmatmul.mubr.f32.gmra.mxu0 %v177
  %v446 = vpop.f32.mrf.mxu0
  %v447 = vadd.f32 0.0, %v446
  %v448 = vpop.f32.mrf.mxu0
  %449 = vmatprep.mubr.f32.mxu0 0.0
  %450 = vmatmul.mubr.f32.gmra.mxu0 %v180
  %v451 = vpop.f32.mrf.mxu0
  %v452 = vadd.f32 0.0, %v451
  %v453 = vpop.f32.mrf.mxu0
  %454 = vmatprep.mubr.f32.mxu0 0.0
  %455 = vmatmul.mubr.f32.gmra.mxu0 %v183
  %v456 = vpop.f32.mrf.mxu0
  %v457 = vadd.f32 0.0, %v456
  %v458 = vpop.f32.mrf.mxu0
  %459 = vmatprep.mubr.f32.mxu0 0.0
  %460 = vmatmul.mubr.f32.gmra.mxu0 %v186
  %v461 = vpop.f32.mrf.mxu0
  %v462 = vadd.f32 0.0, %v461
  %v463 = vpop.f32.mrf.mxu0
  %464 = vmatprep.mubr.f32.mxu0 0.0
  %465 = vmatmul.mubr.f32.gmra.mxu0 %v189
  %v466 = vpop.f32.mrf.mxu0
  %v467 = vadd.f32 0.0, %v466
  %v468 = vpop.f32.mrf.mxu0
  %469 = vmatprep.mubr.f32.mxu0 0.0
  %470 = vmatmul.mubr.f32.gmra.mxu0 %v192
  %v471 = vpop.f32.mrf.mxu0
  %v472 = vadd.f32 0.0, %v471
  %v473 = vpop.f32.mrf.mxu0
  %474 = vmatprep.mubr.f32.mxu0 0.0
  %475 = vmatmul.mubr.f32.gmra.mxu0 %v195
  %v476 = vpop.f32.mrf.mxu0
  %v477 = vadd.f32 0.0, %v476
  %v478 = vpop.f32.mrf.mxu0
  %479 = vmatprep.mubr.f32.mxu0 0.0
  %480 = vmatmul.mubr.f32.gmra.mxu0 %v198
  %v481 = vpop.f32.mrf.mxu0
  %v482 = vadd.f32 0.0, %v481
  %v483 = vpop.f32.mrf.mxu0
  %484 = vmatprep.mubr.f32.mxu0 0.0
  %485 = vmatmul.mubr.f32.gmra.mxu0 %v201
  %v486 = vpop.f32.mrf.mxu0
  %v487 = vadd.f32 0.0, %v486
  %v488 = vpop.f32.mrf.mxu0
  %489 = vmatprep.mubr.f32.mxu0 0.0
  %490 = vmatmul.mubr.f32.gmra.mxu0 %v204
  %v491 = vpop.f32.mrf.mxu0
  %v492 = vadd.f32 0.0, %v491
  %v493 = vpop.f32.mrf.mxu0
  %494 = vmatprep.mubr.f32.mxu0 0.0
  %495 = vmatmul.mubr.f32.gmra.mxu0 %v207
  %v496 = vpop.f32.mrf.mxu0
  %v497 = vadd.f32 0.0, %v496
  %v498 = vpop.f32.mrf.mxu0
  %499 = vmatprep.mubr.f32.mxu0 0.0
  %500 = vmatmul.mubr.f32.gmra.mxu0 %v210
  %v501 = vpop.f32.mrf.mxu0
  %v502 = vadd.f32 0.0, %v501
  %v503 = vpop.f32.mrf.mxu0
  %504 = vmatprep.mubr.f32.mxu0 0.0
  %505 = vmatmul.mubr.f32.gmra.mxu0 %v213
  %v506 = vpop.f32.mrf.mxu0
  %v507 = vadd.f32 0.0, %v506
  %v508 = vpop.f32.mrf.mxu0
  %509 = vmatprep.mubr.f32.mxu0 0.0
  %510 = vmatmul.mubr.f32.gmra.mxu0 %v216
  %v511 = vpop.f32.mrf.mxu0
  %v512 = vadd.f32 0.0, %v511
  %v513 = vpop.f32.mrf.mxu0
  %514 = vmatprep.mubr.f32.mxu0 0.0
  %515 = vmatmul.mubr.f32.gmra.mxu0 %v219
  %v516 = vpop.f32.mrf.mxu0
  %v517 = vadd.f32 0.0, %v516
  %v518 = vpop.f32.mrf.mxu0
  %519 = vmatprep.mubr.f32.mxu0 0.0
  %520 = vmatmul.mubr.f32.gmra.mxu0 %v222
  %v521 = vpop.f32.mrf.mxu0
  %v522 = vadd.f32 0.0, %v521
  %v523 = vpop.f32.mrf.mxu0
  %524 = vmatprep.mubr.f32.mxu0 0.0
  %525 = vmatmul.mubr.f32.gmra.mxu0 %v225
  %v526 = vpop.f32.mrf.mxu0
  %v527 = vadd.f32 0.0, %v526
  %v528 = vpop.f32.mrf.mxu0
  %529 = vmatprep.mubr.f32.mxu0 0.0
  %530 = vmatmul.mubr.f32.gmra.mxu0 %v228
  %v531 = vpop.f32.mrf.mxu0
  %v532 = vadd.f32 0.0, %v531
  %v533 = vpop.f32.mrf.mxu0
  %534 = vmatprep.mubr.f32.mxu0 0.0
  %535 = vmatmul.mubr.f32.gmra.mxu0 %v231
  %v536 = vpop.f32.mrf.mxu0
  %v537 = vadd.f32 0.0, %v536
  %v538 = vpop.f32.mrf.mxu0
  %539 = vmatprep.mubr.f32.mxu0 0.0
  %540 = vmatmul.mubr.f32.gmra.mxu0 %v234
  %v541 = vpop.f32.mrf.mxu0
  %v542 = vadd.f32 0.0, %v541
  %v543 = vpop.f32.mrf.mxu0
  %544 = vmatprep.mubr.f32.mxu0 0.0
  %545 = vmatmul.mubr.f32.gmra.mxu0 %v237
  %v546 = vpop.f32.mrf.mxu0
  %v547 = vadd.f32 0.0, %v546
  %v548 = vpop.f32.mrf.mxu0
  %549 = vmatprep.mubr.f32.mxu0 0.0
  %550 = vmatmul.mubr.f32.gmra.mxu0 %v240
  %v551 = vpop.f32.mrf.mxu0
  %v552 = vadd.f32 0.0, %v551
  %v553 = vpop.f32.mrf.mxu0
  %554 = vmatprep.mubr.f32.mxu0 0.0
  %555 = vmatmul.mubr.f32.gmra.mxu0 %v243
  %v556 = vpop.f32.mrf.mxu0
  %v557 = vadd.f32 0.0, %v556
  %v558 = vpop.f32.mrf.mxu0
  %559 = vmatprep.mubr.f32.mxu0 0.0
  %560 = vmatmul.mubr.f32.gmra.mxu0 %v246
  %v561 = vpop.f32.mrf.mxu0
  %v562 = vadd.f32 0.0, %v561
  %v563 = vpop.f32.mrf.mxu0
  %564 = vmatprep.mubr.f32.mxu0 0.0
  %565 = vmatmul.mubr.f32.gmra.mxu0 %v249
  %v566 = vpop.f32.mrf.mxu0
  %v567 = vadd.f32 0.0, %v566
  %v568 = vpop.f32.mrf.mxu0
  %569 = vmatprep.mubr.f32.mxu0 0.0
  %570 = vmatmul.mubr.f32.gmra.mxu0 %v252
  %v571 = vpop.f32.mrf.mxu0
  %v572 = vadd.f32 0.0, %v571
  %v573 = vpop.f32.mrf.mxu0
  %574 = vmatprep.mubr.f32.mxu0 0.0
  %575 = vmatmul.mubr.f32.gmra.mxu0 %v255
  %v576 = vpop.f32.mrf.mxu0
  %v577 = vadd.f32 0.0, %v576
  %v578 = vpop.f32.mrf.mxu0
  %579 = vmatprep.mubr.f32.mxu0 0.0
  %580 = vmatmul.mubr.f32.gmra.mxu0 %v258
  %v581 = vpop.f32.mrf.mxu0
  %v582 = vadd.f32 0.0, %v581
  %v583 = vpop.f32.mrf.mxu0
  %584 = vmatprep.mubr.f32.mxu0 0.0
  %585 = vmatmul.mubr.f32.gmra.mxu0 %v261
  %v586 = vpop.f32.mrf.mxu0
  %v587 = vadd.f32 0.0, %v586
  %v588 = vpop.f32.mrf.mxu0
  %589 = vmatprep.mubr.f32.mxu0 0.0
  %590 = vmatmul.mubr.f32.gmra.mxu0 %v264
  %v591 = vpop.f32.mrf.mxu0
  %v592 = vadd.f32 0.0, %v591
  %v593 = vpop.f32.mrf.mxu0
  %594 = vmatprep.mubr.f32.mxu0 0.0
  %595 = vmatmul.mubr.f32.gmra.mxu0 %v267
  %v596 = vpop.f32.mrf.mxu0
  %v597 = vadd.f32 0.0, %v596
  %v598 = vpop.f32.mrf.mxu0
  %599 = vmatprep.mubr.f32.mxu0 0.0
  %600 = vmatmul.mubr.f32.gmra.mxu0 %v270
  %v601 = vpop.f32.mrf.mxu0
  %v602 = vadd.f32 0.0, %v601
  %v603 = vpop.f32.mrf.mxu0
  %604 = vmatprep.mubr.f32.mxu0 0.0
  %605 = vmatmul.mubr.f32.gmra.mxu0 %v273
  %v606 = vpop.f32.mrf.mxu0
  %v607 = vadd.f32 0.0, %v606
  %v608 = vpop.f32.mrf.mxu0
  %609 = vmatprep.mubr.f32.mxu0 0.0
  %610 = vmatmul.mubr.f32.gmra.mxu0 %v276
  %v611 = vpop.f32.mrf.mxu0
  %v612 = vadd.f32 0.0, %v611
  %v613 = vpop.f32.mrf.mxu0
  %614 = vmatprep.mubr.f32.mxu0 0.0
  %615 = vmatmul.mubr.f32.gmra.mxu0 %v279
  %v616 = vpop.f32.mrf.mxu0
  %v617 = vadd.f32 0.0, %v616
  %v618 = vpop.f32.mrf.mxu0
  %619 = vmatprep.mubr.f32.mxu0 0.0
  %620 = vmatmul.mubr.f32.gmra.mxu0 %v282
  %v621 = vpop.f32.mrf.mxu0
  %v622 = vadd.f32 0.0, %v621
  %v623 = vpop.f32.mrf.mxu0
  %624 = vmatprep.mubr.f32.mxu0 0.0
  %625 = vmatmul.mubr.f32.gmra.mxu0 %v285
  %v626 = vpop.f32.mrf.mxu0
  %v627 = vadd.f32 0.0, %v626
  %v628 = vpop.f32.mrf.mxu0
  %629 = vmatprep.mubr.f32.mxu0 0.0
  %630 = vmatmul.mubr.f32.gmra.mxu0 %v288
  %v631 = vpop.f32.mrf.mxu0
  %v632 = vadd.f32 0.0, %v631
  %v633 = vpop.f32.mrf.mxu0
  %634 = vmatprep.mubr.f32.mxu0 0.0
  %635 = vmatmul.mubr.f32.gmra.mxu0 %v291
  %v636 = vpop.f32.mrf.mxu0
  %v637 = vadd.f32 0.0, %v636
  %v638 = vpop.f32.mrf.mxu0
  %639 = vmatprep.mubr.f32.mxu0 0.0
  %640 = vmatmul.mubr.f32.gmra.mxu0 %v294
  %v641 = vpop.f32.mrf.mxu0
  %v642 = vadd.f32 0.0, %v641
  %v643 = vpop.f32.mrf.mxu0
  %644 = vmatprep.mubr.f32.mxu0 0.0
  %645 = vmatmul.mubr.f32.gmra.mxu0 %v297
  %v646 = vpop.f32.mrf.mxu0
  %v647 = vadd.f32 0.0, %v646
  %v648 = vpop.f32.mrf.mxu0
  %649 = vmatprep.mubr.f32.mxu0 0.0
  %650 = vmatmul.mubr.f32.gmra.mxu0 %v300
  %v651 = vpop.f32.mrf.mxu0
  %v652 = vadd.f32 0.0, %v651
  %v653 = vpop.f32.mrf.mxu0
  %654 = vmatprep.mubr.f32.mxu0 0.0
  %655 = vmatmul.mubr.f32.gmra.mxu0 %v303
  %v656 = vpop.f32.mrf.mxu0
  %v657 = vadd.f32 0.0, %v656
  %v658 = vpop.f32.mrf.mxu0
  %659 = vmatprep.mubr.f32.mxu0 0.0
  %660 = vmatmul.mubr.f32.gmra.mxu0 %v306
  %v661 = vpop.f32.mrf.mxu0
  %v662 = vadd.f32 0.0, %v661
  %v663 = vpop.f32.mrf.mxu0
  %664 = vmatprep.mubr.f32.mxu0 0.0
  %665 = vmatmul.mubr.f32.gmra.mxu0 %v309
  %v666 = vpop.f32.mrf.mxu0
  %v667 = vadd.f32 0.0, %v666
  %v668 = vpop.f32.mrf.mxu0
  %669 = vmatprep.mubr.f32.mxu0 0.0
  %670 = vmatmul.mubr.f32.gmra.mxu0 %v312
  %v671 = vpop.f32.mrf.mxu0
  %v672 = vadd.f32 0.0, %v671
  %v673 = vpop.f32.mrf.mxu0
  %674 = vmatprep.mubr.f32.mxu0 0.0
  %675 = vmatmul.mubr.f32.gmra.mxu0 %v315
  %v676 = vpop.f32.mrf.mxu0
  %v677 = vadd.f32 0.0, %v676
  %v678 = vpop.f32.mrf.mxu0
  %679 = vmatprep.mubr.f32.mxu0 0.0
  %680 = vmatmul.mubr.f32.gmra.mxu0 %v318
  %v681 = vpop.f32.mrf.mxu0
  %v682 = vadd.f32 0.0, %v681
  %v683 = vpop.f32.mrf.mxu0
  %684 = vmatprep.mubr.f32.mxu0 0.0
  %685 = vmatmul.mubr.f32.gmra.mxu0 %v321
  %v686 = vpop.f32.mrf.mxu0
  %v687 = vadd.f32 0.0, %v686
  %v688 = vpop.f32.mrf.mxu0
  %689 = vmatprep.mubr.f32.mxu0 0.0
  %690 = vmatmul.mubr.f32.gmra.mxu0 %v324
  %v691 = vpop.f32.mrf.mxu0
  %v692 = vadd.f32 0.0, %v691
  %v693 = vpop.f32.mrf.mxu0
  %694 = vmatprep.mubr.f32.mxu0 0.0
  %695 = vmatmul.mubr.f32.gmra.mxu0 %v327
  %v696 = vpop.f32.mrf.mxu0
  %v697 = vadd.f32 0.0, %v696
  %v698 = vpop.f32.mrf.mxu0
  %699 = vmatprep.mubr.f32.mxu0 0.0
  %700 = vmatmul.mubr.f32.gmra.mxu0 %v330
  %v701 = vpop.f32.mrf.mxu0
  %v702 = vadd.f32 0.0, %v701
  %v703 = vpop.f32.mrf.mxu0
  %704 = vmatprep.mubr.f32.mxu0 0.0
  %705 = vmatmul.mubr.f32.gmra.mxu0 %v333
  %v706 = vpop.f32.mrf.mxu0
  %v707 = vadd.f32 0.0, %v706
  %v708 = vpop.f32.mrf.mxu0
  %709 = vmatprep.mubr.f32.mxu0 0.0
  %710 = vmatmul.mubr.f32.gmra.mxu0 %v336
  %v711 = vpop.f32.mrf.mxu0
  %v712 = vadd.f32 0.0, %v711
  %v713 = vpop.f32.mrf.mxu0
  %714 = vmatprep.mubr.f32.mxu0 0.0
  %715 = vmatmul.mubr.f32.gmra.mxu0 %v339
  %v716 = vpop.f32.mrf.mxu0
  %v717 = vadd.f32 0.0, %v716
  %v718 = vpop.f32.mrf.mxu0
  %719 = vmatprep.mubr.f32.mxu0 0.0
  %720 = vmatmul.mubr.f32.gmra.mxu0 %v342
  %v721 = vpop.f32.mrf.mxu0
  %v722 = vadd.f32 0.0, %v721
  %v723 = vpop.f32.mrf.mxu0
  %724 = vmatprep.mubr.f32.mxu0 0.0
  %725 = vmatmul.mubr.f32.gmra.mxu0 %v345
  %v726 = vpop.f32.mrf.mxu0
  %v727 = vadd.f32 0.0, %v726
  %v728 = vpop.f32.mrf.mxu0
  %729 = vmatprep.mubr.f32.mxu0 0.0
  %730 = vmatmul.mubr.f32.gmra.mxu0 %v348
  %v731 = vpop.f32.mrf.mxu0
  %v732 = vadd.f32 0.0, %v731
  %v733 = vpop.f32.mrf.mxu0
  %734 = vmatprep.mubr.f32.mxu0 0.0
  %735 = vmatmul.mubr.f32.gmra.mxu0 %v351
  %v736 = vpop.f32.mrf.mxu0
  %v737 = vadd.f32 0.0, %v736
  %v738 = vpop.f32.mrf.mxu0
  %739 = vmatprep.mubr.f32.mxu0 0.0
  %740 = vmatmul.mubr.f32.gmra.mxu0 %v354
  %v741 = vpop.f32.mrf.mxu0
  %v742 = vadd.f32 0.0, %v741
  %v743 = vpop.f32.mrf.mxu0
  %744 = vdwg.mxu0
  %v745 = vld [vmem:[%s5] sm:$0x1]
  %v747 = vlaneseq
  %v748 = vshrl.u32 %v747, 7
  %v749 = vsub.s32 0, %v748
  %v750 = vrot.slane %v745, %v749
  %751 = vrot.lane.b32.xlu0 %v750, 4
  %v752 = vpop.permute.xlu0 %751
  %v754 = vmul.f32 %v34, %v752
  %v755 = vmul.f32 %v35, %v752
  %v756 = vmul.f32 %v36, %v752
  %v757 = vmul.f32 %v37, %v752
  %v758 = vmul.f32 %v38, %v752
  %v759 = vmul.f32 %v39, %v752
  %v760 = vmul.f32 %v40, %v752
  %v761 = vmul.f32 %v41, %v752
  %v762 = vmul.f32 %v42, %v752
  %v763 = vmul.f32 %v43, %v752
  %v764 = vmul.f32 %v44, %v752
  %v765 = vmul.f32 %v45, %v752
  %v766 = vmul.f32 %v46, %v752
  %v767 = vmul.f32 %v47, %v752
  %v768 = vmul.f32 %v48, %v752
  %v769 = vmul.f32 %v49, %v752
  %v770 = vmul.f32 %v50, %v752
  %v771 = vmul.f32 %v51, %v752
  %v772 = vmul.f32 %v52, %v752
  %v773 = vmul.f32 %v53, %v752
  %v774 = vmul.f32 %v54, %v752
  %v775 = vmul.f32 %v55, %v752
  %v776 = vmul.f32 %v56, %v752
  %v777 = vmul.f32 %v57, %v752
  %v778 = vmul.f32 %v58, %v752
  %v779 = vmul.f32 %v59, %v752
  %v780 = vmul.f32 %v60, %v752
  %v781 = vmul.f32 %v61, %v752
  %v782 = vmul.f32 %v62, %v752
  %v783 = vmul.f32 %v63, %v752
  %v784 = vmul.f32 %v64, %v752
  %v785 = vmul.f32 %v65, %v752
  %v786 = vmul.f32 %v66, %v752
  %v787 = vmul.f32 %v67, %v752
  %v788 = vmul.f32 %v68, %v752
  %v789 = vmul.f32 %v69, %v752
  %v790 = vmul.f32 %v70, %v752
  %v791 = vmul.f32 %v71, %v752
  %v792 = vmul.f32 %v72, %v752
  %v793 = vmul.f32 %v73, %v752
  %v794 = vmul.f32 %v74, %v752
  %v795 = vmul.f32 %v75, %v752
  %v796 = vmul.f32 %v76, %v752
  %v797 = vmul.f32 %v77, %v752
  %v798 = vmul.f32 %v78, %v752
  %v799 = vmul.f32 %v79, %v752
  %v800 = vmul.f32 %v80, %v752
  %v801 = vmul.f32 %v81, %v752
  %v802 = vmul.f32 %v82, %v752
  %v803 = vmul.f32 %v83, %v752
  %v804 = vmul.f32 %v84, %v752
  %v805 = vmul.f32 %v85, %v752
  %v806 = vmul.f32 %v86, %v752
  %v807 = vmul.f32 %v87, %v752
  %v808 = vmul.f32 %v88, %v752
  %v809 = vmul.f32 %v89, %v752
  %v810 = vmul.f32 %v90, %v752
  %v811 = vmul.f32 %v91, %v752
  %v812 = vmul.f32 %v92, %v752
  %v813 = vmul.f32 %v93, %v752
  %v814 = vmul.f32 %v94, %v752
  %v815 = vmul.f32 %v95, %v752
  %v816 = vmul.f32 %v96, %v752
  %v817 = vmul.f32 %v97, %v752
  %v818 = vld [vmem:[%s6] sm:$0x1]
  %v820 = vlaneseq
  %v821 = vshrl.u32 %v820, 7
  %v822 = vsub.s32 0, %v821
  %v823 = vrot.slane %v818, %v822
  %824 = vrot.lane.b32.xlu0 %v823, 4
  %v825 = vpop.permute.xlu0 %824
  %v827 = vadd.f32 %v754, %v825
  %v828 = vadd.f32 %v755, %v825
  %v829 = vadd.f32 %v756, %v825
  %v830 = vadd.f32 %v757, %v825
  %v831 = vadd.f32 %v758, %v825
  %v832 = vadd.f32 %v759, %v825
  %v833 = vadd.f32 %v760, %v825
  %v834 = vadd.f32 %v761, %v825
  %v835 = vadd.f32 %v762, %v825
  %v836 = vadd.f32 %v763, %v825
  %v837 = vadd.f32 %v764, %v825
  %v838 = vadd.f32 %v765, %v825
  %v839 = vadd.f32 %v766, %v825
  %v840 = vadd.f32 %v767, %v825
  %v841 = vadd.f32 %v768, %v825
  %v842 = vadd.f32 %v769, %v825
  %v843 = vadd.f32 %v770, %v825
  %v844 = vadd.f32 %v771, %v825
  %v845 = vadd.f32 %v772, %v825
  %v846 = vadd.f32 %v773, %v825
  %v847 = vadd.f32 %v774, %v825
  %v848 = vadd.f32 %v775, %v825
  %v849 = vadd.f32 %v776, %v825
  %v850 = vadd.f32 %v777, %v825
  %v851 = vadd.f32 %v778, %v825
  %v852 = vadd.f32 %v779, %v825
  %v853 = vadd.f32 %v780, %v825
  %v854 = vadd.f32 %v781, %v825
  %v855 = vadd.f32 %v782, %v825
  %v856 = vadd.f32 %v783, %v825
  %v857 = vadd.f32 %v784, %v825
  %v858 = vadd.f32 %v785, %v825
  %v859 = vadd.f32 %v786, %v825
  %v860 = vadd.f32 %v787, %v825
  %v861 = vadd.f32 %v788, %v825
  %v862 = vadd.f32 %v789, %v825
  %v863 = vadd.f32 %v790, %v825
  %v864 = vadd.f32 %v791, %v825
  %v865 = vadd.f32 %v792, %v825
  %v866 = vadd.f32 %v793, %v825
  %v867 = vadd.f32 %v794, %v825
  %v868 = vadd.f32 %v795, %v825
  %v869 = vadd.f32 %v796, %v825
  %v870 = vadd.f32 %v797, %v825
  %v871 = vadd.f32 %v798, %v825
  %v872 = vadd.f32 %v799, %v825
  %v873 = vadd.f32 %v800, %v825
  %v874 = vadd.f32 %v801, %v825
  %v875 = vadd.f32 %v802, %v825
  %v876 = vadd.f32 %v803, %v825
  %v877 = vadd.f32 %v804, %v825
  %v878 = vadd.f32 %v805, %v825
  %v879 = vadd.f32 %v806, %v825
  %v880 = vadd.f32 %v807, %v825
  %v881 = vadd.f32 %v808, %v825
  %v882 = vadd.f32 %v809, %v825
  %v883 = vadd.f32 %v810, %v825
  %v884 = vadd.f32 %v811, %v825
  %v885 = vadd.f32 %v812, %v825
  %v886 = vadd.f32 %v813, %v825
  %v887 = vadd.f32 %v814, %v825
  %v888 = vadd.f32 %v815, %v825
  %v889 = vadd.f32 %v816, %v825
  %v890 = vadd.f32 %v817, %v825
  %v891 = vld [vmem:[%s7] sm:$0x1]
  %v893 = vlaneseq
  %v894 = vshrl.u32 %v893, 7
  %v895 = vsub.s32 0, %v894
  %v896 = vrot.slane %v891, %v895
  %v898 = vmul.f32 %v427, %v896
  %v899 = vmul.f32 %v432, %v896
  %v900 = vmul.f32 %v437, %v896
  %v901 = vmul.f32 %v442, %v896
  %v902 = vmul.f32 %v447, %v896
  %v903 = vmul.f32 %v452, %v896
  %v904 = vmul.f32 %v457, %v896
  %v905 = vmul.f32 %v462, %v896
  %v906 = vmul.f32 %v467, %v896
  %v907 = vmul.f32 %v472, %v896
  %v908 = vmul.f32 %v477, %v896
  %v909 = vmul.f32 %v482, %v896
  %v910 = vmul.f32 %v487, %v896
  %v911 = vmul.f32 %v492, %v896
  %v912 = vmul.f32 %v497, %v896
  %v913 = vmul.f32 %v502, %v896
  %v914 = vmul.f32 %v507, %v896
  %v915 = vmul.f32 %v512, %v896
  %v916 = vmul.f32 %v517, %v896
  %v917 = vmul.f32 %v522, %v896
  %v918 = vmul.f32 %v527, %v896
  %v919 = vmul.f32 %v532, %v896
  %v920 = vmul.f32 %v537, %v896
  %v921 = vmul.f32 %v542, %v896
  %v922 = vmul.f32 %v547, %v896
  %v923 = vmul.f32 %v552, %v896
  %v924 = vmul.f32 %v557, %v896
  %v925 = vmul.f32 %v562, %v896
  %v926 = vmul.f32 %v567, %v896
  %v927 = vmul.f32 %v572, %v896
  %v928 = vmul.f32 %v577, %v896
  %v929 = vmul.f32 %v582, %v896
  %v930 = vmul.f32 %v587, %v896
  %v931 = vmul.f32 %v592, %v896
  %v932 = vmul.f32 %v597, %v896
  %v933 = vmul.f32 %v602, %v896
  %v934 = vmul.f32 %v607, %v896
  %v935 = vmul.f32 %v612, %v896
  %v936 = vmul.f32 %v617, %v896
  %v937 = vmul.f32 %v622, %v896
  %v938 = vmul.f32 %v627, %v896
  %v939 = vmul.f32 %v632, %v896
  %v940 = vmul.f32 %v637, %v896
  %v941 = vmul.f32 %v642, %v896
  %v942 = vmul.f32 %v647, %v896
  %v943 = vmul.f32 %v652, %v896
  %v944 = vmul.f32 %v657, %v896
  %v945 = vmul.f32 %v662, %v896
  %v946 = vmul.f32 %v667, %v896
  %v947 = vmul.f32 %v672, %v896
  %v948 = vmul.f32 %v677, %v896
  %v949 = vmul.f32 %v682, %v896
  %v950 = vmul.f32 %v687, %v896
  %v951 = vmul.f32 %v692, %v896
  %v952 = vmul.f32 %v697, %v896
  %v953 = vmul.f32 %v702, %v896
  %v954 = vmul.f32 %v707, %v896
  %v955 = vmul.f32 %v712, %v896
  %v956 = vmul.f32 %v717, %v896
  %v957 = vmul.f32 %v722, %v896
  %v958 = vmul.f32 %v727, %v896
  %v959 = vmul.f32 %v732, %v896
  %v960 = vmul.f32 %v737, %v896
  %v961 = vmul.f32 %v742, %v896
  %1026 = vrot.lane.b32.xlu0 %v898, 4
  %v1027 = vpop.permute.xlu0 %1026
  %1028 = vrot.lane.b32.xlu0 %v899, 4
  %v1029 = vpop.permute.xlu0 %1028
  %1030 = vrot.lane.b32.xlu0 %v900, 4
  %v1031 = vpop.permute.xlu0 %1030
  %1032 = vrot.lane.b32.xlu0 %v901, 4
  %v1033 = vpop.permute.xlu0 %1032
  %1034 = vrot.lane.b32.xlu0 %v902, 4
  %v1035 = vpop.permute.xlu0 %1034
  %1036 = vrot.lane.b32.xlu0 %v903, 4
  %v1037 = vpop.permute.xlu0 %1036
  %1038 = vrot.lane.b32.xlu0 %v904, 4
  %v1039 = vpop.permute.xlu0 %1038
  %1040 = vrot.lane.b32.xlu0 %v905, 4
  %v1041 = vpop.permute.xlu0 %1040
  %1042 = vrot.lane.b32.xlu0 %v906, 4
  %v1043 = vpop.permute.xlu0 %1042
  %1044 = vrot.lane.b32.xlu0 %v907, 4
  %v1045 = vpop.permute.xlu0 %1044
  %1046 = vrot.lane.b32.xlu0 %v908, 4
  %v1047 = vpop.permute.xlu0 %1046
  %1048 = vrot.lane.b32.xlu0 %v909, 4
  %v1049 = vpop.permute.xlu0 %1048
  %1050 = vrot.lane.b32.xlu0 %v910, 4
  %v1051 = vpop.permute.xlu0 %1050
  %1052 = vrot.lane.b32.xlu0 %v911, 4
  %v1053 = vpop.permute.xlu0 %1052
  %1054 = vrot.lane.b32.xlu0 %v912, 4
  %v1055 = vpop.permute.xlu0 %1054
  %1056 = vrot.lane.b32.xlu0 %v913, 4
  %v1057 = vpop.permute.xlu0 %1056
  %1058 = vrot.lane.b32.xlu0 %v914, 4
  %v1059 = vpop.permute.xlu0 %1058
  %1060 = vrot.lane.b32.xlu0 %v915, 4
  %v1061 = vpop.permute.xlu0 %1060
  %1062 = vrot.lane.b32.xlu0 %v916, 4
  %v1063 = vpop.permute.xlu0 %1062
  %1064 = vrot.lane.b32.xlu0 %v917, 4
  %v1065 = vpop.permute.xlu0 %1064
  %1066 = vrot.lane.b32.xlu0 %v918, 4
  %v1067 = vpop.permute.xlu0 %1066
  %1068 = vrot.lane.b32.xlu0 %v919, 4
  %v1069 = vpop.permute.xlu0 %1068
  %1070 = vrot.lane.b32.xlu0 %v920, 4
  %v1071 = vpop.permute.xlu0 %1070
  %1072 = vrot.lane.b32.xlu0 %v921, 4
  %v1073 = vpop.permute.xlu0 %1072
  %1074 = vrot.lane.b32.xlu0 %v922, 4
  %v1075 = vpop.permute.xlu0 %1074
  %1076 = vrot.lane.b32.xlu0 %v923, 4
  %v1077 = vpop.permute.xlu0 %1076
  %1078 = vrot.lane.b32.xlu0 %v924, 4
  %v1079 = vpop.permute.xlu0 %1078
  %1080 = vrot.lane.b32.xlu0 %v925, 4
  %v1081 = vpop.permute.xlu0 %1080
  %1082 = vrot.lane.b32.xlu0 %v926, 4
  %v1083 = vpop.permute.xlu0 %1082
  %1084 = vrot.lane.b32.xlu0 %v927, 4
  %v1085 = vpop.permute.xlu0 %1084
  %1086 = vrot.lane.b32.xlu0 %v928, 4
  %v1087 = vpop.permute.xlu0 %1086
  %1088 = vrot.lane.b32.xlu0 %v929, 4
  %v1089 = vpop.permute.xlu0 %1088
  %1090 = vrot.lane.b32.xlu0 %v930, 4
  %v1091 = vpop.permute.xlu0 %1090
  %1092 = vrot.lane.b32.xlu0 %v931, 4
  %v1093 = vpop.permute.xlu0 %1092
  %1094 = vrot.lane.b32.xlu0 %v932, 4
  %v1095 = vpop.permute.xlu0 %1094
  %1096 = vrot.lane.b32.xlu0 %v933, 4
  %v1097 = vpop.permute.xlu0 %1096
  %1098 = vrot.lane.b32.xlu0 %v934, 4
  %v1099 = vpop.permute.xlu0 %1098
  %1100 = vrot.lane.b32.xlu0 %v935, 4
  %v1101 = vpop.permute.xlu0 %1100
  %1102 = vrot.lane.b32.xlu0 %v936, 4
  %v1103 = vpop.permute.xlu0 %1102
  %1104 = vrot.lane.b32.xlu0 %v937, 4
  %v1105 = vpop.permute.xlu0 %1104
  %1106 = vrot.lane.b32.xlu0 %v938, 4
  %v1107 = vpop.permute.xlu0 %1106
  %1108 = vrot.lane.b32.xlu0 %v939, 4
  %v1109 = vpop.permute.xlu0 %1108
  %1110 = vrot.lane.b32.xlu0 %v940, 4
  %v1111 = vpop.permute.xlu0 %1110
  %1112 = vrot.lane.b32.xlu0 %v941, 4
  %v1113 = vpop.permute.xlu0 %1112
  %1114 = vrot.lane.b32.xlu0 %v942, 4
  %v1115 = vpop.permute.xlu0 %1114
  %1116 = vrot.lane.b32.xlu0 %v943, 4
  %v1117 = vpop.permute.xlu0 %1116
  %1118 = vrot.lane.b32.xlu0 %v944, 4
  %v1119 = vpop.permute.xlu0 %1118
  %1120 = vrot.lane.b32.xlu0 %v945, 4
  %v1121 = vpop.permute.xlu0 %1120
  %1122 = vrot.lane.b32.xlu0 %v946, 4
  %v1123 = vpop.permute.xlu0 %1122
  %1124 = vrot.lane.b32.xlu0 %v947, 4
  %v1125 = vpop.permute.xlu0 %1124
  %1126 = vrot.lane.b32.xlu0 %v948, 4
  %v1127 = vpop.permute.xlu0 %1126
  %1128 = vrot.lane.b32.xlu0 %v949, 4
  %v1129 = vpop.permute.xlu0 %1128
  %1130 = vrot.lane.b32.xlu0 %v950, 4
  %v1131 = vpop.permute.xlu0 %1130
  %1132 = vrot.lane.b32.xlu0 %v951, 4
  %v1133 = vpop.permute.xlu0 %1132
  %1134 = vrot.lane.b32.xlu0 %v952, 4
  %v1135 = vpop.permute.xlu0 %1134
  %1136 = vrot.lane.b32.xlu0 %v953, 4
  %v1137 = vpop.permute.xlu0 %1136
  %1138 = vrot.lane.b32.xlu0 %v954, 4
  %v1139 = vpop.permute.xlu0 %1138
  %1140 = vrot.lane.b32.xlu0 %v955, 4
  %v1141 = vpop.permute.xlu0 %1140
  %1142 = vrot.lane.b32.xlu0 %v956, 4
  %v1143 = vpop.permute.xlu0 %1142
  %1144 = vrot.lane.b32.xlu0 %v957, 4
  %v1145 = vpop.permute.xlu0 %1144
  %1146 = vrot.lane.b32.xlu0 %v958, 4
  %v1147 = vpop.permute.xlu0 %1146
  %1148 = vrot.lane.b32.xlu0 %v959, 4
  %v1149 = vpop.permute.xlu0 %1148
  %1150 = vrot.lane.b32.xlu0 %v960, 4
  %v1151 = vpop.permute.xlu0 %1150
  %1152 = vrot.lane.b32.xlu0 %v961, 4
  %v1153 = vpop.permute.xlu0 %1152
  %v1218 = vadd.f32 %v827, %v1027
  %v1219 = vadd.f32 %v828, %v1029
  %v1220 = vadd.f32 %v829, %v1031
  %v1221 = vadd.f32 %v830, %v1033
  %v1222 = vadd.f32 %v831, %v1035
  %v1223 = vadd.f32 %v832, %v1037
  %v1224 = vadd.f32 %v833, %v1039
  %v1225 = vadd.f32 %v834, %v1041
  %v1226 = vadd.f32 %v835, %v1043
  %v1227 = vadd.f32 %v836, %v1045
  %v1228 = vadd.f32 %v837, %v1047
  %v1229 = vadd.f32 %v838, %v1049
  %v1230 = vadd.f32 %v839, %v1051
  %v1231 = vadd.f32 %v840, %v1053
  %v1232 = vadd.f32 %v841, %v1055
  %v1233 = vadd.f32 %v842, %v1057
  %v1234 = vadd.f32 %v843, %v1059
  %v1235 = vadd.f32 %v844, %v1061
  %v1236 = vadd.f32 %v845, %v1063
  %v1237 = vadd.f32 %v846, %v1065
  %v1238 = vadd.f32 %v847, %v1067
  %v1239 = vadd.f32 %v848, %v1069
  %v1240 = vadd.f32 %v849, %v1071
  %v1241 = vadd.f32 %v850, %v1073
  %v1242 = vadd.f32 %v851, %v1075
  %v1243 = vadd.f32 %v852, %v1077
  %v1244 = vadd.f32 %v853, %v1079
  %v1245 = vadd.f32 %v854, %v1081
  %v1246 = vadd.f32 %v855, %v1083
  %v1247 = vadd.f32 %v856, %v1085
  %v1248 = vadd.f32 %v857, %v1087
  %v1249 = vadd.f32 %v858, %v1089
  %v1250 = vadd.f32 %v859, %v1091
  %v1251 = vadd.f32 %v860, %v1093
  %v1252 = vadd.f32 %v861, %v1095
  %v1253 = vadd.f32 %v862, %v1097
  %v1254 = vadd.f32 %v863, %v1099
  %v1255 = vadd.f32 %v864, %v1101
  %v1256 = vadd.f32 %v865, %v1103
  %v1257 = vadd.f32 %v866, %v1105
  %v1258 = vadd.f32 %v867, %v1107
  %v1259 = vadd.f32 %v868, %v1109
  %v1260 = vadd.f32 %v869, %v1111
  %v1261 = vadd.f32 %v870, %v1113
  %v1262 = vadd.f32 %v871, %v1115
  %v1263 = vadd.f32 %v872, %v1117
  %v1264 = vadd.f32 %v873, %v1119
  %v1265 = vadd.f32 %v874, %v1121
  %v1266 = vadd.f32 %v875, %v1123
  %v1267 = vadd.f32 %v876, %v1125
  %v1268 = vadd.f32 %v877, %v1127
  %v1269 = vadd.f32 %v878, %v1129
  %v1270 = vadd.f32 %v879, %v1131
  %v1271 = vadd.f32 %v880, %v1133
  %v1272 = vadd.f32 %v881, %v1135
  %v1273 = vadd.f32 %v882, %v1137
  %v1274 = vadd.f32 %v883, %v1139
  %v1275 = vadd.f32 %v884, %v1141
  %v1276 = vadd.f32 %v885, %v1143
  %v1277 = vadd.f32 %v886, %v1145
  %v1278 = vadd.f32 %v887, %v1147
  %v1279 = vadd.f32 %v888, %v1149
  %v1280 = vadd.f32 %v889, %v1151
  %v1281 = vadd.f32 %v890, %v1153
  %v1282 = vld [vmem:[%s8] sm:$0x1]
  %v1284 = vlaneseq
  %v1285 = vshrl.u32 %v1284, 7
  %v1286 = vsub.s32 0, %v1285
  %v1287 = vrot.slane %v1282, %v1286
  %1288 = vrot.lane.b32.xlu0 %v1287, 4
  %v1289 = vpop.permute.xlu0 %1288
  %v1291 = vadd.f32 %v1218, %v1289
  %v1292 = vadd.f32 %v1219, %v1289
  %v1293 = vadd.f32 %v1220, %v1289
  %v1294 = vadd.f32 %v1221, %v1289
  %v1295 = vadd.f32 %v1222, %v1289
  %v1296 = vadd.f32 %v1223, %v1289
  %v1297 = vadd.f32 %v1224, %v1289
  %v1298 = vadd.f32 %v1225, %v1289
  %v1299 = vadd.f32 %v1226, %v1289
  %v1300 = vadd.f32 %v1227, %v1289
  %v1301 = vadd.f32 %v1228, %v1289
  %v1302 = vadd.f32 %v1229, %v1289
  %v1303 = vadd.f32 %v1230, %v1289
  %v1304 = vadd.f32 %v1231, %v1289
  %v1305 = vadd.f32 %v1232, %v1289
  %v1306 = vadd.f32 %v1233, %v1289
  %v1307 = vadd.f32 %v1234, %v1289
  %v1308 = vadd.f32 %v1235, %v1289
  %v1309 = vadd.f32 %v1236, %v1289
  %v1310 = vadd.f32 %v1237, %v1289
  %v1311 = vadd.f32 %v1238, %v1289
  %v1312 = vadd.f32 %v1239, %v1289
  %v1313 = vadd.f32 %v1240, %v1289
  %v1314 = vadd.f32 %v1241, %v1289
  %v1315 = vadd.f32 %v1242, %v1289
  %v1316 = vadd.f32 %v1243, %v1289
  %v1317 = vadd.f32 %v1244, %v1289
  %v1318 = vadd.f32 %v1245, %v1289
  %v1319 = vadd.f32 %v1246, %v1289
  %v1320 = vadd.f32 %v1247, %v1289
  %v1321 = vadd.f32 %v1248, %v1289
  %v1322 = vadd.f32 %v1249, %v1289
  %v1323 = vadd.f32 %v1250, %v1289
  %v1324 = vadd.f32 %v1251, %v1289
  %v1325 = vadd.f32 %v1252, %v1289
  %v1326 = vadd.f32 %v1253, %v1289
  %v1327 = vadd.f32 %v1254, %v1289
  %v1328 = vadd.f32 %v1255, %v1289
  %v1329 = vadd.f32 %v1256, %v1289
  %v1330 = vadd.f32 %v1257, %v1289
  %v1331 = vadd.f32 %v1258, %v1289
  %v1332 = vadd.f32 %v1259, %v1289
  %v1333 = vadd.f32 %v1260, %v1289
  %v1334 = vadd.f32 %v1261, %v1289
  %v1335 = vadd.f32 %v1262, %v1289
  %v1336 = vadd.f32 %v1263, %v1289
  %v1337 = vadd.f32 %v1264, %v1289
  %v1338 = vadd.f32 %v1265, %v1289
  %v1339 = vadd.f32 %v1266, %v1289
  %v1340 = vadd.f32 %v1267, %v1289
  %v1341 = vadd.f32 %v1268, %v1289
  %v1342 = vadd.f32 %v1269, %v1289
  %v1343 = vadd.f32 %v1270, %v1289
  %v1344 = vadd.f32 %v1271, %v1289
  %v1345 = vadd.f32 %v1272, %v1289
  %v1346 = vadd.f32 %v1273, %v1289
  %v1347 = vadd.f32 %v1274, %v1289
  %v1348 = vadd.f32 %v1275, %v1289
  %v1349 = vadd.f32 %v1276, %v1289
  %v1350 = vadd.f32 %v1277, %v1289
  %v1351 = vadd.f32 %v1278, %v1289
  %v1352 = vadd.f32 %v1279, %v1289
  %v1353 = vadd.f32 %v1280, %v1289
  %v1354 = vadd.f32 %v1281, %v1289
  %v1355 = vmax.f32 %v1291, 0.0
  %v1356 = vmax.f32 %v1292, 0.0
  %v1357 = vmax.f32 %v1293, 0.0
  %v1358 = vmax.f32 %v1294, 0.0
  %v1359 = vmax.f32 %v1295, 0.0
  %v1360 = vmax.f32 %v1296, 0.0
  %v1361 = vmax.f32 %v1297, 0.0
  %v1362 = vmax.f32 %v1298, 0.0
  %v1363 = vmax.f32 %v1299, 0.0
  %v1364 = vmax.f32 %v1300, 0.0
  %v1365 = vmax.f32 %v1301, 0.0
  %v1366 = vmax.f32 %v1302, 0.0
  %v1367 = vmax.f32 %v1303, 0.0
  %v1368 = vmax.f32 %v1304, 0.0
  %v1369 = vmax.f32 %v1305, 0.0
  %v1370 = vmax.f32 %v1306, 0.0
  %v1371 = vmax.f32 %v1307, 0.0
  %v1372 = vmax.f32 %v1308, 0.0
  %v1373 = vmax.f32 %v1309, 0.0
  %v1374 = vmax.f32 %v1310, 0.0
  %v1375 = vmax.f32 %v1311, 0.0
  %v1376 = vmax.f32 %v1312, 0.0
  %v1377 = vmax.f32 %v1313, 0.0
  %v1378 = vmax.f32 %v1314, 0.0
  %v1379 = vmax.f32 %v1315, 0.0
  %v1380 = vmax.f32 %v1316, 0.0
  %v1381 = vmax.f32 %v1317, 0.0
  %v1382 = vmax.f32 %v1318, 0.0
  %v1383 = vmax.f32 %v1319, 0.0
  %v1384 = vmax.f32 %v1320, 0.0
  %v1385 = vmax.f32 %v1321, 0.0
  %v1386 = vmax.f32 %v1322, 0.0
  %v1387 = vmax.f32 %v1323, 0.0
  %v1388 = vmax.f32 %v1324, 0.0
  %v1389 = vmax.f32 %v1325, 0.0
  %v1390 = vmax.f32 %v1326, 0.0
  %v1391 = vmax.f32 %v1327, 0.0
  %v1392 = vmax.f32 %v1328, 0.0
  %v1393 = vmax.f32 %v1329, 0.0
  %v1394 = vmax.f32 %v1330, 0.0
  %v1395 = vmax.f32 %v1331, 0.0
  %v1396 = vmax.f32 %v1332, 0.0
  %v1397 = vmax.f32 %v1333, 0.0
  %v1398 = vmax.f32 %v1334, 0.0
  %v1399 = vmax.f32 %v1335, 0.0
  %v1400 = vmax.f32 %v1336, 0.0
  %v1401 = vmax.f32 %v1337, 0.0
  %v1402 = vmax.f32 %v1338, 0.0
  %v1403 = vmax.f32 %v1339, 0.0
  %v1404 = vmax.f32 %v1340, 0.0
  %v1405 = vmax.f32 %v1341, 0.0
  %v1406 = vmax.f32 %v1342, 0.0
  %v1407 = vmax.f32 %v1343, 0.0
  %v1408 = vmax.f32 %v1344, 0.0
  %v1409 = vmax.f32 %v1345, 0.0
  %v1410 = vmax.f32 %v1346, 0.0
  %v1411 = vmax.f32 %v1347, 0.0
  %v1412 = vmax.f32 %v1348, 0.0
  %v1413 = vmax.f32 %v1349, 0.0
  %v1414 = vmax.f32 %v1350, 0.0
  %v1415 = vmax.f32 %v1351, 0.0
  %v1416 = vmax.f32 %v1352, 0.0
  %v1417 = vmax.f32 %v1353, 0.0
  %v1418 = vmax.f32 %v1354, 0.0
  %v1419 = vld [vmem:[%s3] sm:$0x1]
  %v1421 = vlaneseq
  %v1422 = vshrl.u32 %v1421, 7
  %v1423 = vsub.s32 0, %v1422
  %v1424 = vrot.slane %v1419, %v1423
  %1425 = vrot.lane.b32.xlu0 %v1424, 4
  %v1426 = vpop.permute.xlu0 %1425
  %v1428 = vmul.f32 %v1355, %v1426
  %v1429 = vmul.f32 %v1356, %v1426
  %v1430 = vmul.f32 %v1357, %v1426
  %v1431 = vmul.f32 %v1358, %v1426
  %v1432 = vmul.f32 %v1359, %v1426
  %v1433 = vmul.f32 %v1360, %v1426
  %v1434 = vmul.f32 %v1361, %v1426
  %v1435 = vmul.f32 %v1362, %v1426
  %v1436 = vmul.f32 %v1363, %v1426
  %v1437 = vmul.f32 %v1364, %v1426
  %v1438 = vmul.f32 %v1365, %v1426
  %v1439 = vmul.f32 %v1366, %v1426
  %v1440 = vmul.f32 %v1367, %v1426
  %v1441 = vmul.f32 %v1368, %v1426
  %v1442 = vmul.f32 %v1369, %v1426
  %v1443 = vmul.f32 %v1370, %v1426
  %v1444 = vmul.f32 %v1371, %v1426
  %v1445 = vmul.f32 %v1372, %v1426
  %v1446 = vmul.f32 %v1373, %v1426
  %v1447 = vmul.f32 %v1374, %v1426
  %v1448 = vmul.f32 %v1375, %v1426
  %v1449 = vmul.f32 %v1376, %v1426
  %v1450 = vmul.f32 %v1377, %v1426
  %v1451 = vmul.f32 %v1378, %v1426
  %v1452 = vmul.f32 %v1379, %v1426
  %v1453 = vmul.f32 %v1380, %v1426
  %v1454 = vmul.f32 %v1381, %v1426
  %v1455 = vmul.f32 %v1382, %v1426
  %v1456 = vmul.f32 %v1383, %v1426
  %v1457 = vmul.f32 %v1384, %v1426
  %v1458 = vmul.f32 %v1385, %v1426
  %v1459 = vmul.f32 %v1386, %v1426
  %v1460 = vmul.f32 %v1387, %v1426
  %v1461 = vmul.f32 %v1388, %v1426
  %v1462 = vmul.f32 %v1389, %v1426
  %v1463 = vmul.f32 %v1390, %v1426
  %v1464 = vmul.f32 %v1391, %v1426
  %v1465 = vmul.f32 %v1392, %v1426
  %v1466 = vmul.f32 %v1393, %v1426
  %v1467 = vmul.f32 %v1394, %v1426
  %v1468 = vmul.f32 %v1395, %v1426
  %v1469 = vmul.f32 %v1396, %v1426
  %v1470 = vmul.f32 %v1397, %v1426
  %v1471 = vmul.f32 %v1398, %v1426
  %v1472 = vmul.f32 %v1399, %v1426
  %v1473 = vmul.f32 %v1400, %v1426
  %v1474 = vmul.f32 %v1401, %v1426
  %v1475 = vmul.f32 %v1402, %v1426
  %v1476 = vmul.f32 %v1403, %v1426
  %v1477 = vmul.f32 %v1404, %v1426
  %v1478 = vmul.f32 %v1405, %v1426
  %v1479 = vmul.f32 %v1406, %v1426
  %v1480 = vmul.f32 %v1407, %v1426
  %v1481 = vmul.f32 %v1408, %v1426
  %v1482 = vmul.f32 %v1409, %v1426
  %v1483 = vmul.f32 %v1410, %v1426
  %v1484 = vmul.f32 %v1411, %v1426
  %v1485 = vmul.f32 %v1412, %v1426
  %v1486 = vmul.f32 %v1413, %v1426
  %v1487 = vmul.f32 %v1414, %v1426
  %v1488 = vmul.f32 %v1415, %v1426
  %v1489 = vmul.f32 %v1416, %v1426
  %v1490 = vmul.f32 %v1417, %v1426
  %v1491 = vmul.f32 %v1418, %v1426
  %1556 = vrot.lane.b32.xlu0 %v1428, 124
  %v1557 = vpop.permute.xlu0 %1556
  %1558 = vrot.lane.b32.xlu0 %v1429, 124
  %v1559 = vpop.permute.xlu0 %1558
  %1560 = vrot.lane.b32.xlu0 %v1430, 124
  %v1561 = vpop.permute.xlu0 %1560
  %1562 = vrot.lane.b32.xlu0 %v1431, 124
  %v1563 = vpop.permute.xlu0 %1562
  %1564 = vrot.lane.b32.xlu0 %v1432, 124
  %v1565 = vpop.permute.xlu0 %1564
  %1566 = vrot.lane.b32.xlu0 %v1433, 124
  %v1567 = vpop.permute.xlu0 %1566
  %1568 = vrot.lane.b32.xlu0 %v1434, 124
  %v1569 = vpop.permute.xlu0 %1568
  %1570 = vrot.lane.b32.xlu0 %v1435, 124
  %v1571 = vpop.permute.xlu0 %1570
  %1572 = vrot.lane.b32.xlu0 %v1436, 124
  %v1573 = vpop.permute.xlu0 %1572
  %1574 = vrot.lane.b32.xlu0 %v1437, 124
  %v1575 = vpop.permute.xlu0 %1574
  %1576 = vrot.lane.b32.xlu0 %v1438, 124
  %v1577 = vpop.permute.xlu0 %1576
  %1578 = vrot.lane.b32.xlu0 %v1439, 124
  %v1579 = vpop.permute.xlu0 %1578
  %1580 = vrot.lane.b32.xlu0 %v1440, 124
  %v1581 = vpop.permute.xlu0 %1580
  %1582 = vrot.lane.b32.xlu0 %v1441, 124
  %v1583 = vpop.permute.xlu0 %1582
  %1584 = vrot.lane.b32.xlu0 %v1442, 124
  %v1585 = vpop.permute.xlu0 %1584
  %1586 = vrot.lane.b32.xlu0 %v1443, 124
  %v1587 = vpop.permute.xlu0 %1586
  %1588 = vrot.lane.b32.xlu0 %v1444, 124
  %v1589 = vpop.permute.xlu0 %1588
  %1590 = vrot.lane.b32.xlu0 %v1445, 124
  %v1591 = vpop.permute.xlu0 %1590
  %1592 = vrot.lane.b32.xlu0 %v1446, 124
  %v1593 = vpop.permute.xlu0 %1592
  %1594 = vrot.lane.b32.xlu0 %v1447, 124
  %v1595 = vpop.permute.xlu0 %1594
  %1596 = vrot.lane.b32.xlu0 %v1448, 124
  %v1597 = vpop.permute.xlu0 %1596
  %1598 = vrot.lane.b32.xlu0 %v1449, 124
  %v1599 = vpop.permute.xlu0 %1598
  %1600 = vrot.lane.b32.xlu0 %v1450, 124
  %v1601 = vpop.permute.xlu0 %1600
  %1602 = vrot.lane.b32.xlu0 %v1451, 124
  %v1603 = vpop.permute.xlu0 %1602
  %1604 = vrot.lane.b32.xlu0 %v1452, 124
  %v1605 = vpop.permute.xlu0 %1604
  %1606 = vrot.lane.b32.xlu0 %v1453, 124
  %v1607 = vpop.permute.xlu0 %1606
  %1608 = vrot.lane.b32.xlu0 %v1454, 124
  %v1609 = vpop.permute.xlu0 %1608
  %1610 = vrot.lane.b32.xlu0 %v1455, 124
  %v1611 = vpop.permute.xlu0 %1610
  %1612 = vrot.lane.b32.xlu0 %v1456, 124
  %v1613 = vpop.permute.xlu0 %1612
  %1614 = vrot.lane.b32.xlu0 %v1457, 124
  %v1615 = vpop.permute.xlu0 %1614
  %1616 = vrot.lane.b32.xlu0 %v1458, 124
  %v1617 = vpop.permute.xlu0 %1616
  %1618 = vrot.lane.b32.xlu0 %v1459, 124
  %v1619 = vpop.permute.xlu0 %1618
  %1620 = vrot.lane.b32.xlu0 %v1460, 124
  %v1621 = vpop.permute.xlu0 %1620
  %1622 = vrot.lane.b32.xlu0 %v1461, 124
  %v1623 = vpop.permute.xlu0 %1622
  %1624 = vrot.lane.b32.xlu0 %v1462, 124
  %v1625 = vpop.permute.xlu0 %1624
  %1626 = vrot.lane.b32.xlu0 %v1463, 124
  %v1627 = vpop.permute.xlu0 %1626
  %1628 = vrot.lane.b32.xlu0 %v1464, 124
  %v1629 = vpop.permute.xlu0 %1628
  %1630 = vrot.lane.b32.xlu0 %v1465, 124
  %v1631 = vpop.permute.xlu0 %1630
  %1632 = vrot.lane.b32.xlu0 %v1466, 124
  %v1633 = vpop.permute.xlu0 %1632
  %1634 = vrot.lane.b32.xlu0 %v1467, 124
  %v1635 = vpop.permute.xlu0 %1634
  %1636 = vrot.lane.b32.xlu0 %v1468, 124
  %v1637 = vpop.permute.xlu0 %1636
  %1638 = vrot.lane.b32.xlu0 %v1469, 124
  %v1639 = vpop.permute.xlu0 %1638
  %1640 = vrot.lane.b32.xlu0 %v1470, 124
  %v1641 = vpop.permute.xlu0 %1640
  %1642 = vrot.lane.b32.xlu0 %v1471, 124
  %v1643 = vpop.permute.xlu0 %1642
  %1644 = vrot.lane.b32.xlu0 %v1472, 124
  %v1645 = vpop.permute.xlu0 %1644
  %1646 = vrot.lane.b32.xlu0 %v1473, 124
  %v1647 = vpop.permute.xlu0 %1646
  %1648 = vrot.lane.b32.xlu0 %v1474, 124
  %v1649 = vpop.permute.xlu0 %1648
  %1650 = vrot.lane.b32.xlu0 %v1475, 124
  %v1651 = vpop.permute.xlu0 %1650
  %1652 = vrot.lane.b32.xlu0 %v1476, 124
  %v1653 = vpop.permute.xlu0 %1652
  %1654 = vrot.lane.b32.xlu0 %v1477, 124
  %v1655 = vpop.permute.xlu0 %1654
  %1656 = vrot.lane.b32.xlu0 %v1478, 124
  %v1657 = vpop.permute.xlu0 %1656
  %1658 = vrot.lane.b32.xlu0 %v1479, 124
  %v1659 = vpop.permute.xlu0 %1658
  %1660 = vrot.lane.b32.xlu0 %v1480, 124
  %v1661 = vpop.permute.xlu0 %1660
  %1662 = vrot.lane.b32.xlu0 %v1481, 124
  %v1663 = vpop.permute.xlu0 %1662
  %1664 = vrot.lane.b32.xlu0 %v1482, 124
  %v1665 = vpop.permute.xlu0 %1664
  %1666 = vrot.lane.b32.xlu0 %v1483, 124
  %v1667 = vpop.permute.xlu0 %1666
  %1668 = vrot.lane.b32.xlu0 %v1484, 124
  %v1669 = vpop.permute.xlu0 %1668
  %1670 = vrot.lane.b32.xlu0 %v1485, 124
  %v1671 = vpop.permute.xlu0 %1670
  %1672 = vrot.lane.b32.xlu0 %v1486, 124
  %v1673 = vpop.permute.xlu0 %1672
  %1674 = vrot.lane.b32.xlu0 %v1487, 124
  %v1675 = vpop.permute.xlu0 %1674
  %1676 = vrot.lane.b32.xlu0 %v1488, 124
  %v1677 = vpop.permute.xlu0 %1676
  %1678 = vrot.lane.b32.xlu0 %v1489, 124
  %v1679 = vpop.permute.xlu0 %1678
  %1680 = vrot.lane.b32.xlu0 %v1490, 124
  %v1681 = vpop.permute.xlu0 %1680
  %1682 = vrot.lane.b32.xlu0 %v1491, 124
  %v1683 = vpop.permute.xlu0 %1682
  %v1748 = vsel %vm163, %v1557, 0.0
  %1749 = vadd.xlane.f32.xlu0 %v1748
  %v1750 = vpop.xlane.xlu0 %1749
  %v1751 = vsel %vm163, %v1559, 0.0
  %1752 = vadd.xlane.f32.xlu0 %v1751
  %v1753 = vpop.xlane.xlu0 %1752
  %v1754 = vsel %vm163, %v1561, 0.0
  %1755 = vadd.xlane.f32.xlu0 %v1754
  %v1756 = vpop.xlane.xlu0 %1755
  %v1757 = vsel %vm163, %v1563, 0.0
  %1758 = vadd.xlane.f32.xlu0 %v1757
  %v1759 = vpop.xlane.xlu0 %1758
  %v1760 = vsel %vm163, %v1565, 0.0
  %1761 = vadd.xlane.f32.xlu0 %v1760
  %v1762 = vpop.xlane.xlu0 %1761
  %v1763 = vsel %vm163, %v1567, 0.0
  %1764 = vadd.xlane.f32.xlu0 %v1763
  %v1765 = vpop.xlane.xlu0 %1764
  %v1766 = vsel %vm163, %v1569, 0.0
  %1767 = vadd.xlane.f32.xlu0 %v1766
  %v1768 = vpop.xlane.xlu0 %1767
  %v1769 = vsel %vm163, %v1571, 0.0
  %1770 = vadd.xlane.f32.xlu0 %v1769
  %v1771 = vpop.xlane.xlu0 %1770
  %v1772 = vsel %vm163, %v1573, 0.0
  %1773 = vadd.xlane.f32.xlu0 %v1772
  %v1774 = vpop.xlane.xlu0 %1773
  %v1775 = vsel %vm163, %v1575, 0.0
  %1776 = vadd.xlane.f32.xlu0 %v1775
  %v1777 = vpop.xlane.xlu0 %1776
  %v1778 = vsel %vm163, %v1577, 0.0
  %1779 = vadd.xlane.f32.xlu0 %v1778
  %v1780 = vpop.xlane.xlu0 %1779
  %v1781 = vsel %vm163, %v1579, 0.0
  %1782 = vadd.xlane.f32.xlu0 %v1781
  %v1783 = vpop.xlane.xlu0 %1782
  %v1784 = vsel %vm163, %v1581, 0.0
  %1785 = vadd.xlane.f32.xlu0 %v1784
  %v1786 = vpop.xlane.xlu0 %1785
  %v1787 = vsel %vm163, %v1583, 0.0
  %1788 = vadd.xlane.f32.xlu0 %v1787
  %v1789 = vpop.xlane.xlu0 %1788
  %v1790 = vsel %vm163, %v1585, 0.0
  %1791 = vadd.xlane.f32.xlu0 %v1790
  %v1792 = vpop.xlane.xlu0 %1791
  %v1793 = vsel %vm163, %v1587, 0.0
  %1794 = vadd.xlane.f32.xlu0 %v1793
  %v1795 = vpop.xlane.xlu0 %1794
  %v1796 = vsel %vm163, %v1589, 0.0
  %1797 = vadd.xlane.f32.xlu0 %v1796
  %v1798 = vpop.xlane.xlu0 %1797
  %v1799 = vsel %vm163, %v1591, 0.0
  %1800 = vadd.xlane.f32.xlu0 %v1799
  %v1801 = vpop.xlane.xlu0 %1800
  %v1802 = vsel %vm163, %v1593, 0.0
  %1803 = vadd.xlane.f32.xlu0 %v1802
  %v1804 = vpop.xlane.xlu0 %1803
  %v1805 = vsel %vm163, %v1595, 0.0
  %1806 = vadd.xlane.f32.xlu0 %v1805
  %v1807 = vpop.xlane.xlu0 %1806
  %v1808 = vsel %vm163, %v1597, 0.0
  %1809 = vadd.xlane.f32.xlu0 %v1808
  %v1810 = vpop.xlane.xlu0 %1809
  %v1811 = vsel %vm163, %v1599, 0.0
  %1812 = vadd.xlane.f32.xlu0 %v1811
  %v1813 = vpop.xlane.xlu0 %1812
  %v1814 = vsel %vm163, %v1601, 0.0
  %1815 = vadd.xlane.f32.xlu0 %v1814
  %v1816 = vpop.xlane.xlu0 %1815
  %v1817 = vsel %vm163, %v1603, 0.0
  %1818 = vadd.xlane.f32.xlu0 %v1817
  %v1819 = vpop.xlane.xlu0 %1818
  %v1820 = vsel %vm163, %v1605, 0.0
  %1821 = vadd.xlane.f32.xlu0 %v1820
  %v1822 = vpop.xlane.xlu0 %1821
  %v1823 = vsel %vm163, %v1607, 0.0
  %1824 = vadd.xlane.f32.xlu0 %v1823
  %v1825 = vpop.xlane.xlu0 %1824
  %v1826 = vsel %vm163, %v1609, 0.0
  %1827 = vadd.xlane.f32.xlu0 %v1826
  %v1828 = vpop.xlane.xlu0 %1827
  %v1829 = vsel %vm163, %v1611, 0.0
  %1830 = vadd.xlane.f32.xlu0 %v1829
  %v1831 = vpop.xlane.xlu0 %1830
  %v1832 = vsel %vm163, %v1613, 0.0
  %1833 = vadd.xlane.f32.xlu0 %v1832
  %v1834 = vpop.xlane.xlu0 %1833
  %v1835 = vsel %vm163, %v1615, 0.0
  %1836 = vadd.xlane.f32.xlu0 %v1835
  %v1837 = vpop.xlane.xlu0 %1836
  %v1838 = vsel %vm163, %v1617, 0.0
  %1839 = vadd.xlane.f32.xlu0 %v1838
  %v1840 = vpop.xlane.xlu0 %1839
  %v1841 = vsel %vm163, %v1619, 0.0
  %1842 = vadd.xlane.f32.xlu0 %v1841
  %v1843 = vpop.xlane.xlu0 %1842
  %v1844 = vsel %vm163, %v1621, 0.0
  %1845 = vadd.xlane.f32.xlu0 %v1844
  %v1846 = vpop.xlane.xlu0 %1845
  %v1847 = vsel %vm163, %v1623, 0.0
  %1848 = vadd.xlane.f32.xlu0 %v1847
  %v1849 = vpop.xlane.xlu0 %1848
  %v1850 = vsel %vm163, %v1625, 0.0
  %1851 = vadd.xlane.f32.xlu0 %v1850
  %v1852 = vpop.xlane.xlu0 %1851
  %v1853 = vsel %vm163, %v1627, 0.0
  %1854 = vadd.xlane.f32.xlu0 %v1853
  %v1855 = vpop.xlane.xlu0 %1854
  %v1856 = vsel %vm163, %v1629, 0.0
  %1857 = vadd.xlane.f32.xlu0 %v1856
  %v1858 = vpop.xlane.xlu0 %1857
  %v1859 = vsel %vm163, %v1631, 0.0
  %1860 = vadd.xlane.f32.xlu0 %v1859
  %v1861 = vpop.xlane.xlu0 %1860
  %v1862 = vsel %vm163, %v1633, 0.0
  %1863 = vadd.xlane.f32.xlu0 %v1862
  %v1864 = vpop.xlane.xlu0 %1863
  %v1865 = vsel %vm163, %v1635, 0.0
  %1866 = vadd.xlane.f32.xlu0 %v1865
  %v1867 = vpop.xlane.xlu0 %1866
  %v1868 = vsel %vm163, %v1637, 0.0
  %1869 = vadd.xlane.f32.xlu0 %v1868
  %v1870 = vpop.xlane.xlu0 %1869
  %v1871 = vsel %vm163, %v1639, 0.0
  %1872 = vadd.xlane.f32.xlu0 %v1871
  %v1873 = vpop.xlane.xlu0 %1872
  %v1874 = vsel %vm163, %v1641, 0.0
  %1875 = vadd.xlane.f32.xlu0 %v1874
  %v1876 = vpop.xlane.xlu0 %1875
  %v1877 = vsel %vm163, %v1643, 0.0
  %1878 = vadd.xlane.f32.xlu0 %v1877
  %v1879 = vpop.xlane.xlu0 %1878
  %v1880 = vsel %vm163, %v1645, 0.0
  %1881 = vadd.xlane.f32.xlu0 %v1880
  %v1882 = vpop.xlane.xlu0 %1881
  %v1883 = vsel %vm163, %v1647, 0.0
  %1884 = vadd.xlane.f32.xlu0 %v1883
  %v1885 = vpop.xlane.xlu0 %1884
  %v1886 = vsel %vm163, %v1649, 0.0
  %1887 = vadd.xlane.f32.xlu0 %v1886
  %v1888 = vpop.xlane.xlu0 %1887
  %v1889 = vsel %vm163, %v1651, 0.0
  %1890 = vadd.xlane.f32.xlu0 %v1889
  %v1891 = vpop.xlane.xlu0 %1890
  %v1892 = vsel %vm163, %v1653, 0.0
  %1893 = vadd.xlane.f32.xlu0 %v1892
  %v1894 = vpop.xlane.xlu0 %1893
  %v1895 = vsel %vm163, %v1655, 0.0
  %1896 = vadd.xlane.f32.xlu0 %v1895
  %v1897 = vpop.xlane.xlu0 %1896
  %v1898 = vsel %vm163, %v1657, 0.0
  %1899 = vadd.xlane.f32.xlu0 %v1898
  %v1900 = vpop.xlane.xlu0 %1899
  %v1901 = vsel %vm163, %v1659, 0.0
  %1902 = vadd.xlane.f32.xlu0 %v1901
  %v1903 = vpop.xlane.xlu0 %1902
  %v1904 = vsel %vm163, %v1661, 0.0
  %1905 = vadd.xlane.f32.xlu0 %v1904
  %v1906 = vpop.xlane.xlu0 %1905
  %v1907 = vsel %vm163, %v1663, 0.0
  %1908 = vadd.xlane.f32.xlu0 %v1907
  %v1909 = vpop.xlane.xlu0 %1908
  %v1910 = vsel %vm163, %v1665, 0.0
  %1911 = vadd.xlane.f32.xlu0 %v1910
  %v1912 = vpop.xlane.xlu0 %1911
  %v1913 = vsel %vm163, %v1667, 0.0
  %1914 = vadd.xlane.f32.xlu0 %v1913
  %v1915 = vpop.xlane.xlu0 %1914
  %v1916 = vsel %vm163, %v1669, 0.0
  %1917 = vadd.xlane.f32.xlu0 %v1916
  %v1918 = vpop.xlane.xlu0 %1917
  %v1919 = vsel %vm163, %v1671, 0.0
  %1920 = vadd.xlane.f32.xlu0 %v1919
  %v1921 = vpop.xlane.xlu0 %1920
  %v1922 = vsel %vm163, %v1673, 0.0
  %1923 = vadd.xlane.f32.xlu0 %v1922
  %v1924 = vpop.xlane.xlu0 %1923
  %v1925 = vsel %vm163, %v1675, 0.0
  %1926 = vadd.xlane.f32.xlu0 %v1925
  %v1927 = vpop.xlane.xlu0 %1926
  %v1928 = vsel %vm163, %v1677, 0.0
  %1929 = vadd.xlane.f32.xlu0 %v1928
  %v1930 = vpop.xlane.xlu0 %1929
  %v1931 = vsel %vm163, %v1679, 0.0
  %1932 = vadd.xlane.f32.xlu0 %v1931
  %v1933 = vpop.xlane.xlu0 %1932
  %v1934 = vsel %vm163, %v1681, 0.0
  %1935 = vadd.xlane.f32.xlu0 %v1934
  %v1936 = vpop.xlane.xlu0 %1935
  %v1937 = vsel %vm163, %v1683, 0.0
  %1938 = vadd.xlane.f32.xlu0 %v1937
  %v1939 = vpop.xlane.xlu0 %1938
  %v1940 = vld [vmem:[#allocation2] sm:$0x1]
  %v1942 = vlaneseq
  %v1943 = vshrl.u32 %v1942, 7
  %v1944 = vsub.s32 0, %v1943
  %v1945 = vrot.slane %v1940, %v1944
  %v1947 = vadd.f32 %v1750, %v1945
  %v1948 = vadd.f32 %v1753, %v1945
  %v1949 = vadd.f32 %v1756, %v1945
  %v1950 = vadd.f32 %v1759, %v1945
  %v1951 = vadd.f32 %v1762, %v1945
  %v1952 = vadd.f32 %v1765, %v1945
  %v1953 = vadd.f32 %v1768, %v1945
  %v1954 = vadd.f32 %v1771, %v1945
  %v1955 = vadd.f32 %v1774, %v1945
  %v1956 = vadd.f32 %v1777, %v1945
  %v1957 = vadd.f32 %v1780, %v1945
  %v1958 = vadd.f32 %v1783, %v1945
  %v1959 = vadd.f32 %v1786, %v1945
  %v1960 = vadd.f32 %v1789, %v1945
  %v1961 = vadd.f32 %v1792, %v1945
  %v1962 = vadd.f32 %v1795, %v1945
  %v1963 = vadd.f32 %v1798, %v1945
  %v1964 = vadd.f32 %v1801, %v1945
  %v1965 = vadd.f32 %v1804, %v1945
  %v1966 = vadd.f32 %v1807, %v1945
  %v1967 = vadd.f32 %v1810, %v1945
  %v1968 = vadd.f32 %v1813, %v1945
  %v1969 = vadd.f32 %v1816, %v1945
  %v1970 = vadd.f32 %v1819, %v1945
  %v1971 = vadd.f32 %v1822, %v1945
  %v1972 = vadd.f32 %v1825, %v1945
  %v1973 = vadd.f32 %v1828, %v1945
  %v1974 = vadd.f32 %v1831, %v1945
  %v1975 = vadd.f32 %v1834, %v1945
  %v1976 = vadd.f32 %v1837, %v1945
  %v1977 = vadd.f32 %v1840, %v1945
  %v1978 = vadd.f32 %v1843, %v1945
  %v1979 = vadd.f32 %v1846, %v1945
  %v1980 = vadd.f32 %v1849, %v1945
  %v1981 = vadd.f32 %v1852, %v1945
  %v1982 = vadd.f32 %v1855, %v1945
  %v1983 = vadd.f32 %v1858, %v1945
  %v1984 = vadd.f32 %v1861, %v1945
  %v1985 = vadd.f32 %v1864, %v1945
  %v1986 = vadd.f32 %v1867, %v1945
  %v1987 = vadd.f32 %v1870, %v1945
  %v1988 = vadd.f32 %v1873, %v1945
  %v1989 = vadd.f32 %v1876, %v1945
  %v1990 = vadd.f32 %v1879, %v1945
  %v1991 = vadd.f32 %v1882, %v1945
  %v1992 = vadd.f32 %v1885, %v1945
  %v1993 = vadd.f32 %v1888, %v1945
  %v1994 = vadd.f32 %v1891, %v1945
  %v1995 = vadd.f32 %v1894, %v1945
  %v1996 = vadd.f32 %v1897, %v1945
  %v1997 = vadd.f32 %v1900, %v1945
  %v1998 = vadd.f32 %v1903, %v1945
  %v1999 = vadd.f32 %v1906, %v1945
  %v2000 = vadd.f32 %v1909, %v1945
  %v2001 = vadd.f32 %v1912, %v1945
  %v2002 = vadd.f32 %v1915, %v1945
  %v2003 = vadd.f32 %v1918, %v1945
  %v2004 = vadd.f32 %v1921, %v1945
  %v2005 = vadd.f32 %v1924, %v1945
  %v2006 = vadd.f32 %v1927, %v1945
  %v2007 = vadd.f32 %v1930, %v1945
  %v2008 = vadd.f32 %v1933, %v1945
  %v2009 = vadd.f32 %v1936, %v1945
  %v2010 = vadd.f32 %v1939, %v1945
  %v2011 = vxor.u32 %v1947, 2147483648
  %v2012 = vxor.u32 %v1948, 2147483648
  %v2013 = vxor.u32 %v1949, 2147483648
  %v2014 = vxor.u32 %v1950, 2147483648
  %v2015 = vxor.u32 %v1951, 2147483648
  %v2016 = vxor.u32 %v1952, 2147483648
  %v2017 = vxor.u32 %v1953, 2147483648
  %v2018 = vxor.u32 %v1954, 2147483648
  %v2019 = vxor.u32 %v1955, 2147483648
  %v2020 = vxor.u32 %v1956, 2147483648
  %v2021 = vxor.u32 %v1957, 2147483648
  %v2022 = vxor.u32 %v1958, 2147483648
  %v2023 = vxor.u32 %v1959, 2147483648
  %v2024 = vxor.u32 %v1960, 2147483648
  %v2025 = vxor.u32 %v1961, 2147483648
  %v2026 = vxor.u32 %v1962, 2147483648
  %v2027 = vxor.u32 %v1963, 2147483648
  %v2028 = vxor.u32 %v1964, 2147483648
  %v2029 = vxor.u32 %v1965, 2147483648
  %v2030 = vxor.u32 %v1966, 2147483648
  %v2031 = vxor.u32 %v1967, 2147483648
  %v2032 = vxor.u32 %v1968, 2147483648
  %v2033 = vxor.u32 %v1969, 2147483648
  %v2034 = vxor.u32 %v1970, 2147483648
  %v2035 = vxor.u32 %v1971, 2147483648
  %v2036 = vxor.u32 %v1972, 2147483648
  %v2037 = vxor.u32 %v1973, 2147483648
  %v2038 = vxor.u32 %v1974, 2147483648
  %v2039 = vxor.u32 %v1975, 2147483648
  %v2040 = vxor.u32 %v1976, 2147483648
  %v2041 = vxor.u32 %v1977, 2147483648
  %v2042 = vxor.u32 %v1978, 2147483648
  %v2043 = vxor.u32 %v1979, 2147483648
  %v2044 = vxor.u32 %v1980, 2147483648
  %v2045 = vxor.u32 %v1981, 2147483648
  %v2046 = vxor.u32 %v1982, 2147483648
  %v2047 = vxor.u32 %v1983, 2147483648
  %v2048 = vxor.u32 %v1984, 2147483648
  %v2049 = vxor.u32 %v1985, 2147483648
  %v2050 = vxor.u32 %v1986, 2147483648
  %v2051 = vxor.u32 %v1987, 2147483648
  %v2052 = vxor.u32 %v1988, 2147483648
  %v2053 = vxor.u32 %v1989, 2147483648
  %v2054 = vxor.u32 %v1990, 2147483648
  %v2055 = vxor.u32 %v1991, 2147483648
  %v2056 = vxor.u32 %v1992, 2147483648
  %v2057 = vxor.u32 %v1993, 2147483648
  %v2058 = vxor.u32 %v1994, 2147483648
  %v2059 = vxor.u32 %v1995, 2147483648
  %v2060 = vxor.u32 %v1996, 2147483648
  %v2061 = vxor.u32 %v1997, 2147483648
  %v2062 = vxor.u32 %v1998, 2147483648
  %v2063 = vxor.u32 %v1999, 2147483648
  %v2064 = vxor.u32 %v2000, 2147483648
  %v2065 = vxor.u32 %v2001, 2147483648
  %v2066 = vxor.u32 %v2002, 2147483648
  %v2067 = vxor.u32 %v2003, 2147483648
  %v2068 = vxor.u32 %v2004, 2147483648
  %v2069 = vxor.u32 %v2005, 2147483648
  %v2070 = vxor.u32 %v2006, 2147483648
  %v2071 = vxor.u32 %v2007, 2147483648
  %v2072 = vxor.u32 %v2008, 2147483648
  %v2073 = vxor.u32 %v2009, 2147483648
  %v2074 = vxor.u32 %v2010, 2147483648
  %v2075 = vmul.f32 %v2011, 1.442695
  %v2076 = vpow.pop %v2075
  %v2077 = vmul.f32 %v2012, 1.442695
  %v2078 = vpow.pop %v2077
  %v2079 = vmul.f32 %v2013, 1.442695
  %v2080 = vpow.pop %v2079
  %v2081 = vmul.f32 %v2014, 1.442695
  %v2082 = vpow.pop %v2081
  %v2083 = vmul.f32 %v2015, 1.442695
  %v2084 = vpow.pop %v2083
  %v2085 = vmul.f32 %v2016, 1.442695
  %v2086 = vpow.pop %v2085
  %v2087 = vmul.f32 %v2017, 1.442695
  %v2088 = vpow.pop %v2087
  %v2089 = vmul.f32 %v2018, 1.442695
  %v2090 = vpow.pop %v2089
  %v2091 = vmul.f32 %v2019, 1.442695
  %v2092 = vpow.pop %v2091
  %v2093 = vmul.f32 %v2020, 1.442695
  %v2094 = vpow.pop %v2093
  %v2095 = vmul.f32 %v2021, 1.442695
  %v2096 = vpow.pop %v2095
  %v2097 = vmul.f32 %v2022, 1.442695
  %v2098 = vpow.pop %v2097
  %v2099 = vmul.f32 %v2023, 1.442695
  %v2100 = vpow.pop %v2099
  %v2101 = vmul.f32 %v2024, 1.442695
  %v2102 = vpow.pop %v2101
  %v2103 = vmul.f32 %v2025, 1.442695
  %v2104 = vpow.pop %v2103
  %v2105 = vmul.f32 %v2026, 1.442695
  %v2106 = vpow.pop %v2105
  %v2107 = vmul.f32 %v2027, 1.442695
  %v2108 = vpow.pop %v2107
  %v2109 = vmul.f32 %v2028, 1.442695
  %v2110 = vpow.pop %v2109
  %v2111 = vmul.f32 %v2029, 1.442695
  %v2112 = vpow.pop %v2111
  %v2113 = vmul.f32 %v2030, 1.442695
  %v2114 = vpow.pop %v2113
  %v2115 = vmul.f32 %v2031, 1.442695
  %v2116 = vpow.pop %v2115
  %v2117 = vmul.f32 %v2032, 1.442695
  %v2118 = vpow.pop %v2117
  %v2119 = vmul.f32 %v2033, 1.442695
  %v2120 = vpow.pop %v2119
  %v2121 = vmul.f32 %v2034, 1.442695
  %v2122 = vpow.pop %v2121
  %v2123 = vmul.f32 %v2035, 1.442695
  %v2124 = vpow.pop %v2123
  %v2125 = vmul.f32 %v2036, 1.442695
  %v2126 = vpow.pop %v2125
  %v2127 = vmul.f32 %v2037, 1.442695
  %v2128 = vpow.pop %v2127
  %v2129 = vmul.f32 %v2038, 1.442695
  %v2130 = vpow.pop %v2129
  %v2131 = vmul.f32 %v2039, 1.442695
  %v2132 = vpow.pop %v2131
  %v2133 = vmul.f32 %v2040, 1.442695
  %v2134 = vpow.pop %v2133
  %v2135 = vmul.f32 %v2041, 1.442695
  %v2136 = vpow.pop %v2135
  %v2137 = vmul.f32 %v2042, 1.442695
  %v2138 = vpow.pop %v2137
  %v2139 = vmul.f32 %v2043, 1.442695
  %v2140 = vpow.pop %v2139
  %v2141 = vmul.f32 %v2044, 1.442695
  %v2142 = vpow.pop %v2141
  %v2143 = vmul.f32 %v2045, 1.442695
  %v2144 = vpow.pop %v2143
  %v2145 = vmul.f32 %v2046, 1.442695
  %v2146 = vpow.pop %v2145
  %v2147 = vmul.f32 %v2047, 1.442695
  %v2148 = vpow.pop %v2147
  %v2149 = vmul.f32 %v2048, 1.442695
  %v2150 = vpow.pop %v2149
  %v2151 = vmul.f32 %v2049, 1.442695
  %v2152 = vpow.pop %v2151
  %v2153 = vmul.f32 %v2050, 1.442695
  %v2154 = vpow.pop %v2153
  %v2155 = vmul.f32 %v2051, 1.442695
  %v2156 = vpow.pop %v2155
  %v2157 = vmul.f32 %v2052, 1.442695
  %v2158 = vpow.pop %v2157
  %v2159 = vmul.f32 %v2053, 1.442695
  %v2160 = vpow.pop %v2159
  %v2161 = vmul.f32 %v2054, 1.442695
  %v2162 = vpow.pop %v2161
  %v2163 = vmul.f32 %v2055, 1.442695
  %v2164 = vpow.pop %v2163
  %v2165 = vmul.f32 %v2056, 1.442695
  %v2166 = vpow.pop %v2165
  %v2167 = vmul.f32 %v2057, 1.442695
  %v2168 = vpow.pop %v2167
  %v2169 = vmul.f32 %v2058, 1.442695
  %v2170 = vpow.pop %v2169
  %v2171 = vmul.f32 %v2059, 1.442695
  %v2172 = vpow.pop %v2171
  %v2173 = vmul.f32 %v2060, 1.442695
  %v2174 = vpow.pop %v2173
  %v2175 = vmul.f32 %v2061, 1.442695
  %v2176 = vpow.pop %v2175
  %v2177 = vmul.f32 %v2062, 1.442695
  %v2178 = vpow.pop %v2177
  %v2179 = vmul.f32 %v2063, 1.442695
  %v2180 = vpow.pop %v2179
  %v2181 = vmul.f32 %v2064, 1.442695
  %v2182 = vpow.pop %v2181
  %v2183 = vmul.f32 %v2065, 1.442695
  %v2184 = vpow.pop %v2183
  %v2185 = vmul.f32 %v2066, 1.442695
  %v2186 = vpow.pop %v2185
  %v2187 = vmul.f32 %v2067, 1.442695
  %v2188 = vpow.pop %v2187
  %v2189 = vmul.f32 %v2068, 1.442695
  %v2190 = vpow.pop %v2189
  %v2191 = vmul.f32 %v2069, 1.442695
  %v2192 = vpow.pop %v2191
  %v2193 = vmul.f32 %v2070, 1.442695
  %v2194 = vpow.pop %v2193
  %v2195 = vmul.f32 %v2071, 1.442695
  %v2196 = vpow.pop %v2195
  %v2197 = vmul.f32 %v2072, 1.442695
  %v2198 = vpow.pop %v2197
  %v2199 = vmul.f32 %v2073, 1.442695
  %v2200 = vpow.pop %v2199
  %v2201 = vmul.f32 %v2074, 1.442695
  %v2202 = vpow.pop %v2201
  %v2203 = vadd.f32 %v2076, 1.0
  %v2204 = vadd.f32 %v2078, 1.0
  %v2205 = vadd.f32 %v2080, 1.0
  %v2206 = vadd.f32 %v2082, 1.0
  %v2207 = vadd.f32 %v2084, 1.0
  %v2208 = vadd.f32 %v2086, 1.0
  %v2209 = vadd.f32 %v2088, 1.0
  %v2210 = vadd.f32 %v2090, 1.0
  %v2211 = vadd.f32 %v2092, 1.0
  %v2212 = vadd.f32 %v2094, 1.0
  %v2213 = vadd.f32 %v2096, 1.0
  %v2214 = vadd.f32 %v2098, 1.0
  %v2215 = vadd.f32 %v2100, 1.0
  %v2216 = vadd.f32 %v2102, 1.0
  %v2217 = vadd.f32 %v2104, 1.0
  %v2218 = vadd.f32 %v2106, 1.0
  %v2219 = vadd.f32 %v2108, 1.0
  %v2220 = vadd.f32 %v2110, 1.0
  %v2221 = vadd.f32 %v2112, 1.0
  %v2222 = vadd.f32 %v2114, 1.0
  %v2223 = vadd.f32 %v2116, 1.0
  %v2224 = vadd.f32 %v2118, 1.0
  %v2225 = vadd.f32 %v2120, 1.0
  %v2226 = vadd.f32 %v2122, 1.0
  %v2227 = vadd.f32 %v2124, 1.0
  %v2228 = vadd.f32 %v2126, 1.0
  %v2229 = vadd.f32 %v2128, 1.0
  %v2230 = vadd.f32 %v2130, 1.0
  %v2231 = vadd.f32 %v2132, 1.0
  %v2232 = vadd.f32 %v2134, 1.0
  %v2233 = vadd.f32 %v2136, 1.0
  %v2234 = vadd.f32 %v2138, 1.0
  %v2235 = vadd.f32 %v2140, 1.0
  %v2236 = vadd.f32 %v2142, 1.0
  %v2237 = vadd.f32 %v2144, 1.0
  %v2238 = vadd.f32 %v2146, 1.0
  %v2239 = vadd.f32 %v2148, 1.0
  %v2240 = vadd.f32 %v2150, 1.0
  %v2241 = vadd.f32 %v2152, 1.0
  %v2242 = vadd.f32 %v2154, 1.0
  %v2243 = vadd.f32 %v2156, 1.0
  %v2244 = vadd.f32 %v2158, 1.0
  %v2245 = vadd.f32 %v2160, 1.0
  %v2246 = vadd.f32 %v2162, 1.0
  %v2247 = vadd.f32 %v2164, 1.0
  %v2248 = vadd.f32 %v2166, 1.0
  %v2249 = vadd.f32 %v2168, 1.0
  %v2250 = vadd.f32 %v2170, 1.0
  %v2251 = vadd.f32 %v2172, 1.0
  %v2252 = vadd.f32 %v2174, 1.0
  %v2253 = vadd.f32 %v2176, 1.0
  %v2254 = vadd.f32 %v2178, 1.0
  %v2255 = vadd.f32 %v2180, 1.0
  %v2256 = vadd.f32 %v2182, 1.0
  %v2257 = vadd.f32 %v2184, 1.0
  %v2258 = vadd.f32 %v2186, 1.0
  %v2259 = vadd.f32 %v2188, 1.0
  %v2260 = vadd.f32 %v2190, 1.0
  %v2261 = vadd.f32 %v2192, 1.0
  %v2262 = vadd.f32 %v2194, 1.0
  %v2263 = vadd.f32 %v2196, 1.0
  %v2264 = vadd.f32 %v2198, 1.0
  %v2265 = vadd.f32 %v2200, 1.0
  %v2266 = vadd.f32 %v2202, 1.0
  %v2267 = vrcp.pop %v2203
  %v2268 = vmul.f32 1.0, %v2267
  %v2269 = vrcp.pop %v2204
  %v2270 = vmul.f32 1.0, %v2269
  %v2271 = vrcp.pop %v2205
  %v2272 = vmul.f32 1.0, %v2271
  %v2273 = vrcp.pop %v2206
  %v2274 = vmul.f32 1.0, %v2273
  %v2275 = vrcp.pop %v2207
  %v2276 = vmul.f32 1.0, %v2275
  %v2277 = vrcp.pop %v2208
  %v2278 = vmul.f32 1.0, %v2277
  %v2279 = vrcp.pop %v2209
  %v2280 = vmul.f32 1.0, %v2279
  %v2281 = vrcp.pop %v2210
  %v2282 = vmul.f32 1.0, %v2281
  %v2283 = vrcp.pop %v2211
  %v2284 = vmul.f32 1.0, %v2283
  %v2285 = vrcp.pop %v2212
  %v2286 = vmul.f32 1.0, %v2285
  %v2287 = vrcp.pop %v2213
  %v2288 = vmul.f32 1.0, %v2287
  %v2289 = vrcp.pop %v2214
  %v2290 = vmul.f32 1.0, %v2289
  %v2291 = vrcp.pop %v2215
  %v2292 = vmul.f32 1.0, %v2291
  %v2293 = vrcp.pop %v2216
  %v2294 = vmul.f32 1.0, %v2293
  %v2295 = vrcp.pop %v2217
  %v2296 = vmul.f32 1.0, %v2295
  %v2297 = vrcp.pop %v2218
  %v2298 = vmul.f32 1.0, %v2297
  %v2299 = vrcp.pop %v2219
  %v2300 = vmul.f32 1.0, %v2299
  %v2301 = vrcp.pop %v2220
  %v2302 = vmul.f32 1.0, %v2301
  %v2303 = vrcp.pop %v2221
  %v2304 = vmul.f32 1.0, %v2303
  %v2305 = vrcp.pop %v2222
  %v2306 = vmul.f32 1.0, %v2305
  %v2307 = vrcp.pop %v2223
  %v2308 = vmul.f32 1.0, %v2307
  %v2309 = vrcp.pop %v2224
  %v2310 = vmul.f32 1.0, %v2309
  %v2311 = vrcp.pop %v2225
  %v2312 = vmul.f32 1.0, %v2311
  %v2313 = vrcp.pop %v2226
  %v2314 = vmul.f32 1.0, %v2313
  %v2315 = vrcp.pop %v2227
  %v2316 = vmul.f32 1.0, %v2315
  %v2317 = vrcp.pop %v2228
  %v2318 = vmul.f32 1.0, %v2317
  %v2319 = vrcp.pop %v2229
  %v2320 = vmul.f32 1.0, %v2319
  %v2321 = vrcp.pop %v2230
  %v2322 = vmul.f32 1.0, %v2321
  %v2323 = vrcp.pop %v2231
  %v2324 = vmul.f32 1.0, %v2323
  %v2325 = vrcp.pop %v2232
  %v2326 = vmul.f32 1.0, %v2325
  %v2327 = vrcp.pop %v2233
  %v2328 = vmul.f32 1.0, %v2327
  %v2329 = vrcp.pop %v2234
  %v2330 = vmul.f32 1.0, %v2329
  %v2331 = vrcp.pop %v2235
  %v2332 = vmul.f32 1.0, %v2331
  %v2333 = vrcp.pop %v2236
  %v2334 = vmul.f32 1.0, %v2333
  %v2335 = vrcp.pop %v2237
  %v2336 = vmul.f32 1.0, %v2335
  %v2337 = vrcp.pop %v2238
  %v2338 = vmul.f32 1.0, %v2337
  %v2339 = vrcp.pop %v2239
  %v2340 = vmul.f32 1.0, %v2339
  %v2341 = vrcp.pop %v2240
  %v2342 = vmul.f32 1.0, %v2341
  %v2343 = vrcp.pop %v2241
  %v2344 = vmul.f32 1.0, %v2343
  %v2345 = vrcp.pop %v2242
  %v2346 = vmul.f32 1.0, %v2345
  %v2347 = vrcp.pop %v2243
  %v2348 = vmul.f32 1.0, %v2347
  %v2349 = vrcp.pop %v2244
  %v2350 = vmul.f32 1.0, %v2349
  %v2351 = vrcp.pop %v2245
  %v2352 = vmul.f32 1.0, %v2351
  %v2353 = vrcp.pop %v2246
  %v2354 = vmul.f32 1.0, %v2353
  %v2355 = vrcp.pop %v2247
  %v2356 = vmul.f32 1.0, %v2355
  %v2357 = vrcp.pop %v2248
  %v2358 = vmul.f32 1.0, %v2357
  %v2359 = vrcp.pop %v2249
  %v2360 = vmul.f32 1.0, %v2359
  %v2361 = vrcp.pop %v2250
  %v2362 = vmul.f32 1.0, %v2361
  %v2363 = vrcp.pop %v2251
  %v2364 = vmul.f32 1.0, %v2363
  %v2365 = vrcp.pop %v2252
  %v2366 = vmul.f32 1.0, %v2365
  %v2367 = vrcp.pop %v2253
  %v2368 = vmul.f32 1.0, %v2367
  %v2369 = vrcp.pop %v2254
  %v2370 = vmul.f32 1.0, %v2369
  %v2371 = vrcp.pop %v2255
  %v2372 = vmul.f32 1.0, %v2371
  %v2373 = vrcp.pop %v2256
  %v2374 = vmul.f32 1.0, %v2373
  %v2375 = vrcp.pop %v2257
  %v2376 = vmul.f32 1.0, %v2375
  %v2377 = vrcp.pop %v2258
  %v2378 = vmul.f32 1.0, %v2377
  %v2379 = vrcp.pop %v2259
  %v2380 = vmul.f32 1.0, %v2379
  %v2381 = vrcp.pop %v2260
  %v2382 = vmul.f32 1.0, %v2381
  %v2383 = vrcp.pop %v2261
  %v2384 = vmul.f32 1.0, %v2383
  %v2385 = vrcp.pop %v2262
  %v2386 = vmul.f32 1.0, %v2385
  %v2387 = vrcp.pop %v2263
  %v2388 = vmul.f32 1.0, %v2387
  %v2389 = vrcp.pop %v2264
  %v2390 = vmul.f32 1.0, %v2389
  %v2391 = vrcp.pop %v2265
  %v2392 = vmul.f32 1.0, %v2391
  %v2393 = vrcp.pop %v2266
  %v2394 = vmul.f32 1.0, %v2393
  %2396 = vset.pattern.permute.xlu0 0
  %2397 = vperm.xlu0 %2396, %v2268
  %v2398 = vpop.permute.xlu0 %2397
  %2401 = vset.pattern.permute.xlu0 0
  %2402 = vperm.xlu0 %2401, %v2270
  %v2403 = vpop.permute.xlu0 %2402
  %2406 = vset.pattern.permute.xlu0 0
  %2407 = vperm.xlu0 %2406, %v2272
  %v2408 = vpop.permute.xlu0 %2407
  %2411 = vset.pattern.permute.xlu0 0
  %2412 = vperm.xlu0 %2411, %v2274
  %v2413 = vpop.permute.xlu0 %2412
  %2416 = vset.pattern.permute.xlu0 0
  %2417 = vperm.xlu0 %2416, %v2276
  %v2418 = vpop.permute.xlu0 %2417
  %2421 = vset.pattern.permute.xlu0 0
  %2422 = vperm.xlu0 %2421, %v2278
  %v2423 = vpop.permute.xlu0 %2422
  %2426 = vset.pattern.permute.xlu0 0
  %2427 = vperm.xlu0 %2426, %v2280
  %v2428 = vpop.permute.xlu0 %2427
  %2431 = vset.pattern.permute.xlu0 0
  %2432 = vperm.xlu0 %2431, %v2282
  %v2433 = vpop.permute.xlu0 %2432
  %2436 = vset.pattern.permute.xlu0 0
  %2437 = vperm.xlu0 %2436, %v2284
  %v2438 = vpop.permute.xlu0 %2437
  %2441 = vset.pattern.permute.xlu0 0
  %2442 = vperm.xlu0 %2441, %v2286
  %v2443 = vpop.permute.xlu0 %2442
  %2446 = vset.pattern.permute.xlu0 0
  %2447 = vperm.xlu0 %2446, %v2288
  %v2448 = vpop.permute.xlu0 %2447
  %2451 = vset.pattern.permute.xlu0 0
  %2452 = vperm.xlu0 %2451, %v2290
  %v2453 = vpop.permute.xlu0 %2452
  %2456 = vset.pattern.permute.xlu0 0
  %2457 = vperm.xlu0 %2456, %v2292
  %v2458 = vpop.permute.xlu0 %2457
  %2461 = vset.pattern.permute.xlu0 0
  %2462 = vperm.xlu0 %2461, %v2294
  %v2463 = vpop.permute.xlu0 %2462
  %2466 = vset.pattern.permute.xlu0 0
  %2467 = vperm.xlu0 %2466, %v2296
  %v2468 = vpop.permute.xlu0 %2467
  %2471 = vset.pattern.permute.xlu0 0
  %2472 = vperm.xlu0 %2471, %v2298
  %v2473 = vpop.permute.xlu0 %2472
  %2476 = vset.pattern.permute.xlu0 0
  %2477 = vperm.xlu0 %2476, %v2300
  %v2478 = vpop.permute.xlu0 %2477
  %2481 = vset.pattern.permute.xlu0 0
  %2482 = vperm.xlu0 %2481, %v2302
  %v2483 = vpop.permute.xlu0 %2482
  %2486 = vset.pattern.permute.xlu0 0
  %2487 = vperm.xlu0 %2486, %v2304
  %v2488 = vpop.permute.xlu0 %2487
  %2491 = vset.pattern.permute.xlu0 0
  %2492 = vperm.xlu0 %2491, %v2306
  %v2493 = vpop.permute.xlu0 %2492
  %2496 = vset.pattern.permute.xlu0 0
  %2497 = vperm.xlu0 %2496, %v2308
  %v2498 = vpop.permute.xlu0 %2497
  %2501 = vset.pattern.permute.xlu0 0
  %2502 = vperm.xlu0 %2501, %v2310
  %v2503 = vpop.permute.xlu0 %2502
  %2506 = vset.pattern.permute.xlu0 0
  %2507 = vperm.xlu0 %2506, %v2312
  %v2508 = vpop.permute.xlu0 %2507
  %2511 = vset.pattern.permute.xlu0 0
  %2512 = vperm.xlu0 %2511, %v2314
  %v2513 = vpop.permute.xlu0 %2512
  %2516 = vset.pattern.permute.xlu0 0
  %2517 = vperm.xlu0 %2516, %v2316
  %v2518 = vpop.permute.xlu0 %2517
  %2521 = vset.pattern.permute.xlu0 0
  %2522 = vperm.xlu0 %2521, %v2318
  %v2523 = vpop.permute.xlu0 %2522
  %2526 = vset.pattern.permute.xlu0 0
  %2527 = vperm.xlu0 %2526, %v2320
  %v2528 = vpop.permute.xlu0 %2527
  %2531 = vset.pattern.permute.xlu0 0
  %2532 = vperm.xlu0 %2531, %v2322
  %v2533 = vpop.permute.xlu0 %2532
  %2536 = vset.pattern.permute.xlu0 0
  %2537 = vperm.xlu0 %2536, %v2324
  %v2538 = vpop.permute.xlu0 %2537
  %2541 = vset.pattern.permute.xlu0 0
  %2542 = vperm.xlu0 %2541, %v2326
  %v2543 = vpop.permute.xlu0 %2542
  %2546 = vset.pattern.permute.xlu0 0
  %2547 = vperm.xlu0 %2546, %v2328
  %v2548 = vpop.permute.xlu0 %2547
  %2551 = vset.pattern.permute.xlu0 0
  %2552 = vperm.xlu0 %2551, %v2330
  %v2553 = vpop.permute.xlu0 %2552
  %2556 = vset.pattern.permute.xlu0 0
  %2557 = vperm.xlu0 %2556, %v2332
  %v2558 = vpop.permute.xlu0 %2557
  %2561 = vset.pattern.permute.xlu0 0
  %2562 = vperm.xlu0 %2561, %v2334
  %v2563 = vpop.permute.xlu0 %2562
  %2566 = vset.pattern.permute.xlu0 0
  %2567 = vperm.xlu0 %2566, %v2336
  %v2568 = vpop.permute.xlu0 %2567
  %2571 = vset.pattern.permute.xlu0 0
  %2572 = vperm.xlu0 %2571, %v2338
  %v2573 = vpop.permute.xlu0 %2572
  %2576 = vset.pattern.permute.xlu0 0
  %2577 = vperm.xlu0 %2576, %v2340
  %v2578 = vpop.permute.xlu0 %2577
  %2581 = vset.pattern.permute.xlu0 0
  %2582 = vperm.xlu0 %2581, %v2342
  %v2583 = vpop.permute.xlu0 %2582
  %2586 = vset.pattern.permute.xlu0 0
  %2587 = vperm.xlu0 %2586, %v2344
  %v2588 = vpop.permute.xlu0 %2587
  %2591 = vset.pattern.permute.xlu0 0
  %2592 = vperm.xlu0 %2591, %v2346
  %v2593 = vpop.permute.xlu0 %2592
  %2596 = vset.pattern.permute.xlu0 0
  %2597 = vperm.xlu0 %2596, %v2348
  %v2598 = vpop.permute.xlu0 %2597
  %2601 = vset.pattern.permute.xlu0 0
  %2602 = vperm.xlu0 %2601, %v2350
  %v2603 = vpop.permute.xlu0 %2602
  %2606 = vset.pattern.permute.xlu0 0
  %2607 = vperm.xlu0 %2606, %v2352
  %v2608 = vpop.permute.xlu0 %2607
  %2611 = vset.pattern.permute.xlu0 0
  %2612 = vperm.xlu0 %2611, %v2354
  %v2613 = vpop.permute.xlu0 %2612
  %2616 = vset.pattern.permute.xlu0 0
  %2617 = vperm.xlu0 %2616, %v2356
  %v2618 = vpop.permute.xlu0 %2617
  %2621 = vset.pattern.permute.xlu0 0
  %2622 = vperm.xlu0 %2621, %v2358
  %v2623 = vpop.permute.xlu0 %2622
  %2626 = vset.pattern.permute.xlu0 0
  %2627 = vperm.xlu0 %2626, %v2360
  %v2628 = vpop.permute.xlu0 %2627
  %2631 = vset.pattern.permute.xlu0 0
  %2632 = vperm.xlu0 %2631, %v2362
  %v2633 = vpop.permute.xlu0 %2632
  %2636 = vset.pattern.permute.xlu0 0
  %2637 = vperm.xlu0 %2636, %v2364
  %v2638 = vpop.permute.xlu0 %2637
  %2641 = vset.pattern.permute.xlu0 0
  %2642 = vperm.xlu0 %2641, %v2366
  %v2643 = vpop.permute.xlu0 %2642
  %2646 = vset.pattern.permute.xlu0 0
  %2647 = vperm.xlu0 %2646, %v2368
  %v2648 = vpop.permute.xlu0 %2647
  %2651 = vset.pattern.permute.xlu0 0
  %2652 = vperm.xlu0 %2651, %v2370
  %v2653 = vpop.permute.xlu0 %2652
  %2656 = vset.pattern.permute.xlu0 0
  %2657 = vperm.xlu0 %2656, %v2372
  %v2658 = vpop.permute.xlu0 %2657
  %2661 = vset.pattern.permute.xlu0 0
  %2662 = vperm.xlu0 %2661, %v2374
  %v2663 = vpop.permute.xlu0 %2662
  %2666 = vset.pattern.permute.xlu0 0
  %2667 = vperm.xlu0 %2666, %v2376
  %v2668 = vpop.permute.xlu0 %2667
  %2671 = vset.pattern.permute.xlu0 0
  %2672 = vperm.xlu0 %2671, %v2378
  %v2673 = vpop.permute.xlu0 %2672
  %2676 = vset.pattern.permute.xlu0 0
  %2677 = vperm.xlu0 %2676, %v2380
  %v2678 = vpop.permute.xlu0 %2677
  %2681 = vset.pattern.permute.xlu0 0
  %2682 = vperm.xlu0 %2681, %v2382
  %v2683 = vpop.permute.xlu0 %2682
  %2686 = vset.pattern.permute.xlu0 0
  %2687 = vperm.xlu0 %2686, %v2384
  %v2688 = vpop.permute.xlu0 %2687
  %2691 = vset.pattern.permute.xlu0 0
  %2692 = vperm.xlu0 %2691, %v2386
  %v2693 = vpop.permute.xlu0 %2692
  %2696 = vset.pattern.permute.xlu0 0
  %2697 = vperm.xlu0 %2696, %v2388
  %v2698 = vpop.permute.xlu0 %2697
  %2701 = vset.pattern.permute.xlu0 0
  %2702 = vperm.xlu0 %2701, %v2390
  %v2703 = vpop.permute.xlu0 %2702
  %2706 = vset.pattern.permute.xlu0 0
  %2707 = vperm.xlu0 %2706, %v2392
  %v2708 = vpop.permute.xlu0 %2707
  %2711 = vset.pattern.permute.xlu0 0
  %2712 = vperm.xlu0 %2711, %v2394
  %v2713 = vpop.permute.xlu0 %2712
  %v2715 = vmul.f32 %v2398, %v34
  %v2716 = vmul.f32 %v2403, %v35
  %v2717 = vmul.f32 %v2408, %v36
  %v2718 = vmul.f32 %v2413, %v37
  %v2719 = vmul.f32 %v2418, %v38
  %v2720 = vmul.f32 %v2423, %v39
  %v2721 = vmul.f32 %v2428, %v40
  %v2722 = vmul.f32 %v2433, %v41
  %v2723 = vmul.f32 %v2438, %v42
  %v2724 = vmul.f32 %v2443, %v43
  %v2725 = vmul.f32 %v2448, %v44
  %v2726 = vmul.f32 %v2453, %v45
  %v2727 = vmul.f32 %v2458, %v46
  %v2728 = vmul.f32 %v2463, %v47
  %v2729 = vmul.f32 %v2468, %v48
  %v2730 = vmul.f32 %v2473, %v49
  %v2731 = vmul.f32 %v2478, %v50
  %v2732 = vmul.f32 %v2483, %v51
  %v2733 = vmul.f32 %v2488, %v52
  %v2734 = vmul.f32 %v2493, %v53
  %v2735 = vmul.f32 %v2498, %v54
  %v2736 = vmul.f32 %v2503, %v55
  %v2737 = vmul.f32 %v2508, %v56
  %v2738 = vmul.f32 %v2513, %v57
  %v2739 = vmul.f32 %v2518, %v58
  %v2740 = vmul.f32 %v2523, %v59
  %v2741 = vmul.f32 %v2528, %v60
  %v2742 = vmul.f32 %v2533, %v61
  %v2743 = vmul.f32 %v2538, %v62
  %v2744 = vmul.f32 %v2543, %v63
  %v2745 = vmul.f32 %v2548, %v64
  %v2746 = vmul.f32 %v2553, %v65
  %v2747 = vmul.f32 %v2558, %v66
  %v2748 = vmul.f32 %v2563, %v67
  %v2749 = vmul.f32 %v2568, %v68
  %v2750 = vmul.f32 %v2573, %v69
  %v2751 = vmul.f32 %v2578, %v70
  %v2752 = vmul.f32 %v2583, %v71
  %v2753 = vmul.f32 %v2588, %v72
  %v2754 = vmul.f32 %v2593, %v73
  %v2755 = vmul.f32 %v2598, %v74
  %v2756 = vmul.f32 %v2603, %v75
  %v2757 = vmul.f32 %v2608, %v76
  %v2758 = vmul.f32 %v2613, %v77
  %v2759 = vmul.f32 %v2618, %v78
  %v2760 = vmul.f32 %v2623, %v79
  %v2761 = vmul.f32 %v2628, %v80
  %v2762 = vmul.f32 %v2633, %v81
  %v2763 = vmul.f32 %v2638, %v82
  %v2764 = vmul.f32 %v2643, %v83
  %v2765 = vmul.f32 %v2648, %v84
  %v2766 = vmul.f32 %v2653, %v85
  %v2767 = vmul.f32 %v2658, %v86
  %v2768 = vmul.f32 %v2663, %v87
  %v2769 = vmul.f32 %v2668, %v88
  %v2770 = vmul.f32 %v2673, %v89
  %v2771 = vmul.f32 %v2678, %v90
  %v2772 = vmul.f32 %v2683, %v91
  %v2773 = vmul.f32 %v2688, %v92
  %v2774 = vmul.f32 %v2693, %v93
  %v2775 = vmul.f32 %v2698, %v94
  %v2776 = vmul.f32 %v2703, %v95
  %v2777 = vmul.f32 %v2708, %v96
  %v2778 = vmul.f32 %v2713, %v97
  %2843 = vrot.lane.b32.xlu0 %v2715, 4
  %v2844 = vpop.permute.xlu0 %2843
  %2845 = vrot.lane.b32.xlu0 %v2716, 4
  %v2846 = vpop.permute.xlu0 %2845
  %2847 = vrot.lane.b32.xlu0 %v2717, 4
  %v2848 = vpop.permute.xlu0 %2847
  %2849 = vrot.lane.b32.xlu0 %v2718, 4
  %v2850 = vpop.permute.xlu0 %2849
  %2851 = vrot.lane.b32.xlu0 %v2719, 4
  %v2852 = vpop.permute.xlu0 %2851
  %2853 = vrot.lane.b32.xlu0 %v2720, 4
  %v2854 = vpop.permute.xlu0 %2853
  %2855 = vrot.lane.b32.xlu0 %v2721, 4
  %v2856 = vpop.permute.xlu0 %2855
  %2857 = vrot.lane.b32.xlu0 %v2722, 4
  %v2858 = vpop.permute.xlu0 %2857
  %2859 = vrot.lane.b32.xlu0 %v2723, 4
  %v2860 = vpop.permute.xlu0 %2859
  %2861 = vrot.lane.b32.xlu0 %v2724, 4
  %v2862 = vpop.permute.xlu0 %2861
  %2863 = vrot.lane.b32.xlu0 %v2725, 4
  %v2864 = vpop.permute.xlu0 %2863
  %2865 = vrot.lane.b32.xlu0 %v2726, 4
  %v2866 = vpop.permute.xlu0 %2865
  %2867 = vrot.lane.b32.xlu0 %v2727, 4
  %v2868 = vpop.permute.xlu0 %2867
  %2869 = vrot.lane.b32.xlu0 %v2728, 4
  %v2870 = vpop.permute.xlu0 %2869
  %2871 = vrot.lane.b32.xlu0 %v2729, 4
  %v2872 = vpop.permute.xlu0 %2871
  %2873 = vrot.lane.b32.xlu0 %v2730, 4
  %v2874 = vpop.permute.xlu0 %2873
  %2875 = vrot.lane.b32.xlu0 %v2731, 4
  %v2876 = vpop.permute.xlu0 %2875
  %2877 = vrot.lane.b32.xlu0 %v2732, 4
  %v2878 = vpop.permute.xlu0 %2877
  %2879 = vrot.lane.b32.xlu0 %v2733, 4
  %v2880 = vpop.permute.xlu0 %2879
  %2881 = vrot.lane.b32.xlu0 %v2734, 4
  %v2882 = vpop.permute.xlu0 %2881
  %2883 = vrot.lane.b32.xlu0 %v2735, 4
  %v2884 = vpop.permute.xlu0 %2883
  %2885 = vrot.lane.b32.xlu0 %v2736, 4
  %v2886 = vpop.permute.xlu0 %2885
  %2887 = vrot.lane.b32.xlu0 %v2737, 4
  %v2888 = vpop.permute.xlu0 %2887
  %2889 = vrot.lane.b32.xlu0 %v2738, 4
  %v2890 = vpop.permute.xlu0 %2889
  %2891 = vrot.lane.b32.xlu0 %v2739, 4
  %v2892 = vpop.permute.xlu0 %2891
  %2893 = vrot.lane.b32.xlu0 %v2740, 4
  %v2894 = vpop.permute.xlu0 %2893
  %2895 = vrot.lane.b32.xlu0 %v2741, 4
  %v2896 = vpop.permute.xlu0 %2895
  %2897 = vrot.lane.b32.xlu0 %v2742, 4
  %v2898 = vpop.permute.xlu0 %2897
  %2899 = vrot.lane.b32.xlu0 %v2743, 4
  %v2900 = vpop.permute.xlu0 %2899
  %2901 = vrot.lane.b32.xlu0 %v2744, 4
  %v2902 = vpop.permute.xlu0 %2901
  %2903 = vrot.lane.b32.xlu0 %v2745, 4
  %v2904 = vpop.permute.xlu0 %2903
  %2905 = vrot.lane.b32.xlu0 %v2746, 4
  %v2906 = vpop.permute.xlu0 %2905
  %2907 = vrot.lane.b32.xlu0 %v2747, 4
  %v2908 = vpop.permute.xlu0 %2907
  %2909 = vrot.lane.b32.xlu0 %v2748, 4
  %v2910 = vpop.permute.xlu0 %2909
  %2911 = vrot.lane.b32.xlu0 %v2749, 4
  %v2912 = vpop.permute.xlu0 %2911
  %2913 = vrot.lane.b32.xlu0 %v2750, 4
  %v2914 = vpop.permute.xlu0 %2913
  %2915 = vrot.lane.b32.xlu0 %v2751, 4
  %v2916 = vpop.permute.xlu0 %2915
  %2917 = vrot.lane.b32.xlu0 %v2752, 4
  %v2918 = vpop.permute.xlu0 %2917
  %2919 = vrot.lane.b32.xlu0 %v2753, 4
  %v2920 = vpop.permute.xlu0 %2919
  %2921 = vrot.lane.b32.xlu0 %v2754, 4
  %v2922 = vpop.permute.xlu0 %2921
  %2923 = vrot.lane.b32.xlu0 %v2755, 4
  %v2924 = vpop.permute.xlu0 %2923
  %2925 = vrot.lane.b32.xlu0 %v2756, 4
  %v2926 = vpop.permute.xlu0 %2925
  %2927 = vrot.lane.b32.xlu0 %v2757, 4
  %v2928 = vpop.permute.xlu0 %2927
  %2929 = vrot.lane.b32.xlu0 %v2758, 4
  %v2930 = vpop.permute.xlu0 %2929
  %2931 = vrot.lane.b32.xlu0 %v2759, 4
  %v2932 = vpop.permute.xlu0 %2931
  %2933 = vrot.lane.b32.xlu0 %v2760, 4
  %v2934 = vpop.permute.xlu0 %2933
  %2935 = vrot.lane.b32.xlu0 %v2761, 4
  %v2936 = vpop.permute.xlu0 %2935
  %2937 = vrot.lane.b32.xlu0 %v2762, 4
  %v2938 = vpop.permute.xlu0 %2937
  %2939 = vrot.lane.b32.xlu0 %v2763, 4
  %v2940 = vpop.permute.xlu0 %2939
  %2941 = vrot.lane.b32.xlu0 %v2764, 4
  %v2942 = vpop.permute.xlu0 %2941
  %2943 = vrot.lane.b32.xlu0 %v2765, 4
  %v2944 = vpop.permute.xlu0 %2943
  %2945 = vrot.lane.b32.xlu0 %v2766, 4
  %v2946 = vpop.permute.xlu0 %2945
  %2947 = vrot.lane.b32.xlu0 %v2767, 4
  %v2948 = vpop.permute.xlu0 %2947
  %2949 = vrot.lane.b32.xlu0 %v2768, 4
  %v2950 = vpop.permute.xlu0 %2949
  %2951 = vrot.lane.b32.xlu0 %v2769, 4
  %v2952 = vpop.permute.xlu0 %2951
  %2953 = vrot.lane.b32.xlu0 %v2770, 4
  %v2954 = vpop.permute.xlu0 %2953
  %2955 = vrot.lane.b32.xlu0 %v2771, 4
  %v2956 = vpop.permute.xlu0 %2955
  %2957 = vrot.lane.b32.xlu0 %v2772, 4
  %v2958 = vpop.permute.xlu0 %2957
  %2959 = vrot.lane.b32.xlu0 %v2773, 4
  %v2960 = vpop.permute.xlu0 %2959
  %2961 = vrot.lane.b32.xlu0 %v2774, 4
  %v2962 = vpop.permute.xlu0 %2961
  %2963 = vrot.lane.b32.xlu0 %v2775, 4
  %v2964 = vpop.permute.xlu0 %2963
  %2965 = vrot.lane.b32.xlu0 %v2776, 4
  %v2966 = vpop.permute.xlu0 %2965
  %2967 = vrot.lane.b32.xlu0 %v2777, 4
  %v2968 = vpop.permute.xlu0 %2967
  %2969 = vrot.lane.b32.xlu0 %v2778, 4
  %v2970 = vpop.permute.xlu0 %2969
  %v3035 = vsel %vm163, %v98, %v2844
  %v3036 = vsel %vm163, %v99, %v2846
  %v3037 = vsel %vm163, %v100, %v2848
  %v3038 = vsel %vm163, %v101, %v2850
  %v3039 = vsel %vm163, %v102, %v2852
  %v3040 = vsel %vm163, %v103, %v2854
  %v3041 = vsel %vm163, %v104, %v2856
  %v3042 = vsel %vm163, %v105, %v2858
  %v3043 = vsel %vm163, %v106, %v2860
  %v3044 = vsel %vm163, %v107, %v2862
  %v3045 = vsel %vm163, %v108, %v2864
  %v3046 = vsel %vm163, %v109, %v2866
  %v3047 = vsel %vm163, %v110, %v2868
  %v3048 = vsel %vm163, %v111, %v2870
  %v3049 = vsel %vm163, %v112, %v2872
  %v3050 = vsel %vm163, %v113, %v2874
  %v3051 = vsel %vm163, %v114, %v2876
  %v3052 = vsel %vm163, %v115, %v2878
  %v3053 = vsel %vm163, %v116, %v2880
  %v3054 = vsel %vm163, %v117, %v2882
  %v3055 = vsel %vm163, %v118, %v2884
  %v3056 = vsel %vm163, %v119, %v2886
  %v3057 = vsel %vm163, %v120, %v2888
  %v3058 = vsel %vm163, %v121, %v2890
  %v3059 = vsel %vm163, %v122, %v2892
  %v3060 = vsel %vm163, %v123, %v2894
  %v3061 = vsel %vm163, %v124, %v2896
  %v3062 = vsel %vm163, %v125, %v2898
  %v3063 = vsel %vm163, %v126, %v2900
  %v3064 = vsel %vm163, %v127, %v2902
  %v3065 = vsel %vm163, %v128, %v2904
  %v3066 = vsel %vm163, %v129, %v2906
  %v3067 = vsel %vm163, %v130, %v2908
  %v3068 = vsel %vm163, %v131, %v2910
  %v3069 = vsel %vm163, %v132, %v2912
  %v3070 = vsel %vm163, %v133, %v2914
  %v3071 = vsel %vm163, %v134, %v2916
  %v3072 = vsel %vm163, %v135, %v2918
  %v3073 = vsel %vm163, %v136, %v2920
  %v3074 = vsel %vm163, %v137, %v2922
  %v3075 = vsel %vm163, %v138, %v2924
  %v3076 = vsel %vm163, %v139, %v2926
  %v3077 = vsel %vm163, %v140, %v2928
  %v3078 = vsel %vm163, %v141, %v2930
  %v3079 = vsel %vm163, %v142, %v2932
  %v3080 = vsel %vm163, %v143, %v2934
  %v3081 = vsel %vm163, %v144, %v2936
  %v3082 = vsel %vm163, %v145, %v2938
  %v3083 = vsel %vm163, %v146, %v2940
  %v3084 = vsel %vm163, %v147, %v2942
  %v3085 = vsel %vm163, %v148, %v2944
  %v3086 = vsel %vm163, %v149, %v2946
  %v3087 = vsel %vm163, %v150, %v2948
  %v3088 = vsel %vm163, %v151, %v2950
  %v3089 = vsel %vm163, %v152, %v2952
  %v3090 = vsel %vm163, %v153, %v2954
  %v3091 = vsel %vm163, %v154, %v2956
  %v3092 = vsel %vm163, %v155, %v2958
  %v3093 = vsel %vm163, %v156, %v2960
  %v3094 = vsel %vm163, %v157, %v2962
  %v3095 = vsel %vm163, %v158, %v2964
  %v3096 = vsel %vm163, %v159, %v2966
  %v3097 = vsel %vm163, %v160, %v2968
  %v3098 = vsel %vm163, %v161, %v2970
  %vm3099 = vcmask 64512
  %3100 = vst.msk [vmem:[%s9] sm:$0xff] %vm3099, %v3035
  %3101 = vst.msk [vmem:[%s9 + $0x8] sm:$0xff] %vm3099, %v3036
  %3102 = vst.msk [vmem:[%s9 + $0x10] sm:$0xff] %vm3099, %v3037
  %3103 = vst.msk [vmem:[%s9 + $0x18] sm:$0xff] %vm3099, %v3038
  %3104 = vst.msk [vmem:[%s9 + $0x20] sm:$0xff] %vm3099, %v3039
  %3105 = vst.msk [vmem:[%s9 + $0x28] sm:$0xff] %vm3099, %v3040
  %3106 = vst.msk [vmem:[%s9 + $0x30] sm:$0xff] %vm3099, %v3041
  %3107 = vst.msk [vmem:[%s9 + $0x38] sm:$0xff] %vm3099, %v3042
  %3108 = vst.msk [vmem:[%s9 + $0x40] sm:$0xff] %vm3099, %v3043
  %3109 = vst.msk [vmem:[%s9 + $0x48] sm:$0xff] %vm3099, %v3044
  %3110 = vst.msk [vmem:[%s9 + $0x50] sm:$0xff] %vm3099, %v3045
  %3111 = vst.msk [vmem:[%s9 + $0x58] sm:$0xff] %vm3099, %v3046
  %3112 = vst.msk [vmem:[%s9 + $0x60] sm:$0xff] %vm3099, %v3047
  %3113 = vst.msk [vmem:[%s9 + $0x68] sm:$0xff] %vm3099, %v3048
  %3114 = vst.msk [vmem:[%s9 + $0x70] sm:$0xff] %vm3099, %v3049
  %3115 = vst.msk [vmem:[%s9 + $0x78] sm:$0xff] %vm3099, %v3050
  %3116 = vst.msk [vmem:[%s9 + $0x80] sm:$0xff] %vm3099, %v3051
  %3117 = vst.msk [vmem:[%s9 + $0x88] sm:$0xff] %vm3099, %v3052
  %3118 = vst.msk [vmem:[%s9 + $0x90] sm:$0xff] %vm3099, %v3053
  %3119 = vst.msk [vmem:[%s9 + $0x98] sm:$0xff] %vm3099, %v3054
  %3120 = vst.msk [vmem:[%s9 + $0xa0] sm:$0xff] %vm3099, %v3055
  %3121 = vst.msk [vmem:[%s9 + $0xa8] sm:$0xff] %vm3099, %v3056
  %3122 = vst.msk [vmem:[%s9 + $0xb0] sm:$0xff] %vm3099, %v3057
  %3123 = vst.msk [vmem:[%s9 + $0xb8] sm:$0xff] %vm3099, %v3058
  %3124 = vst.msk [vmem:[%s9 + $0xc0] sm:$0xff] %vm3099, %v3059
  %3125 = vst.msk [vmem:[%s9 + $0xc8] sm:$0xff] %vm3099, %v3060
  %3126 = vst.msk [vmem:[%s9 + $0xd0] sm:$0xff] %vm3099, %v3061
  %3127 = vst.msk [vmem:[%s9 + $0xd8] sm:$0xff] %vm3099, %v3062
  %3128 = vst.msk [vmem:[%s9 + $0xe0] sm:$0xff] %vm3099, %v3063
  %3129 = vst.msk [vmem:[%s9 + $0xe8] sm:$0xff] %vm3099, %v3064
  %3130 = vst.msk [vmem:[%s9 + $0xf0] sm:$0xff] %vm3099, %v3065
  %3131 = vst.msk [vmem:[%s9 + $0xf8] sm:$0xff] %vm3099, %v3066
  %3132 = vst.msk [vmem:[%s9 + $0x100] sm:$0xff] %vm3099, %v3067
  %3133 = vst.msk [vmem:[%s9 + $0x108] sm:$0xff] %vm3099, %v3068
  %3134 = vst.msk [vmem:[%s9 + $0x110] sm:$0xff] %vm3099, %v3069
  %3135 = vst.msk [vmem:[%s9 + $0x118] sm:$0xff] %vm3099, %v3070
  %3136 = vst.msk [vmem:[%s9 + $0x120] sm:$0xff] %vm3099, %v3071
  %3137 = vst.msk [vmem:[%s9 + $0x128] sm:$0xff] %vm3099, %v3072
  %3138 = vst.msk [vmem:[%s9 + $0x130] sm:$0xff] %vm3099, %v3073
  %3139 = vst.msk [vmem:[%s9 + $0x138] sm:$0xff] %vm3099, %v3074
  %3140 = vst.msk [vmem:[%s9 + $0x140] sm:$0xff] %vm3099, %v3075
  %3141 = vst.msk [vmem:[%s9 + $0x148] sm:$0xff] %vm3099, %v3076
  %3142 = vst.msk [vmem:[%s9 + $0x150] sm:$0xff] %vm3099, %v3077
  %3143 = vst.msk [vmem:[%s9 + $0x158] sm:$0xff] %vm3099, %v3078
  %3144 = vst.msk [vmem:[%s9 + $0x160] sm:$0xff] %vm3099, %v3079
  %3145 = vst.msk [vmem:[%s9 + $0x168] sm:$0xff] %vm3099, %v3080
  %3146 = vst.msk [vmem:[%s9 + $0x170] sm:$0xff] %vm3099, %v3081
  %3147 = vst.msk [vmem:[%s9 + $0x178] sm:$0xff] %vm3099, %v3082
  %3148 = vst.msk [vmem:[%s9 + $0x180] sm:$0xff] %vm3099, %v3083
  %3149 = vst.msk [vmem:[%s9 + $0x188] sm:$0xff] %vm3099, %v3084
  %3150 = vst.msk [vmem:[%s9 + $0x190] sm:$0xff] %vm3099, %v3085
  %3151 = vst.msk [vmem:[%s9 + $0x198] sm:$0xff] %vm3099, %v3086
  %3152 = vst.msk [vmem:[%s9 + $0x1a0] sm:$0xff] %vm3099, %v3087
  %3153 = vst.msk [vmem:[%s9 + $0x1a8] sm:$0xff] %vm3099, %v3088
  %3154 = vst.msk [vmem:[%s9 + $0x1b0] sm:$0xff] %vm3099, %v3089
  %3155 = vst.msk [vmem:[%s9 + $0x1b8] sm:$0xff] %vm3099, %v3090
  %3156 = vst.msk [vmem:[%s9 + $0x1c0] sm:$0xff] %vm3099, %v3091
  %3157 = vst.msk [vmem:[%s9 + $0x1c8] sm:$0xff] %vm3099, %v3092
  %3158 = vst.msk [vmem:[%s9 + $0x1d0] sm:$0xff] %vm3099, %v3093
  %3159 = vst.msk [vmem:[%s9 + $0x1d8] sm:$0xff] %vm3099, %v3094
  %3160 = vst.msk [vmem:[%s9 + $0x1e0] sm:$0xff] %vm3099, %v3095
  %3161 = vst.msk [vmem:[%s9 + $0x1e8] sm:$0xff] %vm3099, %v3096
  %3162 = vst.msk [vmem:[%s9 + $0x1f0] sm:$0xff] %vm3099, %v3097
  %3163 = vst.msk [vmem:[%s9 + $0x1f8] sm:$0xff] %vm3099, %v3098
  // Predicated region
  $region38: #{decoder_forward.6} parent=0 // pred_check
    _
  $region39: #{decoder_forward.6} parent=0 // pred_check_branch
    %3165 = sbr.rel (0) target = $region41
  $region40: #{decoder_forward.6} parent=0 // pred_region
    _
  $region41: #{decoder_forward.6} parent=0 // pred_fallthru
    _
  // Predicated region
  $region42: #{decoder_forward.6} parent=0 // pred_check
    _
  $region43: #{decoder_forward.6} parent=0 // pred_check_branch
    %3167 = sbr.rel (0) target = $region45
  $region44: #{decoder_forward.6} parent=0 // pred_region
    _
  $region45: #{decoder_forward.6} parent=0 // pred_fallthru
    _

// kernel: decoder_forward.9
$region0: #{decoder_forward.9}
  #allocation0 [shape = 'u32[]', space=smem, size = 0x4, offset = 0x4, fixed_abs, tag = 'smem constant byte address 0x4 - core index']
  #allocation1 [shape = 'u32[144,128]{1,0:T(1,128)}', space=vmem, size = 0x12000, scoped, tag = 'internal scratch']
  %s0 = inlined_call_operand.vmem [shape: f32[512,4], index: 0, kind: input, shape index: {}]
  %s1 = inlined_call_operand.vmem [shape: f32[1,4], index: 1, kind: input, shape index: {}]
  %s2 = inlined_call_operand.vmem [shape: f32[1,4], index: 2, kind: input, shape index: {}]
  %s3 = inlined_call_operand.vmem [shape: f32[512,4], index: 3, kind: output, shape index: {}]
  %s4 = sld [smem:[#allocation0]]
  $region22: #{decoder_forward.9} parent=0
    _
  %s6 = ssub.s32 1, %s4
  %s7 = scalar_select 0, %s6, %s4
  // Predicated region
  $region2: #{decoder_forward.9} parent=0 // pred_check
    _
  $region3: #{decoder_forward.9} parent=0 // pred_check_branch
    %9 = sbr.rel (0) target = $region5
  $region4: #{decoder_forward.9} parent=0 // pred_region
    _
  $region5: #{decoder_forward.9} parent=0 // pred_fallthru
    _
  // Predicated region
  $region6: #{decoder_forward.9} parent=0 // pred_check
    _
  $region7: #{decoder_forward.9} parent=0 // pred_check_branch
    %11 = sbr.rel (0) target = $region9
  $region8: #{decoder_forward.9} parent=0 // pred_region
    _
  $region9: #{decoder_forward.9} parent=0 // pred_fallthru
    _
  // Predicated region
  $region10: #{decoder_forward.9} parent=0 // pred_check
    _
  $region11: #{decoder_forward.9} parent=0 // pred_check_branch
    %13 = sbr.rel (0) target = $region13
  $region12: #{decoder_forward.9} parent=0 // pred_region
    _
  $region13: #{decoder_forward.9} parent=0 // pred_fallthru
    _
  %v14 = vld [vmem:[%s0] sm:$0xff]
  %v15 = vld [vmem:[%s0 + $0x8] sm:$0xff]
  %v16 = vld [vmem:[%s0 + $0x10] sm:$0xff]
  %v17 = vld [vmem:[%s0 + $0x18] sm:$0xff]
  %v18 = vld [vmem:[%s0 + $0x20] sm:$0xff]
  %v19 = vld [vmem:[%s0 + $0x28] sm:$0xff]
  %v20 = vld [vmem:[%s0 + $0x30] sm:$0xff]
  %v21 = vld [vmem:[%s0 + $0x38] sm:$0xff]
  %v22 = vld [vmem:[%s0 + $0x40] sm:$0xff]
  %v23 = vld [vmem:[%s0 + $0x48] sm:$0xff]
  %v24 = vld [vmem:[%s0 + $0x50] sm:$0xff]
  %v25 = vld [vmem:[%s0 + $0x58] sm:$0xff]
  %v26 = vld [vmem:[%s0 + $0x60] sm:$0xff]
  %v27 = vld [vmem:[%s0 + $0x68] sm:$0xff]
  %v28 = vld [vmem:[%s0 + $0x70] sm:$0xff]
  %v29 = vld [vmem:[%s0 + $0x78] sm:$0xff]
  %v30 = vld [vmem:[%s0 + $0x80] sm:$0xff]
  %v31 = vld [vmem:[%s0 + $0x88] sm:$0xff]
  %v32 = vld [vmem:[%s0 + $0x90] sm:$0xff]
  %v33 = vld [vmem:[%s0 + $0x98] sm:$0xff]
  %v34 = vld [vmem:[%s0 + $0xa0] sm:$0xff]
  %v35 = vld [vmem:[%s0 + $0xa8] sm:$0xff]
  %v36 = vld [vmem:[%s0 + $0xb0] sm:$0xff]
  %v37 = vld [vmem:[%s0 + $0xb8] sm:$0xff]
  %v38 = vld [vmem:[%s0 + $0xc0] sm:$0xff]
  %v39 = vld [vmem:[%s0 + $0xc8] sm:$0xff]
  %v40 = vld [vmem:[%s0 + $0xd0] sm:$0xff]
  %v41 = vld [vmem:[%s0 + $0xd8] sm:$0xff]
  %v42 = vld [vmem:[%s0 + $0xe0] sm:$0xff]
  %v43 = vld [vmem:[%s0 + $0xe8] sm:$0xff]
  %v44 = vld [vmem:[%s0 + $0xf0] sm:$0xff]
  %v45 = vld [vmem:[%s0 + $0xf8] sm:$0xff]
  %v46 = vld [vmem:[%s0 + $0x100] sm:$0xff]
  %v47 = vld [vmem:[%s0 + $0x108] sm:$0xff]
  %v48 = vld [vmem:[%s0 + $0x110] sm:$0xff]
  %v49 = vld [vmem:[%s0 + $0x118] sm:$0xff]
  %v50 = vld [vmem:[%s0 + $0x120] sm:$0xff]
  %v51 = vld [vmem:[%s0 + $0x128] sm:$0xff]
  %v52 = vld [vmem:[%s0 + $0x130] sm:$0xff]
  %v53 = vld [vmem:[%s0 + $0x138] sm:$0xff]
  %v54 = vld [vmem:[%s0 + $0x140] sm:$0xff]
  %v55 = vld [vmem:[%s0 + $0x148] sm:$0xff]
  %v56 = vld [vmem:[%s0 + $0x150] sm:$0xff]
  %v57 = vld [vmem:[%s0 + $0x158] sm:$0xff]
  %v58 = vld [vmem:[%s0 + $0x160] sm:$0xff]
  %v59 = vld [vmem:[%s0 + $0x168] sm:$0xff]
  %v60 = vld [vmem:[%s0 + $0x170] sm:$0xff]
  %v61 = vld [vmem:[%s0 + $0x178] sm:$0xff]
  %v62 = vld [vmem:[%s0 + $0x180] sm:$0xff]
  %v63 = vld [vmem:[%s0 + $0x188] sm:$0xff]
  %v64 = vld [vmem:[%s0 + $0x190] sm:$0xff]
  %v65 = vld [vmem:[%s0 + $0x198] sm:$0xff]
  %v66 = vld [vmem:[%s0 + $0x1a0] sm:$0xff]
  %v67 = vld [vmem:[%s0 + $0x1a8] sm:$0xff]
  %v68 = vld [vmem:[%s0 + $0x1b0] sm:$0xff]
  %v69 = vld [vmem:[%s0 + $0x1b8] sm:$0xff]
  %v70 = vld [vmem:[%s0 + $0x1c0] sm:$0xff]
  %v71 = vld [vmem:[%s0 + $0x1c8] sm:$0xff]
  %v72 = vld [vmem:[%s0 + $0x1d0] sm:$0xff]
  %v73 = vld [vmem:[%s0 + $0x1d8] sm:$0xff]
  %v74 = vld [vmem:[%s0 + $0x1e0] sm:$0xff]
  %v75 = vld [vmem:[%s0 + $0x1e8] sm:$0xff]
  %v76 = vld [vmem:[%s0 + $0x1f0] sm:$0xff]
  %v77 = vld [vmem:[%s0 + $0x1f8] sm:$0xff]
  %v78 = vld [vmem:[%s1] sm:$0x1]
  %v80 = vlaneseq
  %v81 = vshrl.u32 %v80, 7
  %v82 = vsub.s32 0, %v81
  %v83 = vrot.slane %v78, %v82
  %v85 = vmul.f32 %v14, %v83
  %v86 = vmul.f32 %v15, %v83
  %v87 = vmul.f32 %v16, %v83
  %v88 = vmul.f32 %v17, %v83
  %v89 = vmul.f32 %v18, %v83
  %v90 = vmul.f32 %v19, %v83
  %v91 = vmul.f32 %v20, %v83
  %v92 = vmul.f32 %v21, %v83
  %v93 = vmul.f32 %v22, %v83
  %v94 = vmul.f32 %v23, %v83
  %v95 = vmul.f32 %v24, %v83
  %v96 = vmul.f32 %v25, %v83
  %v97 = vmul.f32 %v26, %v83
  %v98 = vmul.f32 %v27, %v83
  %v99 = vmul.f32 %v28, %v83
  %v100 = vmul.f32 %v29, %v83
  %v101 = vmul.f32 %v30, %v83
  %v102 = vmul.f32 %v31, %v83
  %v103 = vmul.f32 %v32, %v83
  %v104 = vmul.f32 %v33, %v83
  %v105 = vmul.f32 %v34, %v83
  %v106 = vmul.f32 %v35, %v83
  %v107 = vmul.f32 %v36, %v83
  %v108 = vmul.f32 %v37, %v83
  %v109 = vmul.f32 %v38, %v83
  %v110 = vmul.f32 %v39, %v83
  %v111 = vmul.f32 %v40, %v83
  %v112 = vmul.f32 %v41, %v83
  %v113 = vmul.f32 %v42, %v83
  %v114 = vmul.f32 %v43, %v83
  %v115 = vmul.f32 %v44, %v83
  %v116 = vmul.f32 %v45, %v83
  %v117 = vmul.f32 %v46, %v83
  %v118 = vmul.f32 %v47, %v83
  %v119 = vmul.f32 %v48, %v83
  %v120 = vmul.f32 %v49, %v83
  %v121 = vmul.f32 %v50, %v83
  %v122 = vmul.f32 %v51, %v83
  %v123 = vmul.f32 %v52, %v83
  %v124 = vmul.f32 %v53, %v83
  %v125 = vmul.f32 %v54, %v83
  %v126 = vmul.f32 %v55, %v83
  %v127 = vmul.f32 %v56, %v83
  %v128 = vmul.f32 %v57, %v83
  %v129 = vmul.f32 %v58, %v83
  %v130 = vmul.f32 %v59, %v83
  %v131 = vmul.f32 %v60, %v83
  %v132 = vmul.f32 %v61, %v83
  %v133 = vmul.f32 %v62, %v83
  %v134 = vmul.f32 %v63, %v83
  %v135 = vmul.f32 %v64, %v83
  %v136 = vmul.f32 %v65, %v83
  %v137 = vmul.f32 %v66, %v83
  %v138 = vmul.f32 %v67, %v83
  %v139 = vmul.f32 %v68, %v83
  %v140 = vmul.f32 %v69, %v83
  %v141 = vmul.f32 %v70, %v83
  %v142 = vmul.f32 %v71, %v83
  %v143 = vmul.f32 %v72, %v83
  %v144 = vmul.f32 %v73, %v83
  %v145 = vmul.f32 %v74, %v83
  %v146 = vmul.f32 %v75, %v83
  %v147 = vmul.f32 %v76, %v83
  %v148 = vmul.f32 %v77, %v83
  %v149 = vld [vmem:[%s2] sm:$0x1]
  %v151 = vlaneseq
  %v152 = vshrl.u32 %v151, 7
  %v153 = vsub.s32 0, %v152
  %v154 = vrot.slane %v149, %v153
  %v156 = vadd.f32 %v85, %v154
  %v157 = vadd.f32 %v86, %v154
  %v158 = vadd.f32 %v87, %v154
  %v159 = vadd.f32 %v88, %v154
  %v160 = vadd.f32 %v89, %v154
  %v161 = vadd.f32 %v90, %v154
  %v162 = vadd.f32 %v91, %v154
  %v163 = vadd.f32 %v92, %v154
  %v164 = vadd.f32 %v93, %v154
  %v165 = vadd.f32 %v94, %v154
  %v166 = vadd.f32 %v95, %v154
  %v167 = vadd.f32 %v96, %v154
  %v168 = vadd.f32 %v97, %v154
  %v169 = vadd.f32 %v98, %v154
  %v170 = vadd.f32 %v99, %v154
  %v171 = vadd.f32 %v100, %v154
  %v172 = vadd.f32 %v101, %v154
  %v173 = vadd.f32 %v102, %v154
  %v174 = vadd.f32 %v103, %v154
  %v175 = vadd.f32 %v104, %v154
  %v176 = vadd.f32 %v105, %v154
  %v177 = vadd.f32 %v106, %v154
  %v178 = vadd.f32 %v107, %v154
  %v179 = vadd.f32 %v108, %v154
  %v180 = vadd.f32 %v109, %v154
  %v181 = vadd.f32 %v110, %v154
  %v182 = vadd.f32 %v111, %v154
  %v183 = vadd.f32 %v112, %v154
  %v184 = vadd.f32 %v113, %v154
  %v185 = vadd.f32 %v114, %v154
  %v186 = vadd.f32 %v115, %v154
  %v187 = vadd.f32 %v116, %v154
  %v188 = vadd.f32 %v117, %v154
  %v189 = vadd.f32 %v118, %v154
  %v190 = vadd.f32 %v119, %v154
  %v191 = vadd.f32 %v120, %v154
  %v192 = vadd.f32 %v121, %v154
  %v193 = vadd.f32 %v122, %v154
  %v194 = vadd.f32 %v123, %v154
  %v195 = vadd.f32 %v124, %v154
  %v196 = vadd.f32 %v125, %v154
  %v197 = vadd.f32 %v126, %v154
  %v198 = vadd.f32 %v127, %v154
  %v199 = vadd.f32 %v128, %v154
  %v200 = vadd.f32 %v129, %v154
  %v201 = vadd.f32 %v130, %v154
  %v202 = vadd.f32 %v131, %v154
  %v203 = vadd.f32 %v132, %v154
  %v204 = vadd.f32 %v133, %v154
  %v205 = vadd.f32 %v134, %v154
  %v206 = vadd.f32 %v135, %v154
  %v207 = vadd.f32 %v136, %v154
  %v208 = vadd.f32 %v137, %v154
  %v209 = vadd.f32 %v138, %v154
  %v210 = vadd.f32 %v139, %v154
  %v211 = vadd.f32 %v140, %v154
  %v212 = vadd.f32 %v141, %v154
  %v213 = vadd.f32 %v142, %v154
  %v214 = vadd.f32 %v143, %v154
  %v215 = vadd.f32 %v144, %v154
  %v216 = vadd.f32 %v145, %v154
  %v217 = vadd.f32 %v146, %v154
  %v218 = vadd.f32 %v147, %v154
  %v219 = vadd.f32 %v148, %v154
  %v220 = vmax.f32 %v156, 0.0
  %v221 = vmax.f32 %v157, 0.0
  %v222 = vmax.f32 %v158, 0.0
  %v223 = vmax.f32 %v159, 0.0
  %v224 = vmax.f32 %v160, 0.0
  %v225 = vmax.f32 %v161, 0.0
  %v226 = vmax.f32 %v162, 0.0
  %v227 = vmax.f32 %v163, 0.0
  %v228 = vmax.f32 %v164, 0.0
  %v229 = vmax.f32 %v165, 0.0
  %v230 = vmax.f32 %v166, 0.0
  %v231 = vmax.f32 %v167, 0.0
  %v232 = vmax.f32 %v168, 0.0
  %v233 = vmax.f32 %v169, 0.0
  %v234 = vmax.f32 %v170, 0.0
  %v235 = vmax.f32 %v171, 0.0
  %v236 = vmax.f32 %v172, 0.0
  %v237 = vmax.f32 %v173, 0.0
  %v238 = vmax.f32 %v174, 0.0
  %v239 = vmax.f32 %v175, 0.0
  %v240 = vmax.f32 %v176, 0.0
  %v241 = vmax.f32 %v177, 0.0
  %v242 = vmax.f32 %v178, 0.0
  %v243 = vmax.f32 %v179, 0.0
  %v244 = vmax.f32 %v180, 0.0
  %v245 = vmax.f32 %v181, 0.0
  %v246 = vmax.f32 %v182, 0.0
  %v247 = vmax.f32 %v183, 0.0
  %v248 = vmax.f32 %v184, 0.0
  %v249 = vmax.f32 %v185, 0.0
  %v250 = vmax.f32 %v186, 0.0
  %v251 = vmax.f32 %v187, 0.0
  %v252 = vmax.f32 %v188, 0.0
  %v253 = vmax.f32 %v189, 0.0
  %v254 = vmax.f32 %v190, 0.0
  %v255 = vmax.f32 %v191, 0.0
  %v256 = vmax.f32 %v192, 0.0
  %v257 = vmax.f32 %v193, 0.0
  %v258 = vmax.f32 %v194, 0.0
  %v259 = vmax.f32 %v195, 0.0
  %v260 = vmax.f32 %v196, 0.0
  %v261 = vmax.f32 %v197, 0.0
  %v262 = vmax.f32 %v198, 0.0
  %v263 = vmax.f32 %v199, 0.0
  %v264 = vmax.f32 %v200, 0.0
  %v265 = vmax.f32 %v201, 0.0
  %v266 = vmax.f32 %v202, 0.0
  %v267 = vmax.f32 %v203, 0.0
  %v268 = vmax.f32 %v204, 0.0
  %v269 = vmax.f32 %v205, 0.0
  %v270 = vmax.f32 %v206, 0.0
  %v271 = vmax.f32 %v207, 0.0
  %v272 = vmax.f32 %v208, 0.0
  %v273 = vmax.f32 %v209, 0.0
  %v274 = vmax.f32 %v210, 0.0
  %v275 = vmax.f32 %v211, 0.0
  %v276 = vmax.f32 %v212, 0.0
  %v277 = vmax.f32 %v213, 0.0
  %v278 = vmax.f32 %v214, 0.0
  %v279 = vmax.f32 %v215, 0.0
  %v280 = vmax.f32 %v216, 0.0
  %v281 = vmax.f32 %v217, 0.0
  %v282 = vmax.f32 %v218, 0.0
  %v283 = vmax.f32 %v219, 0.0
  %vm284 = vcmask 31744
  %285 = vst.msk [vmem:[%s3] sm:$0xff] %vm284, %v220
  %286 = vst.msk [vmem:[%s3 + $0x8] sm:$0xff] %vm284, %v221
  %287 = vst.msk [vmem:[%s3 + $0x10] sm:$0xff] %vm284, %v222
  %288 = vst.msk [vmem:[%s3 + $0x18] sm:$0xff] %vm284, %v223
  %289 = vst.msk [vmem:[%s3 + $0x20] sm:$0xff] %vm284, %v224
  %290 = vst.msk [vmem:[%s3 + $0x28] sm:$0xff] %vm284, %v225
  %291 = vst.msk [vmem:[%s3 + $0x30] sm:$0xff] %vm284, %v226
  %292 = vst.msk [vmem:[%s3 + $0x38] sm:$0xff] %vm284, %v227
  %293 = vst.msk [vmem:[%s3 + $0x40] sm:$0xff] %vm284, %v228
  %294 = vst.msk [vmem:[%s3 + $0x48] sm:$0xff] %vm284, %v229
  %295 = vst.msk [vmem:[%s3 + $0x50] sm:$0xff] %vm284, %v230
  %296 = vst.msk [vmem:[%s3 + $0x58] sm:$0xff] %vm284, %v231
  %297 = vst.msk [vmem:[%s3 + $0x60] sm:$0xff] %vm284, %v232
  %298 = vst.msk [vmem:[%s3 + $0x68] sm:$0xff] %vm284, %v233
  %299 = vst.msk [vmem:[%s3 + $0x70] sm:$0xff] %vm284, %v234
  %300 = vst.msk [vmem:[%s3 + $0x78] sm:$0xff] %vm284, %v235
  %301 = vst.msk [vmem:[%s3 + $0x80] sm:$0xff] %vm284, %v236
  %302 = vst.msk [vmem:[%s3 + $0x88] sm:$0xff] %vm284, %v237
  %303 = vst.msk [vmem:[%s3 + $0x90] sm:$0xff] %vm284, %v238
  %304 = vst.msk [vmem:[%s3 + $0x98] sm:$0xff] %vm284, %v239
  %305 = vst.msk [vmem:[%s3 + $0xa0] sm:$0xff] %vm284, %v240
  %306 = vst.msk [vmem:[%s3 + $0xa8] sm:$0xff] %vm284, %v241
  %307 = vst.msk [vmem:[%s3 + $0xb0] sm:$0xff] %vm284, %v242
  %308 = vst.msk [vmem:[%s3 + $0xb8] sm:$0xff] %vm284, %v243
  %309 = vst.msk [vmem:[%s3 + $0xc0] sm:$0xff] %vm284, %v244
  %310 = vst.msk [vmem:[%s3 + $0xc8] sm:$0xff] %vm284, %v245
  %311 = vst.msk [vmem:[%s3 + $0xd0] sm:$0xff] %vm284, %v246
  %312 = vst.msk [vmem:[%s3 + $0xd8] sm:$0xff] %vm284, %v247
  %313 = vst.msk [vmem:[%s3 + $0xe0] sm:$0xff] %vm284, %v248
  %314 = vst.msk [vmem:[%s3 + $0xe8] sm:$0xff] %vm284, %v249
  %315 = vst.msk [vmem:[%s3 + $0xf0] sm:$0xff] %vm284, %v250
  %316 = vst.msk [vmem:[%s3 + $0xf8] sm:$0xff] %vm284, %v251
  %317 = vst.msk [vmem:[%s3 + $0x100] sm:$0xff] %vm284, %v252
  %318 = vst.msk [vmem:[%s3 + $0x108] sm:$0xff] %vm284, %v253
  %319 = vst.msk [vmem:[%s3 + $0x110] sm:$0xff] %vm284, %v254
  %320 = vst.msk [vmem:[%s3 + $0x118] sm:$0xff] %vm284, %v255
  %321 = vst.msk [vmem:[%s3 + $0x120] sm:$0xff] %vm284, %v256
  %322 = vst.msk [vmem:[%s3 + $0x128] sm:$0xff] %vm284, %v257
  %323 = vst.msk [vmem:[%s3 + $0x130] sm:$0xff] %vm284, %v258
  %324 = vst.msk [vmem:[%s3 + $0x138] sm:$0xff] %vm284, %v259
  %325 = vst.msk [vmem:[%s3 + $0x140] sm:$0xff] %vm284, %v260
  %326 = vst.msk [vmem:[%s3 + $0x148] sm:$0xff] %vm284, %v261
  %327 = vst.msk [vmem:[%s3 + $0x150] sm:$0xff] %vm284, %v262
  %328 = vst.msk [vmem:[%s3 + $0x158] sm:$0xff] %vm284, %v263
  %329 = vst.msk [vmem:[%s3 + $0x160] sm:$0xff] %vm284, %v264
  %330 = vst.msk [vmem:[%s3 + $0x168] sm:$0xff] %vm284, %v265
  %331 = vst.msk [vmem:[%s3 + $0x170] sm:$0xff] %vm284, %v266
  %332 = vst.msk [vmem:[%s3 + $0x178] sm:$0xff] %vm284, %v267
  %333 = vst.msk [vmem:[%s3 + $0x180] sm:$0xff] %vm284, %v268
  %334 = vst.msk [vmem:[%s3 + $0x188] sm:$0xff] %vm284, %v269
  %335 = vst.msk [vmem:[%s3 + $0x190] sm:$0xff] %vm284, %v270
  %336 = vst.msk [vmem:[%s3 + $0x198] sm:$0xff] %vm284, %v271
  %337 = vst.msk [vmem:[%s3 + $0x1a0] sm:$0xff] %vm284, %v272
  %338 = vst.msk [vmem:[%s3 + $0x1a8] sm:$0xff] %vm284, %v273
  %339 = vst.msk [vmem:[%s3 + $0x1b0] sm:$0xff] %vm284, %v274
  %340 = vst.msk [vmem:[%s3 + $0x1b8] sm:$0xff] %vm284, %v275
  %341 = vst.msk [vmem:[%s3 + $0x1c0] sm:$0xff] %vm284, %v276
  %342 = vst.msk [vmem:[%s3 + $0x1c8] sm:$0xff] %vm284, %v277
  %343 = vst.msk [vmem:[%s3 + $0x1d0] sm:$0xff] %vm284, %v278
  %344 = vst.msk [vmem:[%s3 + $0x1d8] sm:$0xff] %vm284, %v279
  %345 = vst.msk [vmem:[%s3 + $0x1e0] sm:$0xff] %vm284, %v280
  %346 = vst.msk [vmem:[%s3 + $0x1e8] sm:$0xff] %vm284, %v281
  %347 = vst.msk [vmem:[%s3 + $0x1f0] sm:$0xff] %vm284, %v282
  %348 = vst.msk [vmem:[%s3 + $0x1f8] sm:$0xff] %vm284, %v283
  // Predicated region
  $region14: #{decoder_forward.9} parent=0 // pred_check
    _
  $region15: #{decoder_forward.9} parent=0 // pred_check_branch
    %350 = sbr.rel (0) target = $region17
  $region16: #{decoder_forward.9} parent=0 // pred_region
    _
  $region17: #{decoder_forward.9} parent=0 // pred_fallthru
    _
  // Predicated region
  $region18: #{decoder_forward.9} parent=0 // pred_check
    _
  $region19: #{decoder_forward.9} parent=0 // pred_check_branch
    %352 = sbr.rel (0) target = $region21
  $region20: #{decoder_forward.9} parent=0 // pred_region
    _
  $region21: #{decoder_forward.9} parent=0 // pred_fallthru
    _

// kernel: decoder_forward.8
$region0: #{decoder_forward.8}
  #allocation0 [shape = 'u32[]', space=smem, size = 0x4, offset = 0x4, fixed_abs, tag = 'smem constant byte address 0x4 - core index']
  #allocation1 [shape = 'u32[144,128]{1,0:T(1,128)}', space=vmem, size = 0x12000, scoped, tag = 'internal scratch']
  %s0 = inlined_call_operand.vmem [shape: f32[2,18,18,4], index: 0, kind: input, shape index: {}, may-alias: {0,1,2}]
  %s1 = inlined_call_operand.vmem [shape: f32[2,18,18,4], index: 1, kind: input, shape index: {}, may-alias: {0,1,2}]
  %s2 = inlined_call_operand.vmem [shape: f32[2,18,18,4], index: 2, kind: input, shape index: {}, may-alias: {0,1,2}]
  %s3 = inlined_call_operand.vmem [shape: f32[3,3,4,4], index: 3, kind: input, shape index: {}]
  %s4 = inlined_call_operand.vmem [shape: f32[1,4], index: 4, kind: input, shape index: {}]
  %s5 = inlined_call_operand.vmem [shape: f32[1,4], index: 5, kind: input, shape index: {}]
  %s6 = inlined_call_operand.vmem [shape: f32[2,16,16,4], index: 6, kind: output, shape index: {0}]
  %s7 = inlined_call_operand.vmem [shape: f32[2,4], index: 7, kind: output, shape index: {1}]
  %8 = xla_tuple %s6, %s7
  %s9 = sld [smem:[#allocation0]]
  $region69: #{decoder_forward.8} parent=0
    _
  %s11 = ssub.s32 1, %s9
  %s12 = scalar_select 0, %s11, %s9
  loop: start=0, step=1, limit=34
  $region2: #{decoder_forward.8} parent=0 // loop_pre_header
    _
  $region3: #{decoder_forward.8} parent=0 // loop_header
    %s14 = sphi 0, %s18
    %p15 = scmp.ge.s32.totalorder %s14, 34
    %s21 = sphi 0, %s33
    %s22 = sphi 0, %s29
    %s23 = sphi 0, %s21
    %s24 = sphi 0, %s22
    %s25 = sphi 0, %s23
    %s26 = sphi 0, %s24
    %s38 = sphi 0, %s40
    %s41 = sphi 0, %s38
    %s42 = sphi 0, %s41
    %s58 = sphi 0, %s42
    %s68 = sphi 0, %s70
    %s71 = sphi 0, %s68
    %s72 = sphi 0, %s71
    %s88 = sphi 0, %s72
    %s98 = sphi 0, %s100
    %s101 = sphi 0, %s98
    %s102 = sphi 0, %s101
    %s118 = sphi 0, %s102
    %s122 = sphi 0, %s122
    %s124 = sphi 0, %s122
    %s125 = sphi 0, %s124
    %s139 = sphi 0, %s125
    %s143 = sphi 0, %s143
    %s145 = sphi 0, %s143
    %s146 = sphi 0, %s145
    %s160 = sphi 0, %s146
    %s164 = sphi 0, %s164
    %s166 = sphi 0, %s164
    %s167 = sphi 0, %s166
    %s181 = sphi 0, %s167
    %s189 = sphi 0, %s191
    %s192 = sphi 0, %s189
    %s193 = sphi 0, %s192
    %s209 = sphi 0, %s193
    %s213 = sphi 0, %s213
    %s215 = sphi 0, %s213
    %s216 = sphi 0, %s215
    %s230 = sphi 0, %s216
  $region4: #{decoder_forward.8} parent=0 // loop_header_branch
    %17 = sbr.rel (%p15) target = $region8
  $region5: #{decoder_forward.8} parent=0 // loop_body
    %s19 = ssub.s32 %s14, 1
    %s20 = ssub.s32 %s14, 2
    %s27 = sadd.s32 1, %s22
    %p28 = scmp.ge.s32.totalorder %s27, 16
    %s29 = scalar_select %p28, 0, %s27
    %s30 = sadd.s32 1, %s21
    %s31 = scalar_select %p28, %s30, %s21
    %p32 = scmp.ge.s32.totalorder %s31, 2
    %s33 = scalar_select %p32, 0, %s31
    %s34 = ssub.s32 %s21, %s33
    %s35 = ssub.s32 %s22, %s29
    %s36 = sor.u32 %s34, %s35
    %p37 = scmp.eq.s32.totalorder %s36, 0
    %s39 = sadd.s32 %s38, 1
    %s40 = scalar_select %p37, %s38, %s39
    %p43 = pneg %p37
    %p44 = scmp.eq.s32.totalorder %s14, 31
    %p45 = por %p43, %p44
    %p46 = scmp.ne.s32.totalorder %s38, %s41
    %p47 = scmp.eq.s32.totalorder %s14, 0
    %p48 = por %p46, %p47
    %p49 = scmp.ne.s32.totalorder %s38, %s41
    %p50 = scmp.eq.s32.totalorder %s19, 31
    %p51 = por %p49, %p50
    %p52 = scmp.ne.s32.totalorder %s41, %s42
    %p53 = scmp.eq.s32.totalorder %s19, 0
    %p54 = por %p52, %p53
    %p55 = scmp.ne.s32.totalorder %s41, %s42
    %p56 = scmp.eq.s32.totalorder %s20, 31
    %p57 = por %p55, %p56
    %p59 = scmp.ne.s32.totalorder %s42, %s58
    %p60 = scmp.eq.s32.totalorder %s20, 0
    %p61 = por %p59, %p60
    %s62 = sadd.s32 %s22, 1
    %s63 = sadd.s32 %s29, 1
    %s64 = ssub.s32 %s21, %s33
    %s65 = ssub.s32 %s62, %s63
    %s66 = sor.u32 %s64, %s65
    %p67 = scmp.eq.s32.totalorder %s66, 0
    %s69 = sadd.s32 %s68, 1
    %s70 = scalar_select %p67, %s68, %s69
    %p73 = pneg %p67
    %p74 = scmp.eq.s32.totalorder %s14, 31
    %p75 = por %p73, %p74
    %p76 = scmp.ne.s32.totalorder %s68, %s71
    %p77 = scmp.eq.s32.totalorder %s14, 0
    %p78 = por %p76, %p77
    %p79 = scmp.ne.s32.totalorder %s68, %s71
    %p80 = scmp.eq.s32.totalorder %s19, 31
    %p81 = por %p79, %p80
    %p82 = scmp.ne.s32.totalorder %s71, %s72
    %p83 = scmp.eq.s32.totalorder %s19, 0
    %p84 = por %p82, %p83
    %p85 = scmp.ne.s32.totalorder %s71, %s72
    %p86 = scmp.eq.s32.totalorder %s20, 31
    %p87 = por %p85, %p86
    %p89 = scmp.ne.s32.totalorder %s72, %s88
    %p90 = scmp.eq.s32.totalorder %s20, 0
    %p91 = por %p89, %p90
    %s92 = sadd.s32 %s22, 2
    %s93 = sadd.s32 %s29, 2
    %s94 = ssub.s32 %s21, %s33
    %s95 = ssub.s32 %s92, %s93
    %s96 = sor.u32 %s94, %s95
    %p97 = scmp.eq.s32.totalorder %s96, 0
    %s99 = sadd.s32 %s98, 1
    %s100 = scalar_select %p97, %s98, %s99
    %p103 = pneg %p97
    %p104 = scmp.eq.s32.totalorder %s14, 31
    %p105 = por %p103, %p104
    %p106 = scmp.ne.s32.totalorder %s98, %s101
    %p107 = scmp.eq.s32.totalorder %s14, 0
    %p108 = por %p106, %p107
    %p109 = scmp.ne.s32.totalorder %s98, %s101
    %p110 = scmp.eq.s32.totalorder %s19, 31
    %p111 = por %p109, %p110
    %p112 = scmp.ne.s32.totalorder %s101, %s102
    %p113 = scmp.eq.s32.totalorder %s19, 0
    %p114 = por %p112, %p113
    %p115 = scmp.ne.s32.totalorder %s101, %s102
    %p116 = scmp.eq.s32.totalorder %s20, 31
    %p117 = por %p115, %p116
    %p119 = scmp.ne.s32.totalorder %s102, %s118
    %p120 = scmp.eq.s32.totalorder %s20, 0
    %p121 = por %p119, %p120
    %s123 = sadd.s32 %s122, 1
    %p126 = scmp.eq.s32.totalorder %s14, 31
    %p127 = scmp.ne.s32.totalorder %s122, %s124
    %p128 = scmp.eq.s32.totalorder %s14, 0
    %p129 = por %p127, %p128
    %p130 = scmp.ne.s32.totalorder %s122, %s124
    %p131 = scmp.eq.s32.totalorder %s19, 31
    %p132 = por %p130, %p131
    %p133 = scmp.ne.s32.totalorder %s124, %s125
    %p134 = scmp.eq.s32.totalorder %s19, 0
    %p135 = por %p133, %p134
    %p136 = scmp.ne.s32.totalorder %s124, %s125
    %p137 = scmp.eq.s32.totalorder %s20, 31
    %p138 = por %p136, %p137
    %p140 = scmp.ne.s32.totalorder %s125, %s139
    %p141 = scmp.eq.s32.totalorder %s20, 0
    %p142 = por %p140, %p141
    %s144 = sadd.s32 %s143, 1
    %p147 = scmp.eq.s32.totalorder %s14, 31
    %p148 = scmp.ne.s32.totalorder %s143, %s145
    %p149 = scmp.eq.s32.totalorder %s14, 0
    %p150 = por %p148, %p149
    %p151 = scmp.ne.s32.totalorder %s143, %s145
    %p152 = scmp.eq.s32.totalorder %s19, 31
    %p153 = por %p151, %p152
    %p154 = scmp.ne.s32.totalorder %s145, %s146
    %p155 = scmp.eq.s32.totalorder %s19, 0
    %p156 = por %p154, %p155
    %p157 = scmp.ne.s32.totalorder %s145, %s146
    %p158 = scmp.eq.s32.totalorder %s20, 31
    %p159 = por %p157, %p158
    %p161 = scmp.ne.s32.totalorder %s146, %s160
    %p162 = scmp.eq.s32.totalorder %s20, 0
    %p163 = por %p161, %p162
    %s165 = sadd.s32 %s164, 1
    %p168 = scmp.eq.s32.totalorder %s14, 31
    %p169 = scmp.ne.s32.totalorder %s164, %s166
    %p170 = scmp.eq.s32.totalorder %s14, 0
    %p171 = por %p169, %p170
    %p172 = scmp.ne.s32.totalorder %s164, %s166
    %p173 = scmp.eq.s32.totalorder %s19, 31
    %p174 = por %p172, %p173
    %p175 = scmp.ne.s32.totalorder %s166, %s167
    %p176 = scmp.eq.s32.totalorder %s19, 0
    %p177 = por %p175, %p176
    %p178 = scmp.ne.s32.totalorder %s166, %s167
    %p179 = scmp.eq.s32.totalorder %s20, 31
    %p180 = por %p178, %p179
    %p182 = scmp.ne.s32.totalorder %s167, %s181
    %p183 = scmp.eq.s32.totalorder %s20, 0
    %p184 = por %p182, %p183
    %s185 = ssub.s32 %s21, %s33
    %s186 = ssub.s32 %s22, %s29
    %s187 = sor.u32 %s185, %s186
    %p188 = scmp.eq.s32.totalorder %s187, 0
    %s190 = sadd.s32 %s189, 1
    %s191 = scalar_select %p188, %s189, %s190
    %p194 = pneg %p188
    %p195 = scmp.eq.s32.totalorder %s14, 31
    %p196 = por %p194, %p195
    %p197 = scmp.ne.s32.totalorder %s189, %s192
    %p198 = scmp.eq.s32.totalorder %s14, 0
    %p199 = por %p197, %p198
    %p200 = scmp.ne.s32.totalorder %s189, %s192
    %p201 = scmp.eq.s32.totalorder %s19, 31
    %p202 = por %p200, %p201
    %p203 = scmp.ne.s32.totalorder %s192, %s193
    %p204 = scmp.eq.s32.totalorder %s19, 0
    %p205 = por %p203, %p204
    %p206 = scmp.ne.s32.totalorder %s192, %s193
    %p207 = scmp.eq.s32.totalorder %s20, 31
    %p208 = por %p206, %p207
    %p210 = scmp.ne.s32.totalorder %s193, %s209
    %p211 = scmp.eq.s32.totalorder %s20, 0
    %p212 = por %p210, %p211
    %s214 = sadd.s32 %s213, 1
    %p217 = scmp.eq.s32.totalorder %s14, 31
    %p218 = scmp.ne.s32.totalorder %s213, %s215
    %p219 = scmp.eq.s32.totalorder %s14, 0
    %p220 = por %p218, %p219
    %p221 = scmp.ne.s32.totalorder %s213, %s215
    %p222 = scmp.eq.s32.totalorder %s19, 31
    %p223 = por %p221, %p222
    %p224 = scmp.ne.s32.totalorder %s215, %s216
    %p225 = scmp.eq.s32.totalorder %s19, 0
    %p226 = por %p224, %p225
    %p227 = scmp.ne.s32.totalorder %s215, %s216
    %p228 = scmp.eq.s32.totalorder %s20, 31
    %p229 = por %p227, %p228
    %p231 = scmp.ne.s32.totalorder %s216, %s230
    %p232 = scmp.eq.s32.totalorder %s20, 0
    %p233 = por %p231, %p232
    %p234 = scmp.le.s32.totalorder 1, %s14
    %p235 = scmp.lt.s32.totalorder %s14, 33
    %p236 = pnand %p234, %p235
    %p237 = pneg %p236
    // Predicated region
    $region9: #{decoder_forward.8} parent=5 // pred_check
      _
    $region10: #{decoder_forward.8} parent=5 // pred_check_branch
      %239 = sbr.rel (%p236) target = $region12
    $region11: #{decoder_forward.8} parent=5 // pred_region
      %s240 = ssub.s32 %s14, 1
      // Predicated region
      $region13: #{decoder_forward.8} parent=11 // pred_check
        %p241 = pneg %p135
      $region14: #{decoder_forward.8} parent=11 // pred_check_branch
        %243 = sbr.rel (%p241) target = $region16
      $region15: #{decoder_forward.8} parent=11 // pred_region
        _
      $region16: #{decoder_forward.8} parent=11 // pred_fallthru
        _
      // Predicated region
      $region17: #{decoder_forward.8} parent=11 // pred_check
        %p244 = pneg %p156
      $region18: #{decoder_forward.8} parent=11 // pred_check_branch
        %246 = sbr.rel (%p244) target = $region20
      $region19: #{decoder_forward.8} parent=11 // pred_region
        _
      $region20: #{decoder_forward.8} parent=11 // pred_fallthru
        _
      // Predicated region
      $region21: #{decoder_forward.8} parent=11 // pred_check
        %p247 = pneg %p177
      $region22: #{decoder_forward.8} parent=11 // pred_check_branch
        %249 = sbr.rel (%p247) target = $region24
      $region23: #{decoder_forward.8} parent=11 // pred_region
        _
      $region24: #{decoder_forward.8} parent=11 // pred_fallthru
        _
    $region12: #{decoder_forward.8} parent=5 // pred_fallthru
      _
    %p250 = scmp.lt.s32.totalorder %s14, 32
    // Predicated region
    $region25: #{decoder_forward.8} parent=5 // pred_check
      %p251 = pneg %p250
    $region26: #{decoder_forward.8} parent=5 // pred_check_branch
      %253 = sbr.rel (%p251) target = $region28
    $region27: #{decoder_forward.8} parent=5 // pred_region
      // Predicated region
      $region29: #{decoder_forward.8} parent=27 // pred_check
        %p254 = pneg %p48
      $region30: #{decoder_forward.8} parent=27 // pred_check_branch
        %256 = sbr.rel (%p254) target = $region32
      $region31: #{decoder_forward.8} parent=27 // pred_region
        %p257 = scmp.lt.s32.totalorder %s21, 1
        %s258 = scalar_select %p257, %s21, 1
        %p259 = scmp.lt.s32.totalorder %s22, 17
        %s260 = scalar_select %p259, %s22, 17
        %s261 = smul.addr %s260, 3
        %s262 = smul.addr %s258, 54
        %s263 = sadd.s32 %s261, %s262
        %s264 = smul.addr %s263, 8
        %s265 = scalar_lea.vmem %s0, %s264
      $region32: #{decoder_forward.8} parent=27 // pred_fallthru
        _
      // Predicated region
      $region33: #{decoder_forward.8} parent=27 // pred_check
        %p266 = pneg %p78
      $region34: #{decoder_forward.8} parent=27 // pred_check_branch
        %268 = sbr.rel (%p266) target = $region36
      $region35: #{decoder_forward.8} parent=27 // pred_region
        %s269 = sadd.s32 %s22, 1
        %p270 = scmp.lt.s32.totalorder %s21, 1
        %s271 = scalar_select %p270, %s21, 1
        %p272 = scmp.lt.s32.totalorder %s269, 17
        %s273 = scalar_select %p272, %s269, 17
        %s274 = smul.addr %s273, 3
        %s275 = smul.addr %s271, 54
        %s276 = sadd.s32 %s274, %s275
        %s277 = smul.addr %s276, 8
        %s278 = scalar_lea.vmem %s1, %s277
        %s279 = sadd.s32 %s22, 1
      $region36: #{decoder_forward.8} parent=27 // pred_fallthru
        _
      // Predicated region
      $region37: #{decoder_forward.8} parent=27 // pred_check
        %p280 = pneg %p108
      $region38: #{decoder_forward.8} parent=27 // pred_check_branch
        %282 = sbr.rel (%p280) target = $region40
      $region39: #{decoder_forward.8} parent=27 // pred_region
        %s283 = sadd.s32 %s22, 2
        %p284 = scmp.lt.s32.totalorder %s21, 1
        %s285 = scalar_select %p284, %s21, 1
        %p286 = scmp.lt.s32.totalorder %s283, 17
        %s287 = scalar_select %p286, %s283, 17
        %s288 = smul.addr %s287, 3
        %s289 = smul.addr %s285, 54
        %s290 = sadd.s32 %s288, %s289
        %s291 = smul.addr %s290, 8
        %s292 = scalar_lea.vmem %s2, %s291
        %s293 = sadd.s32 %s22, 2
      $region40: #{decoder_forward.8} parent=27 // pred_fallthru
        _
    $region28: #{decoder_forward.8} parent=5 // pred_fallthru
      _
    %p294 = scmp.le.s32.totalorder 1, %s14
    %p295 = scmp.lt.s32.totalorder %s14, 33
    %p296 = pnand %p294, %p295
    %p297 = pneg %p296
    // Predicated region
    $region41: #{decoder_forward.8} parent=5 // pred_check
      _
    $region42: #{decoder_forward.8} parent=5 // pred_check_branch
      %299 = sbr.rel (%p296) target = $region44
    $region43: #{decoder_forward.8} parent=5 // pred_region
      %s300 = ssub.s32 %s14, 1
      %p301 = scmp.lt.s32.totalorder %s23, 1
      %s302 = scalar_select %p301, %s23, 1
      %p303 = scmp.lt.s32.totalorder %s24, 17
      %s304 = scalar_select %p303, %s24, 17
      %s305 = smul.addr %s304, 3
      %s306 = smul.addr %s302, 54
      %s307 = sadd.s32 %s305, %s306
      %s308 = smul.addr %s307, 8
      %s309 = scalar_lea.vmem %s0, %s308
      %p310 = pneg %p54
      %p311 = pneg %p51
      %s312 = sadd.s32 %s24, 1
      %p313 = scmp.lt.s32.totalorder %s23, 1
      %s314 = scalar_select %p313, %s23, 1
      %p315 = scmp.lt.s32.totalorder %s312, 17
      %s316 = scalar_select %p315, %s312, 17
      %s317 = smul.addr %s316, 3
      %s318 = smul.addr %s314, 54
      %s319 = sadd.s32 %s317, %s318
      %s320 = smul.addr %s319, 8
      %s321 = scalar_lea.vmem %s1, %s320
      %p322 = pneg %p84
      %p323 = pneg %p81
      %s324 = sadd.s32 %s24, 2
      %p325 = scmp.lt.s32.totalorder %s23, 1
      %s326 = scalar_select %p325, %s23, 1
      %p327 = scmp.lt.s32.totalorder %s324, 17
      %s328 = scalar_select %p327, %s324, 17
      %s329 = smul.addr %s328, 3
      %s330 = smul.addr %s326, 54
      %s331 = sadd.s32 %s329, %s330
      %s332 = smul.addr %s331, 8
      %s333 = scalar_lea.vmem %s2, %s332
      %p334 = pneg %p114
      %p335 = pneg %p111
      %p336 = pneg %p135
      %p337 = pneg %p132
      %p338 = pneg %p156
      %p339 = pneg %p153
      %p340 = pneg %p177
      %p341 = pneg %p174
      %p342 = pneg %p205
      %p343 = pneg %p202
      %p344 = scmp.lt.s32.totalorder %s23, 1
      %s345 = scalar_select %p344, %s23, 1
      %p346 = scmp.lt.s32.totalorder %s24, 15
      %s347 = scalar_select %p346, %s24, 15
      %s348 = smul.addr %s347, 2
      %s349 = smul.addr %s345, 32
      %s350 = sadd.s32 %s348, %s349
      %s351 = smul.addr %s350, 8
      %s352 = scalar_lea.vmem %s6, %s351
      %p353 = pneg %p226
      %p354 = pneg %p223
      %p355 = scmp.lt.s32.totalorder %s23, 1
      %s356 = scalar_select %p355, %s23, 1
      %p357 = scmp.lt.s32.totalorder %s24, 17
      %s358 = scalar_select %p357, %s24, 17
      %s359 = smul.addr %s358, 3
      %s360 = smul.addr %s356, 54
      %s361 = sadd.s32 %s359, %s360
      %s362 = smul.addr %s361, 8
      %s363 = scalar_lea.vmem %s0, %s362
      %s364 = sadd.s32 %s24, 1
      %p365 = scmp.lt.s32.totalorder %s23, 1
      %s366 = scalar_select %p365, %s23, 1
      %p367 = scmp.lt.s32.totalorder %s364, 17
      %s368 = scalar_select %p367, %s364, 17
      %s369 = smul.addr %s368, 3
      %s370 = smul.addr %s366, 54
      %s371 = sadd.s32 %s369, %s370
      %s372 = smul.addr %s371, 8
      %s373 = scalar_lea.vmem %s1, %s372
      %s374 = sadd.s32 %s24, 1
      %s375 = sadd.s32 %s24, 2
      %p376 = scmp.lt.s32.totalorder %s23, 1
      %s377 = scalar_select %p376, %s23, 1
      %p378 = scmp.lt.s32.totalorder %s375, 17
      %s379 = scalar_select %p378, %s375, 17
      %s380 = smul.addr %s379, 3
      %s381 = smul.addr %s377, 54
      %s382 = sadd.s32 %s380, %s381
      %s383 = smul.addr %s382, 8
      %s384 = scalar_lea.vmem %s2, %s383
      %s385 = sadd.s32 %s24, 2
      %p386 = scmp.lt.s32.totalorder %s23, 1
      %s387 = scalar_select %p386, %s23, 1
      %p388 = scmp.lt.s32.totalorder %s24, 15
      %s389 = scalar_select %p388, %s24, 15
      %s390 = smul.addr %s389, 2
      %s391 = smul.addr %s387, 32
      %s392 = sadd.s32 %s390, %s391
      %s393 = smul.addr %s392, 8
      %s394 = scalar_lea.vmem %s6, %s393
      %p395 = scmp.eq.s32.totalorder %s23, 0
      %p396 = scmp.eq.s32.totalorder %s24, 0
      %p397 = pnand %p395, %p396
      %p398 = pneg %p397
      // Predicated region
      $region45: #{decoder_forward.8} parent=43 // pred_check
        _
      $region46: #{decoder_forward.8} parent=43 // pred_check_branch
        %400 = sbr.rel (%p397) target = $region48
      $region47: #{decoder_forward.8} parent=43 // pred_region
        %vm401 = vcmask 25600
        %402 = vst.msk [vmem:[%s7] sm:$0x3] %vm401, 0.0
      $region48: #{decoder_forward.8} parent=43 // pred_fallthru
        _
      %v403 = vld [vmem:[%s363] sm:$0xff]
      %v404 = vld [vmem:[%s363 + $0x8] sm:$0xff]
      %v405 = vld [vmem:[%s363 + $0x10] sm:$0x3]
      %v406 = vld [vmem:[%s373] sm:$0xff]
      %v407 = vld [vmem:[%s373 + $0x8] sm:$0xff]
      %v408 = vld [vmem:[%s373 + $0x10] sm:$0x3]
      %v409 = vld [vmem:[%s384] sm:$0xff]
      %v410 = vld [vmem:[%s384 + $0x8] sm:$0xff]
      %v411 = vld [vmem:[%s384 + $0x10] sm:$0x3]
      %v412 = vlaneseq
      %v413 = vshrl.u32 %v412, 7
      %v414 = vadd.s32 %v413, 8
      %v415 = vadd.s32 %v413, 16
      %vm416 = vcmp.ge.s32.totalorder %v413, 1
      %vm417 = vcmp.ge.s32.totalorder %v414, 1
      %vm418 = vcmp.ge.s32.totalorder %v415, 1
      %vm419 = vcmp.le.s32.totalorder %v413, 16
      %vm420 = vcmp.le.s32.totalorder %v414, 16
      %vm421 = vcmp.le.s32.totalorder %v415, 16
      %vm422 = vmand %vm416, %vm419
      %vm423 = vmand %vm417, %vm420
      %vm424 = vmand %vm418, %vm421
      %p425 = scmp.gt.s32.totalorder %s24, 0
      %s426 = scalar_select %p425, 1, 0
      %v427 = vstv %s426
      %vm428 = vcmp.eq.s32.totalorder %v427, 1
      %vm429 = vmand %vm422, %vm428
      %vm430 = vmand %vm423, %vm428
      %vm431 = vmand %vm424, %vm428
      %p432 = scmp.lt.s32.totalorder %s24, 15
      %s433 = scalar_select %p432, 1, 0
      %v434 = vstv %s433
      %vm435 = vcmp.eq.s32.totalorder %v434, 1
      %vm436 = vmand %vm422, %vm435
      %vm437 = vmand %vm423, %vm435
      %vm438 = vmand %vm424, %vm435
      %v439 = vld [vmem:[%s4] sm:$0x1]
      %v441 = vlaneseq
      %v442 = vshrl.u32 %v441, 7
      %v443 = vsub.s32 0, %v442
      %v444 = vrot.slane %v439, %v443
      %v446 = vmul.f32 %v403, %v444
      %v447 = vmul.f32 %v404, %v444
      %v448 = vmul.f32 %v405, %v444
      %v449 = vld [vmem:[%s5] sm:$0x1]
      %v451 = vlaneseq
      %v452 = vshrl.u32 %v451, 7
      %v453 = vsub.s32 0, %v452
      %v454 = vrot.slane %v449, %v453
      %v456 = vadd.f32 %v446, %v454
      %v457 = vadd.f32 %v447, %v454
      %v458 = vadd.f32 %v448, %v454
      %v459 = vmax.f32 %v456, 0.0
      %v460 = vmax.f32 %v457, 0.0
      %v461 = vmax.f32 %v458, 0.0
      %v462 = vsel %vm429, 1, 0
      %v463 = vsel %vm430, 1, 0
      %v464 = vsel %vm431, 1, 0
      %vm465 = vcmp.eq.s32.totalorder %v462, 1
      %vm466 = vcmp.eq.s32.totalorder %v463, 1
      %vm467 = vcmp.eq.s32.totalorder %v464, 1
      %v468 = vsel %vm465, %v459, 0.0
      %v469 = vsel %vm466, %v460, 0.0
      %v470 = vsel %vm467, %v461, 0.0
      %v471 = vmul.f32 %v406, %v444
      %v472 = vmul.f32 %v407, %v444
      %v473 = vmul.f32 %v408, %v444
      %v474 = vadd.f32 %v471, %v454
      %v475 = vadd.f32 %v472, %v454
      %v476 = vadd.f32 %v473, %v454
      %v477 = vmax.f32 %v474, 0.0
      %v478 = vmax.f32 %v475, 0.0
      %v479 = vmax.f32 %v476, 0.0
      %v480 = vsel %vm422, 1, 0
      %v481 = vsel %vm423, 1, 0
      %v482 = vsel %vm424, 1, 0
      %vm483 = vcmp.eq.s32.totalorder %v480, 1
      %vm484 = vcmp.eq.s32.totalorder %v481, 1
      %vm485 = vcmp.eq.s32.totalorder %v482, 1
      %v486 = vsel %vm483, %v477, 0.0
      %v487 = vsel %vm484, %v478, 0.0
      %v488 = vsel %vm485, %v479, 0.0
      %v489 = vmul.f32 %v409, %v444
      %v490 = vmul.f32 %v410, %v444
      %v491 = vmul.f32 %v411, %v444
      %v492 = vadd.f32 %v489, %v454
      %v493 = vadd.f32 %v490, %v454
      %v494 = vadd.f32 %v491, %v454
      %v495 = vmax.f32 %v492, 0.0
      %v496 = vmax.f32 %v493, 0.0
      %v497 = vmax.f32 %v494, 0.0
      %v498 = vsel %vm436, 1, 0
      %v499 = vsel %vm437, 1, 0
      %v500 = vsel %vm438, 1, 0
      %vm501 = vcmp.eq.s32.totalorder %v498, 1
      %vm502 = vcmp.eq.s32.totalorder %v499, 1
      %vm503 = vcmp.eq.s32.totalorder %v500, 1
      %v504 = vsel %vm501, %v495, 0.0
      %v505 = vsel %vm502, %v496, 0.0
      %v506 = vsel %vm503, %v497, 0.0
      %v507 = vld [vmem:[%s3] sm:$0xf]
      %s508 = scalar_lea.vmem %s3, 4
      %v509 = vld [vmem:[%s508] sm:$0xf]
      %vm513 = vcmask 1046528
      %v514 = vrot.slane %v468, 1
      %v515 = vrot.slane %v469, 1
      %v516 = vsel %vm513, %v514, %v515
      %v517 = vrot.slane %v470, 1
      %v518 = vsel %vm513, %v515, %v517
      %vm519 = vcmask 31744
      %v520 = vsel %vm519, %v516, 0
      %v522 = vsel %vm519, %v518, 0
      %vm524 = vcmask 1043456
      %v526 = vsel %vm524, %v509, 0
      %528 = vmatprep.subr.mxu0 0.0
      %529 = vmatpush1.msra.mxu0 0.0
      %530 = vmatprep.subr.mxu0 0.0
      %531 = vmatpush1.msra.mxu0 0.0
      %532 = vmatprep.subr.mxu0 0.0
      %533 = vmatpush1.msra.mxu0 0.0
      %534 = vmatprep.subr.mxu0 0.0
      %535 = vmatpush1.msra.mxu0 0.0
      %536 = vmatprep.subr.mxu0 0.0
      %537 = vmatpush1.msra.mxu0 0.0
      %538 = vmatprep.subr.mxu0 0.0
      %539 = vmatpush1.msra.mxu0 0.0
      %540 = vmatprep.subr.mxu0 0.0
      %541 = vmatpush1.msra.mxu0 0.0
      %542 = vmatprep.subr.mxu0 0.0
      %543 = vmatpush1.msra.mxu0 0.0
      %544 = vmatprep.subr.mxu0 0.0
      %545 = vmatpush1.msra.mxu0 0.0
      %546 = vmatprep.subr.mxu0 0.0
      %547 = vmatpush1.msra.mxu0 0.0
      %548 = vmatprep.subr.mxu0 0.0
      %549 = vmatpush1.msra.mxu0 0.0
      %550 = vmatprep.subr.mxu0 0.0
      %551 = vmatpush1.msra.mxu0 0.0
      %552 = vmatprep.subr.mxu0 0.0
      %553 = vmatpush1.msra.mxu0 0.0
      %554 = vmatprep.subr.mxu0 0.0
      %555 = vmatpush1.msra.mxu0 0.0
      %556 = vmatprep.subr.mxu0 0.0
      %557 = vmatpush1.msra.mxu0 0.0
      %558 = vmatprep.subr.mxu0 0.0
      %559 = vmatpush1.msra.mxu0 %v526
      %560 = vmatprep.subr.mxu0 0.0
      %561 = vmatpush2.msra.mxu0 0.0
      %562 = vmatprep.subr.mxu0 0.0
      %563 = vmatpush2.msra.mxu0 0.0
      %564 = vmatprep.subr.mxu0 0.0
      %565 = vmatpush2.msra.mxu0 0.0
      %566 = vmatprep.subr.mxu0 0.0
      %567 = vmatpush2.msra.mxu0 0.0
      %568 = vmatprep.subr.mxu0 0.0
      %569 = vmatpush2.msra.mxu0 0.0
      %570 = vmatprep.subr.mxu0 0.0
      %571 = vmatpush2.msra.mxu0 0.0
      %572 = vmatprep.subr.mxu0 0.0
      %573 = vmatpush2.msra.mxu0 0.0
      %574 = vmatprep.subr.mxu0 0.0
      %575 = vmatpush2.msra.mxu0 0.0
      %576 = vmatprep.subr.mxu0 0.0
      %577 = vmatpush2.msra.mxu0 0.0
      %578 = vmatprep.subr.mxu0 0.0
      %579 = vmatpush2.msra.mxu0 0.0
      %580 = vmatprep.subr.mxu0 0.0
      %581 = vmatpush2.msra.mxu0 0.0
      %582 = vmatprep.subr.mxu0 0.0
      %583 = vmatpush2.msra.mxu0 0.0
      %584 = vmatprep.subr.mxu0 0.0
      %585 = vmatpush2.msra.mxu0 0.0
      %586 = vmatprep.subr.mxu0 0.0
      %587 = vmatpush2.msra.mxu0 0.0
      %588 = vmatprep.subr.mxu0 0.0
      %589 = vmatpush2.msra.mxu0 0.0
      %590 = vmatprep.subr.mxu0 0.0
      %591 = vmatpush2.msra.mxu0 0.0
      %592 = vmatprep.mubr.f32.mxu0 0.0
      %593 = vmatmul.mubr.f32.gmra.mxu0 %v520
      %v594 = vpop.f32.mrf.mxu0
      %v595 = vadd.f32 0.0, %v594
      %v596 = vpop.f32.mrf.mxu0
      %597 = vmatprep.mubr.f32.mxu0 0.0
      %598 = vmatmul.mubr.f32.gmra.mxu0 %v522
      %v599 = vpop.f32.mrf.mxu0
      %v600 = vadd.f32 0.0, %v599
      %v601 = vpop.f32.mrf.mxu0
      %602 = vdwg.mxu0
      %v603 = vsel %vm519, %v468, 0
      %v605 = vsel %vm519, %v469, 0
      %v608 = vsel %vm524, %v507, 0
      %610 = vmatprep.subr.mxu0 0.0
      %611 = vmatpush1.msra.mxu0 0.0
      %612 = vmatprep.subr.mxu0 0.0
      %613 = vmatpush1.msra.mxu0 0.0
      %614 = vmatprep.subr.mxu0 0.0
      %615 = vmatpush1.msra.mxu0 0.0
      %616 = vmatprep.subr.mxu0 0.0
      %617 = vmatpush1.msra.mxu0 0.0
      %618 = vmatprep.subr.mxu0 0.0
      %619 = vmatpush1.msra.mxu0 0.0
      %620 = vmatprep.subr.mxu0 0.0
      %621 = vmatpush1.msra.mxu0 0.0
      %622 = vmatprep.subr.mxu0 0.0
      %623 = vmatpush1.msra.mxu0 0.0
      %624 = vmatprep.subr.mxu0 0.0
      %625 = vmatpush1.msra.mxu0 0.0
      %626 = vmatprep.subr.mxu0 0.0
      %627 = vmatpush1.msra.mxu0 0.0
      %628 = vmatprep.subr.mxu0 0.0
      %629 = vmatpush1.msra.mxu0 0.0
      %630 = vmatprep.subr.mxu0 0.0
      %631 = vmatpush1.msra.mxu0 0.0
      %632 = vmatprep.subr.mxu0 0.0
      %633 = vmatpush1.msra.mxu0 0.0
      %634 = vmatprep.subr.mxu0 0.0
      %635 = vmatpush1.msra.mxu0 0.0
      %636 = vmatprep.subr.mxu0 0.0
      %637 = vmatpush1.msra.mxu0 0.0
      %638 = vmatprep.subr.mxu0 0.0
      %639 = vmatpush1.msra.mxu0 0.0
      %640 = vmatprep.subr.mxu0 0.0
      %641 = vmatpush1.msra.mxu0 %v608
      %642 = vmatprep.subr.mxu0 0.0
      %643 = vmatpush2.msra.mxu0 0.0
      %644 = vmatprep.subr.mxu0 0.0
      %645 = vmatpush2.msra.mxu0 0.0
      %646 = vmatprep.subr.mxu0 0.0
      %647 = vmatpush2.msra.mxu0 0.0
      %648 = vmatprep.subr.mxu0 0.0
      %649 = vmatpush2.msra.mxu0 0.0
      %650 = vmatprep.subr.mxu0 0.0
      %651 = vmatpush2.msra.mxu0 0.0
      %652 = vmatprep.subr.mxu0 0.0
      %653 = vmatpush2.msra.mxu0 0.0
      %654 = vmatprep.subr.mxu0 0.0
      %655 = vmatpush2.msra.mxu0 0.0
      %656 = vmatprep.subr.mxu0 0.0
      %657 = vmatpush2.msra.mxu0 0.0
      %658 = vmatprep.subr.mxu0 0.0
      %659 = vmatpush2.msra.mxu0 0.0
      %660 = vmatprep.subr.mxu0 0.0
      %661 = vmatpush2.msra.mxu0 0.0
      %662 = vmatprep.subr.mxu0 0.0
      %663 = vmatpush2.msra.mxu0 0.0
      %664 = vmatprep.subr.mxu0 0.0
      %665 = vmatpush2.msra.mxu0 0.0
      %666 = vmatprep.subr.mxu0 0.0
      %667 = vmatpush2.msra.mxu0 0.0
      %668 = vmatprep.subr.mxu0 0.0
      %669 = vmatpush2.msra.mxu0 0.0
      %670 = vmatprep.subr.mxu0 0.0
      %671 = vmatpush2.msra.mxu0 0.0
      %672 = vmatprep.subr.mxu0 0.0
      %673 = vmatpush2.msra.mxu0 0.0
      %674 = vmatprep.mubr.f32.mxu0 0.0
      %675 = vmatmul.mubr.f32.gmra.mxu0 %v603
      %v676 = vpop.f32.mrf.mxu0
      %v677 = vadd.f32 %v595, %v676
      %v678 = vpop.f32.mrf.mxu0
      %679 = vmatprep.mubr.f32.mxu0 0.0
      %680 = vmatmul.mubr.f32.gmra.mxu0 %v605
      %v681 = vpop.f32.mrf.mxu0
      %v682 = vadd.f32 %v600, %v681
      %v683 = vpop.f32.mrf.mxu0
      %684 = vdwg.mxu0
      %s685 = scalar_lea.vmem %s3, 8
      %v686 = vld [vmem:[%s685] sm:$0xf]
      %vm687 = vcmask 1045504
      %v688 = vrot.slane %v468, 2
      %v689 = vrot.slane %v469, 2
      %v690 = vsel %vm687, %v688, %v689
      %v691 = vrot.slane %v470, 2
      %v692 = vsel %vm687, %v689, %v691
      %v693 = vsel %vm519, %v690, 0
      %v695 = vsel %vm519, %v692, 0
      %v698 = vsel %vm524, %v686, 0
      %700 = vmatprep.subr.mxu0 0.0
      %701 = vmatpush1.msra.mxu0 0.0
      %702 = vmatprep.subr.mxu0 0.0
      %703 = vmatpush1.msra.mxu0 0.0
      %704 = vmatprep.subr.mxu0 0.0
      %705 = vmatpush1.msra.mxu0 0.0
      %706 = vmatprep.subr.mxu0 0.0
      %707 = vmatpush1.msra.mxu0 0.0
      %708 = vmatprep.subr.mxu0 0.0
      %709 = vmatpush1.msra.mxu0 0.0
      %710 = vmatprep.subr.mxu0 0.0
      %711 = vmatpush1.msra.mxu0 0.0
      %712 = vmatprep.subr.mxu0 0.0
      %713 = vmatpush1.msra.mxu0 0.0
      %714 = vmatprep.subr.mxu0 0.0
      %715 = vmatpush1.msra.mxu0 0.0
      %716 = vmatprep.subr.mxu0 0.0
      %717 = vmatpush1.msra.mxu0 0.0
      %718 = vmatprep.subr.mxu0 0.0
      %719 = vmatpush1.msra.mxu0 0.0
      %720 = vmatprep.subr.mxu0 0.0
      %721 = vmatpush1.msra.mxu0 0.0
      %722 = vmatprep.subr.mxu0 0.0
      %723 = vmatpush1.msra.mxu0 0.0
      %724 = vmatprep.subr.mxu0 0.0
      %725 = vmatpush1.msra.mxu0 0.0
      %726 = vmatprep.subr.mxu0 0.0
      %727 = vmatpush1.msra.mxu0 0.0
      %728 = vmatprep.subr.mxu0 0.0
      %729 = vmatpush1.msra.mxu0 0.0
      %730 = vmatprep.subr.mxu0 0.0
      %731 = vmatpush1.msra.mxu0 %v698
      %732 = vmatprep.subr.mxu0 0.0
      %733 = vmatpush2.msra.mxu0 0.0
      %734 = vmatprep.subr.mxu0 0.0
      %735 = vmatpush2.msra.mxu0 0.0
      %736 = vmatprep.subr.mxu0 0.0
      %737 = vmatpush2.msra.mxu0 0.0
      %738 = vmatprep.subr.mxu0 0.0
      %739 = vmatpush2.msra.mxu0 0.0
      %740 = vmatprep.subr.mxu0 0.0
      %741 = vmatpush2.msra.mxu0 0.0
      %742 = vmatprep.subr.mxu0 0.0
      %743 = vmatpush2.msra.mxu0 0.0
      %744 = vmatprep.subr.mxu0 0.0
      %745 = vmatpush2.msra.mxu0 0.0
      %746 = vmatprep.subr.mxu0 0.0
      %747 = vmatpush2.msra.mxu0 0.0
      %748 = vmatprep.subr.mxu0 0.0
      %749 = vmatpush2.msra.mxu0 0.0
      %750 = vmatprep.subr.mxu0 0.0
      %751 = vmatpush2.msra.mxu0 0.0
      %752 = vmatprep.subr.mxu0 0.0
      %753 = vmatpush2.msra.mxu0 0.0
      %754 = vmatprep.subr.mxu0 0.0
      %755 = vmatpush2.msra.mxu0 0.0
      %756 = vmatprep.subr.mxu0 0.0
      %757 = vmatpush2.msra.mxu0 0.0
      %758 = vmatprep.subr.mxu0 0.0
      %759 = vmatpush2.msra.mxu0 0.0
      %760 = vmatprep.subr.mxu0 0.0
      %761 = vmatpush2.msra.mxu0 0.0
      %762 = vmatprep.subr.mxu0 0.0
      %763 = vmatpush2.msra.mxu0 0.0
      %764 = vmatprep.mubr.f32.mxu0 0.0
      %765 = vmatmul.mubr.f32.gmra.mxu0 %v693
      %v766 = vpop.f32.mrf.mxu0
      %v767 = vadd.f32 0.0, %v766
      %v768 = vpop.f32.mrf.mxu0
      %769 = vmatprep.mubr.f32.mxu0 0.0
      %770 = vmatmul.mubr.f32.gmra.mxu0 %v695
      %v771 = vpop.f32.mrf.mxu0
      %v772 = vadd.f32 0.0, %v771
      %v773 = vpop.f32.mrf.mxu0
      %774 = vdwg.mxu0
      %v775 = vadd.f32 %v677, %v767
      %v776 = vadd.f32 %v682, %v772
      %s777 = scalar_lea.vmem %s3, 12
      %v778 = vld [vmem:[%s777] sm:$0xf]
      %v780 = vsel %vm519, %v486, 0
      %v783 = vsel %vm519, %v487, 0
      %v786 = vsel %vm524, %v778, 0
      %788 = vmatprep.subr.mxu0 0.0
      %789 = vmatpush1.msra.mxu0 0.0
      %790 = vmatprep.subr.mxu0 0.0
      %791 = vmatpush1.msra.mxu0 0.0
      %792 = vmatprep.subr.mxu0 0.0
      %793 = vmatpush1.msra.mxu0 0.0
      %794 = vmatprep.subr.mxu0 0.0
      %795 = vmatpush1.msra.mxu0 0.0
      %796 = vmatprep.subr.mxu0 0.0
      %797 = vmatpush1.msra.mxu0 0.0
      %798 = vmatprep.subr.mxu0 0.0
      %799 = vmatpush1.msra.mxu0 0.0
      %800 = vmatprep.subr.mxu0 0.0
      %801 = vmatpush1.msra.mxu0 0.0
      %802 = vmatprep.subr.mxu0 0.0
      %803 = vmatpush1.msra.mxu0 0.0
      %804 = vmatprep.subr.mxu0 0.0
      %805 = vmatpush1.msra.mxu0 0.0
      %806 = vmatprep.subr.mxu0 0.0
      %807 = vmatpush1.msra.mxu0 0.0
      %808 = vmatprep.subr.mxu0 0.0
      %809 = vmatpush1.msra.mxu0 0.0
      %810 = vmatprep.subr.mxu0 0.0
      %811 = vmatpush1.msra.mxu0 0.0
      %812 = vmatprep.subr.mxu0 0.0
      %813 = vmatpush1.msra.mxu0 0.0
      %814 = vmatprep.subr.mxu0 0.0
      %815 = vmatpush1.msra.mxu0 0.0
      %816 = vmatprep.subr.mxu0 0.0
      %817 = vmatpush1.msra.mxu0 0.0
      %818 = vmatprep.subr.mxu0 0.0
      %819 = vmatpush1.msra.mxu0 %v786
      %820 = vmatprep.subr.mxu0 0.0
      %821 = vmatpush2.msra.mxu0 0.0
      %822 = vmatprep.subr.mxu0 0.0
      %823 = vmatpush2.msra.mxu0 0.0
      %824 = vmatprep.subr.mxu0 0.0
      %825 = vmatpush2.msra.mxu0 0.0
      %826 = vmatprep.subr.mxu0 0.0
      %827 = vmatpush2.msra.mxu0 0.0
      %828 = vmatprep.subr.mxu0 0.0
      %829 = vmatpush2.msra.mxu0 0.0
      %830 = vmatprep.subr.mxu0 0.0
      %831 = vmatpush2.msra.mxu0 0.0
      %832 = vmatprep.subr.mxu0 0.0
      %833 = vmatpush2.msra.mxu0 0.0
      %834 = vmatprep.subr.mxu0 0.0
      %835 = vmatpush2.msra.mxu0 0.0
      %836 = vmatprep.subr.mxu0 0.0
      %837 = vmatpush2.msra.mxu0 0.0
      %838 = vmatprep.subr.mxu0 0.0
      %839 = vmatpush2.msra.mxu0 0.0
      %840 = vmatprep.subr.mxu0 0.0
      %841 = vmatpush2.msra.mxu0 0.0
      %842 = vmatprep.subr.mxu0 0.0
      %843 = vmatpush2.msra.mxu0 0.0
      %844 = vmatprep.subr.mxu0 0.0
      %845 = vmatpush2.msra.mxu0 0.0
      %846 = vmatprep.subr.mxu0 0.0
      %847 = vmatpush2.msra.mxu0 0.0
      %848 = vmatprep.subr.mxu0 0.0
      %849 = vmatpush2.msra.mxu0 0.0
      %850 = vmatprep.subr.mxu0 0.0
      %851 = vmatpush2.msra.mxu0 0.0
      %852 = vmatprep.mubr.f32.mxu0 0.0
      %853 = vmatmul.mubr.f32.gmra.mxu0 %v780
      %v854 = vpop.f32.mrf.mxu0
      %v855 = vadd.f32 0.0, %v854
      %v856 = vpop.f32.mrf.mxu0
      %857 = vmatprep.mubr.f32.mxu0 0.0
      %858 = vmatmul.mubr.f32.gmra.mxu0 %v783
      %v859 = vpop.f32.mrf.mxu0
      %v860 = vadd.f32 0.0, %v859
      %v861 = vpop.f32.mrf.mxu0
      %862 = vdwg.mxu0
      %v863 = vadd.f32 %v775, %v855
      %v864 = vadd.f32 %v776, %v860
      %s865 = scalar_lea.vmem %s3, 16
      %v866 = vld [vmem:[%s865] sm:$0xf]
      %v868 = vrot.slane %v486, 1
      %v869 = vrot.slane %v487, 1
      %v870 = vsel %vm513, %v868, %v869
      %v871 = vrot.slane %v488, 1
      %v872 = vsel %vm513, %v869, %v871
      %v873 = vsel %vm519, %v870, 0
      %v875 = vsel %vm519, %v872, 0
      %v878 = vsel %vm524, %v866, 0
      %880 = vmatprep.subr.mxu0 0.0
      %881 = vmatpush1.msra.mxu0 0.0
      %882 = vmatprep.subr.mxu0 0.0
      %883 = vmatpush1.msra.mxu0 0.0
      %884 = vmatprep.subr.mxu0 0.0
      %885 = vmatpush1.msra.mxu0 0.0
      %886 = vmatprep.subr.mxu0 0.0
      %887 = vmatpush1.msra.mxu0 0.0
      %888 = vmatprep.subr.mxu0 0.0
      %889 = vmatpush1.msra.mxu0 0.0
      %890 = vmatprep.subr.mxu0 0.0
      %891 = vmatpush1.msra.mxu0 0.0
      %892 = vmatprep.subr.mxu0 0.0
      %893 = vmatpush1.msra.mxu0 0.0
      %894 = vmatprep.subr.mxu0 0.0
      %895 = vmatpush1.msra.mxu0 0.0
      %896 = vmatprep.subr.mxu0 0.0
      %897 = vmatpush1.msra.mxu0 0.0
      %898 = vmatprep.subr.mxu0 0.0
      %899 = vmatpush1.msra.mxu0 0.0
      %900 = vmatprep.subr.mxu0 0.0
      %901 = vmatpush1.msra.mxu0 0.0
      %902 = vmatprep.subr.mxu0 0.0
      %903 = vmatpush1.msra.mxu0 0.0
      %904 = vmatprep.subr.mxu0 0.0
      %905 = vmatpush1.msra.mxu0 0.0
      %906 = vmatprep.subr.mxu0 0.0
      %907 = vmatpush1.msra.mxu0 0.0
      %908 = vmatprep.subr.mxu0 0.0
      %909 = vmatpush1.msra.mxu0 0.0
      %910 = vmatprep.subr.mxu0 0.0
      %911 = vmatpush1.msra.mxu0 %v878
      %912 = vmatprep.subr.mxu0 0.0
      %913 = vmatpush2.msra.mxu0 0.0
      %914 = vmatprep.subr.mxu0 0.0
      %915 = vmatpush2.msra.mxu0 0.0
      %916 = vmatprep.subr.mxu0 0.0
      %917 = vmatpush2.msra.mxu0 0.0
      %918 = vmatprep.subr.mxu0 0.0
      %919 = vmatpush2.msra.mxu0 0.0
      %920 = vmatprep.subr.mxu0 0.0
      %921 = vmatpush2.msra.mxu0 0.0
      %922 = vmatprep.subr.mxu0 0.0
      %923 = vmatpush2.msra.mxu0 0.0
      %924 = vmatprep.subr.mxu0 0.0
      %925 = vmatpush2.msra.mxu0 0.0
      %926 = vmatprep.subr.mxu0 0.0
      %927 = vmatpush2.msra.mxu0 0.0
      %928 = vmatprep.subr.mxu0 0.0
      %929 = vmatpush2.msra.mxu0 0.0
      %930 = vmatprep.subr.mxu0 0.0
      %931 = vmatpush2.msra.mxu0 0.0
      %932 = vmatprep.subr.mxu0 0.0
      %933 = vmatpush2.msra.mxu0 0.0
      %934 = vmatprep.subr.mxu0 0.0
      %935 = vmatpush2.msra.mxu0 0.0
      %936 = vmatprep.subr.mxu0 0.0
      %937 = vmatpush2.msra.mxu0 0.0
      %938 = vmatprep.subr.mxu0 0.0
      %939 = vmatpush2.msra.mxu0 0.0
      %940 = vmatprep.subr.mxu0 0.0
      %941 = vmatpush2.msra.mxu0 0.0
      %942 = vmatprep.subr.mxu0 0.0
      %943 = vmatpush2.msra.mxu0 0.0
      %944 = vmatprep.mubr.f32.mxu0 0.0
      %945 = vmatmul.mubr.f32.gmra.mxu0 %v873
      %v946 = vpop.f32.mrf.mxu0
      %v947 = vadd.f32 0.0, %v946
      %v948 = vpop.f32.mrf.mxu0
      %949 = vmatprep.mubr.f32.mxu0 0.0
      %950 = vmatmul.mubr.f32.gmra.mxu0 %v875
      %v951 = vpop.f32.mrf.mxu0
      %v952 = vadd.f32 0.0, %v951
      %v953 = vpop.f32.mrf.mxu0
      %954 = vdwg.mxu0
      %v955 = vadd.f32 %v863, %v947
      %v956 = vadd.f32 %v864, %v952
      %s957 = scalar_lea.vmem %s3, 20
      %v958 = vld [vmem:[%s957] sm:$0xf]
      %v959 = vrot.slane %v486, 2
      %v960 = vrot.slane %v487, 2
      %v961 = vsel %vm687, %v959, %v960
      %v962 = vrot.slane %v488, 2
      %v963 = vsel %vm687, %v960, %v962
      %v964 = vsel %vm519, %v961, 0
      %v966 = vsel %vm519, %v963, 0
      %v969 = vsel %vm524, %v958, 0
      %971 = vmatprep.subr.mxu0 0.0
      %972 = vmatpush1.msra.mxu0 0.0
      %973 = vmatprep.subr.mxu0 0.0
      %974 = vmatpush1.msra.mxu0 0.0
      %975 = vmatprep.subr.mxu0 0.0
      %976 = vmatpush1.msra.mxu0 0.0
      %977 = vmatprep.subr.mxu0 0.0
      %978 = vmatpush1.msra.mxu0 0.0
      %979 = vmatprep.subr.mxu0 0.0
      %980 = vmatpush1.msra.mxu0 0.0
      %981 = vmatprep.subr.mxu0 0.0
      %982 = vmatpush1.msra.mxu0 0.0
      %983 = vmatprep.subr.mxu0 0.0
      %984 = vmatpush1.msra.mxu0 0.0
      %985 = vmatprep.subr.mxu0 0.0
      %986 = vmatpush1.msra.mxu0 0.0
      %987 = vmatprep.subr.mxu0 0.0
      %988 = vmatpush1.msra.mxu0 0.0
      %989 = vmatprep.subr.mxu0 0.0
      %990 = vmatpush1.msra.mxu0 0.0
      %991 = vmatprep.subr.mxu0 0.0
      %992 = vmatpush1.msra.mxu0 0.0
      %993 = vmatprep.subr.mxu0 0.0
      %994 = vmatpush1.msra.mxu0 0.0
      %995 = vmatprep.subr.mxu0 0.0
      %996 = vmatpush1.msra.mxu0 0.0
      %997 = vmatprep.subr.mxu0 0.0
      %998 = vmatpush1.msra.mxu0 0.0
      %999 = vmatprep.subr.mxu0 0.0
      %1000 = vmatpush1.msra.mxu0 0.0
      %1001 = vmatprep.subr.mxu0 0.0
      %1002 = vmatpush1.msra.mxu0 %v969
      %1003 = vmatprep.subr.mxu0 0.0
      %1004 = vmatpush2.msra.mxu0 0.0
      %1005 = vmatprep.subr.mxu0 0.0
      %1006 = vmatpush2.msra.mxu0 0.0
      %1007 = vmatprep.subr.mxu0 0.0
      %1008 = vmatpush2.msra.mxu0 0.0
      %1009 = vmatprep.subr.mxu0 0.0
      %1010 = vmatpush2.msra.mxu0 0.0
      %1011 = vmatprep.subr.mxu0 0.0
      %1012 = vmatpush2.msra.mxu0 0.0
      %1013 = vmatprep.subr.mxu0 0.0
      %1014 = vmatpush2.msra.mxu0 0.0
      %1015 = vmatprep.subr.mxu0 0.0
      %1016 = vmatpush2.msra.mxu0 0.0
      %1017 = vmatprep.subr.mxu0 0.0
      %1018 = vmatpush2.msra.mxu0 0.0
      %1019 = vmatprep.subr.mxu0 0.0
      %1020 = vmatpush2.msra.mxu0 0.0
      %1021 = vmatprep.subr.mxu0 0.0
      %1022 = vmatpush2.msra.mxu0 0.0
      %1023 = vmatprep.subr.mxu0 0.0
      %1024 = vmatpush2.msra.mxu0 0.0
      %1025 = vmatprep.subr.mxu0 0.0
      %1026 = vmatpush2.msra.mxu0 0.0
      %1027 = vmatprep.subr.mxu0 0.0
      %1028 = vmatpush2.msra.mxu0 0.0
      %1029 = vmatprep.subr.mxu0 0.0
      %1030 = vmatpush2.msra.mxu0 0.0
      %1031 = vmatprep.subr.mxu0 0.0
      %1032 = vmatpush2.msra.mxu0 0.0
      %1033 = vmatprep.subr.mxu0 0.0
      %1034 = vmatpush2.msra.mxu0 0.0
      %1035 = vmatprep.mubr.f32.mxu0 0.0
      %1036 = vmatmul.mubr.f32.gmra.mxu0 %v964
      %v1037 = vpop.f32.mrf.mxu0
      %v1038 = vadd.f32 0.0, %v1037
      %v1039 = vpop.f32.mrf.mxu0
      %1040 = vmatprep.mubr.f32.mxu0 0.0
      %1041 = vmatmul.mubr.f32.gmra.mxu0 %v966
      %v1042 = vpop.f32.mrf.mxu0
      %v1043 = vadd.f32 0.0, %v1042
      %v1044 = vpop.f32.mrf.mxu0
      %1045 = vdwg.mxu0
      %v1046 = vadd.f32 %v955, %v1038
      %v1047 = vadd.f32 %v956, %v1043
      %s1048 = scalar_lea.vmem %s3, 24
      %v1049 = vld [vmem:[%s1048] sm:$0xf]
      %v1051 = vsel %vm519, %v504, 0
      %v1054 = vsel %vm519, %v505, 0
      %v1057 = vsel %vm524, %v1049, 0
      %1059 = vmatprep.subr.mxu0 0.0
      %1060 = vmatpush1.msra.mxu0 0.0
      %1061 = vmatprep.subr.mxu0 0.0
      %1062 = vmatpush1.msra.mxu0 0.0
      %1063 = vmatprep.subr.mxu0 0.0
      %1064 = vmatpush1.msra.mxu0 0.0
      %1065 = vmatprep.subr.mxu0 0.0
      %1066 = vmatpush1.msra.mxu0 0.0
      %1067 = vmatprep.subr.mxu0 0.0
      %1068 = vmatpush1.msra.mxu0 0.0
      %1069 = vmatprep.subr.mxu0 0.0
      %1070 = vmatpush1.msra.mxu0 0.0
      %1071 = vmatprep.subr.mxu0 0.0
      %1072 = vmatpush1.msra.mxu0 0.0
      %1073 = vmatprep.subr.mxu0 0.0
      %1074 = vmatpush1.msra.mxu0 0.0
      %1075 = vmatprep.subr.mxu0 0.0
      %1076 = vmatpush1.msra.mxu0 0.0
      %1077 = vmatprep.subr.mxu0 0.0
      %1078 = vmatpush1.msra.mxu0 0.0
      %1079 = vmatprep.subr.mxu0 0.0
      %1080 = vmatpush1.msra.mxu0 0.0
      %1081 = vmatprep.subr.mxu0 0.0
      %1082 = vmatpush1.msra.mxu0 0.0
      %1083 = vmatprep.subr.mxu0 0.0
      %1084 = vmatpush1.msra.mxu0 0.0
      %1085 = vmatprep.subr.mxu0 0.0
      %1086 = vmatpush1.msra.mxu0 0.0
      %1087 = vmatprep.subr.mxu0 0.0
      %1088 = vmatpush1.msra.mxu0 0.0
      %1089 = vmatprep.subr.mxu0 0.0
      %1090 = vmatpush1.msra.mxu0 %v1057
      %1091 = vmatprep.subr.mxu0 0.0
      %1092 = vmatpush2.msra.mxu0 0.0
      %1093 = vmatprep.subr.mxu0 0.0
      %1094 = vmatpush2.msra.mxu0 0.0
      %1095 = vmatprep.subr.mxu0 0.0
      %1096 = vmatpush2.msra.mxu0 0.0
      %1097 = vmatprep.subr.mxu0 0.0
      %1098 = vmatpush2.msra.mxu0 0.0
      %1099 = vmatprep.subr.mxu0 0.0
      %1100 = vmatpush2.msra.mxu0 0.0
      %1101 = vmatprep.subr.mxu0 0.0
      %1102 = vmatpush2.msra.mxu0 0.0
      %1103 = vmatprep.subr.mxu0 0.0
      %1104 = vmatpush2.msra.mxu0 0.0
      %1105 = vmatprep.subr.mxu0 0.0
      %1106 = vmatpush2.msra.mxu0 0.0
      %1107 = vmatprep.subr.mxu0 0.0
      %1108 = vmatpush2.msra.mxu0 0.0
      %1109 = vmatprep.subr.mxu0 0.0
      %1110 = vmatpush2.msra.mxu0 0.0
      %1111 = vmatprep.subr.mxu0 0.0
      %1112 = vmatpush2.msra.mxu0 0.0
      %1113 = vmatprep.subr.mxu0 0.0
      %1114 = vmatpush2.msra.mxu0 0.0
      %1115 = vmatprep.subr.mxu0 0.0
      %1116 = vmatpush2.msra.mxu0 0.0
      %1117 = vmatprep.subr.mxu0 0.0
      %1118 = vmatpush2.msra.mxu0 0.0
      %1119 = vmatprep.subr.mxu0 0.0
      %1120 = vmatpush2.msra.mxu0 0.0
      %1121 = vmatprep.subr.mxu0 0.0
      %1122 = vmatpush2.msra.mxu0 0.0
      %1123 = vmatprep.mubr.f32.mxu0 0.0
      %1124 = vmatmul.mubr.f32.gmra.mxu0 %v1051
      %v1125 = vpop.f32.mrf.mxu0
      %v1126 = vadd.f32 0.0, %v1125
      %v1127 = vpop.f32.mrf.mxu0
      %1128 = vmatprep.mubr.f32.mxu0 0.0
      %1129 = vmatmul.mubr.f32.gmra.mxu0 %v1054
      %v1130 = vpop.f32.mrf.mxu0
      %v1131 = vadd.f32 0.0, %v1130
      %v1132 = vpop.f32.mrf.mxu0
      %1133 = vdwg.mxu0
      %v1134 = vadd.f32 %v1046, %v1126
      %v1135 = vadd.f32 %v1047, %v1131
      %s1136 = scalar_lea.vmem %s3, 28
      %v1137 = vld [vmem:[%s1136] sm:$0xf]
      %v1139 = vrot.slane %v504, 1
      %v1140 = vrot.slane %v505, 1
      %v1141 = vsel %vm513, %v1139, %v1140
      %v1142 = vrot.slane %v506, 1
      %v1143 = vsel %vm513, %v1140, %v1142
      %v1144 = vsel %vm519, %v1141, 0
      %v1146 = vsel %vm519, %v1143, 0
      %v1149 = vsel %vm524, %v1137, 0
      %1151 = vmatprep.subr.mxu0 0.0
      %1152 = vmatpush1.msra.mxu0 0.0
      %1153 = vmatprep.subr.mxu0 0.0
      %1154 = vmatpush1.msra.mxu0 0.0
      %1155 = vmatprep.subr.mxu0 0.0
      %1156 = vmatpush1.msra.mxu0 0.0
      %1157 = vmatprep.subr.mxu0 0.0
      %1158 = vmatpush1.msra.mxu0 0.0
      %1159 = vmatprep.subr.mxu0 0.0
      %1160 = vmatpush1.msra.mxu0 0.0
      %1161 = vmatprep.subr.mxu0 0.0
      %1162 = vmatpush1.msra.mxu0 0.0
      %1163 = vmatprep.subr.mxu0 0.0
      %1164 = vmatpush1.msra.mxu0 0.0
      %1165 = vmatprep.subr.mxu0 0.0
      %1166 = vmatpush1.msra.mxu0 0.0
      %1167 = vmatprep.subr.mxu0 0.0
      %1168 = vmatpush1.msra.mxu0 0.0
      %1169 = vmatprep.subr.mxu0 0.0
      %1170 = vmatpush1.msra.mxu0 0.0
      %1171 = vmatprep.subr.mxu0 0.0
      %1172 = vmatpush1.msra.mxu0 0.0
      %1173 = vmatprep.subr.mxu0 0.0
      %1174 = vmatpush1.msra.mxu0 0.0
      %1175 = vmatprep.subr.mxu0 0.0
      %1176 = vmatpush1.msra.mxu0 0.0
      %1177 = vmatprep.subr.mxu0 0.0
      %1178 = vmatpush1.msra.mxu0 0.0
      %1179 = vmatprep.subr.mxu0 0.0
      %1180 = vmatpush1.msra.mxu0 0.0
      %1181 = vmatprep.subr.mxu0 0.0
      %1182 = vmatpush1.msra.mxu0 %v1149
      %1183 = vmatprep.subr.mxu0 0.0
      %1184 = vmatpush2.msra.mxu0 0.0
      %1185 = vmatprep.subr.mxu0 0.0
      %1186 = vmatpush2.msra.mxu0 0.0
      %1187 = vmatprep.subr.mxu0 0.0
      %1188 = vmatpush2.msra.mxu0 0.0
      %1189 = vmatprep.subr.mxu0 0.0
      %1190 = vmatpush2.msra.mxu0 0.0
      %1191 = vmatprep.subr.mxu0 0.0
      %1192 = vmatpush2.msra.mxu0 0.0
      %1193 = vmatprep.subr.mxu0 0.0
      %1194 = vmatpush2.msra.mxu0 0.0
      %1195 = vmatprep.subr.mxu0 0.0
      %1196 = vmatpush2.msra.mxu0 0.0
      %1197 = vmatprep.subr.mxu0 0.0
      %1198 = vmatpush2.msra.mxu0 0.0
      %1199 = vmatprep.subr.mxu0 0.0
      %1200 = vmatpush2.msra.mxu0 0.0
      %1201 = vmatprep.subr.mxu0 0.0
      %1202 = vmatpush2.msra.mxu0 0.0
      %1203 = vmatprep.subr.mxu0 0.0
      %1204 = vmatpush2.msra.mxu0 0.0
      %1205 = vmatprep.subr.mxu0 0.0
      %1206 = vmatpush2.msra.mxu0 0.0
      %1207 = vmatprep.subr.mxu0 0.0
      %1208 = vmatpush2.msra.mxu0 0.0
      %1209 = vmatprep.subr.mxu0 0.0
      %1210 = vmatpush2.msra.mxu0 0.0
      %1211 = vmatprep.subr.mxu0 0.0
      %1212 = vmatpush2.msra.mxu0 0.0
      %1213 = vmatprep.subr.mxu0 0.0
      %1214 = vmatpush2.msra.mxu0 0.0
      %1215 = vmatprep.mubr.f32.mxu0 0.0
      %1216 = vmatmul.mubr.f32.gmra.mxu0 %v1144
      %v1217 = vpop.f32.mrf.mxu0
      %v1218 = vadd.f32 0.0, %v1217
      %v1219 = vpop.f32.mrf.mxu0
      %1220 = vmatprep.mubr.f32.mxu0 0.0
      %1221 = vmatmul.mubr.f32.gmra.mxu0 %v1146
      %v1222 = vpop.f32.mrf.mxu0
      %v1223 = vadd.f32 0.0, %v1222
      %v1224 = vpop.f32.mrf.mxu0
      %1225 = vdwg.mxu0
      %v1226 = vadd.f32 %v1134, %v1218
      %v1227 = vadd.f32 %v1135, %v1223
      %s1228 = scalar_lea.vmem %s3, 32
      %v1229 = vld [vmem:[%s1228] sm:$0xf]
      %v1230 = vrot.slane %v504, 2
      %v1231 = vrot.slane %v505, 2
      %v1232 = vsel %vm687, %v1230, %v1231
      %v1233 = vrot.slane %v506, 2
      %v1234 = vsel %vm687, %v1231, %v1233
      %v1235 = vsel %vm519, %v1232, 0
      %v1237 = vsel %vm519, %v1234, 0
      %v1240 = vsel %vm524, %v1229, 0
      %1242 = vmatprep.subr.mxu0 0.0
      %1243 = vmatpush1.msra.mxu0 0.0
      %1244 = vmatprep.subr.mxu0 0.0
      %1245 = vmatpush1.msra.mxu0 0.0
      %1246 = vmatprep.subr.mxu0 0.0
      %1247 = vmatpush1.msra.mxu0 0.0
      %1248 = vmatprep.subr.mxu0 0.0
      %1249 = vmatpush1.msra.mxu0 0.0
      %1250 = vmatprep.subr.mxu0 0.0
      %1251 = vmatpush1.msra.mxu0 0.0
      %1252 = vmatprep.subr.mxu0 0.0
      %1253 = vmatpush1.msra.mxu0 0.0
      %1254 = vmatprep.subr.mxu0 0.0
      %1255 = vmatpush1.msra.mxu0 0.0
      %1256 = vmatprep.subr.mxu0 0.0
      %1257 = vmatpush1.msra.mxu0 0.0
      %1258 = vmatprep.subr.mxu0 0.0
      %1259 = vmatpush1.msra.mxu0 0.0
      %1260 = vmatprep.subr.mxu0 0.0
      %1261 = vmatpush1.msra.mxu0 0.0
      %1262 = vmatprep.subr.mxu0 0.0
      %1263 = vmatpush1.msra.mxu0 0.0
      %1264 = vmatprep.subr.mxu0 0.0
      %1265 = vmatpush1.msra.mxu0 0.0
      %1266 = vmatprep.subr.mxu0 0.0
      %1267 = vmatpush1.msra.mxu0 0.0
      %1268 = vmatprep.subr.mxu0 0.0
      %1269 = vmatpush1.msra.mxu0 0.0
      %1270 = vmatprep.subr.mxu0 0.0
      %1271 = vmatpush1.msra.mxu0 0.0
      %1272 = vmatprep.subr.mxu0 0.0
      %1273 = vmatpush1.msra.mxu0 %v1240
      %1274 = vmatprep.subr.mxu0 0.0
      %1275 = vmatpush2.msra.mxu0 0.0
      %1276 = vmatprep.subr.mxu0 0.0
      %1277 = vmatpush2.msra.mxu0 0.0
      %1278 = vmatprep.subr.mxu0 0.0
      %1279 = vmatpush2.msra.mxu0 0.0
      %1280 = vmatprep.subr.mxu0 0.0
      %1281 = vmatpush2.msra.mxu0 0.0
      %1282 = vmatprep.subr.mxu0 0.0
      %1283 = vmatpush2.msra.mxu0 0.0
      %1284 = vmatprep.subr.mxu0 0.0
      %1285 = vmatpush2.msra.mxu0 0.0
      %1286 = vmatprep.subr.mxu0 0.0
      %1287 = vmatpush2.msra.mxu0 0.0
      %1288 = vmatprep.subr.mxu0 0.0
      %1289 = vmatpush2.msra.mxu0 0.0
      %1290 = vmatprep.subr.mxu0 0.0
      %1291 = vmatpush2.msra.mxu0 0.0
      %1292 = vmatprep.subr.mxu0 0.0
      %1293 = vmatpush2.msra.mxu0 0.0
      %1294 = vmatprep.subr.mxu0 0.0
      %1295 = vmatpush2.msra.mxu0 0.0
      %1296 = vmatprep.subr.mxu0 0.0
      %1297 = vmatpush2.msra.mxu0 0.0
      %1298 = vmatprep.subr.mxu0 0.0
      %1299 = vmatpush2.msra.mxu0 0.0
      %1300 = vmatprep.subr.mxu0 0.0
      %1301 = vmatpush2.msra.mxu0 0.0
      %1302 = vmatprep.subr.mxu0 0.0
      %1303 = vmatpush2.msra.mxu0 0.0
      %1304 = vmatprep.subr.mxu0 0.0
      %1305 = vmatpush2.msra.mxu0 0.0
      %1306 = vmatprep.mubr.f32.mxu0 0.0
      %1307 = vmatmul.mubr.f32.gmra.mxu0 %v1235
      %v1308 = vpop.f32.mrf.mxu0
      %v1309 = vadd.f32 0.0, %v1308
      %v1310 = vpop.f32.mrf.mxu0
      %1311 = vmatprep.mubr.f32.mxu0 0.0
      %1312 = vmatmul.mubr.f32.gmra.mxu0 %v1237
      %v1313 = vpop.f32.mrf.mxu0
      %v1314 = vadd.f32 0.0, %v1313
      %v1315 = vpop.f32.mrf.mxu0
      %1316 = vdwg.mxu0
      %v1317 = vadd.f32 %v1226, %v1309
      %v1318 = vadd.f32 %v1227, %v1314
      %1319 = vst.msk [vmem:[%s394] sm:$0xff] %vm519, %v1317
      %1320 = vst.msk [vmem:[%s394 + $0x8] sm:$0xff] %vm519, %v1318
      %v1321 = vld [vmem:[%s7] sm:$0x3]
      %v1322 = vsel %vm519, %v1317, 0.0
      %v1323 = vsel %vm519, %v1318, 0.0
      %v1324 = vadd.f32 %v1322, %v1323
      %v1325 = vrot.slane %v1324, 4
      %v1326 = vadd.f32 %v1324, %v1325
      %v1327 = vrot.slane %v1326, 2
      %v1328 = vadd.f32 %v1326, %v1327
      %v1329 = vrot.slane %v1328, 1
      %v1330 = vadd.f32 %v1328, %v1329
      %v1331 = vmul.f32 %v1317, %v1317
      %v1332 = vmul.f32 %v1318, %v1318
      %v1333 = vsel %vm519, %v1331, 0.0
      %v1334 = vsel %vm519, %v1332, 0.0
      %v1335 = vadd.f32 %v1333, %v1334
      %v1336 = vrot.slane %v1335, 4
      %v1337 = vadd.f32 %v1335, %v1336
      %v1338 = vrot.slane %v1337, 2
      %v1339 = vadd.f32 %v1337, %v1338
      %v1340 = vrot.slane %v1339, 1
      %v1341 = vadd.f32 %v1339, %v1340
      %vm1342 = vcmask 1040384
      %v1343 = vsel %vm1342, %v1330, %v1341
      %v1344 = vadd.f32 %v1321, %v1343
      %vm1345 = vcmask 25600
      %1346 = vst.msk [vmem:[%s7] sm:$0x3] %vm1345, %v1344
      %p1347 = scmp.lt.s32.totalorder %s23, 1
      %s1348 = scalar_select %p1347, %s23, 1
      %p1349 = scmp.lt.s32.totalorder %s24, 15
      %s1350 = scalar_select %p1349, %s24, 15
      %s1351 = smul.addr %s1350, 2
      %s1352 = smul.addr %s1348, 32
      %s1353 = sadd.s32 %s1351, %s1352
      %s1354 = smul.addr %s1353, 8
      %s1355 = scalar_lea.vmem %s6, %s1354
      // Predicated region
      $region49: #{decoder_forward.8} parent=43 // pred_check
        %p1356 = pneg %p202
      $region50: #{decoder_forward.8} parent=43 // pred_check_branch
        %1358 = sbr.rel (%p1356) target = $region52
      $region51: #{decoder_forward.8} parent=43 // pred_region
        _
      $region52: #{decoder_forward.8} parent=43 // pred_fallthru
        _
      // Predicated region
      $region53: #{decoder_forward.8} parent=43 // pred_check
        %p1359 = pneg %p223
      $region54: #{decoder_forward.8} parent=43 // pred_check_branch
        %1361 = sbr.rel (%p1359) target = $region56
      $region55: #{decoder_forward.8} parent=43 // pred_region
        _
      $region56: #{decoder_forward.8} parent=43 // pred_fallthru
        _
      // Predicated region
      $region57: #{decoder_forward.8} parent=43 // pred_check
        %p1362 = pneg %p223
      $region58: #{decoder_forward.8} parent=43 // pred_check_branch
        %1364 = sbr.rel (%p1362) target = $region60
      $region59: #{decoder_forward.8} parent=43 // pred_region
        _
      $region60: #{decoder_forward.8} parent=43 // pred_fallthru
        _
    $region44: #{decoder_forward.8} parent=5 // pred_fallthru
      _
    %p1365 = scmp.le.s32.totalorder 2, %s14
    // Predicated region
    $region61: #{decoder_forward.8} parent=5 // pred_check
      %p1366 = pneg %p1365
    $region62: #{decoder_forward.8} parent=5 // pred_check_branch
      %1368 = sbr.rel (%p1366) target = $region64
    $region63: #{decoder_forward.8} parent=5 // pred_region
      %s1369 = ssub.s32 %s14, 2
      // Predicated region
      $region65: #{decoder_forward.8} parent=63 // pred_check
        %p1370 = pneg %p208
      $region66: #{decoder_forward.8} parent=63 // pred_check_branch
        %1372 = sbr.rel (%p1370) target = $region68
      $region67: #{decoder_forward.8} parent=63 // pred_region
        %p1373 = scmp.lt.s32.totalorder %s25, 1
        %s1374 = scalar_select %p1373, %s25, 1
        %p1375 = scmp.lt.s32.totalorder %s26, 15
        %s1376 = scalar_select %p1375, %s26, 15
        %s1377 = smul.addr %s1376, 2
        %s1378 = smul.addr %s1374, 32
        %s1379 = sadd.s32 %s1377, %s1378
        %s1380 = smul.addr %s1379, 8
        %s1381 = scalar_lea.vmem %s6, %s1380
      $region68: #{decoder_forward.8} parent=63 // pred_fallthru
        _
    $region64: #{decoder_forward.8} parent=5 // pred_fallthru
      _
  $region6: #{decoder_forward.8} parent=0 // loop_footer
    %s18 = sadd.s32 1, %s14
  $region7: #{decoder_forward.8} parent=0 // loop_footer_branch
    %13 = sbr.rel target = $region3
  $region8: #{decoder_forward.8} parent=0 // loop_exit
    _

</llo_original>
